<compile_context>
chip_gen: v5e
topology: v5e:2x2
jax: 0.10.0
libtpu: 0.0.40
codegen_flags: <defaults>
</compile_context>

<pallas_src>
import jax
import jax.numpy as jnp
from jax.experimental import pallas as pl
from jax.experimental.pallas import tpu as pltpu


# ----------------------------------------------------------------------------
# Pallas kernel: one batch element per grid step.
# ----------------------------------------------------------------------------
def down_mru2_kernel(slab_ref, x_ref, w1_ref, b1_ref, w2x_ref, w2sk_ref,
                     b2_ref, w3_ref, b3_ref, w4_ref, b4_ref, o_ref, pad_ref):
    Hp2, Wp2, C = pad_ref.shape
    H, W = Hp2 - 2, Wp2 - 2
    HW = H * W
    Cout = w4_ref.shape[3]
    f32 = jnp.float32

    slab = slab_ref[0]                       # (H*W, 9*(C+1))  im2col of [x,sk]
    x = x_ref[0]                             # (H*W, C)

    # conv1 / conv3 / conv2-sketch-part: one K = 9*(C+1) matmul each.
    mi = jax.nn.sigmoid(
        jnp.dot(slab, w1_ref[...], preferred_element_type=f32) + b1_ref[...])
    ni = jax.nn.sigmoid(
        jnp.dot(slab, w3_ref[...], preferred_element_type=f32) + b3_ref[...])
    z = jnp.dot(slab, w2sk_ref[...], preferred_element_type=f32) + b2_ref[...]

    def conv3x3_from_scratch(w_ref, n_out):
        # 3x3 / pad=1 / stride=1 conv over whatever currently sits in the
        # scratch interior (borders are zero).  9 shifted-window taps.
        acc = jnp.zeros((HW, n_out), f32)
        for kh in range(3):
            for kw in range(3):
                win = pad_ref[pl.ds(kh, H), pl.ds(kw, W), :]   # (H, W, C)
                acc = acc + jnp.dot(win.reshape(HW, C), w_ref[kh, kw],
                                    preferred_element_type=f32)
        return acc

    # conv2 x-part: write mi*x into the padded scratch (borders zero), tap it.
    pad_ref[...] = jnp.zeros(pad_ref.shape, pad_ref.dtype)
    pad_ref[pl.ds(1, H), pl.ds(1, W), :] = (mi * x).astype(f32).reshape(H, W, C)
    z = z + conv3x3_from_scratch(w2x_ref, C)
    zi = jnp.maximum(z, 0.0)
    yi = (1.0 - ni) * zi + ni * x            # (H*W, C), f32

    # conv4 (computed at stride 1; the stride-2 subsample happens outside).
    pad_ref[pl.ds(1, H), pl.ds(1, W), :] = yi.reshape(H, W, C)
    y4 = jax.nn.sigmoid(conv3x3_from_scratch(w4_ref, Cout) + b4_ref[...])
    o_ref[0] = y4.reshape(H, W, Cout).astype(o_ref.dtype)


# ----------------------------------------------------------------------------
# Bilinear resize with align_corners=True (matches F.interpolate semantics).
# ----------------------------------------------------------------------------
def bilinear_resize_align_corners(img_nchw, out_h, out_w):
    N, C, H, W = img_nchw.shape

    def coords(out_size, in_size):
        if out_size == 1:
            return jnp.zeros((1,), jnp.float32)
        scale = (in_size - 1) / (out_size - 1)
        return jnp.arange(out_size, dtype=jnp.float32) * scale

    ys = coords(out_h, H)
    xs = coords(out_w, W)
    y0 = jnp.floor(ys).astype(jnp.int32)
    x0 = jnp.floor(xs).astype(jnp.int32)
    y1 = jnp.minimum(y0 + 1, H - 1)
    x1 = jnp.minimum(x0 + 1, W - 1)
    wy = (ys - y0.astype(jnp.float32))[None, None, :, None]
    wx = (xs - x0.astype(jnp.float32))[None, None, None, :]

    r0 = jnp.take(img_nchw, y0, axis=2)
    r1 = jnp.take(img_nchw, y1, axis=2)
    a = jnp.take(r0, x0, axis=3)
    b = jnp.take(r0, x1, axis=3)
    c = jnp.take(r1, x0, axis=3)
    d = jnp.take(r1, x1, axis=3)
    top = a * (1.0 - wx) + b * wx
    bot = c * (1.0 - wx) + d * wx
    return top * (1.0 - wy) + bot * wy


# ----------------------------------------------------------------------------
# Wrapper: resize + concat + im2col + weight prep in XLA, convs in Pallas.
# ----------------------------------------------------------------------------
@jax.jit
def down_mru2_forward(x_nchw, sketch_nchw, w1, b1, w2, b2, w3, b3, w4, b4):
    N, C, H, W = x_nchw.shape
    Cin = C + 1
    HW = H * W
    K9 = 9 * Cin
    Cout = w4.shape[-1]

    sk = bilinear_resize_align_corners(sketch_nchw, H, W)         # (N,1,H,W)
    x_nhwc = jnp.transpose(x_nchw, (0, 2, 3, 1))                  # (N,H,W,C)
    sk_nhwc = jnp.transpose(sk, (0, 2, 3, 1))                     # (N,H,W,1)
    xs = jnp.concatenate([x_nhwc, sk_nhwc], axis=-1)              # (N,H,W,C+1)

    # 3x3 im2col of [x, sketch], tap-major then channel -- matches the
    # (3,3,Cin,C) -> (9*Cin, C) weight reshape below.  Computed once in XLA.
    xs_pad = jnp.pad(xs, ((0, 0), (1, 1), (1, 1), (0, 0)))
    taps = [xs_pad[:, kh:kh + H, kw:kw + W, :]
            for kh in range(3) for kw in range(3)]
    slab = jnp.concatenate(taps, axis=-1).reshape(N, HW, K9)      # (N,HW,9Cin)

    x_flat = x_nhwc.reshape(N, HW, C)                             # (N,HW,C)

    # Weight prep (HWIO).
    w1f = w1.reshape(K9, C)
    w3f = w3.reshape(K9, C)
    w2skf = w2.at[:, :, :C, :].set(0.0).reshape(K9, C)  # sketch channel only
    w2x = w2[:, :, :C, :]                               # (3,3,C,C) x channels

    full = lambda shape: pl.BlockSpec(shape, lambda n: (0,) * len(shape))

    y4_full = pl.pallas_call(
        down_mru2_kernel,
        out_shape=jax.ShapeDtypeStruct((N, H, W, Cout), x_nchw.dtype),
        grid_spec=pltpu.PrefetchScalarGridSpec(
            num_scalar_prefetch=0,
            grid=(N,),
            in_specs=[
                pl.BlockSpec((1, HW, K9), lambda n: (n, 0, 0)),   # im2col slab
                pl.BlockSpec((1, HW, C), lambda n: (n, 0, 0)),    # x
                full((K9, C)), full((1, C)),                      # w1f, b1
                full((3, 3, C, C)), full((K9, C)), full((1, C)),  # w2x,w2sk,b2
                full((K9, C)), full((1, C)),                      # w3f, b3
                full((3, 3, C, Cout)), full((1, Cout)),           # w4, b4
            ],
            out_specs=pl.BlockSpec((1, H, W, Cout), lambda n: (n, 0, 0, 0)),
            scratch_shapes=[pltpu.VMEM((H + 2, W + 2, C), jnp.float32)],
        ),
        compiler_params=pltpu.CompilerParams(
            dimension_semantics=("parallel",)),
    )(slab, x_flat, w1f, b1, w2x, w2skf, b2, w3f, b3, w4, b4)

    # stride-2, pad-1 conv == stride-1, pad-1 conv sampled at even positions.
    y = y4_full[:, ::2, ::2, :]
    return jnp.transpose(y, (0, 3, 1, 2))                         # NCHW


# ----------------------------------------------------------------------------
# Pure-JAX reference (lax.conv) for a correctness check.
# ----------------------------------------------------------------------------
def down_mru2_reference(x_nchw, sketch_nchw, w1, b1, w2, b2, w3, b3, w4, b4):
    N, C, H, W = x_nchw.shape
    sk = bilinear_resize_align_corners(sketch_nchw, H, W)
    x = jnp.transpose(x_nchw, (0, 2, 3, 1))
    sk = jnp.transpose(sk, (0, 2, 3, 1))

    def conv(inp, w, b, stride=1):
        out = jax.lax.conv_general_dilated(
            inp, w, window_strides=(stride, stride), padding=((1, 1), (1, 1)),
            dimension_numbers=("NHWC", "HWIO", "NHWC"))
        return out + b.reshape(1, 1, 1, -1)

    xsk = jnp.concatenate([x, sk], axis=-1)
    mi = jax.nn.sigmoid(conv(xsk, w1, b1))
    ni = jax.nn.sigmoid(conv(xsk, w3, b3))
    zi = jnp.maximum(conv(jnp.concatenate([mi * x, sk], axis=-1), w2, b2), 0.0)
    yi = (1.0 - ni) * zi + ni * x
    y = jax.nn.sigmoid(conv(yi, w4, b4, stride=2))
    return jnp.transpose(y, (0, 3, 1, 2))


if __name__ == "__main__":
    key = jax.random.PRNGKey(0)
    N, C, H, W = 2, 4, 16, 16        # x: (N, C, H, W)
    Cout = 8                         # DownMRU2 out_channels
    SH, SW = 8, 8                    # sketch at a different resolution
    Cin = C + 1

    ks = jax.random.split(key, 10)
    x = jax.random.normal(ks[0], (N, C, H, W), jnp.float32)
    sketch = jax.random.normal(ks[1], (N, 1, SH, SW), jnp.float32)

    # Deterministic parameter init (HWIO layout).
    w1 = 0.1 * jax.random.normal(ks[2], (3, 3, Cin, C), jnp.float32)
    w2 = 0.1 * jax.random.normal(ks[3], (3, 3, Cin, C), jnp.float32)
    w3 = 0.1 * jax.random.normal(ks[4], (3, 3, Cin, C), jnp.float32)
    w4 = 0.1 * jax.random.normal(ks[5], (3, 3, C, Cout), jnp.float32)
    b1 = 0.1 * jax.random.normal(ks[6], (1, C), jnp.float32)
    b2 = 0.1 * jax.random.normal(ks[7], (1, C), jnp.float32)
    b3 = 0.1 * jax.random.normal(ks[8], (1, C), jnp.float32)
    b4 = 0.1 * jax.random.normal(ks[9], (1, Cout), jnp.float32)

    y = down_mru2_forward(x, sketch, w1, b1, w2, b2, w3, b3, w4, b4)
    y = jax.block_until_ready(y)

    y_ref = down_mru2_reference(x, sketch, w1, b1, w2, b2, w3, b3, w4, b4)
    Ho, Wo = (H + 1) // 2, (W + 1) // 2
    assert y.shape == (N, Cout, Ho, Wo), y.shape
    assert jnp.allclose(y, y_ref, atol=2e-4, rtol=2e-4), (
        float(jnp.max(jnp.abs(y - y_ref))))

    print("KERNEL_OK")
</pallas_src>

<mosaic_0001>
module attributes {stable_mosaic.version = 11 : i64} {
  func.func @down_mru2_kernel(%arg0: i32, %arg1: memref<1x256x45xf32, #tpu.memory_space<vmem>>, %arg2: memref<1x256x4xf32, #tpu.memory_space<vmem>>, %arg3: memref<45x4xf32, #tpu.memory_space<vmem>>, %arg4: memref<1x4xf32, #tpu.memory_space<vmem>>, %arg5: memref<3x3x4x4xf32, #tpu.memory_space<vmem>>, %arg6: memref<45x4xf32, #tpu.memory_space<vmem>>, %arg7: memref<1x4xf32, #tpu.memory_space<vmem>>, %arg8: memref<45x4xf32, #tpu.memory_space<vmem>>, %arg9: memref<1x4xf32, #tpu.memory_space<vmem>>, %arg10: memref<3x3x4x8xf32, #tpu.memory_space<vmem>>, %arg11: memref<1x8xf32, #tpu.memory_space<vmem>>, %arg12: memref<1x16x16x8xf32, #tpu.memory_space<vmem>>, %arg13: memref<18x18x4xf32, #tpu.memory_space<vmem>>) attributes {dimension_semantics = [#tpu.dimension_semantics<parallel>], iteration_bounds = array<i64: 2>, scalar_prefetch = 0 : i64, scratch_operands = 1 : i64, tpu.core_type = #tpu.core_type<tc>, window_params = [{transform_indices = @transform_0, window_bounds = array<i64: 1, 256, 45>}, {transform_indices = @transform_1, window_bounds = array<i64: 1, 256, 4>}, {pipeline_mode = #tpu.pipeline_mode<synchronous>, transform_indices = @transform_2, window_bounds = array<i64: 45, 4>}, {pipeline_mode = #tpu.pipeline_mode<synchronous>, transform_indices = @transform_3, window_bounds = array<i64: 1, 4>}, {pipeline_mode = #tpu.pipeline_mode<synchronous>, transform_indices = @transform_4, window_bounds = array<i64: 3, 3, 4, 4>}, {pipeline_mode = #tpu.pipeline_mode<synchronous>, transform_indices = @transform_5, window_bounds = array<i64: 45, 4>}, {pipeline_mode = #tpu.pipeline_mode<synchronous>, transform_indices = @transform_6, window_bounds = array<i64: 1, 4>}, {pipeline_mode = #tpu.pipeline_mode<synchronous>, transform_indices = @transform_7, window_bounds = array<i64: 45, 4>}, {pipeline_mode = #tpu.pipeline_mode<synchronous>, transform_indices = @transform_8, window_bounds = array<i64: 1, 4>}, {pipeline_mode = #tpu.pipeline_mode<synchronous>, transform_indices = @transform_9, window_bounds = array<i64: 3, 3, 4, 8>}, {pipeline_mode = #tpu.pipeline_mode<synchronous>, transform_indices = @transform_10, window_bounds = array<i64: 1, 8>}, {transform_indices = @transform_11, window_bounds = array<i64: 1, 16, 16, 8>}]} {
    %c0 = arith.constant 0 : index
    %c0_0 = arith.constant 0 : index
    %c0_1 = arith.constant 0 : index
    %0 = vector.load %arg1[%c0, %c0_0, %c0_1] : memref<1x256x45xf32, #tpu.memory_space<vmem>>, vector<1x256x45xf32>
    %1 = vector.shape_cast %0 : vector<1x256x45xf32> to vector<256x45xf32>
    %c0_2 = arith.constant 0 : index
    %c0_3 = arith.constant 0 : index
    %c0_4 = arith.constant 0 : index
    %2 = vector.load %arg2[%c0_2, %c0_3, %c0_4] : memref<1x256x4xf32, #tpu.memory_space<vmem>>, vector<1x256x4xf32>
    %3 = vector.shape_cast %2 : vector<1x256x4xf32> to vector<256x4xf32>
    %c0_5 = arith.constant 0 : index
    %c0_6 = arith.constant 0 : index
    %4 = vector.load %arg3[%c0_5, %c0_6] : memref<45x4xf32, #tpu.memory_space<vmem>>, vector<45x4xf32>
    %cst = arith.constant dense<0.000000e+00> : vector<256x4xf32>
    %5 = tpu.matmul %1, %4, %cst {dimension_numbers = #tpu.dot_dimension_numbers<[1], [0], [0], [1], [0, 0, 1, 1], [], []>} : vector<256x45xf32>, vector<45x4xf32>, vector<256x4xf32> -> vector<256x4xf32>
    %c0_7 = arith.constant 0 : index
    %c0_8 = arith.constant 0 : index
    %6 = vector.load %arg4[%c0_7, %c0_8] : memref<1x4xf32, #tpu.memory_space<vmem>>, vector<1x4xf32>
    %7 = vector.broadcast %6 : vector<1x4xf32> to vector<256x4xf32>
    %8 = arith.addf %5, %7 : vector<256x4xf32>
    %9 = arith.negf %8 : vector<256x4xf32>
    %10 = math.exp %9 : vector<256x4xf32>
    %cst_9 = arith.constant 1.000000e+00 : f32
    %11 = vector.broadcast %cst_9 : f32 to vector<256x4xf32>
    %12 = arith.addf %11, %10 : vector<256x4xf32>
    %13 = arith.divf %11, %12 : vector<256x4xf32>
    %c0_10 = arith.constant 0 : index
    %c0_11 = arith.constant 0 : index
    %14 = vector.load %arg8[%c0_10, %c0_11] : memref<45x4xf32, #tpu.memory_space<vmem>>, vector<45x4xf32>
    %cst_12 = arith.constant dense<0.000000e+00> : vector<256x4xf32>
    %15 = tpu.matmul %1, %14, %cst_12 {dimension_numbers = #tpu.dot_dimension_numbers<[1], [0], [0], [1], [0, 0, 1, 1], [], []>} : vector<256x45xf32>, vector<45x4xf32>, vector<256x4xf32> -> vector<256x4xf32>
    %c0_13 = arith.constant 0 : index
    %c0_14 = arith.constant 0 : index
    %16 = vector.load %arg9[%c0_13, %c0_14] : memref<1x4xf32, #tpu.memory_space<vmem>>, vector<1x4xf32>
    %17 = vector.broadcast %16 : vector<1x4xf32> to vector<256x4xf32>
    %18 = arith.addf %15, %17 : vector<256x4xf32>
    %19 = arith.negf %18 : vector<256x4xf32>
    %20 = math.exp %19 : vector<256x4xf32>
    %cst_15 = arith.constant 1.000000e+00 : f32
    %21 = vector.broadcast %cst_15 : f32 to vector<256x4xf32>
    %22 = arith.addf %21, %20 : vector<256x4xf32>
    %23 = arith.divf %21, %22 : vector<256x4xf32>
    %c0_16 = arith.constant 0 : index
    %c0_17 = arith.constant 0 : index
    %24 = vector.load %arg6[%c0_16, %c0_17] : memref<45x4xf32, #tpu.memory_space<vmem>>, vector<45x4xf32>
    %cst_18 = arith.constant dense<0.000000e+00> : vector<256x4xf32>
    %25 = tpu.matmul %1, %24, %cst_18 {dimension_numbers = #tpu.dot_dimension_numbers<[1], [0], [0], [1], [0, 0, 1, 1], [], []>} : vector<256x45xf32>, vector<45x4xf32>, vector<256x4xf32> -> vector<256x4xf32>
    %c0_19 = arith.constant 0 : index
    %c0_20 = arith.constant 0 : index
    %26 = vector.load %arg7[%c0_19, %c0_20] : memref<1x4xf32, #tpu.memory_space<vmem>>, vector<1x4xf32>
    %27 = vector.broadcast %26 : vector<1x4xf32> to vector<256x4xf32>
    %28 = arith.addf %25, %27 : vector<256x4xf32>
    %cst_21 = arith.constant 0.000000e+00 : f32
    %29 = vector.broadcast %cst_21 : f32 to vector<18x18x4xf32>
    %c0_22 = arith.constant 0 : index
    %c0_23 = arith.constant 0 : index
    %c0_24 = arith.constant 0 : index
    %30 = vector.load %arg13[%c0_22, %c0_23, %c0_24] : memref<18x18x4xf32, #tpu.memory_space<vmem>>, vector<18x18x4xf32>
    tpu.vector_store %arg13[%c0_22, %c0_23, %c0_24], %29 {strides = array<i32>} : memref<18x18x4xf32, #tpu.memory_space<vmem>>, vector<18x18x4xf32>,
    %31 = arith.mulf %13, %3 : vector<256x4xf32>
    %32 = vector.shape_cast %31 : vector<256x4xf32> to vector<16x16x4xf32>
    %c1 = arith.constant 1 : index
    %c1_25 = arith.constant 1 : index
    %c0_26 = arith.constant 0 : index
    %33 = vector.load %arg13[%c1, %c1_25, %c0_26] : memref<18x18x4xf32, #tpu.memory_space<vmem>>, vector<16x16x4xf32>
    tpu.vector_store %arg13[%c1, %c1_25, %c0_26], %32 {strides = array<i32>} : memref<18x18x4xf32, #tpu.memory_space<vmem>>, vector<16x16x4xf32>,
    %cst_27 = arith.constant 0.000000e+00 : f32
    %34 = vector.broadcast %cst_27 : f32 to vector<256x4xf32>
    %c0_28 = arith.constant 0 : index
    %c0_29 = arith.constant 0 : index
    %c0_30 = arith.constant 0 : index
    %35 = vector.load %arg13[%c0_28, %c0_29, %c0_30] : memref<18x18x4xf32, #tpu.memory_space<vmem>>, vector<16x16x4xf32>
    %36 = vector.shape_cast %35 : vector<16x16x4xf32> to vector<256x4xf32>
    %c0_31 = arith.constant 0 : index
    %c0_32 = arith.constant 0 : index
    %c0_33 = arith.constant 0 : index
    %c0_34 = arith.constant 0 : index
    %37 = vector.load %arg5[%c0_31, %c0_32, %c0_33, %c0_34] : memref<3x3x4x4xf32, #tpu.memory_space<vmem>>, vector<1x1x4x4xf32>
    %38 = vector.shape_cast %37 : vector<1x1x4x4xf32> to vector<4x4xf32>
    %cst_35 = arith.constant dense<0.000000e+00> : vector<256x4xf32>
    %39 = tpu.matmul %36, %38, %cst_35 {dimension_numbers = #tpu.dot_dimension_numbers<[1], [0], [0], [1], [0, 0, 1, 1], [], []>} : vector<256x4xf32>, vector<4x4xf32>, vector<256x4xf32> -> vector<256x4xf32>
    %40 = arith.addf %34, %39 : vector<256x4xf32>
    %c0_36 = arith.constant 0 : index
    %c1_37 = arith.constant 1 : index
    %c0_38 = arith.constant 0 : index
    %41 = vector.load %arg13[%c0_36, %c1_37, %c0_38] : memref<18x18x4xf32, #tpu.memory_space<vmem>>, vector<16x16x4xf32>
    %42 = vector.shape_cast %41 : vector<16x16x4xf32> to vector<256x4xf32>
    %c0_39 = arith.constant 0 : index
    %c1_40 = arith.constant 1 : index
    %c0_41 = arith.constant 0 : index
    %c0_42 = arith.constant 0 : index
    %43 = vector.load %arg5[%c0_39, %c1_40, %c0_41, %c0_42] : memref<3x3x4x4xf32, #tpu.memory_space<vmem>>, vector<1x1x4x4xf32>
    %44 = vector.shape_cast %43 : vector<1x1x4x4xf32> to vector<4x4xf32>
    %cst_43 = arith.constant dense<0.000000e+00> : vector<256x4xf32>
    %45 = tpu.matmul %42, %44, %cst_43 {dimension_numbers = #tpu.dot_dimension_numbers<[1], [0], [0], [1], [0, 0, 1, 1], [], []>} : vector<256x4xf32>, vector<4x4xf32>, vector<256x4xf32> -> vector<256x4xf32>
    %46 = arith.addf %40, %45 : vector<256x4xf32>
    %c0_44 = arith.constant 0 : index
    %c2 = arith.constant 2 : index
    %c0_45 = arith.constant 0 : index
    %47 = vector.load %arg13[%c0_44, %c2, %c0_45] : memref<18x18x4xf32, #tpu.memory_space<vmem>>, vector<16x16x4xf32>
    %48 = vector.shape_cast %47 : vector<16x16x4xf32> to vector<256x4xf32>
    %c0_46 = arith.constant 0 : index
    %c2_47 = arith.constant 2 : index
    %c0_48 = arith.constant 0 : index
    %c0_49 = arith.constant 0 : index
    %49 = vector.load %arg5[%c0_46, %c2_47, %c0_48, %c0_49] : memref<3x3x4x4xf32, #tpu.memory_space<vmem>>, vector<1x1x4x4xf32>
    %50 = vector.shape_cast %49 : vector<1x1x4x4xf32> to vector<4x4xf32>
    %cst_50 = arith.constant dense<0.000000e+00> : vector<256x4xf32>
    %51 = tpu.matmul %48, %50, %cst_50 {dimension_numbers = #tpu.dot_dimension_numbers<[1], [0], [0], [1], [0, 0, 1, 1], [], []>} : vector<256x4xf32>, vector<4x4xf32>, vector<256x4xf32> -> vector<256x4xf32>
    %52 = arith.addf %46, %51 : vector<256x4xf32>
    %c1_51 = arith.constant 1 : index
    %c0_52 = arith.constant 0 : index
    %c0_53 = arith.constant 0 : index
    %53 = vector.load %arg13[%c1_51, %c0_52, %c0_53] : memref<18x18x4xf32, #tpu.memory_space<vmem>>, vector<16x16x4xf32>
    %54 = vector.shape_cast %53 : vector<16x16x4xf32> to vector<256x4xf32>
    %c1_54 = arith.constant 1 : index
    %c0_55 = arith.constant 0 : index
    %c0_56 = arith.constant 0 : index
    %c0_57 = arith.constant 0 : index
    %55 = vector.load %arg5[%c1_54, %c0_55, %c0_56, %c0_57] : memref<3x3x4x4xf32, #tpu.memory_space<vmem>>, vector<1x1x4x4xf32>
    %56 = vector.shape_cast %55 : vector<1x1x4x4xf32> to vector<4x4xf32>
    %cst_58 = arith.constant dense<0.000000e+00> : vector<256x4xf32>
    %57 = tpu.matmul %54, %56, %cst_58 {dimension_numbers = #tpu.dot_dimension_numbers<[1], [0], [0], [1], [0, 0, 1, 1], [], []>} : vector<256x4xf32>, vector<4x4xf32>, vector<256x4xf32> -> vector<256x4xf32>
    %58 = arith.addf %52, %57 : vector<256x4xf32>
    %c1_59 = arith.constant 1 : index
    %c1_60 = arith.constant 1 : index
    %c0_61 = arith.constant 0 : index
    %59 = vector.load %arg13[%c1_59, %c1_60, %c0_61] : memref<18x18x4xf32, #tpu.memory_space<vmem>>, vector<16x16x4xf32>
    %60 = vector.shape_cast %59 : vector<16x16x4xf32> to vector<256x4xf32>
    %c1_62 = arith.constant 1 : index
    %c1_63 = arith.constant 1 : index
    %c0_64 = arith.constant 0 : index
    %c0_65 = arith.constant 0 : index
    %61 = vector.load %arg5[%c1_62, %c1_63, %c0_64, %c0_65] : memref<3x3x4x4xf32, #tpu.memory_space<vmem>>, vector<1x1x4x4xf32>
    %62 = vector.shape_cast %61 : vector<1x1x4x4xf32> to vector<4x4xf32>
    %cst_66 = arith.constant dense<0.000000e+00> : vector<256x4xf32>
    %63 = tpu.matmul %60, %62, %cst_66 {dimension_numbers = #tpu.dot_dimension_numbers<[1], [0], [0], [1], [0, 0, 1, 1], [], []>} : vector<256x4xf32>, vector<4x4xf32>, vector<256x4xf32> -> vector<256x4xf32>
    %64 = arith.addf %58, %63 : vector<256x4xf32>
    %c1_67 = arith.constant 1 : index
    %c2_68 = arith.constant 2 : index
    %c0_69 = arith.constant 0 : index
    %65 = vector.load %arg13[%c1_67, %c2_68, %c0_69] : memref<18x18x4xf32, #tpu.memory_space<vmem>>, vector<16x16x4xf32>
    %66 = vector.shape_cast %65 : vector<16x16x4xf32> to vector<256x4xf32>
    %c1_70 = arith.constant 1 : index
    %c2_71 = arith.constant 2 : index
    %c0_72 = arith.constant 0 : index
    %c0_73 = arith.constant 0 : index
    %67 = vector.load %arg5[%c1_70, %c2_71, %c0_72, %c0_73] : memref<3x3x4x4xf32, #tpu.memory_space<vmem>>, vector<1x1x4x4xf32>
    %68 = vector.shape_cast %67 : vector<1x1x4x4xf32> to vector<4x4xf32>
    %cst_74 = arith.constant dense<0.000000e+00> : vector<256x4xf32>
    %69 = tpu.matmul %66, %68, %cst_74 {dimension_numbers = #tpu.dot_dimension_numbers<[1], [0], [0], [1], [0, 0, 1, 1], [], []>} : vector<256x4xf32>, vector<4x4xf32>, vector<256x4xf32> -> vector<256x4xf32>
    %70 = arith.addf %64, %69 : vector<256x4xf32>
    %c2_75 = arith.constant 2 : index
    %c0_76 = arith.constant 0 : index
    %c0_77 = arith.constant 0 : index
    %71 = vector.load %arg13[%c2_75, %c0_76, %c0_77] : memref<18x18x4xf32, #tpu.memory_space<vmem>>, vector<16x16x4xf32>
    %72 = vector.shape_cast %71 : vector<16x16x4xf32> to vector<256x4xf32>
    %c2_78 = arith.constant 2 : index
    %c0_79 = arith.constant 0 : index
    %c0_80 = arith.constant 0 : index
    %c0_81 = arith.constant 0 : index
    %73 = vector.load %arg5[%c2_78, %c0_79, %c0_80, %c0_81] : memref<3x3x4x4xf32, #tpu.memory_space<vmem>>, vector<1x1x4x4xf32>
    %74 = vector.shape_cast %73 : vector<1x1x4x4xf32> to vector<4x4xf32>
    %cst_82 = arith.constant dense<0.000000e+00> : vector<256x4xf32>
    %75 = tpu.matmul %72, %74, %cst_82 {dimension_numbers = #tpu.dot_dimension_numbers<[1], [0], [0], [1], [0, 0, 1, 1], [], []>} : vector<256x4xf32>, vector<4x4xf32>, vector<256x4xf32> -> vector<256x4xf32>
    %76 = arith.addf %70, %75 : vector<256x4xf32>
    %c2_83 = arith.constant 2 : index
    %c1_84 = arith.constant 1 : index
    %c0_85 = arith.constant 0 : index
    %77 = vector.load %arg13[%c2_83, %c1_84, %c0_85] : memref<18x18x4xf32, #tpu.memory_space<vmem>>, vector<16x16x4xf32>
    %78 = vector.shape_cast %77 : vector<16x16x4xf32> to vector<256x4xf32>
    %c2_86 = arith.constant 2 : index
    %c1_87 = arith.constant 1 : index
    %c0_88 = arith.constant 0 : index
    %c0_89 = arith.constant 0 : index
    %79 = vector.load %arg5[%c2_86, %c1_87, %c0_88, %c0_89] : memref<3x3x4x4xf32, #tpu.memory_space<vmem>>, vector<1x1x4x4xf32>
    %80 = vector.shape_cast %79 : vector<1x1x4x4xf32> to vector<4x4xf32>
    %cst_90 = arith.constant dense<0.000000e+00> : vector<256x4xf32>
    %81 = tpu.matmul %78, %80, %cst_90 {dimension_numbers = #tpu.dot_dimension_numbers<[1], [0], [0], [1], [0, 0, 1, 1], [], []>} : vector<256x4xf32>, vector<4x4xf32>, vector<256x4xf32> -> vector<256x4xf32>
    %82 = arith.addf %76, %81 : vector<256x4xf32>
    %c2_91 = arith.constant 2 : index
    %c2_92 = arith.constant 2 : index
    %c0_93 = arith.constant 0 : index
    %83 = vector.load %arg13[%c2_91, %c2_92, %c0_93] : memref<18x18x4xf32, #tpu.memory_space<vmem>>, vector<16x16x4xf32>
    %84 = vector.shape_cast %83 : vector<16x16x4xf32> to vector<256x4xf32>
    %c2_94 = arith.constant 2 : index
    %c2_95 = arith.constant 2 : index
    %c0_96 = arith.constant 0 : index
    %c0_97 = arith.constant 0 : index
    %85 = vector.load %arg5[%c2_94, %c2_95, %c0_96, %c0_97] : memref<3x3x4x4xf32, #tpu.memory_space<vmem>>, vector<1x1x4x4xf32>
    %86 = vector.shape_cast %85 : vector<1x1x4x4xf32> to vector<4x4xf32>
    %cst_98 = arith.constant dense<0.000000e+00> : vector<256x4xf32>
    %87 = tpu.matmul %84, %86, %cst_98 {dimension_numbers = #tpu.dot_dimension_numbers<[1], [0], [0], [1], [0, 0, 1, 1], [], []>} : vector<256x4xf32>, vector<4x4xf32>, vector<256x4xf32> -> vector<256x4xf32>
    %88 = arith.addf %82, %87 : vector<256x4xf32>
    %89 = arith.addf %28, %88 : vector<256x4xf32>
    %cst_99 = arith.constant 0.000000e+00 : f32
    %90 = vector.broadcast %cst_99 : f32 to vector<256x4xf32>
    %91 = arith.maximumf %89, %90 : vector<256x4xf32>
    %cst_100 = arith.constant 1.000000e+00 : f32
    %92 = vector.broadcast %cst_100 : f32 to vector<256x4xf32>
    %93 = arith.subf %92, %23 : vector<256x4xf32>
    %94 = arith.mulf %93, %91 : vector<256x4xf32>
    %95 = arith.mulf %23, %3 : vector<256x4xf32>
    %96 = arith.addf %94, %95 : vector<256x4xf32>
    %97 = vector.shape_cast %96 : vector<256x4xf32> to vector<16x16x4xf32>
    %c1_101 = arith.constant 1 : index
    %c1_102 = arith.constant 1 : index
    %c0_103 = arith.constant 0 : index
    %98 = vector.load %arg13[%c1_101, %c1_102, %c0_103] : memref<18x18x4xf32, #tpu.memory_space<vmem>>, vector<16x16x4xf32>
    tpu.vector_store %arg13[%c1_101, %c1_102, %c0_103], %97 {strides = array<i32>} : memref<18x18x4xf32, #tpu.memory_space<vmem>>, vector<16x16x4xf32>,
    %cst_104 = arith.constant 0.000000e+00 : f32
    %99 = vector.broadcast %cst_104 : f32 to vector<256x8xf32>
    %c0_105 = arith.constant 0 : index
    %c0_106 = arith.constant 0 : index
    %c0_107 = arith.constant 0 : index
    %100 = vector.load %arg13[%c0_105, %c0_106, %c0_107] : memref<18x18x4xf32, #tpu.memory_space<vmem>>, vector<16x16x4xf32>
    %101 = vector.shape_cast %100 : vector<16x16x4xf32> to vector<256x4xf32>
    %c0_108 = arith.constant 0 : index
    %c0_109 = arith.constant 0 : index
    %c0_110 = arith.constant 0 : index
    %c0_111 = arith.constant 0 : index
    %102 = vector.load %arg10[%c0_108, %c0_109, %c0_110, %c0_111] : memref<3x3x4x8xf32, #tpu.memory_space<vmem>>, vector<1x1x4x8xf32>
    %103 = vector.shape_cast %102 : vector<1x1x4x8xf32> to vector<4x8xf32>
    %cst_112 = arith.constant dense<0.000000e+00> : vector<256x8xf32>
    %104 = tpu.matmul %101, %103, %cst_112 {dimension_numbers = #tpu.dot_dimension_numbers<[1], [0], [0], [1], [0, 0, 1, 1], [], []>} : vector<256x4xf32>, vector<4x8xf32>, vector<256x8xf32> -> vector<256x8xf32>
    %105 = arith.addf %99, %104 : vector<256x8xf32>
    %c0_113 = arith.constant 0 : index
    %c1_114 = arith.constant 1 : index
    %c0_115 = arith.constant 0 : index
    %106 = vector.load %arg13[%c0_113, %c1_114, %c0_115] : memref<18x18x4xf32, #tpu.memory_space<vmem>>, vector<16x16x4xf32>
    %107 = vector.shape_cast %106 : vector<16x16x4xf32> to vector<256x4xf32>
    %c0_116 = arith.constant 0 : index
    %c1_117 = arith.constant 1 : index
    %c0_118 = arith.constant 0 : index
    %c0_119 = arith.constant 0 : index
    %108 = vector.load %arg10[%c0_116, %c1_117, %c0_118, %c0_119] : memref<3x3x4x8xf32, #tpu.memory_space<vmem>>, vector<1x1x4x8xf32>
    %109 = vector.shape_cast %108 : vector<1x1x4x8xf32> to vector<4x8xf32>
    %cst_120 = arith.constant dense<0.000000e+00> : vector<256x8xf32>
    %110 = tpu.matmul %107, %109, %cst_120 {dimension_numbers = #tpu.dot_dimension_numbers<[1], [0], [0], [1], [0, 0, 1, 1], [], []>} : vector<256x4xf32>, vector<4x8xf32>, vector<256x8xf32> -> vector<256x8xf32>
    %111 = arith.addf %105, %110 : vector<256x8xf32>
    %c0_121 = arith.constant 0 : index
    %c2_122 = arith.constant 2 : index
    %c0_123 = arith.constant 0 : index
    %112 = vector.load %arg13[%c0_121, %c2_122, %c0_123] : memref<18x18x4xf32, #tpu.memory_space<vmem>>, vector<16x16x4xf32>
    %113 = vector.shape_cast %112 : vector<16x16x4xf32> to vector<256x4xf32>
    %c0_124 = arith.constant 0 : index
    %c2_125 = arith.constant 2 : index
    %c0_126 = arith.constant 0 : index
    %c0_127 = arith.constant 0 : index
    %114 = vector.load %arg10[%c0_124, %c2_125, %c0_126, %c0_127] : memref<3x3x4x8xf32, #tpu.memory_space<vmem>>, vector<1x1x4x8xf32>
    %115 = vector.shape_cast %114 : vector<1x1x4x8xf32> to vector<4x8xf32>
    %cst_128 = arith.constant dense<0.000000e+00> : vector<256x8xf32>
    %116 = tpu.matmul %113, %115, %cst_128 {dimension_numbers = #tpu.dot_dimension_numbers<[1], [0], [0], [1], [0, 0, 1, 1], [], []>} : vector<256x4xf32>, vector<4x8xf32>, vector<256x8xf32> -> vector<256x8xf32>
    %117 = arith.addf %111, %116 : vector<256x8xf32>
    %c1_129 = arith.constant 1 : index
    %c0_130 = arith.constant 0 : index
    %c0_131 = arith.constant 0 : index
    %118 = vector.load %arg13[%c1_129, %c0_130, %c0_131] : memref<18x18x4xf32, #tpu.memory_space<vmem>>, vector<16x16x4xf32>
    %119 = vector.shape_cast %118 : vector<16x16x4xf32> to vector<256x4xf32>
    %c1_132 = arith.constant 1 : index
    %c0_133 = arith.constant 0 : index
    %c0_134 = arith.constant 0 : index
    %c0_135 = arith.constant 0 : index
    %120 = vector.load %arg10[%c1_132, %c0_133, %c0_134, %c0_135] : memref<3x3x4x8xf32, #tpu.memory_space<vmem>>, vector<1x1x4x8xf32>
    %121 = vector.shape_cast %120 : vector<1x1x4x8xf32> to vector<4x8xf32>
    %cst_136 = arith.constant dense<0.000000e+00> : vector<256x8xf32>
    %122 = tpu.matmul %119, %121, %cst_136 {dimension_numbers = #tpu.dot_dimension_numbers<[1], [0], [0], [1], [0, 0, 1, 1], [], []>} : vector<256x4xf32>, vector<4x8xf32>, vector<256x8xf32> -> vector<256x8xf32>
    %123 = arith.addf %117, %122 : vector<256x8xf32>
    %c1_137 = arith.constant 1 : index
    %c1_138 = arith.constant 1 : index
    %c0_139 = arith.constant 0 : index
    %124 = vector.load %arg13[%c1_137, %c1_138, %c0_139] : memref<18x18x4xf32, #tpu.memory_space<vmem>>, vector<16x16x4xf32>
    %125 = vector.shape_cast %124 : vector<16x16x4xf32> to vector<256x4xf32>
    %c1_140 = arith.constant 1 : index
    %c1_141 = arith.constant 1 : index
    %c0_142 = arith.constant 0 : index
    %c0_143 = arith.constant 0 : index
    %126 = vector.load %arg10[%c1_140, %c1_141, %c0_142, %c0_143] : memref<3x3x4x8xf32, #tpu.memory_space<vmem>>, vector<1x1x4x8xf32>
    %127 = vector.shape_cast %126 : vector<1x1x4x8xf32> to vector<4x8xf32>
    %cst_144 = arith.constant dense<0.000000e+00> : vector<256x8xf32>
    %128 = tpu.matmul %125, %127, %cst_144 {dimension_numbers = #tpu.dot_dimension_numbers<[1], [0], [0], [1], [0, 0, 1, 1], [], []>} : vector<256x4xf32>, vector<4x8xf32>, vector<256x8xf32> -> vector<256x8xf32>
    %129 = arith.addf %123, %128 : vector<256x8xf32>
    %c1_145 = arith.constant 1 : index
    %c2_146 = arith.constant 2 : index
    %c0_147 = arith.constant 0 : index
    %130 = vector.load %arg13[%c1_145, %c2_146, %c0_147] : memref<18x18x4xf32, #tpu.memory_space<vmem>>, vector<16x16x4xf32>
    %131 = vector.shape_cast %130 : vector<16x16x4xf32> to vector<256x4xf32>
    %c1_148 = arith.constant 1 : index
    %c2_149 = arith.constant 2 : index
    %c0_150 = arith.constant 0 : index
    %c0_151 = arith.constant 0 : index
    %132 = vector.load %arg10[%c1_148, %c2_149, %c0_150, %c0_151] : memref<3x3x4x8xf32, #tpu.memory_space<vmem>>, vector<1x1x4x8xf32>
    %133 = vector.shape_cast %132 : vector<1x1x4x8xf32> to vector<4x8xf32>
    %cst_152 = arith.constant dense<0.000000e+00> : vector<256x8xf32>
    %134 = tpu.matmul %131, %133, %cst_152 {dimension_numbers = #tpu.dot_dimension_numbers<[1], [0], [0], [1], [0, 0, 1, 1], [], []>} : vector<256x4xf32>, vector<4x8xf32>, vector<256x8xf32> -> vector<256x8xf32>
    %135 = arith.addf %129, %134 : vector<256x8xf32>
    %c2_153 = arith.constant 2 : index
    %c0_154 = arith.constant 0 : index
    %c0_155 = arith.constant 0 : index
    %136 = vector.load %arg13[%c2_153, %c0_154, %c0_155] : memref<18x18x4xf32, #tpu.memory_space<vmem>>, vector<16x16x4xf32>
    %137 = vector.shape_cast %136 : vector<16x16x4xf32> to vector<256x4xf32>
    %c2_156 = arith.constant 2 : index
    %c0_157 = arith.constant 0 : index
    %c0_158 = arith.constant 0 : index
    %c0_159 = arith.constant 0 : index
    %138 = vector.load %arg10[%c2_156, %c0_157, %c0_158, %c0_159] : memref<3x3x4x8xf32, #tpu.memory_space<vmem>>, vector<1x1x4x8xf32>
    %139 = vector.shape_cast %138 : vector<1x1x4x8xf32> to vector<4x8xf32>
    %cst_160 = arith.constant dense<0.000000e+00> : vector<256x8xf32>
    %140 = tpu.matmul %137, %139, %cst_160 {dimension_numbers = #tpu.dot_dimension_numbers<[1], [0], [0], [1], [0, 0, 1, 1], [], []>} : vector<256x4xf32>, vector<4x8xf32>, vector<256x8xf32> -> vector<256x8xf32>
    %141 = arith.addf %135, %140 : vector<256x8xf32>
    %c2_161 = arith.constant 2 : index
    %c1_162 = arith.constant 1 : index
    %c0_163 = arith.constant 0 : index
    %142 = vector.load %arg13[%c2_161, %c1_162, %c0_163] : memref<18x18x4xf32, #tpu.memory_space<vmem>>, vector<16x16x4xf32>
    %143 = vector.shape_cast %142 : vector<16x16x4xf32> to vector<256x4xf32>
    %c2_164 = arith.constant 2 : index
    %c1_165 = arith.constant 1 : index
    %c0_166 = arith.constant 0 : index
    %c0_167 = arith.constant 0 : index
    %144 = vector.load %arg10[%c2_164, %c1_165, %c0_166, %c0_167] : memref<3x3x4x8xf32, #tpu.memory_space<vmem>>, vector<1x1x4x8xf32>
    %145 = vector.shape_cast %144 : vector<1x1x4x8xf32> to vector<4x8xf32>
    %cst_168 = arith.constant dense<0.000000e+00> : vector<256x8xf32>
    %146 = tpu.matmul %143, %145, %cst_168 {dimension_numbers = #tpu.dot_dimension_numbers<[1], [0], [0], [1], [0, 0, 1, 1], [], []>} : vector<256x4xf32>, vector<4x8xf32>, vector<256x8xf32> -> vector<256x8xf32>
    %147 = arith.addf %141, %146 : vector<256x8xf32>
    %c2_169 = arith.constant 2 : index
    %c2_170 = arith.constant 2 : index
    %c0_171 = arith.constant 0 : index
    %148 = vector.load %arg13[%c2_169, %c2_170, %c0_171] : memref<18x18x4xf32, #tpu.memory_space<vmem>>, vector<16x16x4xf32>
    %149 = vector.shape_cast %148 : vector<16x16x4xf32> to vector<256x4xf32>
    %c2_172 = arith.constant 2 : index
    %c2_173 = arith.constant 2 : index
    %c0_174 = arith.constant 0 : index
    %c0_175 = arith.constant 0 : index
    %150 = vector.load %arg10[%c2_172, %c2_173, %c0_174, %c0_175] : memref<3x3x4x8xf32, #tpu.memory_space<vmem>>, vector<1x1x4x8xf32>
    %151 = vector.shape_cast %150 : vector<1x1x4x8xf32> to vector<4x8xf32>
    %cst_176 = arith.constant dense<0.000000e+00> : vector<256x8xf32>
    %152 = tpu.matmul %149, %151, %cst_176 {dimension_numbers = #tpu.dot_dimension_numbers<[1], [0], [0], [1], [0, 0, 1, 1], [], []>} : vector<256x4xf32>, vector<4x8xf32>, vector<256x8xf32> -> vector<256x8xf32>
    %153 = arith.addf %147, %152 : vector<256x8xf32>
    %c0_177 = arith.constant 0 : index
    %c0_178 = arith.constant 0 : index
    %154 = vector.load %arg11[%c0_177, %c0_178] : memref<1x8xf32, #tpu.memory_space<vmem>>, vector<1x8xf32>
    %155 = vector.broadcast %154 : vector<1x8xf32> to vector<256x8xf32>
    %156 = arith.addf %153, %155 : vector<256x8xf32>
    %157 = arith.negf %156 : vector<256x8xf32>
    %158 = math.exp %157 : vector<256x8xf32>
    %cst_179 = arith.constant 1.000000e+00 : f32
    %159 = vector.broadcast %cst_179 : f32 to vector<256x8xf32>
    %160 = arith.addf %159, %158 : vector<256x8xf32>
    %161 = arith.divf %159, %160 : vector<256x8xf32>
    %162 = vector.shape_cast %161 : vector<256x8xf32> to vector<16x16x8xf32>
    %c0_180 = arith.constant 0 : index
    %c0_181 = arith.constant 0 : index
    %c0_182 = arith.constant 0 : index
    %c0_183 = arith.constant 0 : index
    %163 = vector.load %arg12[%c0_180, %c0_181, %c0_182, %c0_183] : memref<1x16x16x8xf32, #tpu.memory_space<vmem>>, vector<1x16x16x8xf32>
    %164 = vector.shape_cast %163 : vector<1x16x16x8xf32> to vector<16x16x8xf32>
    %165 = vector.shape_cast %162 : vector<16x16x8xf32> to vector<1x16x16x8xf32>
    tpu.vector_store %arg12[%c0_180, %c0_181, %c0_182, %c0_183], %165 {strides = array<i32>} : memref<1x16x16x8xf32, #tpu.memory_space<vmem>>, vector<1x16x16x8xf32>,
    return
  }
  func.func @transform_0(%arg0: i32) -> (i32, i32, i32) {
    %c0_i32 = arith.constant 0 : i32
    %c0_i32_0 = arith.constant 0 : i32
    %c0_i32_1 = arith.constant 0 : i32
    return %arg0, %c0_i32, %c0_i32_0 : i32, i32, i32
  }
  func.func @transform_1(%arg0: i32) -> (i32, i32, i32) {
    %c0_i32 = arith.constant 0 : i32
    %c0_i32_0 = arith.constant 0 : i32
    %c0_i32_1 = arith.constant 0 : i32
    return %arg0, %c0_i32, %c0_i32_0 : i32, i32, i32
  }
  func.func @transform_2(%arg0: i32) -> (i32, i32) {
    %c0_i32 = arith.constant 0 : i32
    %c0_i32_0 = arith.constant 0 : i32
    %c0_i32_1 = arith.constant 0 : i32
    return %c0_i32, %c0_i32_0 : i32, i32
  }
  func.func @transform_3(%arg0: i32) -> (i32, i32) {
    %c0_i32 = arith.constant 0 : i32
    %c0_i32_0 = arith.constant 0 : i32
    %c0_i32_1 = arith.constant 0 : i32
    return %c0_i32, %c0_i32_0 : i32, i32
  }
  func.func @transform_4(%arg0: i32) -> (i32, i32, i32, i32) {
    %c0_i32 = arith.constant 0 : i32
    %c0_i32_0 = arith.constant 0 : i32
    %c0_i32_1 = arith.constant 0 : i32
    %c0_i32_2 = arith.constant 0 : i32
    %c0_i32_3 = arith.constant 0 : i32
    return %c0_i32, %c0_i32_0, %c0_i32_1, %c0_i32_2 : i32, i32, i32, i32
  }
  func.func @transform_5(%arg0: i32) -> (i32, i32) {
    %c0_i32 = arith.constant 0 : i32
    %c0_i32_0 = arith.constant 0 : i32
    %c0_i32_1 = arith.constant 0 : i32
    return %c0_i32, %c0_i32_0 : i32, i32
  }
  func.func @transform_6(%arg0: i32) -> (i32, i32) {
    %c0_i32 = arith.constant 0 : i32
    %c0_i32_0 = arith.constant 0 : i32
    %c0_i32_1 = arith.constant 0 : i32
    return %c0_i32, %c0_i32_0 : i32, i32
  }
  func.func @transform_7(%arg0: i32) -> (i32, i32) {
    %c0_i32 = arith.constant 0 : i32
    %c0_i32_0 = arith.constant 0 : i32
    %c0_i32_1 = arith.constant 0 : i32
    return %c0_i32, %c0_i32_0 : i32, i32
  }
  func.func @transform_8(%arg0: i32) -> (i32, i32) {
    %c0_i32 = arith.constant 0 : i32
    %c0_i32_0 = arith.constant 0 : i32
    %c0_i32_1 = arith.constant 0 : i32
    return %c0_i32, %c0_i32_0 : i32, i32
  }
  func.func @transform_9(%arg0: i32) -> (i32, i32, i32, i32) {
    %c0_i32 = arith.constant 0 : i32
    %c0_i32_0 = arith.constant 0 : i32
    %c0_i32_1 = arith.constant 0 : i32
    %c0_i32_2 = arith.constant 0 : i32
    %c0_i32_3 = arith.constant 0 : i32
    return %c0_i32, %c0_i32_0, %c0_i32_1, %c0_i32_2 : i32, i32, i32, i32
  }
  func.func @transform_10(%arg0: i32) -> (i32, i32) {
    %c0_i32 = arith.constant 0 : i32
    %c0_i32_0 = arith.constant 0 : i32
    %c0_i32_1 = arith.constant 0 : i32
    return %c0_i32, %c0_i32_0 : i32, i32
  }
  func.func @transform_11(%arg0: i32) -> (i32, i32, i32, i32) {
    %c0_i32 = arith.constant 0 : i32
    %c0_i32_0 = arith.constant 0 : i32
    %c0_i32_1 = arith.constant 0 : i32
    %c0_i32_2 = arith.constant 0 : i32
    return %arg0, %c0_i32, %c0_i32_0, %c0_i32_1 : i32, i32, i32, i32
  }
}

</mosaic_0001>

<llo_original>
// kernel: down_mru2_forward.1
$region0: #{down_mru2_forward.1}
  #allocation0 [shape = 'u32[]', space=smem, size = 0x4, offset = 0x4, fixed_abs, tag = 'smem constant byte address 0x4 - core index']
  #allocation1 [shape = 'u32[72,128]{1,0:T(1,128)}', space=vmem, size = 0x9000, scoped, tag = 'internal scratch']
  #allocation2 [shape = 'f32[18,18,4]{2,1,0:T(8,128)}', space=vmem, size = 0x36000, scoped, tag = 'scratch operand']
  %s0 = inlined_call_operand.vmem [shape: f32[2,256,45], index: 0, kind: input, shape index: {}]
  %s1 = inlined_call_operand.vmem [shape: f32[2,256,4], index: 1, kind: input, shape index: {}]
  %s2 = inlined_call_operand.vmem [shape: f32[45,4], index: 2, kind: input, shape index: {}]
  %s3 = inlined_call_operand.vmem [shape: f32[1,4], index: 3, kind: input, shape index: {}]
  %s4 = inlined_call_operand.vmem [shape: f32[3,3,4,4], index: 4, kind: input, shape index: {}]
  %s5 = inlined_call_operand.vmem [shape: f32[45,4], index: 5, kind: input, shape index: {}]
  %s6 = inlined_call_operand.vmem [shape: f32[1,4], index: 6, kind: input, shape index: {}]
  %s7 = inlined_call_operand.vmem [shape: f32[45,4], index: 7, kind: input, shape index: {}]
  %s8 = inlined_call_operand.vmem [shape: f32[1,4], index: 8, kind: input, shape index: {}]
  %s9 = inlined_call_operand.vmem [shape: f32[3,3,4,8], index: 9, kind: input, shape index: {}]
  %s10 = inlined_call_operand.vmem [shape: f32[1,8], index: 10, kind: input, shape index: {}]
  %s11 = inlined_call_operand.vmem [shape: f32[2,16,16,8], index: 11, kind: output, shape index: {}]
  %s12 = sld [smem:[#allocation0]]
  $region77: #{down_mru2_forward.1} parent=0
    _
  %s14 = ssub.s32 1, %s12
  %s15 = scalar_select 0, %s14, %s12
  loop: start=0, step=1, limit=4
  $region2: #{down_mru2_forward.1} parent=0 // loop_pre_header
    _
  $region3: #{down_mru2_forward.1} parent=0 // loop_header
    %s17 = sphi 0, %s21
    %p18 = scmp.ge.s32.totalorder %s17, 4
    %s27 = sphi 0, %s29
    %s30 = sphi 0, %s27
    %s31 = sphi 0, %s30
    %s47 = sphi 0, %s31
    %s53 = sphi 0, %s55
    %s56 = sphi 0, %s53
    %s57 = sphi 0, %s56
    %s73 = sphi 0, %s57
    %s77 = sphi 0, %s77
    %s79 = sphi 0, %s77
    %s80 = sphi 0, %s79
    %s94 = sphi 0, %s80
    %s98 = sphi 0, %s98
    %s100 = sphi 0, %s98
    %s101 = sphi 0, %s100
    %s115 = sphi 0, %s101
    %s119 = sphi 0, %s119
    %s121 = sphi 0, %s119
    %s122 = sphi 0, %s121
    %s136 = sphi 0, %s122
    %s140 = sphi 0, %s140
    %s142 = sphi 0, %s140
    %s143 = sphi 0, %s142
    %s157 = sphi 0, %s143
    %s161 = sphi 0, %s161
    %s163 = sphi 0, %s161
    %s164 = sphi 0, %s163
    %s178 = sphi 0, %s164
    %s182 = sphi 0, %s182
    %s184 = sphi 0, %s182
    %s185 = sphi 0, %s184
    %s199 = sphi 0, %s185
    %s203 = sphi 0, %s203
    %s205 = sphi 0, %s203
    %s206 = sphi 0, %s205
    %s220 = sphi 0, %s206
    %s224 = sphi 0, %s224
    %s226 = sphi 0, %s224
    %s227 = sphi 0, %s226
    %s241 = sphi 0, %s227
    %s245 = sphi 0, %s245
    %s247 = sphi 0, %s245
    %s248 = sphi 0, %s247
    %s262 = sphi 0, %s248
    %s268 = sphi 0, %s270
    %s271 = sphi 0, %s268
    %s272 = sphi 0, %s271
    %s288 = sphi 0, %s272
  $region4: #{down_mru2_forward.1} parent=0 // loop_header_branch
    %20 = sbr.rel (%p18) target = $region8
  $region5: #{down_mru2_forward.1} parent=0 // loop_body
    %s22 = ssub.s32 %s17, 1
    %s23 = ssub.s32 %s17, 2
    %s24 = sadd.s32 %s17, 1
    %s25 = ssub.s32 %s17, %s24
    %p26 = scmp.eq.s32.totalorder %s25, 0
    %s28 = sadd.s32 %s27, 1
    %s29 = scalar_select %p26, %s27, %s28
    %p32 = pneg %p26
    %p33 = scmp.eq.s32.totalorder %s17, 1
    %p34 = por %p32, %p33
    %p35 = scmp.ne.s32.totalorder %s27, %s30
    %p36 = scmp.eq.s32.totalorder %s17, 0
    %p37 = por %p35, %p36
    %p38 = scmp.ne.s32.totalorder %s27, %s30
    %p39 = scmp.eq.s32.totalorder %s22, 1
    %p40 = por %p38, %p39
    %p41 = scmp.ne.s32.totalorder %s30, %s31
    %p42 = scmp.eq.s32.totalorder %s22, 0
    %p43 = por %p41, %p42
    %p44 = scmp.ne.s32.totalorder %s30, %s31
    %p45 = scmp.eq.s32.totalorder %s23, 1
    %p46 = por %p44, %p45
    %p48 = scmp.ne.s32.totalorder %s31, %s47
    %p49 = scmp.eq.s32.totalorder %s23, 0
    %p50 = por %p48, %p49
    %s51 = ssub.s32 %s17, %s24
    %p52 = scmp.eq.s32.totalorder %s51, 0
    %s54 = sadd.s32 %s53, 1
    %s55 = scalar_select %p52, %s53, %s54
    %p58 = pneg %p52
    %p59 = scmp.eq.s32.totalorder %s17, 1
    %p60 = por %p58, %p59
    %p61 = scmp.ne.s32.totalorder %s53, %s56
    %p62 = scmp.eq.s32.totalorder %s17, 0
    %p63 = por %p61, %p62
    %p64 = scmp.ne.s32.totalorder %s53, %s56
    %p65 = scmp.eq.s32.totalorder %s22, 1
    %p66 = por %p64, %p65
    %p67 = scmp.ne.s32.totalorder %s56, %s57
    %p68 = scmp.eq.s32.totalorder %s22, 0
    %p69 = por %p67, %p68
    %p70 = scmp.ne.s32.totalorder %s56, %s57
    %p71 = scmp.eq.s32.totalorder %s23, 1
    %p72 = por %p70, %p71
    %p74 = scmp.ne.s32.totalorder %s57, %s73
    %p75 = scmp.eq.s32.totalorder %s23, 0
    %p76 = por %p74, %p75
    %s78 = sadd.s32 %s77, 1
    %p81 = scmp.eq.s32.totalorder %s17, 1
    %p82 = scmp.ne.s32.totalorder %s77, %s79
    %p83 = scmp.eq.s32.totalorder %s17, 0
    %p84 = por %p82, %p83
    %p85 = scmp.ne.s32.totalorder %s77, %s79
    %p86 = scmp.eq.s32.totalorder %s22, 1
    %p87 = por %p85, %p86
    %p88 = scmp.ne.s32.totalorder %s79, %s80
    %p89 = scmp.eq.s32.totalorder %s22, 0
    %p90 = por %p88, %p89
    %p91 = scmp.ne.s32.totalorder %s79, %s80
    %p92 = scmp.eq.s32.totalorder %s23, 1
    %p93 = por %p91, %p92
    %p95 = scmp.ne.s32.totalorder %s80, %s94
    %p96 = scmp.eq.s32.totalorder %s23, 0
    %p97 = por %p95, %p96
    %s99 = sadd.s32 %s98, 1
    %p102 = scmp.eq.s32.totalorder %s17, 1
    %p103 = scmp.ne.s32.totalorder %s98, %s100
    %p104 = scmp.eq.s32.totalorder %s17, 0
    %p105 = por %p103, %p104
    %p106 = scmp.ne.s32.totalorder %s98, %s100
    %p107 = scmp.eq.s32.totalorder %s22, 1
    %p108 = por %p106, %p107
    %p109 = scmp.ne.s32.totalorder %s100, %s101
    %p110 = scmp.eq.s32.totalorder %s22, 0
    %p111 = por %p109, %p110
    %p112 = scmp.ne.s32.totalorder %s100, %s101
    %p113 = scmp.eq.s32.totalorder %s23, 1
    %p114 = por %p112, %p113
    %p116 = scmp.ne.s32.totalorder %s101, %s115
    %p117 = scmp.eq.s32.totalorder %s23, 0
    %p118 = por %p116, %p117
    %s120 = sadd.s32 %s119, 1
    %p123 = scmp.eq.s32.totalorder %s17, 1
    %p124 = scmp.ne.s32.totalorder %s119, %s121
    %p125 = scmp.eq.s32.totalorder %s17, 0
    %p126 = por %p124, %p125
    %p127 = scmp.ne.s32.totalorder %s119, %s121
    %p128 = scmp.eq.s32.totalorder %s22, 1
    %p129 = por %p127, %p128
    %p130 = scmp.ne.s32.totalorder %s121, %s122
    %p131 = scmp.eq.s32.totalorder %s22, 0
    %p132 = por %p130, %p131
    %p133 = scmp.ne.s32.totalorder %s121, %s122
    %p134 = scmp.eq.s32.totalorder %s23, 1
    %p135 = por %p133, %p134
    %p137 = scmp.ne.s32.totalorder %s122, %s136
    %p138 = scmp.eq.s32.totalorder %s23, 0
    %p139 = por %p137, %p138
    %s141 = sadd.s32 %s140, 1
    %p144 = scmp.eq.s32.totalorder %s17, 1
    %p145 = scmp.ne.s32.totalorder %s140, %s142
    %p146 = scmp.eq.s32.totalorder %s17, 0
    %p147 = por %p145, %p146
    %p148 = scmp.ne.s32.totalorder %s140, %s142
    %p149 = scmp.eq.s32.totalorder %s22, 1
    %p150 = por %p148, %p149
    %p151 = scmp.ne.s32.totalorder %s142, %s143
    %p152 = scmp.eq.s32.totalorder %s22, 0
    %p153 = por %p151, %p152
    %p154 = scmp.ne.s32.totalorder %s142, %s143
    %p155 = scmp.eq.s32.totalorder %s23, 1
    %p156 = por %p154, %p155
    %p158 = scmp.ne.s32.totalorder %s143, %s157
    %p159 = scmp.eq.s32.totalorder %s23, 0
    %p160 = por %p158, %p159
    %s162 = sadd.s32 %s161, 1
    %p165 = scmp.eq.s32.totalorder %s17, 1
    %p166 = scmp.ne.s32.totalorder %s161, %s163
    %p167 = scmp.eq.s32.totalorder %s17, 0
    %p168 = por %p166, %p167
    %p169 = scmp.ne.s32.totalorder %s161, %s163
    %p170 = scmp.eq.s32.totalorder %s22, 1
    %p171 = por %p169, %p170
    %p172 = scmp.ne.s32.totalorder %s163, %s164
    %p173 = scmp.eq.s32.totalorder %s22, 0
    %p174 = por %p172, %p173
    %p175 = scmp.ne.s32.totalorder %s163, %s164
    %p176 = scmp.eq.s32.totalorder %s23, 1
    %p177 = por %p175, %p176
    %p179 = scmp.ne.s32.totalorder %s164, %s178
    %p180 = scmp.eq.s32.totalorder %s23, 0
    %p181 = por %p179, %p180
    %s183 = sadd.s32 %s182, 1
    %p186 = scmp.eq.s32.totalorder %s17, 1
    %p187 = scmp.ne.s32.totalorder %s182, %s184
    %p188 = scmp.eq.s32.totalorder %s17, 0
    %p189 = por %p187, %p188
    %p190 = scmp.ne.s32.totalorder %s182, %s184
    %p191 = scmp.eq.s32.totalorder %s22, 1
    %p192 = por %p190, %p191
    %p193 = scmp.ne.s32.totalorder %s184, %s185
    %p194 = scmp.eq.s32.totalorder %s22, 0
    %p195 = por %p193, %p194
    %p196 = scmp.ne.s32.totalorder %s184, %s185
    %p197 = scmp.eq.s32.totalorder %s23, 1
    %p198 = por %p196, %p197
    %p200 = scmp.ne.s32.totalorder %s185, %s199
    %p201 = scmp.eq.s32.totalorder %s23, 0
    %p202 = por %p200, %p201
    %s204 = sadd.s32 %s203, 1
    %p207 = scmp.eq.s32.totalorder %s17, 1
    %p208 = scmp.ne.s32.totalorder %s203, %s205
    %p209 = scmp.eq.s32.totalorder %s17, 0
    %p210 = por %p208, %p209
    %p211 = scmp.ne.s32.totalorder %s203, %s205
    %p212 = scmp.eq.s32.totalorder %s22, 1
    %p213 = por %p211, %p212
    %p214 = scmp.ne.s32.totalorder %s205, %s206
    %p215 = scmp.eq.s32.totalorder %s22, 0
    %p216 = por %p214, %p215
    %p217 = scmp.ne.s32.totalorder %s205, %s206
    %p218 = scmp.eq.s32.totalorder %s23, 1
    %p219 = por %p217, %p218
    %p221 = scmp.ne.s32.totalorder %s206, %s220
    %p222 = scmp.eq.s32.totalorder %s23, 0
    %p223 = por %p221, %p222
    %s225 = sadd.s32 %s224, 1
    %p228 = scmp.eq.s32.totalorder %s17, 1
    %p229 = scmp.ne.s32.totalorder %s224, %s226
    %p230 = scmp.eq.s32.totalorder %s17, 0
    %p231 = por %p229, %p230
    %p232 = scmp.ne.s32.totalorder %s224, %s226
    %p233 = scmp.eq.s32.totalorder %s22, 1
    %p234 = por %p232, %p233
    %p235 = scmp.ne.s32.totalorder %s226, %s227
    %p236 = scmp.eq.s32.totalorder %s22, 0
    %p237 = por %p235, %p236
    %p238 = scmp.ne.s32.totalorder %s226, %s227
    %p239 = scmp.eq.s32.totalorder %s23, 1
    %p240 = por %p238, %p239
    %p242 = scmp.ne.s32.totalorder %s227, %s241
    %p243 = scmp.eq.s32.totalorder %s23, 0
    %p244 = por %p242, %p243
    %s246 = sadd.s32 %s245, 1
    %p249 = scmp.eq.s32.totalorder %s17, 1
    %p250 = scmp.ne.s32.totalorder %s245, %s247
    %p251 = scmp.eq.s32.totalorder %s17, 0
    %p252 = por %p250, %p251
    %p253 = scmp.ne.s32.totalorder %s245, %s247
    %p254 = scmp.eq.s32.totalorder %s22, 1
    %p255 = por %p253, %p254
    %p256 = scmp.ne.s32.totalorder %s247, %s248
    %p257 = scmp.eq.s32.totalorder %s22, 0
    %p258 = por %p256, %p257
    %p259 = scmp.ne.s32.totalorder %s247, %s248
    %p260 = scmp.eq.s32.totalorder %s23, 1
    %p261 = por %p259, %p260
    %p263 = scmp.ne.s32.totalorder %s248, %s262
    %p264 = scmp.eq.s32.totalorder %s23, 0
    %p265 = por %p263, %p264
    %s266 = ssub.s32 %s17, %s24
    %p267 = scmp.eq.s32.totalorder %s266, 0
    %s269 = sadd.s32 %s268, 1
    %s270 = scalar_select %p267, %s268, %s269
    %p273 = pneg %p267
    %p274 = scmp.eq.s32.totalorder %s17, 1
    %p275 = por %p273, %p274
    %p276 = scmp.ne.s32.totalorder %s268, %s271
    %p277 = scmp.eq.s32.totalorder %s17, 0
    %p278 = por %p276, %p277
    %p279 = scmp.ne.s32.totalorder %s268, %s271
    %p280 = scmp.eq.s32.totalorder %s22, 1
    %p281 = por %p279, %p280
    %p282 = scmp.ne.s32.totalorder %s271, %s272
    %p283 = scmp.eq.s32.totalorder %s22, 0
    %p284 = por %p282, %p283
    %p285 = scmp.ne.s32.totalorder %s271, %s272
    %p286 = scmp.eq.s32.totalorder %s23, 1
    %p287 = por %p285, %p286
    %p289 = scmp.ne.s32.totalorder %s272, %s288
    %p290 = scmp.eq.s32.totalorder %s23, 0
    %p291 = por %p289, %p290
    %p292 = scmp.le.s32.totalorder 1, %s17
    %p293 = scmp.lt.s32.totalorder %s17, 3
    %p294 = pnand %p292, %p293
    %p295 = pneg %p294
    // Predicated region
    $region9: #{down_mru2_forward.1} parent=5 // pred_check
      _
    $region10: #{down_mru2_forward.1} parent=5 // pred_check_branch
      %297 = sbr.rel (%p294) target = $region12
    $region11: #{down_mru2_forward.1} parent=5 // pred_region
      %s298 = ssub.s32 %s17, 1
      // Predicated region
      $region13: #{down_mru2_forward.1} parent=11 // pred_check
        %p299 = pneg %p90
      $region14: #{down_mru2_forward.1} parent=11 // pred_check_branch
        %301 = sbr.rel (%p299) target = $region16
      $region15: #{down_mru2_forward.1} parent=11 // pred_region
        _
      $region16: #{down_mru2_forward.1} parent=11 // pred_fallthru
        _
      // Predicated region
      $region17: #{down_mru2_forward.1} parent=11 // pred_check
        %p302 = pneg %p111
      $region18: #{down_mru2_forward.1} parent=11 // pred_check_branch
        %304 = sbr.rel (%p302) target = $region20
      $region19: #{down_mru2_forward.1} parent=11 // pred_region
        _
      $region20: #{down_mru2_forward.1} parent=11 // pred_fallthru
        _
      // Predicated region
      $region21: #{down_mru2_forward.1} parent=11 // pred_check
        %p305 = pneg %p132
      $region22: #{down_mru2_forward.1} parent=11 // pred_check_branch
        %307 = sbr.rel (%p305) target = $region24
      $region23: #{down_mru2_forward.1} parent=11 // pred_region
        _
      $region24: #{down_mru2_forward.1} parent=11 // pred_fallthru
        _
      // Predicated region
      $region25: #{down_mru2_forward.1} parent=11 // pred_check
        %p308 = pneg %p153
      $region26: #{down_mru2_forward.1} parent=11 // pred_check_branch
        %310 = sbr.rel (%p308) target = $region28
      $region27: #{down_mru2_forward.1} parent=11 // pred_region
        _
      $region28: #{down_mru2_forward.1} parent=11 // pred_fallthru
        _
      // Predicated region
      $region29: #{down_mru2_forward.1} parent=11 // pred_check
        %p311 = pneg %p174
      $region30: #{down_mru2_forward.1} parent=11 // pred_check_branch
        %313 = sbr.rel (%p311) target = $region32
      $region31: #{down_mru2_forward.1} parent=11 // pred_region
        _
      $region32: #{down_mru2_forward.1} parent=11 // pred_fallthru
        _
      // Predicated region
      $region33: #{down_mru2_forward.1} parent=11 // pred_check
        %p314 = pneg %p195
      $region34: #{down_mru2_forward.1} parent=11 // pred_check_branch
        %316 = sbr.rel (%p314) target = $region36
      $region35: #{down_mru2_forward.1} parent=11 // pred_region
        _
      $region36: #{down_mru2_forward.1} parent=11 // pred_fallthru
        _
      // Predicated region
      $region37: #{down_mru2_forward.1} parent=11 // pred_check
        %p317 = pneg %p216
      $region38: #{down_mru2_forward.1} parent=11 // pred_check_branch
        %319 = sbr.rel (%p317) target = $region40
      $region39: #{down_mru2_forward.1} parent=11 // pred_region
        _
      $region40: #{down_mru2_forward.1} parent=11 // pred_fallthru
        _
      // Predicated region
      $region41: #{down_mru2_forward.1} parent=11 // pred_check
        %p320 = pneg %p237
      $region42: #{down_mru2_forward.1} parent=11 // pred_check_branch
        %322 = sbr.rel (%p320) target = $region44
      $region43: #{down_mru2_forward.1} parent=11 // pred_region
        _
      $region44: #{down_mru2_forward.1} parent=11 // pred_fallthru
        _
      // Predicated region
      $region45: #{down_mru2_forward.1} parent=11 // pred_check
        %p323 = pneg %p258
      $region46: #{down_mru2_forward.1} parent=11 // pred_check_branch
        %325 = sbr.rel (%p323) target = $region48
      $region47: #{down_mru2_forward.1} parent=11 // pred_region
        _
      $region48: #{down_mru2_forward.1} parent=11 // pred_fallthru
        _
    $region12: #{down_mru2_forward.1} parent=5 // pred_fallthru
      _
    %p326 = scmp.lt.s32.totalorder %s17, 2
    // Predicated region
    $region49: #{down_mru2_forward.1} parent=5 // pred_check
      %p327 = pneg %p326
    $region50: #{down_mru2_forward.1} parent=5 // pred_check_branch
      %329 = sbr.rel (%p327) target = $region52
    $region51: #{down_mru2_forward.1} parent=5 // pred_region
      // Predicated region
      $region53: #{down_mru2_forward.1} parent=51 // pred_check
        %p330 = pneg %p37
      $region54: #{down_mru2_forward.1} parent=51 // pred_check_branch
        %332 = sbr.rel (%p330) target = $region56
      $region55: #{down_mru2_forward.1} parent=51 // pred_region
        %p333 = scmp.lt.s32.totalorder %s17, 1
        %s334 = scalar_select %p333, %s17, 1
        %s335 = smul.addr %s334, 32
        %s336 = smul.addr %s335, 8
        %s337 = scalar_lea.vmem %s0, %s336
      $region56: #{down_mru2_forward.1} parent=51 // pred_fallthru
        _
      // Predicated region
      $region57: #{down_mru2_forward.1} parent=51 // pred_check
        %p338 = pneg %p63
      $region58: #{down_mru2_forward.1} parent=51 // pred_check_branch
        %340 = sbr.rel (%p338) target = $region60
      $region59: #{down_mru2_forward.1} parent=51 // pred_region
        %p341 = scmp.lt.s32.totalorder %s17, 1
        %s342 = scalar_select %p341, %s17, 1
        %s343 = smul.addr %s342, 32
        %s344 = smul.addr %s343, 8
        %s345 = scalar_lea.vmem %s1, %s344
      $region60: #{down_mru2_forward.1} parent=51 // pred_fallthru
        _
    $region52: #{down_mru2_forward.1} parent=5 // pred_fallthru
      _
    %p346 = scmp.le.s32.totalorder 1, %s17
    %p347 = scmp.lt.s32.totalorder %s17, 3
    %p348 = pnand %p346, %p347
    %p349 = pneg %p348
    // Predicated region
    $region61: #{down_mru2_forward.1} parent=5 // pred_check
      _
    $region62: #{down_mru2_forward.1} parent=5 // pred_check_branch
      %351 = sbr.rel (%p348) target = $region64
    $region63: #{down_mru2_forward.1} parent=5 // pred_region
      %s352 = ssub.s32 %s17, 1
      %p353 = scmp.lt.s32.totalorder %s22, 1
      %s354 = scalar_select %p353, %s22, 1
      %s355 = smul.addr %s354, 32
      %s356 = smul.addr %s355, 8
      %s357 = scalar_lea.vmem %s0, %s356
      %p358 = pneg %p43
      %p359 = pneg %p40
      %p360 = scmp.lt.s32.totalorder %s22, 1
      %s361 = scalar_select %p360, %s22, 1
      %s362 = smul.addr %s361, 32
      %s363 = smul.addr %s362, 8
      %s364 = scalar_lea.vmem %s1, %s363
      %p365 = pneg %p69
      %p366 = pneg %p66
      %p367 = pneg %p90
      %p368 = pneg %p87
      %p369 = pneg %p111
      %p370 = pneg %p108
      %p371 = pneg %p132
      %p372 = pneg %p129
      %p373 = pneg %p153
      %p374 = pneg %p150
      %p375 = pneg %p174
      %p376 = pneg %p171
      %p377 = pneg %p195
      %p378 = pneg %p192
      %p379 = pneg %p216
      %p380 = pneg %p213
      %p381 = pneg %p237
      %p382 = pneg %p234
      %p383 = pneg %p258
      %p384 = pneg %p255
      %p385 = pneg %p284
      %p386 = pneg %p281
      %p387 = scmp.lt.s32.totalorder %s22, 1
      %s388 = scalar_select %p387, %s22, 1
      %s389 = smul.addr %s388, 32
      %s390 = smul.addr %s389, 8
      %s391 = scalar_lea.vmem %s11, %s390
      %p392 = scmp.lt.s32.totalorder %s22, 1
      %s393 = scalar_select %p392, %s22, 1
      %s394 = smul.addr %s393, 32
      %s395 = smul.addr %s394, 8
      %s396 = scalar_lea.vmem %s0, %s395
      %p397 = scmp.lt.s32.totalorder %s22, 1
      %s398 = scalar_select %p397, %s22, 1
      %s399 = smul.addr %s398, 32
      %s400 = smul.addr %s399, 8
      %s401 = scalar_lea.vmem %s1, %s400
      %p402 = scmp.lt.s32.totalorder %s22, 1
      %s403 = scalar_select %p402, %s22, 1
      %s404 = smul.addr %s403, 32
      %s405 = smul.addr %s404, 8
      %s406 = scalar_lea.vmem %s11, %s405
      %v407 = vld [vmem:[%s396] sm:$0xff]
      %v408 = vld [vmem:[%s396 + $0x8] sm:$0xff]
      %v409 = vld [vmem:[%s396 + $0x10] sm:$0xff]
      %v410 = vld [vmem:[%s396 + $0x18] sm:$0xff]
      %v411 = vld [vmem:[%s396 + $0x20] sm:$0xff]
      %v412 = vld [vmem:[%s396 + $0x28] sm:$0xff]
      %v413 = vld [vmem:[%s396 + $0x30] sm:$0xff]
      %v414 = vld [vmem:[%s396 + $0x38] sm:$0xff]
      %v415 = vld [vmem:[%s396 + $0x40] sm:$0xff]
      %v416 = vld [vmem:[%s396 + $0x48] sm:$0xff]
      %v417 = vld [vmem:[%s396 + $0x50] sm:$0xff]
      %v418 = vld [vmem:[%s396 + $0x58] sm:$0xff]
      %v419 = vld [vmem:[%s396 + $0x60] sm:$0xff]
      %v420 = vld [vmem:[%s396 + $0x68] sm:$0xff]
      %v421 = vld [vmem:[%s396 + $0x70] sm:$0xff]
      %v422 = vld [vmem:[%s396 + $0x78] sm:$0xff]
      %v423 = vld [vmem:[%s396 + $0x80] sm:$0xff]
      %v424 = vld [vmem:[%s396 + $0x88] sm:$0xff]
      %v425 = vld [vmem:[%s396 + $0x90] sm:$0xff]
      %v426 = vld [vmem:[%s396 + $0x98] sm:$0xff]
      %v427 = vld [vmem:[%s396 + $0xa0] sm:$0xff]
      %v428 = vld [vmem:[%s396 + $0xa8] sm:$0xff]
      %v429 = vld [vmem:[%s396 + $0xb0] sm:$0xff]
      %v430 = vld [vmem:[%s396 + $0xb8] sm:$0xff]
      %v431 = vld [vmem:[%s396 + $0xc0] sm:$0xff]
      %v432 = vld [vmem:[%s396 + $0xc8] sm:$0xff]
      %v433 = vld [vmem:[%s396 + $0xd0] sm:$0xff]
      %v434 = vld [vmem:[%s396 + $0xd8] sm:$0xff]
      %v435 = vld [vmem:[%s396 + $0xe0] sm:$0xff]
      %v436 = vld [vmem:[%s396 + $0xe8] sm:$0xff]
      %v437 = vld [vmem:[%s396 + $0xf0] sm:$0xff]
      %v438 = vld [vmem:[%s396 + $0xf8] sm:$0xff]
      %v439 = vld [vmem:[%s401] sm:$0xff]
      %v440 = vld [vmem:[%s401 + $0x8] sm:$0xff]
      %v441 = vld [vmem:[%s401 + $0x10] sm:$0xff]
      %v442 = vld [vmem:[%s401 + $0x18] sm:$0xff]
      %v443 = vld [vmem:[%s401 + $0x20] sm:$0xff]
      %v444 = vld [vmem:[%s401 + $0x28] sm:$0xff]
      %v445 = vld [vmem:[%s401 + $0x30] sm:$0xff]
      %v446 = vld [vmem:[%s401 + $0x38] sm:$0xff]
      %v447 = vld [vmem:[%s401 + $0x40] sm:$0xff]
      %v448 = vld [vmem:[%s401 + $0x48] sm:$0xff]
      %v449 = vld [vmem:[%s401 + $0x50] sm:$0xff]
      %v450 = vld [vmem:[%s401 + $0x58] sm:$0xff]
      %v451 = vld [vmem:[%s401 + $0x60] sm:$0xff]
      %v452 = vld [vmem:[%s401 + $0x68] sm:$0xff]
      %v453 = vld [vmem:[%s401 + $0x70] sm:$0xff]
      %v454 = vld [vmem:[%s401 + $0x78] sm:$0xff]
      %v455 = vld [vmem:[%s401 + $0x80] sm:$0xff]
      %v456 = vld [vmem:[%s401 + $0x88] sm:$0xff]
      %v457 = vld [vmem:[%s401 + $0x90] sm:$0xff]
      %v458 = vld [vmem:[%s401 + $0x98] sm:$0xff]
      %v459 = vld [vmem:[%s401 + $0xa0] sm:$0xff]
      %v460 = vld [vmem:[%s401 + $0xa8] sm:$0xff]
      %v461 = vld [vmem:[%s401 + $0xb0] sm:$0xff]
      %v462 = vld [vmem:[%s401 + $0xb8] sm:$0xff]
      %v463 = vld [vmem:[%s401 + $0xc0] sm:$0xff]
      %v464 = vld [vmem:[%s401 + $0xc8] sm:$0xff]
      %v465 = vld [vmem:[%s401 + $0xd0] sm:$0xff]
      %v466 = vld [vmem:[%s401 + $0xd8] sm:$0xff]
      %v467 = vld [vmem:[%s401 + $0xe0] sm:$0xff]
      %v468 = vld [vmem:[%s401 + $0xe8] sm:$0xff]
      %v469 = vld [vmem:[%s401 + $0xf0] sm:$0xff]
      %v470 = vld [vmem:[%s401 + $0xf8] sm:$0xff]
      %v471 = vld [vmem:[%s2] sm:$0xff]
      %v472 = vld [vmem:[%s2 + $0x8] sm:$0xff]
      %v473 = vld [vmem:[%s2 + $0x10] sm:$0xff]
      %v474 = vld [vmem:[%s2 + $0x18] sm:$0xff]
      %v475 = vld [vmem:[%s2 + $0x20] sm:$0xff]
      %v476 = vld [vmem:[%s2 + $0x28] sm:$0x1f]
      %v477 = vld [vmem:[%s3] sm:$0x1]
      %v479 = vperm.slane %v477, 0
      %vm481 = vcmask 367616
      %v483 = vsel %vm481, %v407, 0
      %v486 = vsel %vm481, %v408, 0
      %v489 = vsel %vm481, %v409, 0
      %v492 = vsel %vm481, %v410, 0
      %v495 = vsel %vm481, %v411, 0
      %v498 = vsel %vm481, %v412, 0
      %v501 = vsel %vm481, %v413, 0
      %v504 = vsel %vm481, %v414, 0
      %v507 = vsel %vm481, %v415, 0
      %v510 = vsel %vm481, %v416, 0
      %v513 = vsel %vm481, %v417, 0
      %v516 = vsel %vm481, %v418, 0
      %v519 = vsel %vm481, %v419, 0
      %v522 = vsel %vm481, %v420, 0
      %v525 = vsel %vm481, %v421, 0
      %v528 = vsel %vm481, %v422, 0
      %v531 = vsel %vm481, %v423, 0
      %v534 = vsel %vm481, %v424, 0
      %v537 = vsel %vm481, %v425, 0
      %v540 = vsel %vm481, %v426, 0
      %v543 = vsel %vm481, %v427, 0
      %v546 = vsel %vm481, %v428, 0
      %v549 = vsel %vm481, %v429, 0
      %v552 = vsel %vm481, %v430, 0
      %v555 = vsel %vm481, %v431, 0
      %v558 = vsel %vm481, %v432, 0
      %v561 = vsel %vm481, %v433, 0
      %v564 = vsel %vm481, %v434, 0
      %v567 = vsel %vm481, %v435, 0
      %v570 = vsel %vm481, %v436, 0
      %v573 = vsel %vm481, %v437, 0
      %v576 = vsel %vm481, %v438, 0
      %vm578 = vcmask 1044480
      %v580 = vsel %vm578, %v476, 0
      %582 = vmatpush.msra.mxu0 0.0
      %583 = vmatpush.msra.mxu0 0.0
      %584 = vmatpush.msra.mxu0 0.0
      %585 = vmatpush.msra.mxu0 0.0
      %586 = vmatpush.msra.mxu0 0.0
      %587 = vmatpush.msra.mxu0 0.0
      %588 = vmatpush.msra.mxu0 0.0
      %589 = vmatpush.msra.mxu0 0.0
      %590 = vmatpush.msra.mxu0 0.0
      %591 = vmatpush.msra.mxu0 0.0
      %592 = vmatpush.msra.mxu0 %v580
      %593 = vmatpush.msra.mxu0 %v475
      %594 = vmatpush.msra.mxu0 %v474
      %595 = vmatpush.msra.mxu0 %v473
      %596 = vmatpush.msra.mxu0 %v472
      %597 = vmatpush.msra.mxu0 %v471
      %598 = vmatmul.f32.gmra.mxu0 %v483
      %v599 = vpop.f32.mrf.mxu0
      %v600 = vadd.f32 %v479, %v599
      %601 = vmatmul.f32.gmra.mxu0 %v486
      %v602 = vpop.f32.mrf.mxu0
      %v603 = vadd.f32 %v479, %v602
      %604 = vmatmul.f32.gmra.mxu0 %v489
      %v605 = vpop.f32.mrf.mxu0
      %v606 = vadd.f32 %v479, %v605
      %607 = vmatmul.f32.gmra.mxu0 %v492
      %v608 = vpop.f32.mrf.mxu0
      %v609 = vadd.f32 %v479, %v608
      %610 = vmatmul.f32.gmra.mxu0 %v495
      %v611 = vpop.f32.mrf.mxu0
      %v612 = vadd.f32 %v479, %v611
      %613 = vmatmul.f32.gmra.mxu0 %v498
      %v614 = vpop.f32.mrf.mxu0
      %v615 = vadd.f32 %v479, %v614
      %616 = vmatmul.f32.gmra.mxu0 %v501
      %v617 = vpop.f32.mrf.mxu0
      %v618 = vadd.f32 %v479, %v617
      %619 = vmatmul.f32.gmra.mxu0 %v504
      %v620 = vpop.f32.mrf.mxu0
      %v621 = vadd.f32 %v479, %v620
      %622 = vmatmul.f32.gmra.mxu0 %v507
      %v623 = vpop.f32.mrf.mxu0
      %v624 = vadd.f32 %v479, %v623
      %625 = vmatmul.f32.gmra.mxu0 %v510
      %v626 = vpop.f32.mrf.mxu0
      %v627 = vadd.f32 %v479, %v626
      %628 = vmatmul.f32.gmra.mxu0 %v513
      %v629 = vpop.f32.mrf.mxu0
      %v630 = vadd.f32 %v479, %v629
      %631 = vmatmul.f32.gmra.mxu0 %v516
      %v632 = vpop.f32.mrf.mxu0
      %v633 = vadd.f32 %v479, %v632
      %634 = vmatmul.f32.gmra.mxu0 %v519
      %v635 = vpop.f32.mrf.mxu0
      %v636 = vadd.f32 %v479, %v635
      %637 = vmatmul.f32.gmra.mxu0 %v522
      %v638 = vpop.f32.mrf.mxu0
      %v639 = vadd.f32 %v479, %v638
      %640 = vmatmul.f32.gmra.mxu0 %v525
      %v641 = vpop.f32.mrf.mxu0
      %v642 = vadd.f32 %v479, %v641
      %643 = vmatmul.f32.gmra.mxu0 %v528
      %v644 = vpop.f32.mrf.mxu0
      %v645 = vadd.f32 %v479, %v644
      %646 = vmatmul.f32.gmra.mxu0 %v531
      %v647 = vpop.f32.mrf.mxu0
      %v648 = vadd.f32 %v479, %v647
      %649 = vmatmul.f32.gmra.mxu0 %v534
      %v650 = vpop.f32.mrf.mxu0
      %v651 = vadd.f32 %v479, %v650
      %652 = vmatmul.f32.gmra.mxu0 %v537
      %v653 = vpop.f32.mrf.mxu0
      %v654 = vadd.f32 %v479, %v653
      %655 = vmatmul.f32.gmra.mxu0 %v540
      %v656 = vpop.f32.mrf.mxu0
      %v657 = vadd.f32 %v479, %v656
      %658 = vmatmul.f32.gmra.mxu0 %v543
      %v659 = vpop.f32.mrf.mxu0
      %v660 = vadd.f32 %v479, %v659
      %661 = vmatmul.f32.gmra.mxu0 %v546
      %v662 = vpop.f32.mrf.mxu0
      %v663 = vadd.f32 %v479, %v662
      %664 = vmatmul.f32.gmra.mxu0 %v549
      %v665 = vpop.f32.mrf.mxu0
      %v666 = vadd.f32 %v479, %v665
      %667 = vmatmul.f32.gmra.mxu0 %v552
      %v668 = vpop.f32.mrf.mxu0
      %v669 = vadd.f32 %v479, %v668
      %670 = vmatmul.f32.gmra.mxu0 %v555
      %v671 = vpop.f32.mrf.mxu0
      %v672 = vadd.f32 %v479, %v671
      %673 = vmatmul.f32.gmra.mxu0 %v558
      %v674 = vpop.f32.mrf.mxu0
      %v675 = vadd.f32 %v479, %v674
      %676 = vmatmul.f32.gmra.mxu0 %v561
      %v677 = vpop.f32.mrf.mxu0
      %v678 = vadd.f32 %v479, %v677
      %679 = vmatmul.f32.gmra.mxu0 %v564
      %v680 = vpop.f32.mrf.mxu0
      %v681 = vadd.f32 %v479, %v680
      %682 = vmatmul.f32.gmra.mxu0 %v567
      %v683 = vpop.f32.mrf.mxu0
      %v684 = vadd.f32 %v479, %v683
      %685 = vmatmul.f32.gmra.mxu0 %v570
      %v686 = vpop.f32.mrf.mxu0
      %v687 = vadd.f32 %v479, %v686
      %688 = vmatmul.f32.gmra.mxu0 %v573
      %v689 = vpop.f32.mrf.mxu0
      %v690 = vadd.f32 %v479, %v689
      %691 = vmatmul.f32.gmra.mxu0 %v576
      %v692 = vpop.f32.mrf.mxu0
      %v693 = vadd.f32 %v479, %v692
      %694 = vdwg.mxu0
      %v695 = vxor.u32 %v600, 2147483648
      %v696 = vxor.u32 %v603, 2147483648
      %v697 = vxor.u32 %v606, 2147483648
      %v698 = vxor.u32 %v609, 2147483648
      %v699 = vxor.u32 %v612, 2147483648
      %v700 = vxor.u32 %v615, 2147483648
      %v701 = vxor.u32 %v618, 2147483648
      %v702 = vxor.u32 %v621, 2147483648
      %v703 = vxor.u32 %v624, 2147483648
      %v704 = vxor.u32 %v627, 2147483648
      %v705 = vxor.u32 %v630, 2147483648
      %v706 = vxor.u32 %v633, 2147483648
      %v707 = vxor.u32 %v636, 2147483648
      %v708 = vxor.u32 %v639, 2147483648
      %v709 = vxor.u32 %v642, 2147483648
      %v710 = vxor.u32 %v645, 2147483648
      %v711 = vxor.u32 %v648, 2147483648
      %v712 = vxor.u32 %v651, 2147483648
      %v713 = vxor.u32 %v654, 2147483648
      %v714 = vxor.u32 %v657, 2147483648
      %v715 = vxor.u32 %v660, 2147483648
      %v716 = vxor.u32 %v663, 2147483648
      %v717 = vxor.u32 %v666, 2147483648
      %v718 = vxor.u32 %v669, 2147483648
      %v719 = vxor.u32 %v672, 2147483648
      %v720 = vxor.u32 %v675, 2147483648
      %v721 = vxor.u32 %v678, 2147483648
      %v722 = vxor.u32 %v681, 2147483648
      %v723 = vxor.u32 %v684, 2147483648
      %v724 = vxor.u32 %v687, 2147483648
      %v725 = vxor.u32 %v690, 2147483648
      %v726 = vxor.u32 %v693, 2147483648
      %v727 = vmul.f32 %v695, 1.442695
      %v728 = vpow.pop %v727
      %v729 = vmul.f32 %v696, 1.442695
      %v730 = vpow.pop %v729
      %v731 = vmul.f32 %v697, 1.442695
      %v732 = vpow.pop %v731
      %v733 = vmul.f32 %v698, 1.442695
      %v734 = vpow.pop %v733
      %v735 = vmul.f32 %v699, 1.442695
      %v736 = vpow.pop %v735
      %v737 = vmul.f32 %v700, 1.442695
      %v738 = vpow.pop %v737
      %v739 = vmul.f32 %v701, 1.442695
      %v740 = vpow.pop %v739
      %v741 = vmul.f32 %v702, 1.442695
      %v742 = vpow.pop %v741
      %v743 = vmul.f32 %v703, 1.442695
      %v744 = vpow.pop %v743
      %v745 = vmul.f32 %v704, 1.442695
      %v746 = vpow.pop %v745
      %v747 = vmul.f32 %v705, 1.442695
      %v748 = vpow.pop %v747
      %v749 = vmul.f32 %v706, 1.442695
      %v750 = vpow.pop %v749
      %v751 = vmul.f32 %v707, 1.442695
      %v752 = vpow.pop %v751
      %v753 = vmul.f32 %v708, 1.442695
      %v754 = vpow.pop %v753
      %v755 = vmul.f32 %v709, 1.442695
      %v756 = vpow.pop %v755
      %v757 = vmul.f32 %v710, 1.442695
      %v758 = vpow.pop %v757
      %v759 = vmul.f32 %v711, 1.442695
      %v760 = vpow.pop %v759
      %v761 = vmul.f32 %v712, 1.442695
      %v762 = vpow.pop %v761
      %v763 = vmul.f32 %v713, 1.442695
      %v764 = vpow.pop %v763
      %v765 = vmul.f32 %v714, 1.442695
      %v766 = vpow.pop %v765
      %v767 = vmul.f32 %v715, 1.442695
      %v768 = vpow.pop %v767
      %v769 = vmul.f32 %v716, 1.442695
      %v770 = vpow.pop %v769
      %v771 = vmul.f32 %v717, 1.442695
      %v772 = vpow.pop %v771
      %v773 = vmul.f32 %v718, 1.442695
      %v774 = vpow.pop %v773
      %v775 = vmul.f32 %v719, 1.442695
      %v776 = vpow.pop %v775
      %v777 = vmul.f32 %v720, 1.442695
      %v778 = vpow.pop %v777
      %v779 = vmul.f32 %v721, 1.442695
      %v780 = vpow.pop %v779
      %v781 = vmul.f32 %v722, 1.442695
      %v782 = vpow.pop %v781
      %v783 = vmul.f32 %v723, 1.442695
      %v784 = vpow.pop %v783
      %v785 = vmul.f32 %v724, 1.442695
      %v786 = vpow.pop %v785
      %v787 = vmul.f32 %v725, 1.442695
      %v788 = vpow.pop %v787
      %v789 = vmul.f32 %v726, 1.442695
      %v790 = vpow.pop %v789
      %v791 = vadd.f32 %v728, 1.0
      %v792 = vadd.f32 %v730, 1.0
      %v793 = vadd.f32 %v732, 1.0
      %v794 = vadd.f32 %v734, 1.0
      %v795 = vadd.f32 %v736, 1.0
      %v796 = vadd.f32 %v738, 1.0
      %v797 = vadd.f32 %v740, 1.0
      %v798 = vadd.f32 %v742, 1.0
      %v799 = vadd.f32 %v744, 1.0
      %v800 = vadd.f32 %v746, 1.0
      %v801 = vadd.f32 %v748, 1.0
      %v802 = vadd.f32 %v750, 1.0
      %v803 = vadd.f32 %v752, 1.0
      %v804 = vadd.f32 %v754, 1.0
      %v805 = vadd.f32 %v756, 1.0
      %v806 = vadd.f32 %v758, 1.0
      %v807 = vadd.f32 %v760, 1.0
      %v808 = vadd.f32 %v762, 1.0
      %v809 = vadd.f32 %v764, 1.0
      %v810 = vadd.f32 %v766, 1.0
      %v811 = vadd.f32 %v768, 1.0
      %v812 = vadd.f32 %v770, 1.0
      %v813 = vadd.f32 %v772, 1.0
      %v814 = vadd.f32 %v774, 1.0
      %v815 = vadd.f32 %v776, 1.0
      %v816 = vadd.f32 %v778, 1.0
      %v817 = vadd.f32 %v780, 1.0
      %v818 = vadd.f32 %v782, 1.0
      %v819 = vadd.f32 %v784, 1.0
      %v820 = vadd.f32 %v786, 1.0
      %v821 = vadd.f32 %v788, 1.0
      %v822 = vadd.f32 %v790, 1.0
      %v823 = vrcp.pop %v791
      %v824 = vmul.f32 %v791, %v823
      %v825 = vsub.f32 1.0, %v824
      %v826 = vmul.f32 %v823, %v825
      %v827 = vadd.f32 %v823, %v826
      %vm828 = vweird.f32 %v791
      %vm829 = vweird.f32 %v823
      %vm830 = vmor %vm828, %vm829
      %v831 = vsel %vm830, %v823, %v827
      %v832 = vand.u32 2147483647, %v791
      %vm833 = vcmp.eq.f32.partialorder %v832, 8.507059e+37
      %v834 = vand.u32 %v791, 2147483648
      %v835 = vor.u32 1.1754944e-38, %v834
      %v836 = vsel %vm833, %v835, %v831
      %v837 = vmul.f32 1.0, %v836
      %v838 = vrcp.pop %v792
      %v839 = vmul.f32 %v792, %v838
      %v840 = vsub.f32 1.0, %v839
      %v841 = vmul.f32 %v838, %v840
      %v842 = vadd.f32 %v838, %v841
      %vm843 = vweird.f32 %v792
      %vm844 = vweird.f32 %v838
      %vm845 = vmor %vm843, %vm844
      %v846 = vsel %vm845, %v838, %v842
      %v847 = vand.u32 2147483647, %v792
      %vm848 = vcmp.eq.f32.partialorder %v847, 8.507059e+37
      %v849 = vand.u32 %v792, 2147483648
      %v850 = vor.u32 1.1754944e-38, %v849
      %v851 = vsel %vm848, %v850, %v846
      %v852 = vmul.f32 1.0, %v851
      %v853 = vrcp.pop %v793
      %v854 = vmul.f32 %v793, %v853
      %v855 = vsub.f32 1.0, %v854
      %v856 = vmul.f32 %v853, %v855
      %v857 = vadd.f32 %v853, %v856
      %vm858 = vweird.f32 %v793
      %vm859 = vweird.f32 %v853
      %vm860 = vmor %vm858, %vm859
      %v861 = vsel %vm860, %v853, %v857
      %v862 = vand.u32 2147483647, %v793
      %vm863 = vcmp.eq.f32.partialorder %v862, 8.507059e+37
      %v864 = vand.u32 %v793, 2147483648
      %v865 = vor.u32 1.1754944e-38, %v864
      %v866 = vsel %vm863, %v865, %v861
      %v867 = vmul.f32 1.0, %v866
      %v868 = vrcp.pop %v794
      %v869 = vmul.f32 %v794, %v868
      %v870 = vsub.f32 1.0, %v869
      %v871 = vmul.f32 %v868, %v870
      %v872 = vadd.f32 %v868, %v871
      %vm873 = vweird.f32 %v794
      %vm874 = vweird.f32 %v868
      %vm875 = vmor %vm873, %vm874
      %v876 = vsel %vm875, %v868, %v872
      %v877 = vand.u32 2147483647, %v794
      %vm878 = vcmp.eq.f32.partialorder %v877, 8.507059e+37
      %v879 = vand.u32 %v794, 2147483648
      %v880 = vor.u32 1.1754944e-38, %v879
      %v881 = vsel %vm878, %v880, %v876
      %v882 = vmul.f32 1.0, %v881
      %v883 = vrcp.pop %v795
      %v884 = vmul.f32 %v795, %v883
      %v885 = vsub.f32 1.0, %v884
      %v886 = vmul.f32 %v883, %v885
      %v887 = vadd.f32 %v883, %v886
      %vm888 = vweird.f32 %v795
      %vm889 = vweird.f32 %v883
      %vm890 = vmor %vm888, %vm889
      %v891 = vsel %vm890, %v883, %v887
      %v892 = vand.u32 2147483647, %v795
      %vm893 = vcmp.eq.f32.partialorder %v892, 8.507059e+37
      %v894 = vand.u32 %v795, 2147483648
      %v895 = vor.u32 1.1754944e-38, %v894
      %v896 = vsel %vm893, %v895, %v891
      %v897 = vmul.f32 1.0, %v896
      %v898 = vrcp.pop %v796
      %v899 = vmul.f32 %v796, %v898
      %v900 = vsub.f32 1.0, %v899
      %v901 = vmul.f32 %v898, %v900
      %v902 = vadd.f32 %v898, %v901
      %vm903 = vweird.f32 %v796
      %vm904 = vweird.f32 %v898
      %vm905 = vmor %vm903, %vm904
      %v906 = vsel %vm905, %v898, %v902
      %v907 = vand.u32 2147483647, %v796
      %vm908 = vcmp.eq.f32.partialorder %v907, 8.507059e+37
      %v909 = vand.u32 %v796, 2147483648
      %v910 = vor.u32 1.1754944e-38, %v909
      %v911 = vsel %vm908, %v910, %v906
      %v912 = vmul.f32 1.0, %v911
      %v913 = vrcp.pop %v797
      %v914 = vmul.f32 %v797, %v913
      %v915 = vsub.f32 1.0, %v914
      %v916 = vmul.f32 %v913, %v915
      %v917 = vadd.f32 %v913, %v916
      %vm918 = vweird.f32 %v797
      %vm919 = vweird.f32 %v913
      %vm920 = vmor %vm918, %vm919
      %v921 = vsel %vm920, %v913, %v917
      %v922 = vand.u32 2147483647, %v797
      %vm923 = vcmp.eq.f32.partialorder %v922, 8.507059e+37
      %v924 = vand.u32 %v797, 2147483648
      %v925 = vor.u32 1.1754944e-38, %v924
      %v926 = vsel %vm923, %v925, %v921
      %v927 = vmul.f32 1.0, %v926
      %v928 = vrcp.pop %v798
      %v929 = vmul.f32 %v798, %v928
      %v930 = vsub.f32 1.0, %v929
      %v931 = vmul.f32 %v928, %v930
      %v932 = vadd.f32 %v928, %v931
      %vm933 = vweird.f32 %v798
      %vm934 = vweird.f32 %v928
      %vm935 = vmor %vm933, %vm934
      %v936 = vsel %vm935, %v928, %v932
      %v937 = vand.u32 2147483647, %v798
      %vm938 = vcmp.eq.f32.partialorder %v937, 8.507059e+37
      %v939 = vand.u32 %v798, 2147483648
      %v940 = vor.u32 1.1754944e-38, %v939
      %v941 = vsel %vm938, %v940, %v936
      %v942 = vmul.f32 1.0, %v941
      %v943 = vrcp.pop %v799
      %v944 = vmul.f32 %v799, %v943
      %v945 = vsub.f32 1.0, %v944
      %v946 = vmul.f32 %v943, %v945
      %v947 = vadd.f32 %v943, %v946
      %vm948 = vweird.f32 %v799
      %vm949 = vweird.f32 %v943
      %vm950 = vmor %vm948, %vm949
      %v951 = vsel %vm950, %v943, %v947
      %v952 = vand.u32 2147483647, %v799
      %vm953 = vcmp.eq.f32.partialorder %v952, 8.507059e+37
      %v954 = vand.u32 %v799, 2147483648
      %v955 = vor.u32 1.1754944e-38, %v954
      %v956 = vsel %vm953, %v955, %v951
      %v957 = vmul.f32 1.0, %v956
      %v958 = vrcp.pop %v800
      %v959 = vmul.f32 %v800, %v958
      %v960 = vsub.f32 1.0, %v959
      %v961 = vmul.f32 %v958, %v960
      %v962 = vadd.f32 %v958, %v961
      %vm963 = vweird.f32 %v800
      %vm964 = vweird.f32 %v958
      %vm965 = vmor %vm963, %vm964
      %v966 = vsel %vm965, %v958, %v962
      %v967 = vand.u32 2147483647, %v800
      %vm968 = vcmp.eq.f32.partialorder %v967, 8.507059e+37
      %v969 = vand.u32 %v800, 2147483648
      %v970 = vor.u32 1.1754944e-38, %v969
      %v971 = vsel %vm968, %v970, %v966
      %v972 = vmul.f32 1.0, %v971
      %v973 = vrcp.pop %v801
      %v974 = vmul.f32 %v801, %v973
      %v975 = vsub.f32 1.0, %v974
      %v976 = vmul.f32 %v973, %v975
      %v977 = vadd.f32 %v973, %v976
      %vm978 = vweird.f32 %v801
      %vm979 = vweird.f32 %v973
      %vm980 = vmor %vm978, %vm979
      %v981 = vsel %vm980, %v973, %v977
      %v982 = vand.u32 2147483647, %v801
      %vm983 = vcmp.eq.f32.partialorder %v982, 8.507059e+37
      %v984 = vand.u32 %v801, 2147483648
      %v985 = vor.u32 1.1754944e-38, %v984
      %v986 = vsel %vm983, %v985, %v981
      %v987 = vmul.f32 1.0, %v986
      %v988 = vrcp.pop %v802
      %v989 = vmul.f32 %v802, %v988
      %v990 = vsub.f32 1.0, %v989
      %v991 = vmul.f32 %v988, %v990
      %v992 = vadd.f32 %v988, %v991
      %vm993 = vweird.f32 %v802
      %vm994 = vweird.f32 %v988
      %vm995 = vmor %vm993, %vm994
      %v996 = vsel %vm995, %v988, %v992
      %v997 = vand.u32 2147483647, %v802
      %vm998 = vcmp.eq.f32.partialorder %v997, 8.507059e+37
      %v999 = vand.u32 %v802, 2147483648
      %v1000 = vor.u32 1.1754944e-38, %v999
      %v1001 = vsel %vm998, %v1000, %v996
      %v1002 = vmul.f32 1.0, %v1001
      %v1003 = vrcp.pop %v803
      %v1004 = vmul.f32 %v803, %v1003
      %v1005 = vsub.f32 1.0, %v1004
      %v1006 = vmul.f32 %v1003, %v1005
      %v1007 = vadd.f32 %v1003, %v1006
      %vm1008 = vweird.f32 %v803
      %vm1009 = vweird.f32 %v1003
      %vm1010 = vmor %vm1008, %vm1009
      %v1011 = vsel %vm1010, %v1003, %v1007
      %v1012 = vand.u32 2147483647, %v803
      %vm1013 = vcmp.eq.f32.partialorder %v1012, 8.507059e+37
      %v1014 = vand.u32 %v803, 2147483648
      %v1015 = vor.u32 1.1754944e-38, %v1014
      %v1016 = vsel %vm1013, %v1015, %v1011
      %v1017 = vmul.f32 1.0, %v1016
      %v1018 = vrcp.pop %v804
      %v1019 = vmul.f32 %v804, %v1018
      %v1020 = vsub.f32 1.0, %v1019
      %v1021 = vmul.f32 %v1018, %v1020
      %v1022 = vadd.f32 %v1018, %v1021
      %vm1023 = vweird.f32 %v804
      %vm1024 = vweird.f32 %v1018
      %vm1025 = vmor %vm1023, %vm1024
      %v1026 = vsel %vm1025, %v1018, %v1022
      %v1027 = vand.u32 2147483647, %v804
      %vm1028 = vcmp.eq.f32.partialorder %v1027, 8.507059e+37
      %v1029 = vand.u32 %v804, 2147483648
      %v1030 = vor.u32 1.1754944e-38, %v1029
      %v1031 = vsel %vm1028, %v1030, %v1026
      %v1032 = vmul.f32 1.0, %v1031
      %v1033 = vrcp.pop %v805
      %v1034 = vmul.f32 %v805, %v1033
      %v1035 = vsub.f32 1.0, %v1034
      %v1036 = vmul.f32 %v1033, %v1035
      %v1037 = vadd.f32 %v1033, %v1036
      %vm1038 = vweird.f32 %v805
      %vm1039 = vweird.f32 %v1033
      %vm1040 = vmor %vm1038, %vm1039
      %v1041 = vsel %vm1040, %v1033, %v1037
      %v1042 = vand.u32 2147483647, %v805
      %vm1043 = vcmp.eq.f32.partialorder %v1042, 8.507059e+37
      %v1044 = vand.u32 %v805, 2147483648
      %v1045 = vor.u32 1.1754944e-38, %v1044
      %v1046 = vsel %vm1043, %v1045, %v1041
      %v1047 = vmul.f32 1.0, %v1046
      %v1048 = vrcp.pop %v806
      %v1049 = vmul.f32 %v806, %v1048
      %v1050 = vsub.f32 1.0, %v1049
      %v1051 = vmul.f32 %v1048, %v1050
      %v1052 = vadd.f32 %v1048, %v1051
      %vm1053 = vweird.f32 %v806
      %vm1054 = vweird.f32 %v1048
      %vm1055 = vmor %vm1053, %vm1054
      %v1056 = vsel %vm1055, %v1048, %v1052
      %v1057 = vand.u32 2147483647, %v806
      %vm1058 = vcmp.eq.f32.partialorder %v1057, 8.507059e+37
      %v1059 = vand.u32 %v806, 2147483648
      %v1060 = vor.u32 1.1754944e-38, %v1059
      %v1061 = vsel %vm1058, %v1060, %v1056
      %v1062 = vmul.f32 1.0, %v1061
      %v1063 = vrcp.pop %v807
      %v1064 = vmul.f32 %v807, %v1063
      %v1065 = vsub.f32 1.0, %v1064
      %v1066 = vmul.f32 %v1063, %v1065
      %v1067 = vadd.f32 %v1063, %v1066
      %vm1068 = vweird.f32 %v807
      %vm1069 = vweird.f32 %v1063
      %vm1070 = vmor %vm1068, %vm1069
      %v1071 = vsel %vm1070, %v1063, %v1067
      %v1072 = vand.u32 2147483647, %v807
      %vm1073 = vcmp.eq.f32.partialorder %v1072, 8.507059e+37
      %v1074 = vand.u32 %v807, 2147483648
      %v1075 = vor.u32 1.1754944e-38, %v1074
      %v1076 = vsel %vm1073, %v1075, %v1071
      %v1077 = vmul.f32 1.0, %v1076
      %v1078 = vrcp.pop %v808
      %v1079 = vmul.f32 %v808, %v1078
      %v1080 = vsub.f32 1.0, %v1079
      %v1081 = vmul.f32 %v1078, %v1080
      %v1082 = vadd.f32 %v1078, %v1081
      %vm1083 = vweird.f32 %v808
      %vm1084 = vweird.f32 %v1078
      %vm1085 = vmor %vm1083, %vm1084
      %v1086 = vsel %vm1085, %v1078, %v1082
      %v1087 = vand.u32 2147483647, %v808
      %vm1088 = vcmp.eq.f32.partialorder %v1087, 8.507059e+37
      %v1089 = vand.u32 %v808, 2147483648
      %v1090 = vor.u32 1.1754944e-38, %v1089
      %v1091 = vsel %vm1088, %v1090, %v1086
      %v1092 = vmul.f32 1.0, %v1091
      %v1093 = vrcp.pop %v809
      %v1094 = vmul.f32 %v809, %v1093
      %v1095 = vsub.f32 1.0, %v1094
      %v1096 = vmul.f32 %v1093, %v1095
      %v1097 = vadd.f32 %v1093, %v1096
      %vm1098 = vweird.f32 %v809
      %vm1099 = vweird.f32 %v1093
      %vm1100 = vmor %vm1098, %vm1099
      %v1101 = vsel %vm1100, %v1093, %v1097
      %v1102 = vand.u32 2147483647, %v809
      %vm1103 = vcmp.eq.f32.partialorder %v1102, 8.507059e+37
      %v1104 = vand.u32 %v809, 2147483648
      %v1105 = vor.u32 1.1754944e-38, %v1104
      %v1106 = vsel %vm1103, %v1105, %v1101
      %v1107 = vmul.f32 1.0, %v1106
      %v1108 = vrcp.pop %v810
      %v1109 = vmul.f32 %v810, %v1108
      %v1110 = vsub.f32 1.0, %v1109
      %v1111 = vmul.f32 %v1108, %v1110
      %v1112 = vadd.f32 %v1108, %v1111
      %vm1113 = vweird.f32 %v810
      %vm1114 = vweird.f32 %v1108
      %vm1115 = vmor %vm1113, %vm1114
      %v1116 = vsel %vm1115, %v1108, %v1112
      %v1117 = vand.u32 2147483647, %v810
      %vm1118 = vcmp.eq.f32.partialorder %v1117, 8.507059e+37
      %v1119 = vand.u32 %v810, 2147483648
      %v1120 = vor.u32 1.1754944e-38, %v1119
      %v1121 = vsel %vm1118, %v1120, %v1116
      %v1122 = vmul.f32 1.0, %v1121
      %v1123 = vrcp.pop %v811
      %v1124 = vmul.f32 %v811, %v1123
      %v1125 = vsub.f32 1.0, %v1124
      %v1126 = vmul.f32 %v1123, %v1125
      %v1127 = vadd.f32 %v1123, %v1126
      %vm1128 = vweird.f32 %v811
      %vm1129 = vweird.f32 %v1123
      %vm1130 = vmor %vm1128, %vm1129
      %v1131 = vsel %vm1130, %v1123, %v1127
      %v1132 = vand.u32 2147483647, %v811
      %vm1133 = vcmp.eq.f32.partialorder %v1132, 8.507059e+37
      %v1134 = vand.u32 %v811, 2147483648
      %v1135 = vor.u32 1.1754944e-38, %v1134
      %v1136 = vsel %vm1133, %v1135, %v1131
      %v1137 = vmul.f32 1.0, %v1136
      %v1138 = vrcp.pop %v812
      %v1139 = vmul.f32 %v812, %v1138
      %v1140 = vsub.f32 1.0, %v1139
      %v1141 = vmul.f32 %v1138, %v1140
      %v1142 = vadd.f32 %v1138, %v1141
      %vm1143 = vweird.f32 %v812
      %vm1144 = vweird.f32 %v1138
      %vm1145 = vmor %vm1143, %vm1144
      %v1146 = vsel %vm1145, %v1138, %v1142
      %v1147 = vand.u32 2147483647, %v812
      %vm1148 = vcmp.eq.f32.partialorder %v1147, 8.507059e+37
      %v1149 = vand.u32 %v812, 2147483648
      %v1150 = vor.u32 1.1754944e-38, %v1149
      %v1151 = vsel %vm1148, %v1150, %v1146
      %v1152 = vmul.f32 1.0, %v1151
      %v1153 = vrcp.pop %v813
      %v1154 = vmul.f32 %v813, %v1153
      %v1155 = vsub.f32 1.0, %v1154
      %v1156 = vmul.f32 %v1153, %v1155
      %v1157 = vadd.f32 %v1153, %v1156
      %vm1158 = vweird.f32 %v813
      %vm1159 = vweird.f32 %v1153
      %vm1160 = vmor %vm1158, %vm1159
      %v1161 = vsel %vm1160, %v1153, %v1157
      %v1162 = vand.u32 2147483647, %v813
      %vm1163 = vcmp.eq.f32.partialorder %v1162, 8.507059e+37
      %v1164 = vand.u32 %v813, 2147483648
      %v1165 = vor.u32 1.1754944e-38, %v1164
      %v1166 = vsel %vm1163, %v1165, %v1161
      %v1167 = vmul.f32 1.0, %v1166
      %v1168 = vrcp.pop %v814
      %v1169 = vmul.f32 %v814, %v1168
      %v1170 = vsub.f32 1.0, %v1169
      %v1171 = vmul.f32 %v1168, %v1170
      %v1172 = vadd.f32 %v1168, %v1171
      %vm1173 = vweird.f32 %v814
      %vm1174 = vweird.f32 %v1168
      %vm1175 = vmor %vm1173, %vm1174
      %v1176 = vsel %vm1175, %v1168, %v1172
      %v1177 = vand.u32 2147483647, %v814
      %vm1178 = vcmp.eq.f32.partialorder %v1177, 8.507059e+37
      %v1179 = vand.u32 %v814, 2147483648
      %v1180 = vor.u32 1.1754944e-38, %v1179
      %v1181 = vsel %vm1178, %v1180, %v1176
      %v1182 = vmul.f32 1.0, %v1181
      %v1183 = vrcp.pop %v815
      %v1184 = vmul.f32 %v815, %v1183
      %v1185 = vsub.f32 1.0, %v1184
      %v1186 = vmul.f32 %v1183, %v1185
      %v1187 = vadd.f32 %v1183, %v1186
      %vm1188 = vweird.f32 %v815
      %vm1189 = vweird.f32 %v1183
      %vm1190 = vmor %vm1188, %vm1189
      %v1191 = vsel %vm1190, %v1183, %v1187
      %v1192 = vand.u32 2147483647, %v815
      %vm1193 = vcmp.eq.f32.partialorder %v1192, 8.507059e+37
      %v1194 = vand.u32 %v815, 2147483648
      %v1195 = vor.u32 1.1754944e-38, %v1194
      %v1196 = vsel %vm1193, %v1195, %v1191
      %v1197 = vmul.f32 1.0, %v1196
      %v1198 = vrcp.pop %v816
      %v1199 = vmul.f32 %v816, %v1198
      %v1200 = vsub.f32 1.0, %v1199
      %v1201 = vmul.f32 %v1198, %v1200
      %v1202 = vadd.f32 %v1198, %v1201
      %vm1203 = vweird.f32 %v816
      %vm1204 = vweird.f32 %v1198
      %vm1205 = vmor %vm1203, %vm1204
      %v1206 = vsel %vm1205, %v1198, %v1202
      %v1207 = vand.u32 2147483647, %v816
      %vm1208 = vcmp.eq.f32.partialorder %v1207, 8.507059e+37
      %v1209 = vand.u32 %v816, 2147483648
      %v1210 = vor.u32 1.1754944e-38, %v1209
      %v1211 = vsel %vm1208, %v1210, %v1206
      %v1212 = vmul.f32 1.0, %v1211
      %v1213 = vrcp.pop %v817
      %v1214 = vmul.f32 %v817, %v1213
      %v1215 = vsub.f32 1.0, %v1214
      %v1216 = vmul.f32 %v1213, %v1215
      %v1217 = vadd.f32 %v1213, %v1216
      %vm1218 = vweird.f32 %v817
      %vm1219 = vweird.f32 %v1213
      %vm1220 = vmor %vm1218, %vm1219
      %v1221 = vsel %vm1220, %v1213, %v1217
      %v1222 = vand.u32 2147483647, %v817
      %vm1223 = vcmp.eq.f32.partialorder %v1222, 8.507059e+37
      %v1224 = vand.u32 %v817, 2147483648
      %v1225 = vor.u32 1.1754944e-38, %v1224
      %v1226 = vsel %vm1223, %v1225, %v1221
      %v1227 = vmul.f32 1.0, %v1226
      %v1228 = vrcp.pop %v818
      %v1229 = vmul.f32 %v818, %v1228
      %v1230 = vsub.f32 1.0, %v1229
      %v1231 = vmul.f32 %v1228, %v1230
      %v1232 = vadd.f32 %v1228, %v1231
      %vm1233 = vweird.f32 %v818
      %vm1234 = vweird.f32 %v1228
      %vm1235 = vmor %vm1233, %vm1234
      %v1236 = vsel %vm1235, %v1228, %v1232
      %v1237 = vand.u32 2147483647, %v818
      %vm1238 = vcmp.eq.f32.partialorder %v1237, 8.507059e+37
      %v1239 = vand.u32 %v818, 2147483648
      %v1240 = vor.u32 1.1754944e-38, %v1239
      %v1241 = vsel %vm1238, %v1240, %v1236
      %v1242 = vmul.f32 1.0, %v1241
      %v1243 = vrcp.pop %v819
      %v1244 = vmul.f32 %v819, %v1243
      %v1245 = vsub.f32 1.0, %v1244
      %v1246 = vmul.f32 %v1243, %v1245
      %v1247 = vadd.f32 %v1243, %v1246
      %vm1248 = vweird.f32 %v819
      %vm1249 = vweird.f32 %v1243
      %vm1250 = vmor %vm1248, %vm1249
      %v1251 = vsel %vm1250, %v1243, %v1247
      %v1252 = vand.u32 2147483647, %v819
      %vm1253 = vcmp.eq.f32.partialorder %v1252, 8.507059e+37
      %v1254 = vand.u32 %v819, 2147483648
      %v1255 = vor.u32 1.1754944e-38, %v1254
      %v1256 = vsel %vm1253, %v1255, %v1251
      %v1257 = vmul.f32 1.0, %v1256
      %v1258 = vrcp.pop %v820
      %v1259 = vmul.f32 %v820, %v1258
      %v1260 = vsub.f32 1.0, %v1259
      %v1261 = vmul.f32 %v1258, %v1260
      %v1262 = vadd.f32 %v1258, %v1261
      %vm1263 = vweird.f32 %v820
      %vm1264 = vweird.f32 %v1258
      %vm1265 = vmor %vm1263, %vm1264
      %v1266 = vsel %vm1265, %v1258, %v1262
      %v1267 = vand.u32 2147483647, %v820
      %vm1268 = vcmp.eq.f32.partialorder %v1267, 8.507059e+37
      %v1269 = vand.u32 %v820, 2147483648
      %v1270 = vor.u32 1.1754944e-38, %v1269
      %v1271 = vsel %vm1268, %v1270, %v1266
      %v1272 = vmul.f32 1.0, %v1271
      %v1273 = vrcp.pop %v821
      %v1274 = vmul.f32 %v821, %v1273
      %v1275 = vsub.f32 1.0, %v1274
      %v1276 = vmul.f32 %v1273, %v1275
      %v1277 = vadd.f32 %v1273, %v1276
      %vm1278 = vweird.f32 %v821
      %vm1279 = vweird.f32 %v1273
      %vm1280 = vmor %vm1278, %vm1279
      %v1281 = vsel %vm1280, %v1273, %v1277
      %v1282 = vand.u32 2147483647, %v821
      %vm1283 = vcmp.eq.f32.partialorder %v1282, 8.507059e+37
      %v1284 = vand.u32 %v821, 2147483648
      %v1285 = vor.u32 1.1754944e-38, %v1284
      %v1286 = vsel %vm1283, %v1285, %v1281
      %v1287 = vmul.f32 1.0, %v1286
      %v1288 = vrcp.pop %v822
      %v1289 = vmul.f32 %v822, %v1288
      %v1290 = vsub.f32 1.0, %v1289
      %v1291 = vmul.f32 %v1288, %v1290
      %v1292 = vadd.f32 %v1288, %v1291
      %vm1293 = vweird.f32 %v822
      %vm1294 = vweird.f32 %v1288
      %vm1295 = vmor %vm1293, %vm1294
      %v1296 = vsel %vm1295, %v1288, %v1292
      %v1297 = vand.u32 2147483647, %v822
      %vm1298 = vcmp.eq.f32.partialorder %v1297, 8.507059e+37
      %v1299 = vand.u32 %v822, 2147483648
      %v1300 = vor.u32 1.1754944e-38, %v1299
      %v1301 = vsel %vm1298, %v1300, %v1296
      %v1302 = vmul.f32 1.0, %v1301
      %v1303 = vld [vmem:[%s7] sm:$0xff]
      %v1304 = vld [vmem:[%s7 + $0x8] sm:$0xff]
      %v1305 = vld [vmem:[%s7 + $0x10] sm:$0xff]
      %v1306 = vld [vmem:[%s7 + $0x18] sm:$0xff]
      %v1307 = vld [vmem:[%s7 + $0x20] sm:$0xff]
      %v1308 = vld [vmem:[%s7 + $0x28] sm:$0x1f]
      %v1309 = vld [vmem:[%s8] sm:$0x1]
      %v1311 = vperm.slane %v1309, 0
      %v1314 = vsel %vm578, %v1308, 0
      %1316 = vmatpush.msra.mxu0 0.0
      %1317 = vmatpush.msra.mxu0 0.0
      %1318 = vmatpush.msra.mxu0 0.0
      %1319 = vmatpush.msra.mxu0 0.0
      %1320 = vmatpush.msra.mxu0 0.0
      %1321 = vmatpush.msra.mxu0 0.0
      %1322 = vmatpush.msra.mxu0 0.0
      %1323 = vmatpush.msra.mxu0 0.0
      %1324 = vmatpush.msra.mxu0 0.0
      %1325 = vmatpush.msra.mxu0 0.0
      %1326 = vmatpush.msra.mxu0 %v1314
      %1327 = vmatpush.msra.mxu0 %v1307
      %1328 = vmatpush.msra.mxu0 %v1306
      %1329 = vmatpush.msra.mxu0 %v1305
      %1330 = vmatpush.msra.mxu0 %v1304
      %1331 = vmatpush.msra.mxu0 %v1303
      %1332 = vmatmul.f32.gmra.mxu0 %v483
      %v1333 = vpop.f32.mrf.mxu0
      %v1334 = vadd.f32 %v1311, %v1333
      %1335 = vmatmul.f32.gmra.mxu0 %v486
      %v1336 = vpop.f32.mrf.mxu0
      %v1337 = vadd.f32 %v1311, %v1336
      %1338 = vmatmul.f32.gmra.mxu0 %v489
      %v1339 = vpop.f32.mrf.mxu0
      %v1340 = vadd.f32 %v1311, %v1339
      %1341 = vmatmul.f32.gmra.mxu0 %v492
      %v1342 = vpop.f32.mrf.mxu0
      %v1343 = vadd.f32 %v1311, %v1342
      %1344 = vmatmul.f32.gmra.mxu0 %v495
      %v1345 = vpop.f32.mrf.mxu0
      %v1346 = vadd.f32 %v1311, %v1345
      %1347 = vmatmul.f32.gmra.mxu0 %v498
      %v1348 = vpop.f32.mrf.mxu0
      %v1349 = vadd.f32 %v1311, %v1348
      %1350 = vmatmul.f32.gmra.mxu0 %v501
      %v1351 = vpop.f32.mrf.mxu0
      %v1352 = vadd.f32 %v1311, %v1351
      %1353 = vmatmul.f32.gmra.mxu0 %v504
      %v1354 = vpop.f32.mrf.mxu0
      %v1355 = vadd.f32 %v1311, %v1354
      %1356 = vmatmul.f32.gmra.mxu0 %v507
      %v1357 = vpop.f32.mrf.mxu0
      %v1358 = vadd.f32 %v1311, %v1357
      %1359 = vmatmul.f32.gmra.mxu0 %v510
      %v1360 = vpop.f32.mrf.mxu0
      %v1361 = vadd.f32 %v1311, %v1360
      %1362 = vmatmul.f32.gmra.mxu0 %v513
      %v1363 = vpop.f32.mrf.mxu0
      %v1364 = vadd.f32 %v1311, %v1363
      %1365 = vmatmul.f32.gmra.mxu0 %v516
      %v1366 = vpop.f32.mrf.mxu0
      %v1367 = vadd.f32 %v1311, %v1366
      %1368 = vmatmul.f32.gmra.mxu0 %v519
      %v1369 = vpop.f32.mrf.mxu0
      %v1370 = vadd.f32 %v1311, %v1369
      %1371 = vmatmul.f32.gmra.mxu0 %v522
      %v1372 = vpop.f32.mrf.mxu0
      %v1373 = vadd.f32 %v1311, %v1372
      %1374 = vmatmul.f32.gmra.mxu0 %v525
      %v1375 = vpop.f32.mrf.mxu0
      %v1376 = vadd.f32 %v1311, %v1375
      %1377 = vmatmul.f32.gmra.mxu0 %v528
      %v1378 = vpop.f32.mrf.mxu0
      %v1379 = vadd.f32 %v1311, %v1378
      %1380 = vmatmul.f32.gmra.mxu0 %v531
      %v1381 = vpop.f32.mrf.mxu0
      %v1382 = vadd.f32 %v1311, %v1381
      %1383 = vmatmul.f32.gmra.mxu0 %v534
      %v1384 = vpop.f32.mrf.mxu0
      %v1385 = vadd.f32 %v1311, %v1384
      %1386 = vmatmul.f32.gmra.mxu0 %v537
      %v1387 = vpop.f32.mrf.mxu0
      %v1388 = vadd.f32 %v1311, %v1387
      %1389 = vmatmul.f32.gmra.mxu0 %v540
      %v1390 = vpop.f32.mrf.mxu0
      %v1391 = vadd.f32 %v1311, %v1390
      %1392 = vmatmul.f32.gmra.mxu0 %v543
      %v1393 = vpop.f32.mrf.mxu0
      %v1394 = vadd.f32 %v1311, %v1393
      %1395 = vmatmul.f32.gmra.mxu0 %v546
      %v1396 = vpop.f32.mrf.mxu0
      %v1397 = vadd.f32 %v1311, %v1396
      %1398 = vmatmul.f32.gmra.mxu0 %v549
      %v1399 = vpop.f32.mrf.mxu0
      %v1400 = vadd.f32 %v1311, %v1399
      %1401 = vmatmul.f32.gmra.mxu0 %v552
      %v1402 = vpop.f32.mrf.mxu0
      %v1403 = vadd.f32 %v1311, %v1402
      %1404 = vmatmul.f32.gmra.mxu0 %v555
      %v1405 = vpop.f32.mrf.mxu0
      %v1406 = vadd.f32 %v1311, %v1405
      %1407 = vmatmul.f32.gmra.mxu0 %v558
      %v1408 = vpop.f32.mrf.mxu0
      %v1409 = vadd.f32 %v1311, %v1408
      %1410 = vmatmul.f32.gmra.mxu0 %v561
      %v1411 = vpop.f32.mrf.mxu0
      %v1412 = vadd.f32 %v1311, %v1411
      %1413 = vmatmul.f32.gmra.mxu0 %v564
      %v1414 = vpop.f32.mrf.mxu0
      %v1415 = vadd.f32 %v1311, %v1414
      %1416 = vmatmul.f32.gmra.mxu0 %v567
      %v1417 = vpop.f32.mrf.mxu0
      %v1418 = vadd.f32 %v1311, %v1417
      %1419 = vmatmul.f32.gmra.mxu0 %v570
      %v1420 = vpop.f32.mrf.mxu0
      %v1421 = vadd.f32 %v1311, %v1420
      %1422 = vmatmul.f32.gmra.mxu0 %v573
      %v1423 = vpop.f32.mrf.mxu0
      %v1424 = vadd.f32 %v1311, %v1423
      %1425 = vmatmul.f32.gmra.mxu0 %v576
      %v1426 = vpop.f32.mrf.mxu0
      %v1427 = vadd.f32 %v1311, %v1426
      %1428 = vdwg.mxu0
      %v1429 = vxor.u32 %v1334, 2147483648
      %v1430 = vxor.u32 %v1337, 2147483648
      %v1431 = vxor.u32 %v1340, 2147483648
      %v1432 = vxor.u32 %v1343, 2147483648
      %v1433 = vxor.u32 %v1346, 2147483648
      %v1434 = vxor.u32 %v1349, 2147483648
      %v1435 = vxor.u32 %v1352, 2147483648
      %v1436 = vxor.u32 %v1355, 2147483648
      %v1437 = vxor.u32 %v1358, 2147483648
      %v1438 = vxor.u32 %v1361, 2147483648
      %v1439 = vxor.u32 %v1364, 2147483648
      %v1440 = vxor.u32 %v1367, 2147483648
      %v1441 = vxor.u32 %v1370, 2147483648
      %v1442 = vxor.u32 %v1373, 2147483648
      %v1443 = vxor.u32 %v1376, 2147483648
      %v1444 = vxor.u32 %v1379, 2147483648
      %v1445 = vxor.u32 %v1382, 2147483648
      %v1446 = vxor.u32 %v1385, 2147483648
      %v1447 = vxor.u32 %v1388, 2147483648
      %v1448 = vxor.u32 %v1391, 2147483648
      %v1449 = vxor.u32 %v1394, 2147483648
      %v1450 = vxor.u32 %v1397, 2147483648
      %v1451 = vxor.u32 %v1400, 2147483648
      %v1452 = vxor.u32 %v1403, 2147483648
      %v1453 = vxor.u32 %v1406, 2147483648
      %v1454 = vxor.u32 %v1409, 2147483648
      %v1455 = vxor.u32 %v1412, 2147483648
      %v1456 = vxor.u32 %v1415, 2147483648
      %v1457 = vxor.u32 %v1418, 2147483648
      %v1458 = vxor.u32 %v1421, 2147483648
      %v1459 = vxor.u32 %v1424, 2147483648
      %v1460 = vxor.u32 %v1427, 2147483648
      %v1461 = vmul.f32 %v1429, 1.442695
      %v1462 = vpow.pop %v1461
      %v1463 = vmul.f32 %v1430, 1.442695
      %v1464 = vpow.pop %v1463
      %v1465 = vmul.f32 %v1431, 1.442695
      %v1466 = vpow.pop %v1465
      %v1467 = vmul.f32 %v1432, 1.442695
      %v1468 = vpow.pop %v1467
      %v1469 = vmul.f32 %v1433, 1.442695
      %v1470 = vpow.pop %v1469
      %v1471 = vmul.f32 %v1434, 1.442695
      %v1472 = vpow.pop %v1471
      %v1473 = vmul.f32 %v1435, 1.442695
      %v1474 = vpow.pop %v1473
      %v1475 = vmul.f32 %v1436, 1.442695
      %v1476 = vpow.pop %v1475
      %v1477 = vmul.f32 %v1437, 1.442695
      %v1478 = vpow.pop %v1477
      %v1479 = vmul.f32 %v1438, 1.442695
      %v1480 = vpow.pop %v1479
      %v1481 = vmul.f32 %v1439, 1.442695
      %v1482 = vpow.pop %v1481
      %v1483 = vmul.f32 %v1440, 1.442695
      %v1484 = vpow.pop %v1483
      %v1485 = vmul.f32 %v1441, 1.442695
      %v1486 = vpow.pop %v1485
      %v1487 = vmul.f32 %v1442, 1.442695
      %v1488 = vpow.pop %v1487
      %v1489 = vmul.f32 %v1443, 1.442695
      %v1490 = vpow.pop %v1489
      %v1491 = vmul.f32 %v1444, 1.442695
      %v1492 = vpow.pop %v1491
      %v1493 = vmul.f32 %v1445, 1.442695
      %v1494 = vpow.pop %v1493
      %v1495 = vmul.f32 %v1446, 1.442695
      %v1496 = vpow.pop %v1495
      %v1497 = vmul.f32 %v1447, 1.442695
      %v1498 = vpow.pop %v1497
      %v1499 = vmul.f32 %v1448, 1.442695
      %v1500 = vpow.pop %v1499
      %v1501 = vmul.f32 %v1449, 1.442695
      %v1502 = vpow.pop %v1501
      %v1503 = vmul.f32 %v1450, 1.442695
      %v1504 = vpow.pop %v1503
      %v1505 = vmul.f32 %v1451, 1.442695
      %v1506 = vpow.pop %v1505
      %v1507 = vmul.f32 %v1452, 1.442695
      %v1508 = vpow.pop %v1507
      %v1509 = vmul.f32 %v1453, 1.442695
      %v1510 = vpow.pop %v1509
      %v1511 = vmul.f32 %v1454, 1.442695
      %v1512 = vpow.pop %v1511
      %v1513 = vmul.f32 %v1455, 1.442695
      %v1514 = vpow.pop %v1513
      %v1515 = vmul.f32 %v1456, 1.442695
      %v1516 = vpow.pop %v1515
      %v1517 = vmul.f32 %v1457, 1.442695
      %v1518 = vpow.pop %v1517
      %v1519 = vmul.f32 %v1458, 1.442695
      %v1520 = vpow.pop %v1519
      %v1521 = vmul.f32 %v1459, 1.442695
      %v1522 = vpow.pop %v1521
      %v1523 = vmul.f32 %v1460, 1.442695
      %v1524 = vpow.pop %v1523
      %v1525 = vadd.f32 %v1462, 1.0
      %v1526 = vadd.f32 %v1464, 1.0
      %v1527 = vadd.f32 %v1466, 1.0
      %v1528 = vadd.f32 %v1468, 1.0
      %v1529 = vadd.f32 %v1470, 1.0
      %v1530 = vadd.f32 %v1472, 1.0
      %v1531 = vadd.f32 %v1474, 1.0
      %v1532 = vadd.f32 %v1476, 1.0
      %v1533 = vadd.f32 %v1478, 1.0
      %v1534 = vadd.f32 %v1480, 1.0
      %v1535 = vadd.f32 %v1482, 1.0
      %v1536 = vadd.f32 %v1484, 1.0
      %v1537 = vadd.f32 %v1486, 1.0
      %v1538 = vadd.f32 %v1488, 1.0
      %v1539 = vadd.f32 %v1490, 1.0
      %v1540 = vadd.f32 %v1492, 1.0
      %v1541 = vadd.f32 %v1494, 1.0
      %v1542 = vadd.f32 %v1496, 1.0
      %v1543 = vadd.f32 %v1498, 1.0
      %v1544 = vadd.f32 %v1500, 1.0
      %v1545 = vadd.f32 %v1502, 1.0
      %v1546 = vadd.f32 %v1504, 1.0
      %v1547 = vadd.f32 %v1506, 1.0
      %v1548 = vadd.f32 %v1508, 1.0
      %v1549 = vadd.f32 %v1510, 1.0
      %v1550 = vadd.f32 %v1512, 1.0
      %v1551 = vadd.f32 %v1514, 1.0
      %v1552 = vadd.f32 %v1516, 1.0
      %v1553 = vadd.f32 %v1518, 1.0
      %v1554 = vadd.f32 %v1520, 1.0
      %v1555 = vadd.f32 %v1522, 1.0
      %v1556 = vadd.f32 %v1524, 1.0
      %v1557 = vrcp.pop %v1525
      %v1558 = vmul.f32 %v1525, %v1557
      %v1559 = vsub.f32 1.0, %v1558
      %v1560 = vmul.f32 %v1557, %v1559
      %v1561 = vadd.f32 %v1557, %v1560
      %vm1562 = vweird.f32 %v1525
      %vm1563 = vweird.f32 %v1557
      %vm1564 = vmor %vm1562, %vm1563
      %v1565 = vsel %vm1564, %v1557, %v1561
      %v1566 = vand.u32 2147483647, %v1525
      %vm1567 = vcmp.eq.f32.partialorder %v1566, 8.507059e+37
      %v1568 = vand.u32 %v1525, 2147483648
      %v1569 = vor.u32 1.1754944e-38, %v1568
      %v1570 = vsel %vm1567, %v1569, %v1565
      %v1571 = vmul.f32 1.0, %v1570
      %v1572 = vrcp.pop %v1526
      %v1573 = vmul.f32 %v1526, %v1572
      %v1574 = vsub.f32 1.0, %v1573
      %v1575 = vmul.f32 %v1572, %v1574
      %v1576 = vadd.f32 %v1572, %v1575
      %vm1577 = vweird.f32 %v1526
      %vm1578 = vweird.f32 %v1572
      %vm1579 = vmor %vm1577, %vm1578
      %v1580 = vsel %vm1579, %v1572, %v1576
      %v1581 = vand.u32 2147483647, %v1526
      %vm1582 = vcmp.eq.f32.partialorder %v1581, 8.507059e+37
      %v1583 = vand.u32 %v1526, 2147483648
      %v1584 = vor.u32 1.1754944e-38, %v1583
      %v1585 = vsel %vm1582, %v1584, %v1580
      %v1586 = vmul.f32 1.0, %v1585
      %v1587 = vrcp.pop %v1527
      %v1588 = vmul.f32 %v1527, %v1587
      %v1589 = vsub.f32 1.0, %v1588
      %v1590 = vmul.f32 %v1587, %v1589
      %v1591 = vadd.f32 %v1587, %v1590
      %vm1592 = vweird.f32 %v1527
      %vm1593 = vweird.f32 %v1587
      %vm1594 = vmor %vm1592, %vm1593
      %v1595 = vsel %vm1594, %v1587, %v1591
      %v1596 = vand.u32 2147483647, %v1527
      %vm1597 = vcmp.eq.f32.partialorder %v1596, 8.507059e+37
      %v1598 = vand.u32 %v1527, 2147483648
      %v1599 = vor.u32 1.1754944e-38, %v1598
      %v1600 = vsel %vm1597, %v1599, %v1595
      %v1601 = vmul.f32 1.0, %v1600
      %v1602 = vrcp.pop %v1528
      %v1603 = vmul.f32 %v1528, %v1602
      %v1604 = vsub.f32 1.0, %v1603
      %v1605 = vmul.f32 %v1602, %v1604
      %v1606 = vadd.f32 %v1602, %v1605
      %vm1607 = vweird.f32 %v1528
      %vm1608 = vweird.f32 %v1602
      %vm1609 = vmor %vm1607, %vm1608
      %v1610 = vsel %vm1609, %v1602, %v1606
      %v1611 = vand.u32 2147483647, %v1528
      %vm1612 = vcmp.eq.f32.partialorder %v1611, 8.507059e+37
      %v1613 = vand.u32 %v1528, 2147483648
      %v1614 = vor.u32 1.1754944e-38, %v1613
      %v1615 = vsel %vm1612, %v1614, %v1610
      %v1616 = vmul.f32 1.0, %v1615
      %v1617 = vrcp.pop %v1529
      %v1618 = vmul.f32 %v1529, %v1617
      %v1619 = vsub.f32 1.0, %v1618
      %v1620 = vmul.f32 %v1617, %v1619
      %v1621 = vadd.f32 %v1617, %v1620
      %vm1622 = vweird.f32 %v1529
      %vm1623 = vweird.f32 %v1617
      %vm1624 = vmor %vm1622, %vm1623
      %v1625 = vsel %vm1624, %v1617, %v1621
      %v1626 = vand.u32 2147483647, %v1529
      %vm1627 = vcmp.eq.f32.partialorder %v1626, 8.507059e+37
      %v1628 = vand.u32 %v1529, 2147483648
      %v1629 = vor.u32 1.1754944e-38, %v1628
      %v1630 = vsel %vm1627, %v1629, %v1625
      %v1631 = vmul.f32 1.0, %v1630
      %v1632 = vrcp.pop %v1530
      %v1633 = vmul.f32 %v1530, %v1632
      %v1634 = vsub.f32 1.0, %v1633
      %v1635 = vmul.f32 %v1632, %v1634
      %v1636 = vadd.f32 %v1632, %v1635
      %vm1637 = vweird.f32 %v1530
      %vm1638 = vweird.f32 %v1632
      %vm1639 = vmor %vm1637, %vm1638
      %v1640 = vsel %vm1639, %v1632, %v1636
      %v1641 = vand.u32 2147483647, %v1530
      %vm1642 = vcmp.eq.f32.partialorder %v1641, 8.507059e+37
      %v1643 = vand.u32 %v1530, 2147483648
      %v1644 = vor.u32 1.1754944e-38, %v1643
      %v1645 = vsel %vm1642, %v1644, %v1640
      %v1646 = vmul.f32 1.0, %v1645
      %v1647 = vrcp.pop %v1531
      %v1648 = vmul.f32 %v1531, %v1647
      %v1649 = vsub.f32 1.0, %v1648
      %v1650 = vmul.f32 %v1647, %v1649
      %v1651 = vadd.f32 %v1647, %v1650
      %vm1652 = vweird.f32 %v1531
      %vm1653 = vweird.f32 %v1647
      %vm1654 = vmor %vm1652, %vm1653
      %v1655 = vsel %vm1654, %v1647, %v1651
      %v1656 = vand.u32 2147483647, %v1531
      %vm1657 = vcmp.eq.f32.partialorder %v1656, 8.507059e+37
      %v1658 = vand.u32 %v1531, 2147483648
      %v1659 = vor.u32 1.1754944e-38, %v1658
      %v1660 = vsel %vm1657, %v1659, %v1655
      %v1661 = vmul.f32 1.0, %v1660
      %v1662 = vrcp.pop %v1532
      %v1663 = vmul.f32 %v1532, %v1662
      %v1664 = vsub.f32 1.0, %v1663
      %v1665 = vmul.f32 %v1662, %v1664
      %v1666 = vadd.f32 %v1662, %v1665
      %vm1667 = vweird.f32 %v1532
      %vm1668 = vweird.f32 %v1662
      %vm1669 = vmor %vm1667, %vm1668
      %v1670 = vsel %vm1669, %v1662, %v1666
      %v1671 = vand.u32 2147483647, %v1532
      %vm1672 = vcmp.eq.f32.partialorder %v1671, 8.507059e+37
      %v1673 = vand.u32 %v1532, 2147483648
      %v1674 = vor.u32 1.1754944e-38, %v1673
      %v1675 = vsel %vm1672, %v1674, %v1670
      %v1676 = vmul.f32 1.0, %v1675
      %v1677 = vrcp.pop %v1533
      %v1678 = vmul.f32 %v1533, %v1677
      %v1679 = vsub.f32 1.0, %v1678
      %v1680 = vmul.f32 %v1677, %v1679
      %v1681 = vadd.f32 %v1677, %v1680
      %vm1682 = vweird.f32 %v1533
      %vm1683 = vweird.f32 %v1677
      %vm1684 = vmor %vm1682, %vm1683
      %v1685 = vsel %vm1684, %v1677, %v1681
      %v1686 = vand.u32 2147483647, %v1533
      %vm1687 = vcmp.eq.f32.partialorder %v1686, 8.507059e+37
      %v1688 = vand.u32 %v1533, 2147483648
      %v1689 = vor.u32 1.1754944e-38, %v1688
      %v1690 = vsel %vm1687, %v1689, %v1685
      %v1691 = vmul.f32 1.0, %v1690
      %v1692 = vrcp.pop %v1534
      %v1693 = vmul.f32 %v1534, %v1692
      %v1694 = vsub.f32 1.0, %v1693
      %v1695 = vmul.f32 %v1692, %v1694
      %v1696 = vadd.f32 %v1692, %v1695
      %vm1697 = vweird.f32 %v1534
      %vm1698 = vweird.f32 %v1692
      %vm1699 = vmor %vm1697, %vm1698
      %v1700 = vsel %vm1699, %v1692, %v1696
      %v1701 = vand.u32 2147483647, %v1534
      %vm1702 = vcmp.eq.f32.partialorder %v1701, 8.507059e+37
      %v1703 = vand.u32 %v1534, 2147483648
      %v1704 = vor.u32 1.1754944e-38, %v1703
      %v1705 = vsel %vm1702, %v1704, %v1700
      %v1706 = vmul.f32 1.0, %v1705
      %v1707 = vrcp.pop %v1535
      %v1708 = vmul.f32 %v1535, %v1707
      %v1709 = vsub.f32 1.0, %v1708
      %v1710 = vmul.f32 %v1707, %v1709
      %v1711 = vadd.f32 %v1707, %v1710
      %vm1712 = vweird.f32 %v1535
      %vm1713 = vweird.f32 %v1707
      %vm1714 = vmor %vm1712, %vm1713
      %v1715 = vsel %vm1714, %v1707, %v1711
      %v1716 = vand.u32 2147483647, %v1535
      %vm1717 = vcmp.eq.f32.partialorder %v1716, 8.507059e+37
      %v1718 = vand.u32 %v1535, 2147483648
      %v1719 = vor.u32 1.1754944e-38, %v1718
      %v1720 = vsel %vm1717, %v1719, %v1715
      %v1721 = vmul.f32 1.0, %v1720
      %v1722 = vrcp.pop %v1536
      %v1723 = vmul.f32 %v1536, %v1722
      %v1724 = vsub.f32 1.0, %v1723
      %v1725 = vmul.f32 %v1722, %v1724
      %v1726 = vadd.f32 %v1722, %v1725
      %vm1727 = vweird.f32 %v1536
      %vm1728 = vweird.f32 %v1722
      %vm1729 = vmor %vm1727, %vm1728
      %v1730 = vsel %vm1729, %v1722, %v1726
      %v1731 = vand.u32 2147483647, %v1536
      %vm1732 = vcmp.eq.f32.partialorder %v1731, 8.507059e+37
      %v1733 = vand.u32 %v1536, 2147483648
      %v1734 = vor.u32 1.1754944e-38, %v1733
      %v1735 = vsel %vm1732, %v1734, %v1730
      %v1736 = vmul.f32 1.0, %v1735
      %v1737 = vrcp.pop %v1537
      %v1738 = vmul.f32 %v1537, %v1737
      %v1739 = vsub.f32 1.0, %v1738
      %v1740 = vmul.f32 %v1737, %v1739
      %v1741 = vadd.f32 %v1737, %v1740
      %vm1742 = vweird.f32 %v1537
      %vm1743 = vweird.f32 %v1737
      %vm1744 = vmor %vm1742, %vm1743
      %v1745 = vsel %vm1744, %v1737, %v1741
      %v1746 = vand.u32 2147483647, %v1537
      %vm1747 = vcmp.eq.f32.partialorder %v1746, 8.507059e+37
      %v1748 = vand.u32 %v1537, 2147483648
      %v1749 = vor.u32 1.1754944e-38, %v1748
      %v1750 = vsel %vm1747, %v1749, %v1745
      %v1751 = vmul.f32 1.0, %v1750
      %v1752 = vrcp.pop %v1538
      %v1753 = vmul.f32 %v1538, %v1752
      %v1754 = vsub.f32 1.0, %v1753
      %v1755 = vmul.f32 %v1752, %v1754
      %v1756 = vadd.f32 %v1752, %v1755
      %vm1757 = vweird.f32 %v1538
      %vm1758 = vweird.f32 %v1752
      %vm1759 = vmor %vm1757, %vm1758
      %v1760 = vsel %vm1759, %v1752, %v1756
      %v1761 = vand.u32 2147483647, %v1538
      %vm1762 = vcmp.eq.f32.partialorder %v1761, 8.507059e+37
      %v1763 = vand.u32 %v1538, 2147483648
      %v1764 = vor.u32 1.1754944e-38, %v1763
      %v1765 = vsel %vm1762, %v1764, %v1760
      %v1766 = vmul.f32 1.0, %v1765
      %v1767 = vrcp.pop %v1539
      %v1768 = vmul.f32 %v1539, %v1767
      %v1769 = vsub.f32 1.0, %v1768
      %v1770 = vmul.f32 %v1767, %v1769
      %v1771 = vadd.f32 %v1767, %v1770
      %vm1772 = vweird.f32 %v1539
      %vm1773 = vweird.f32 %v1767
      %vm1774 = vmor %vm1772, %vm1773
      %v1775 = vsel %vm1774, %v1767, %v1771
      %v1776 = vand.u32 2147483647, %v1539
      %vm1777 = vcmp.eq.f32.partialorder %v1776, 8.507059e+37
      %v1778 = vand.u32 %v1539, 2147483648
      %v1779 = vor.u32 1.1754944e-38, %v1778
      %v1780 = vsel %vm1777, %v1779, %v1775
      %v1781 = vmul.f32 1.0, %v1780
      %v1782 = vrcp.pop %v1540
      %v1783 = vmul.f32 %v1540, %v1782
      %v1784 = vsub.f32 1.0, %v1783
      %v1785 = vmul.f32 %v1782, %v1784
      %v1786 = vadd.f32 %v1782, %v1785
      %vm1787 = vweird.f32 %v1540
      %vm1788 = vweird.f32 %v1782
      %vm1789 = vmor %vm1787, %vm1788
      %v1790 = vsel %vm1789, %v1782, %v1786
      %v1791 = vand.u32 2147483647, %v1540
      %vm1792 = vcmp.eq.f32.partialorder %v1791, 8.507059e+37
      %v1793 = vand.u32 %v1540, 2147483648
      %v1794 = vor.u32 1.1754944e-38, %v1793
      %v1795 = vsel %vm1792, %v1794, %v1790
      %v1796 = vmul.f32 1.0, %v1795
      %v1797 = vrcp.pop %v1541
      %v1798 = vmul.f32 %v1541, %v1797
      %v1799 = vsub.f32 1.0, %v1798
      %v1800 = vmul.f32 %v1797, %v1799
      %v1801 = vadd.f32 %v1797, %v1800
      %vm1802 = vweird.f32 %v1541
      %vm1803 = vweird.f32 %v1797
      %vm1804 = vmor %vm1802, %vm1803
      %v1805 = vsel %vm1804, %v1797, %v1801
      %v1806 = vand.u32 2147483647, %v1541
      %vm1807 = vcmp.eq.f32.partialorder %v1806, 8.507059e+37
      %v1808 = vand.u32 %v1541, 2147483648
      %v1809 = vor.u32 1.1754944e-38, %v1808
      %v1810 = vsel %vm1807, %v1809, %v1805
      %v1811 = vmul.f32 1.0, %v1810
      %v1812 = vrcp.pop %v1542
      %v1813 = vmul.f32 %v1542, %v1812
      %v1814 = vsub.f32 1.0, %v1813
      %v1815 = vmul.f32 %v1812, %v1814
      %v1816 = vadd.f32 %v1812, %v1815
      %vm1817 = vweird.f32 %v1542
      %vm1818 = vweird.f32 %v1812
      %vm1819 = vmor %vm1817, %vm1818
      %v1820 = vsel %vm1819, %v1812, %v1816
      %v1821 = vand.u32 2147483647, %v1542
      %vm1822 = vcmp.eq.f32.partialorder %v1821, 8.507059e+37
      %v1823 = vand.u32 %v1542, 2147483648
      %v1824 = vor.u32 1.1754944e-38, %v1823
      %v1825 = vsel %vm1822, %v1824, %v1820
      %v1826 = vmul.f32 1.0, %v1825
      %v1827 = vrcp.pop %v1543
      %v1828 = vmul.f32 %v1543, %v1827
      %v1829 = vsub.f32 1.0, %v1828
      %v1830 = vmul.f32 %v1827, %v1829
      %v1831 = vadd.f32 %v1827, %v1830
      %vm1832 = vweird.f32 %v1543
      %vm1833 = vweird.f32 %v1827
      %vm1834 = vmor %vm1832, %vm1833
      %v1835 = vsel %vm1834, %v1827, %v1831
      %v1836 = vand.u32 2147483647, %v1543
      %vm1837 = vcmp.eq.f32.partialorder %v1836, 8.507059e+37
      %v1838 = vand.u32 %v1543, 2147483648
      %v1839 = vor.u32 1.1754944e-38, %v1838
      %v1840 = vsel %vm1837, %v1839, %v1835
      %v1841 = vmul.f32 1.0, %v1840
      %v1842 = vrcp.pop %v1544
      %v1843 = vmul.f32 %v1544, %v1842
      %v1844 = vsub.f32 1.0, %v1843
      %v1845 = vmul.f32 %v1842, %v1844
      %v1846 = vadd.f32 %v1842, %v1845
      %vm1847 = vweird.f32 %v1544
      %vm1848 = vweird.f32 %v1842
      %vm1849 = vmor %vm1847, %vm1848
      %v1850 = vsel %vm1849, %v1842, %v1846
      %v1851 = vand.u32 2147483647, %v1544
      %vm1852 = vcmp.eq.f32.partialorder %v1851, 8.507059e+37
      %v1853 = vand.u32 %v1544, 2147483648
      %v1854 = vor.u32 1.1754944e-38, %v1853
      %v1855 = vsel %vm1852, %v1854, %v1850
      %v1856 = vmul.f32 1.0, %v1855
      %v1857 = vrcp.pop %v1545
      %v1858 = vmul.f32 %v1545, %v1857
      %v1859 = vsub.f32 1.0, %v1858
      %v1860 = vmul.f32 %v1857, %v1859
      %v1861 = vadd.f32 %v1857, %v1860
      %vm1862 = vweird.f32 %v1545
      %vm1863 = vweird.f32 %v1857
      %vm1864 = vmor %vm1862, %vm1863
      %v1865 = vsel %vm1864, %v1857, %v1861
      %v1866 = vand.u32 2147483647, %v1545
      %vm1867 = vcmp.eq.f32.partialorder %v1866, 8.507059e+37
      %v1868 = vand.u32 %v1545, 2147483648
      %v1869 = vor.u32 1.1754944e-38, %v1868
      %v1870 = vsel %vm1867, %v1869, %v1865
      %v1871 = vmul.f32 1.0, %v1870
      %v1872 = vrcp.pop %v1546
      %v1873 = vmul.f32 %v1546, %v1872
      %v1874 = vsub.f32 1.0, %v1873
      %v1875 = vmul.f32 %v1872, %v1874
      %v1876 = vadd.f32 %v1872, %v1875
      %vm1877 = vweird.f32 %v1546
      %vm1878 = vweird.f32 %v1872
      %vm1879 = vmor %vm1877, %vm1878
      %v1880 = vsel %vm1879, %v1872, %v1876
      %v1881 = vand.u32 2147483647, %v1546
      %vm1882 = vcmp.eq.f32.partialorder %v1881, 8.507059e+37
      %v1883 = vand.u32 %v1546, 2147483648
      %v1884 = vor.u32 1.1754944e-38, %v1883
      %v1885 = vsel %vm1882, %v1884, %v1880
      %v1886 = vmul.f32 1.0, %v1885
      %v1887 = vrcp.pop %v1547
      %v1888 = vmul.f32 %v1547, %v1887
      %v1889 = vsub.f32 1.0, %v1888
      %v1890 = vmul.f32 %v1887, %v1889
      %v1891 = vadd.f32 %v1887, %v1890
      %vm1892 = vweird.f32 %v1547
      %vm1893 = vweird.f32 %v1887
      %vm1894 = vmor %vm1892, %vm1893
      %v1895 = vsel %vm1894, %v1887, %v1891
      %v1896 = vand.u32 2147483647, %v1547
      %vm1897 = vcmp.eq.f32.partialorder %v1896, 8.507059e+37
      %v1898 = vand.u32 %v1547, 2147483648
      %v1899 = vor.u32 1.1754944e-38, %v1898
      %v1900 = vsel %vm1897, %v1899, %v1895
      %v1901 = vmul.f32 1.0, %v1900
      %v1902 = vrcp.pop %v1548
      %v1903 = vmul.f32 %v1548, %v1902
      %v1904 = vsub.f32 1.0, %v1903
      %v1905 = vmul.f32 %v1902, %v1904
      %v1906 = vadd.f32 %v1902, %v1905
      %vm1907 = vweird.f32 %v1548
      %vm1908 = vweird.f32 %v1902
      %vm1909 = vmor %vm1907, %vm1908
      %v1910 = vsel %vm1909, %v1902, %v1906
      %v1911 = vand.u32 2147483647, %v1548
      %vm1912 = vcmp.eq.f32.partialorder %v1911, 8.507059e+37
      %v1913 = vand.u32 %v1548, 2147483648
      %v1914 = vor.u32 1.1754944e-38, %v1913
      %v1915 = vsel %vm1912, %v1914, %v1910
      %v1916 = vmul.f32 1.0, %v1915
      %v1917 = vrcp.pop %v1549
      %v1918 = vmul.f32 %v1549, %v1917
      %v1919 = vsub.f32 1.0, %v1918
      %v1920 = vmul.f32 %v1917, %v1919
      %v1921 = vadd.f32 %v1917, %v1920
      %vm1922 = vweird.f32 %v1549
      %vm1923 = vweird.f32 %v1917
      %vm1924 = vmor %vm1922, %vm1923
      %v1925 = vsel %vm1924, %v1917, %v1921
      %v1926 = vand.u32 2147483647, %v1549
      %vm1927 = vcmp.eq.f32.partialorder %v1926, 8.507059e+37
      %v1928 = vand.u32 %v1549, 2147483648
      %v1929 = vor.u32 1.1754944e-38, %v1928
      %v1930 = vsel %vm1927, %v1929, %v1925
      %v1931 = vmul.f32 1.0, %v1930
      %v1932 = vrcp.pop %v1550
      %v1933 = vmul.f32 %v1550, %v1932
      %v1934 = vsub.f32 1.0, %v1933
      %v1935 = vmul.f32 %v1932, %v1934
      %v1936 = vadd.f32 %v1932, %v1935
      %vm1937 = vweird.f32 %v1550
      %vm1938 = vweird.f32 %v1932
      %vm1939 = vmor %vm1937, %vm1938
      %v1940 = vsel %vm1939, %v1932, %v1936
      %v1941 = vand.u32 2147483647, %v1550
      %vm1942 = vcmp.eq.f32.partialorder %v1941, 8.507059e+37
      %v1943 = vand.u32 %v1550, 2147483648
      %v1944 = vor.u32 1.1754944e-38, %v1943
      %v1945 = vsel %vm1942, %v1944, %v1940
      %v1946 = vmul.f32 1.0, %v1945
      %v1947 = vrcp.pop %v1551
      %v1948 = vmul.f32 %v1551, %v1947
      %v1949 = vsub.f32 1.0, %v1948
      %v1950 = vmul.f32 %v1947, %v1949
      %v1951 = vadd.f32 %v1947, %v1950
      %vm1952 = vweird.f32 %v1551
      %vm1953 = vweird.f32 %v1947
      %vm1954 = vmor %vm1952, %vm1953
      %v1955 = vsel %vm1954, %v1947, %v1951
      %v1956 = vand.u32 2147483647, %v1551
      %vm1957 = vcmp.eq.f32.partialorder %v1956, 8.507059e+37
      %v1958 = vand.u32 %v1551, 2147483648
      %v1959 = vor.u32 1.1754944e-38, %v1958
      %v1960 = vsel %vm1957, %v1959, %v1955
      %v1961 = vmul.f32 1.0, %v1960
      %v1962 = vrcp.pop %v1552
      %v1963 = vmul.f32 %v1552, %v1962
      %v1964 = vsub.f32 1.0, %v1963
      %v1965 = vmul.f32 %v1962, %v1964
      %v1966 = vadd.f32 %v1962, %v1965
      %vm1967 = vweird.f32 %v1552
      %vm1968 = vweird.f32 %v1962
      %vm1969 = vmor %vm1967, %vm1968
      %v1970 = vsel %vm1969, %v1962, %v1966
      %v1971 = vand.u32 2147483647, %v1552
      %vm1972 = vcmp.eq.f32.partialorder %v1971, 8.507059e+37
      %v1973 = vand.u32 %v1552, 2147483648
      %v1974 = vor.u32 1.1754944e-38, %v1973
      %v1975 = vsel %vm1972, %v1974, %v1970
      %v1976 = vmul.f32 1.0, %v1975
      %v1977 = vrcp.pop %v1553
      %v1978 = vmul.f32 %v1553, %v1977
      %v1979 = vsub.f32 1.0, %v1978
      %v1980 = vmul.f32 %v1977, %v1979
      %v1981 = vadd.f32 %v1977, %v1980
      %vm1982 = vweird.f32 %v1553
      %vm1983 = vweird.f32 %v1977
      %vm1984 = vmor %vm1982, %vm1983
      %v1985 = vsel %vm1984, %v1977, %v1981
      %v1986 = vand.u32 2147483647, %v1553
      %vm1987 = vcmp.eq.f32.partialorder %v1986, 8.507059e+37
      %v1988 = vand.u32 %v1553, 2147483648
      %v1989 = vor.u32 1.1754944e-38, %v1988
      %v1990 = vsel %vm1987, %v1989, %v1985
      %v1991 = vmul.f32 1.0, %v1990
      %v1992 = vrcp.pop %v1554
      %v1993 = vmul.f32 %v1554, %v1992
      %v1994 = vsub.f32 1.0, %v1993
      %v1995 = vmul.f32 %v1992, %v1994
      %v1996 = vadd.f32 %v1992, %v1995
      %vm1997 = vweird.f32 %v1554
      %vm1998 = vweird.f32 %v1992
      %vm1999 = vmor %vm1997, %vm1998
      %v2000 = vsel %vm1999, %v1992, %v1996
      %v2001 = vand.u32 2147483647, %v1554
      %vm2002 = vcmp.eq.f32.partialorder %v2001, 8.507059e+37
      %v2003 = vand.u32 %v1554, 2147483648
      %v2004 = vor.u32 1.1754944e-38, %v2003
      %v2005 = vsel %vm2002, %v2004, %v2000
      %v2006 = vmul.f32 1.0, %v2005
      %v2007 = vrcp.pop %v1555
      %v2008 = vmul.f32 %v1555, %v2007
      %v2009 = vsub.f32 1.0, %v2008
      %v2010 = vmul.f32 %v2007, %v2009
      %v2011 = vadd.f32 %v2007, %v2010
      %vm2012 = vweird.f32 %v1555
      %vm2013 = vweird.f32 %v2007
      %vm2014 = vmor %vm2012, %vm2013
      %v2015 = vsel %vm2014, %v2007, %v2011
      %v2016 = vand.u32 2147483647, %v1555
      %vm2017 = vcmp.eq.f32.partialorder %v2016, 8.507059e+37
      %v2018 = vand.u32 %v1555, 2147483648
      %v2019 = vor.u32 1.1754944e-38, %v2018
      %v2020 = vsel %vm2017, %v2019, %v2015
      %v2021 = vmul.f32 1.0, %v2020
      %v2022 = vrcp.pop %v1556
      %v2023 = vmul.f32 %v1556, %v2022
      %v2024 = vsub.f32 1.0, %v2023
      %v2025 = vmul.f32 %v2022, %v2024
      %v2026 = vadd.f32 %v2022, %v2025
      %vm2027 = vweird.f32 %v1556
      %vm2028 = vweird.f32 %v2022
      %vm2029 = vmor %vm2027, %vm2028
      %v2030 = vsel %vm2029, %v2022, %v2026
      %v2031 = vand.u32 2147483647, %v1556
      %vm2032 = vcmp.eq.f32.partialorder %v2031, 8.507059e+37
      %v2033 = vand.u32 %v1556, 2147483648
      %v2034 = vor.u32 1.1754944e-38, %v2033
      %v2035 = vsel %vm2032, %v2034, %v2030
      %v2036 = vmul.f32 1.0, %v2035
      %v2037 = vld [vmem:[%s5] sm:$0xff]
      %v2038 = vld [vmem:[%s5 + $0x8] sm:$0xff]
      %v2039 = vld [vmem:[%s5 + $0x10] sm:$0xff]
      %v2040 = vld [vmem:[%s5 + $0x18] sm:$0xff]
      %v2041 = vld [vmem:[%s5 + $0x20] sm:$0xff]
      %v2042 = vld [vmem:[%s5 + $0x28] sm:$0x1f]
      %v2043 = vld [vmem:[%s6] sm:$0x1]
      %v2045 = vperm.slane %v2043, 0
      %v2048 = vsel %vm578, %v2042, 0
      %2050 = vmatpush.msra.mxu0 0.0
      %2051 = vmatpush.msra.mxu0 0.0
      %2052 = vmatpush.msra.mxu0 0.0
      %2053 = vmatpush.msra.mxu0 0.0
      %2054 = vmatpush.msra.mxu0 0.0
      %2055 = vmatpush.msra.mxu0 0.0
      %2056 = vmatpush.msra.mxu0 0.0
      %2057 = vmatpush.msra.mxu0 0.0
      %2058 = vmatpush.msra.mxu0 0.0
      %2059 = vmatpush.msra.mxu0 0.0
      %2060 = vmatpush.msra.mxu0 %v2048
      %2061 = vmatpush.msra.mxu0 %v2041
      %2062 = vmatpush.msra.mxu0 %v2040
      %2063 = vmatpush.msra.mxu0 %v2039
      %2064 = vmatpush.msra.mxu0 %v2038
      %2065 = vmatpush.msra.mxu0 %v2037
      %2066 = vmatmul.f32.gmra.mxu0 %v483
      %v2067 = vpop.f32.mrf.mxu0
      %v2068 = vadd.f32 %v2045, %v2067
      %2069 = vmatmul.f32.gmra.mxu0 %v486
      %v2070 = vpop.f32.mrf.mxu0
      %v2071 = vadd.f32 %v2045, %v2070
      %2072 = vmatmul.f32.gmra.mxu0 %v489
      %v2073 = vpop.f32.mrf.mxu0
      %v2074 = vadd.f32 %v2045, %v2073
      %2075 = vmatmul.f32.gmra.mxu0 %v492
      %v2076 = vpop.f32.mrf.mxu0
      %v2077 = vadd.f32 %v2045, %v2076
      %2078 = vmatmul.f32.gmra.mxu0 %v495
      %v2079 = vpop.f32.mrf.mxu0
      %v2080 = vadd.f32 %v2045, %v2079
      %2081 = vmatmul.f32.gmra.mxu0 %v498
      %v2082 = vpop.f32.mrf.mxu0
      %v2083 = vadd.f32 %v2045, %v2082
      %2084 = vmatmul.f32.gmra.mxu0 %v501
      %v2085 = vpop.f32.mrf.mxu0
      %v2086 = vadd.f32 %v2045, %v2085
      %2087 = vmatmul.f32.gmra.mxu0 %v504
      %v2088 = vpop.f32.mrf.mxu0
      %v2089 = vadd.f32 %v2045, %v2088
      %2090 = vmatmul.f32.gmra.mxu0 %v507
      %v2091 = vpop.f32.mrf.mxu0
      %v2092 = vadd.f32 %v2045, %v2091
      %2093 = vmatmul.f32.gmra.mxu0 %v510
      %v2094 = vpop.f32.mrf.mxu0
      %v2095 = vadd.f32 %v2045, %v2094
      %2096 = vmatmul.f32.gmra.mxu0 %v513
      %v2097 = vpop.f32.mrf.mxu0
      %v2098 = vadd.f32 %v2045, %v2097
      %2099 = vmatmul.f32.gmra.mxu0 %v516
      %v2100 = vpop.f32.mrf.mxu0
      %v2101 = vadd.f32 %v2045, %v2100
      %2102 = vmatmul.f32.gmra.mxu0 %v519
      %v2103 = vpop.f32.mrf.mxu0
      %v2104 = vadd.f32 %v2045, %v2103
      %2105 = vmatmul.f32.gmra.mxu0 %v522
      %v2106 = vpop.f32.mrf.mxu0
      %v2107 = vadd.f32 %v2045, %v2106
      %2108 = vmatmul.f32.gmra.mxu0 %v525
      %v2109 = vpop.f32.mrf.mxu0
      %v2110 = vadd.f32 %v2045, %v2109
      %2111 = vmatmul.f32.gmra.mxu0 %v528
      %v2112 = vpop.f32.mrf.mxu0
      %v2113 = vadd.f32 %v2045, %v2112
      %2114 = vmatmul.f32.gmra.mxu0 %v531
      %v2115 = vpop.f32.mrf.mxu0
      %v2116 = vadd.f32 %v2045, %v2115
      %2117 = vmatmul.f32.gmra.mxu0 %v534
      %v2118 = vpop.f32.mrf.mxu0
      %v2119 = vadd.f32 %v2045, %v2118
      %2120 = vmatmul.f32.gmra.mxu0 %v537
      %v2121 = vpop.f32.mrf.mxu0
      %v2122 = vadd.f32 %v2045, %v2121
      %2123 = vmatmul.f32.gmra.mxu0 %v540
      %v2124 = vpop.f32.mrf.mxu0
      %v2125 = vadd.f32 %v2045, %v2124
      %2126 = vmatmul.f32.gmra.mxu0 %v543
      %v2127 = vpop.f32.mrf.mxu0
      %v2128 = vadd.f32 %v2045, %v2127
      %2129 = vmatmul.f32.gmra.mxu0 %v546
      %v2130 = vpop.f32.mrf.mxu0
      %v2131 = vadd.f32 %v2045, %v2130
      %2132 = vmatmul.f32.gmra.mxu0 %v549
      %v2133 = vpop.f32.mrf.mxu0
      %v2134 = vadd.f32 %v2045, %v2133
      %2135 = vmatmul.f32.gmra.mxu0 %v552
      %v2136 = vpop.f32.mrf.mxu0
      %v2137 = vadd.f32 %v2045, %v2136
      %2138 = vmatmul.f32.gmra.mxu0 %v555
      %v2139 = vpop.f32.mrf.mxu0
      %v2140 = vadd.f32 %v2045, %v2139
      %2141 = vmatmul.f32.gmra.mxu0 %v558
      %v2142 = vpop.f32.mrf.mxu0
      %v2143 = vadd.f32 %v2045, %v2142
      %2144 = vmatmul.f32.gmra.mxu0 %v561
      %v2145 = vpop.f32.mrf.mxu0
      %v2146 = vadd.f32 %v2045, %v2145
      %2147 = vmatmul.f32.gmra.mxu0 %v564
      %v2148 = vpop.f32.mrf.mxu0
      %v2149 = vadd.f32 %v2045, %v2148
      %2150 = vmatmul.f32.gmra.mxu0 %v567
      %v2151 = vpop.f32.mrf.mxu0
      %v2152 = vadd.f32 %v2045, %v2151
      %2153 = vmatmul.f32.gmra.mxu0 %v570
      %v2154 = vpop.f32.mrf.mxu0
      %v2155 = vadd.f32 %v2045, %v2154
      %2156 = vmatmul.f32.gmra.mxu0 %v573
      %v2157 = vpop.f32.mrf.mxu0
      %v2158 = vadd.f32 %v2045, %v2157
      %2159 = vmatmul.f32.gmra.mxu0 %v576
      %v2160 = vpop.f32.mrf.mxu0
      %v2161 = vadd.f32 %v2045, %v2160
      %2162 = vdwg.mxu0
      %vm2163 = vcmask 31744
      %2164 = vst.msk [vmem:[#allocation2] sm:$0xff] %vm2163, 0.0
      %2165 = vst.msk [vmem:[#allocation2 + $0x8] sm:$0xff] %vm2163, 0.0
      %vm2166 = vcmask 25600
      %2167 = vst.msk [vmem:[#allocation2 + $0x10] sm:$0x3] %vm2166, 0.0
      %2168 = vst.msk [vmem:[#allocation2 + $0x18] sm:$0xff] %vm2163, 0.0
      %2169 = vst.msk [vmem:[#allocation2 + $0x20] sm:$0xff] %vm2163, 0.0
      %2170 = vst.msk [vmem:[#allocation2 + $0x28] sm:$0x3] %vm2166, 0.0
      %2171 = vst.msk [vmem:[#allocation2 + $0x30] sm:$0xff] %vm2163, 0.0
      %2172 = vst.msk [vmem:[#allocation2 + $0x38] sm:$0xff] %vm2163, 0.0
      %2173 = vst.msk [vmem:[#allocation2 + $0x40] sm:$0x3] %vm2166, 0.0
      %2174 = vst.msk [vmem:[#allocation2 + $0x48] sm:$0xff] %vm2163, 0.0
      %2175 = vst.msk [vmem:[#allocation2 + $0x50] sm:$0xff] %vm2163, 0.0
      %2176 = vst.msk [vmem:[#allocation2 + $0x58] sm:$0x3] %vm2166, 0.0
      %2177 = vst.msk [vmem:[#allocation2 + $0x60] sm:$0xff] %vm2163, 0.0
      %2178 = vst.msk [vmem:[#allocation2 + $0x68] sm:$0xff] %vm2163, 0.0
      %2179 = vst.msk [vmem:[#allocation2 + $0x70] sm:$0x3] %vm2166, 0.0
      %2180 = vst.msk [vmem:[#allocation2 + $0x78] sm:$0xff] %vm2163, 0.0
      %2181 = vst.msk [vmem:[#allocation2 + $0x80] sm:$0xff] %vm2163, 0.0
      %2182 = vst.msk [vmem:[#allocation2 + $0x88] sm:$0x3] %vm2166, 0.0
      %2183 = vst.msk [vmem:[#allocation2 + $0x90] sm:$0xff] %vm2163, 0.0
      %2184 = vst.msk [vmem:[#allocation2 + $0x98] sm:$0xff] %vm2163, 0.0
      %2185 = vst.msk [vmem:[#allocation2 + $0xa0] sm:$0x3] %vm2166, 0.0
      %2186 = vst.msk [vmem:[#allocation2 + $0xa8] sm:$0xff] %vm2163, 0.0
      %2187 = vst.msk [vmem:[#allocation2 + $0xb0] sm:$0xff] %vm2163, 0.0
      %2188 = vst.msk [vmem:[#allocation2 + $0xb8] sm:$0x3] %vm2166, 0.0
      %2189 = vst.msk [vmem:[#allocation2 + $0xc0] sm:$0xff] %vm2163, 0.0
      %2190 = vst.msk [vmem:[#allocation2 + $0xc8] sm:$0xff] %vm2163, 0.0
      %2191 = vst.msk [vmem:[#allocation2 + $0xd0] sm:$0x3] %vm2166, 0.0
      %2192 = vst.msk [vmem:[#allocation2 + $0xd8] sm:$0xff] %vm2163, 0.0
      %2193 = vst.msk [vmem:[#allocation2 + $0xe0] sm:$0xff] %vm2163, 0.0
      %2194 = vst.msk [vmem:[#allocation2 + $0xe8] sm:$0x3] %vm2166, 0.0
      %2195 = vst.msk [vmem:[#allocation2 + $0xf0] sm:$0xff] %vm2163, 0.0
      %2196 = vst.msk [vmem:[#allocation2 + $0xf8] sm:$0xff] %vm2163, 0.0
      %2197 = vst.msk [vmem:[#allocation2 + $0x100] sm:$0x3] %vm2166, 0.0
      %2198 = vst.msk [vmem:[#allocation2 + $0x108] sm:$0xff] %vm2163, 0.0
      %2199 = vst.msk [vmem:[#allocation2 + $0x110] sm:$0xff] %vm2163, 0.0
      %2200 = vst.msk [vmem:[#allocation2 + $0x118] sm:$0x3] %vm2166, 0.0
      %2201 = vst.msk [vmem:[#allocation2 + $0x120] sm:$0xff] %vm2163, 0.0
      %2202 = vst.msk [vmem:[#allocation2 + $0x128] sm:$0xff] %vm2163, 0.0
      %2203 = vst.msk [vmem:[#allocation2 + $0x130] sm:$0x3] %vm2166, 0.0
      %2204 = vst.msk [vmem:[#allocation2 + $0x138] sm:$0xff] %vm2163, 0.0
      %2205 = vst.msk [vmem:[#allocation2 + $0x140] sm:$0xff] %vm2163, 0.0
      %2206 = vst.msk [vmem:[#allocation2 + $0x148] sm:$0x3] %vm2166, 0.0
      %2207 = vst.msk [vmem:[#allocation2 + $0x150] sm:$0xff] %vm2163, 0.0
      %2208 = vst.msk [vmem:[#allocation2 + $0x158] sm:$0xff] %vm2163, 0.0
      %2209 = vst.msk [vmem:[#allocation2 + $0x160] sm:$0x3] %vm2166, 0.0
      %2210 = vst.msk [vmem:[#allocation2 + $0x168] sm:$0xff] %vm2163, 0.0
      %2211 = vst.msk [vmem:[#allocation2 + $0x170] sm:$0xff] %vm2163, 0.0
      %2212 = vst.msk [vmem:[#allocation2 + $0x178] sm:$0x3] %vm2166, 0.0
      %2213 = vst.msk [vmem:[#allocation2 + $0x180] sm:$0xff] %vm2163, 0.0
      %2214 = vst.msk [vmem:[#allocation2 + $0x188] sm:$0xff] %vm2163, 0.0
      %2215 = vst.msk [vmem:[#allocation2 + $0x190] sm:$0x3] %vm2166, 0.0
      %2216 = vst.msk [vmem:[#allocation2 + $0x198] sm:$0xff] %vm2163, 0.0
      %2217 = vst.msk [vmem:[#allocation2 + $0x1a0] sm:$0xff] %vm2163, 0.0
      %2218 = vst.msk [vmem:[#allocation2 + $0x1a8] sm:$0x3] %vm2166, 0.0
      %v2219 = vmul.f32 %v837, %v439
      %v2220 = vmul.f32 %v852, %v440
      %v2221 = vmul.f32 %v867, %v441
      %v2222 = vmul.f32 %v882, %v442
      %v2223 = vmul.f32 %v897, %v443
      %v2224 = vmul.f32 %v912, %v444
      %v2225 = vmul.f32 %v927, %v445
      %v2226 = vmul.f32 %v942, %v446
      %v2227 = vmul.f32 %v957, %v447
      %v2228 = vmul.f32 %v972, %v448
      %v2229 = vmul.f32 %v987, %v449
      %v2230 = vmul.f32 %v1002, %v450
      %v2231 = vmul.f32 %v1017, %v451
      %v2232 = vmul.f32 %v1032, %v452
      %v2233 = vmul.f32 %v1047, %v453
      %v2234 = vmul.f32 %v1062, %v454
      %v2235 = vmul.f32 %v1077, %v455
      %v2236 = vmul.f32 %v1092, %v456
      %v2237 = vmul.f32 %v1107, %v457
      %v2238 = vmul.f32 %v1122, %v458
      %v2239 = vmul.f32 %v1137, %v459
      %v2240 = vmul.f32 %v1152, %v460
      %v2241 = vmul.f32 %v1167, %v461
      %v2242 = vmul.f32 %v1182, %v462
      %v2243 = vmul.f32 %v1197, %v463
      %v2244 = vmul.f32 %v1212, %v464
      %v2245 = vmul.f32 %v1227, %v465
      %v2246 = vmul.f32 %v1242, %v466
      %v2247 = vmul.f32 %v1257, %v467
      %v2248 = vmul.f32 %v1272, %v468
      %v2249 = vmul.f32 %v1287, %v469
      %v2250 = vmul.f32 %v1302, %v470
      %s2251 = scalar_lea.vmem [#allocation2], 24
      %2252 = vst.msk [vmem:[%s2251 + $0x1] sm:$0xff] %vm2163, %v2219
      %2253 = vst.msk [vmem:[%s2251 + $0x9] sm:$0xff] %vm2163, %v2220
      %2254 = vst.msk [vmem:[%s2251 + $0x19] sm:$0xff] %vm2163, %v2221
      %2255 = vst.msk [vmem:[%s2251 + $0x21] sm:$0xff] %vm2163, %v2222
      %2256 = vst.msk [vmem:[%s2251 + $0x31] sm:$0xff] %vm2163, %v2223
      %2257 = vst.msk [vmem:[%s2251 + $0x39] sm:$0xff] %vm2163, %v2224
      %2258 = vst.msk [vmem:[%s2251 + $0x49] sm:$0xff] %vm2163, %v2225
      %2259 = vst.msk [vmem:[%s2251 + $0x51] sm:$0xff] %vm2163, %v2226
      %2260 = vst.msk [vmem:[%s2251 + $0x61] sm:$0xff] %vm2163, %v2227
      %2261 = vst.msk [vmem:[%s2251 + $0x69] sm:$0xff] %vm2163, %v2228
      %2262 = vst.msk [vmem:[%s2251 + $0x79] sm:$0xff] %vm2163, %v2229
      %2263 = vst.msk [vmem:[%s2251 + $0x81] sm:$0xff] %vm2163, %v2230
      %2264 = vst.msk [vmem:[%s2251 + $0x91] sm:$0xff] %vm2163, %v2231
      %2265 = vst.msk [vmem:[%s2251 + $0x99] sm:$0xff] %vm2163, %v2232
      %2266 = vst.msk [vmem:[%s2251 + $0xa9] sm:$0xff] %vm2163, %v2233
      %2267 = vst.msk [vmem:[%s2251 + $0xb1] sm:$0xff] %vm2163, %v2234
      %2268 = vst.msk [vmem:[%s2251 + $0xc1] sm:$0xff] %vm2163, %v2235
      %2269 = vst.msk [vmem:[%s2251 + $0xc9] sm:$0xff] %vm2163, %v2236
      %2270 = vst.msk [vmem:[%s2251 + $0xd9] sm:$0xff] %vm2163, %v2237
      %2271 = vst.msk [vmem:[%s2251 + $0xe1] sm:$0xff] %vm2163, %v2238
      %2272 = vst.msk [vmem:[%s2251 + $0xf1] sm:$0xff] %vm2163, %v2239
      %2273 = vst.msk [vmem:[%s2251 + $0xf9] sm:$0xff] %vm2163, %v2240
      %2274 = vst.msk [vmem:[%s2251 + $0x109] sm:$0xff] %vm2163, %v2241
      %2275 = vst.msk [vmem:[%s2251 + $0x111] sm:$0xff] %vm2163, %v2242
      %2276 = vst.msk [vmem:[%s2251 + $0x121] sm:$0xff] %vm2163, %v2243
      %2277 = vst.msk [vmem:[%s2251 + $0x129] sm:$0xff] %vm2163, %v2244
      %2278 = vst.msk [vmem:[%s2251 + $0x139] sm:$0xff] %vm2163, %v2245
      %2279 = vst.msk [vmem:[%s2251 + $0x141] sm:$0xff] %vm2163, %v2246
      %2280 = vst.msk [vmem:[%s2251 + $0x151] sm:$0xff] %vm2163, %v2247
      %2281 = vst.msk [vmem:[%s2251 + $0x159] sm:$0xff] %vm2163, %v2248
      %2282 = vst.msk [vmem:[%s2251 + $0x169] sm:$0xff] %vm2163, %v2249
      %2283 = vst.msk [vmem:[%s2251 + $0x171] sm:$0xff] %vm2163, %v2250
      %v2284 = vld [vmem:[#allocation2] sm:$0xff]
      %v2285 = vld [vmem:[#allocation2 + $0x8] sm:$0xff]
      %v2286 = vld [vmem:[#allocation2 + $0x18] sm:$0xff]
      %v2287 = vld [vmem:[#allocation2 + $0x20] sm:$0xff]
      %v2288 = vld [vmem:[#allocation2 + $0x30] sm:$0xff]
      %v2289 = vld [vmem:[#allocation2 + $0x38] sm:$0xff]
      %v2290 = vld [vmem:[#allocation2 + $0x48] sm:$0xff]
      %v2291 = vld [vmem:[#allocation2 + $0x50] sm:$0xff]
      %v2292 = vld [vmem:[#allocation2 + $0x60] sm:$0xff]
      %v2293 = vld [vmem:[#allocation2 + $0x68] sm:$0xff]
      %v2294 = vld [vmem:[#allocation2 + $0x78] sm:$0xff]
      %v2295 = vld [vmem:[#allocation2 + $0x80] sm:$0xff]
      %v2296 = vld [vmem:[#allocation2 + $0x90] sm:$0xff]
      %v2297 = vld [vmem:[#allocation2 + $0x98] sm:$0xff]
      %v2298 = vld [vmem:[#allocation2 + $0xa8] sm:$0xff]
      %v2299 = vld [vmem:[#allocation2 + $0xb0] sm:$0xff]
      %v2300 = vld [vmem:[#allocation2 + $0xc0] sm:$0xff]
      %v2301 = vld [vmem:[#allocation2 + $0xc8] sm:$0xff]
      %v2302 = vld [vmem:[#allocation2 + $0xd8] sm:$0xff]
      %v2303 = vld [vmem:[#allocation2 + $0xe0] sm:$0xff]
      %v2304 = vld [vmem:[#allocation2 + $0xf0] sm:$0xff]
      %v2305 = vld [vmem:[#allocation2 + $0xf8] sm:$0xff]
      %v2306 = vld [vmem:[#allocation2 + $0x108] sm:$0xff]
      %v2307 = vld [vmem:[#allocation2 + $0x110] sm:$0xff]
      %v2308 = vld [vmem:[#allocation2 + $0x120] sm:$0xff]
      %v2309 = vld [vmem:[#allocation2 + $0x128] sm:$0xff]
      %v2310 = vld [vmem:[#allocation2 + $0x138] sm:$0xff]
      %v2311 = vld [vmem:[#allocation2 + $0x140] sm:$0xff]
      %v2312 = vld [vmem:[#allocation2 + $0x150] sm:$0xff]
      %v2313 = vld [vmem:[#allocation2 + $0x158] sm:$0xff]
      %v2314 = vld [vmem:[#allocation2 + $0x168] sm:$0xff]
      %v2315 = vld [vmem:[#allocation2 + $0x170] sm:$0xff]
      %v2316 = vld [vmem:[%s4] sm:$0xf]
      %v2317 = vld [vmem:[#allocation2 + $0x1] sm:$0xff]
      %v2318 = vld [vmem:[#allocation2 + $0x9] sm:$0xff]
      %v2319 = vld [vmem:[#allocation2 + $0x19] sm:$0xff]
      %v2320 = vld [vmem:[#allocation2 + $0x21] sm:$0xff]
      %v2321 = vld [vmem:[#allocation2 + $0x31] sm:$0xff]
      %v2322 = vld [vmem:[#allocation2 + $0x39] sm:$0xff]
      %v2323 = vld [vmem:[#allocation2 + $0x49] sm:$0xff]
      %v2324 = vld [vmem:[#allocation2 + $0x51] sm:$0xff]
      %v2325 = vld [vmem:[#allocation2 + $0x61] sm:$0xff]
      %v2326 = vld [vmem:[#allocation2 + $0x69] sm:$0xff]
      %v2327 = vld [vmem:[#allocation2 + $0x79] sm:$0xff]
      %v2328 = vld [vmem:[#allocation2 + $0x81] sm:$0xff]
      %v2329 = vld [vmem:[#allocation2 + $0x91] sm:$0xff]
      %v2330 = vld [vmem:[#allocation2 + $0x99] sm:$0xff]
      %v2331 = vld [vmem:[#allocation2 + $0xa9] sm:$0xff]
      %v2332 = vld [vmem:[#allocation2 + $0xb1] sm:$0xff]
      %v2333 = vld [vmem:[#allocation2 + $0xc1] sm:$0xff]
      %v2334 = vld [vmem:[#allocation2 + $0xc9] sm:$0xff]
      %v2335 = vld [vmem:[#allocation2 + $0xd9] sm:$0xff]
      %v2336 = vld [vmem:[#allocation2 + $0xe1] sm:$0xff]
      %v2337 = vld [vmem:[#allocation2 + $0xf1] sm:$0xff]
      %v2338 = vld [vmem:[#allocation2 + $0xf9] sm:$0xff]
      %v2339 = vld [vmem:[#allocation2 + $0x109] sm:$0xff]
      %v2340 = vld [vmem:[#allocation2 + $0x111] sm:$0xff]
      %v2341 = vld [vmem:[#allocation2 + $0x121] sm:$0xff]
      %v2342 = vld [vmem:[#allocation2 + $0x129] sm:$0xff]
      %v2343 = vld [vmem:[#allocation2 + $0x139] sm:$0xff]
      %v2344 = vld [vmem:[#allocation2 + $0x141] sm:$0xff]
      %v2345 = vld [vmem:[#allocation2 + $0x151] sm:$0xff]
      %v2346 = vld [vmem:[#allocation2 + $0x159] sm:$0xff]
      %v2347 = vld [vmem:[#allocation2 + $0x169] sm:$0xff]
      %v2348 = vld [vmem:[#allocation2 + $0x171] sm:$0xff]
      %s2349 = scalar_lea.vmem %s4, 4
      %v2350 = vld [vmem:[%s2349] sm:$0xf]
      %v2352 = vsel %vm2163, %v2317, 0
      %v2355 = vsel %vm2163, %v2318, 0
      %v2358 = vsel %vm2163, %v2319, 0
      %v2361 = vsel %vm2163, %v2320, 0
      %v2364 = vsel %vm2163, %v2321, 0
      %v2367 = vsel %vm2163, %v2322, 0
      %v2370 = vsel %vm2163, %v2323, 0
      %v2373 = vsel %vm2163, %v2324, 0
      %v2376 = vsel %vm2163, %v2325, 0
      %v2379 = vsel %vm2163, %v2326, 0
      %v2382 = vsel %vm2163, %v2327, 0
      %v2385 = vsel %vm2163, %v2328, 0
      %v2388 = vsel %vm2163, %v2329, 0
      %v2391 = vsel %vm2163, %v2330, 0
      %v2394 = vsel %vm2163, %v2331, 0
      %v2397 = vsel %vm2163, %v2332, 0
      %v2400 = vsel %vm2163, %v2333, 0
      %v2403 = vsel %vm2163, %v2334, 0
      %v2406 = vsel %vm2163, %v2335, 0
      %v2409 = vsel %vm2163, %v2336, 0
      %v2412 = vsel %vm2163, %v2337, 0
      %v2415 = vsel %vm2163, %v2338, 0
      %v2418 = vsel %vm2163, %v2339, 0
      %v2421 = vsel %vm2163, %v2340, 0
      %v2424 = vsel %vm2163, %v2341, 0
      %v2427 = vsel %vm2163, %v2342, 0
      %v2430 = vsel %vm2163, %v2343, 0
      %v2433 = vsel %vm2163, %v2344, 0
      %v2436 = vsel %vm2163, %v2345, 0
      %v2439 = vsel %vm2163, %v2346, 0
      %v2442 = vsel %vm2163, %v2347, 0
      %v2445 = vsel %vm2163, %v2348, 0
      %vm2447 = vcmask 1043456
      %v2449 = vsel %vm2447, %v2350, 0
      %2451 = vmatpush.msra.mxu0 0.0
      %2452 = vmatpush.msra.mxu0 0.0
      %2453 = vmatpush.msra.mxu0 0.0
      %2454 = vmatpush.msra.mxu0 0.0
      %2455 = vmatpush.msra.mxu0 0.0
      %2456 = vmatpush.msra.mxu0 0.0
      %2457 = vmatpush.msra.mxu0 0.0
      %2458 = vmatpush.msra.mxu0 0.0
      %2459 = vmatpush.msra.mxu0 0.0
      %2460 = vmatpush.msra.mxu0 0.0
      %2461 = vmatpush.msra.mxu0 0.0
      %2462 = vmatpush.msra.mxu0 0.0
      %2463 = vmatpush.msra.mxu0 0.0
      %2464 = vmatpush.msra.mxu0 0.0
      %2465 = vmatpush.msra.mxu0 0.0
      %2466 = vmatpush.msra.mxu0 %v2449
      %2467 = vmatmul.f32.gmra.mxu0 %v2352
      %v2468 = vpop.f32.mrf.mxu0
      %v2469 = vadd.f32 0.0, %v2468
      %2470 = vmatmul.f32.gmra.mxu0 %v2355
      %v2471 = vpop.f32.mrf.mxu0
      %v2472 = vadd.f32 0.0, %v2471
      %2473 = vmatmul.f32.gmra.mxu0 %v2358
      %v2474 = vpop.f32.mrf.mxu0
      %v2475 = vadd.f32 0.0, %v2474
      %2476 = vmatmul.f32.gmra.mxu0 %v2361
      %v2477 = vpop.f32.mrf.mxu0
      %v2478 = vadd.f32 0.0, %v2477
      %2479 = vmatmul.f32.gmra.mxu0 %v2364
      %v2480 = vpop.f32.mrf.mxu0
      %v2481 = vadd.f32 0.0, %v2480
      %2482 = vmatmul.f32.gmra.mxu0 %v2367
      %v2483 = vpop.f32.mrf.mxu0
      %v2484 = vadd.f32 0.0, %v2483
      %2485 = vmatmul.f32.gmra.mxu0 %v2370
      %v2486 = vpop.f32.mrf.mxu0
      %v2487 = vadd.f32 0.0, %v2486
      %2488 = vmatmul.f32.gmra.mxu0 %v2373
      %v2489 = vpop.f32.mrf.mxu0
      %v2490 = vadd.f32 0.0, %v2489
      %2491 = vmatmul.f32.gmra.mxu0 %v2376
      %v2492 = vpop.f32.mrf.mxu0
      %v2493 = vadd.f32 0.0, %v2492
      %2494 = vmatmul.f32.gmra.mxu0 %v2379
      %v2495 = vpop.f32.mrf.mxu0
      %v2496 = vadd.f32 0.0, %v2495
      %2497 = vmatmul.f32.gmra.mxu0 %v2382
      %v2498 = vpop.f32.mrf.mxu0
      %v2499 = vadd.f32 0.0, %v2498
      %2500 = vmatmul.f32.gmra.mxu0 %v2385
      %v2501 = vpop.f32.mrf.mxu0
      %v2502 = vadd.f32 0.0, %v2501
      %2503 = vmatmul.f32.gmra.mxu0 %v2388
      %v2504 = vpop.f32.mrf.mxu0
      %v2505 = vadd.f32 0.0, %v2504
      %2506 = vmatmul.f32.gmra.mxu0 %v2391
      %v2507 = vpop.f32.mrf.mxu0
      %v2508 = vadd.f32 0.0, %v2507
      %2509 = vmatmul.f32.gmra.mxu0 %v2394
      %v2510 = vpop.f32.mrf.mxu0
      %v2511 = vadd.f32 0.0, %v2510
      %2512 = vmatmul.f32.gmra.mxu0 %v2397
      %v2513 = vpop.f32.mrf.mxu0
      %v2514 = vadd.f32 0.0, %v2513
      %2515 = vmatmul.f32.gmra.mxu0 %v2400
      %v2516 = vpop.f32.mrf.mxu0
      %v2517 = vadd.f32 0.0, %v2516
      %2518 = vmatmul.f32.gmra.mxu0 %v2403
      %v2519 = vpop.f32.mrf.mxu0
      %v2520 = vadd.f32 0.0, %v2519
      %2521 = vmatmul.f32.gmra.mxu0 %v2406
      %v2522 = vpop.f32.mrf.mxu0
      %v2523 = vadd.f32 0.0, %v2522
      %2524 = vmatmul.f32.gmra.mxu0 %v2409
      %v2525 = vpop.f32.mrf.mxu0
      %v2526 = vadd.f32 0.0, %v2525
      %2527 = vmatmul.f32.gmra.mxu0 %v2412
      %v2528 = vpop.f32.mrf.mxu0
      %v2529 = vadd.f32 0.0, %v2528
      %2530 = vmatmul.f32.gmra.mxu0 %v2415
      %v2531 = vpop.f32.mrf.mxu0
      %v2532 = vadd.f32 0.0, %v2531
      %2533 = vmatmul.f32.gmra.mxu0 %v2418
      %v2534 = vpop.f32.mrf.mxu0
      %v2535 = vadd.f32 0.0, %v2534
      %2536 = vmatmul.f32.gmra.mxu0 %v2421
      %v2537 = vpop.f32.mrf.mxu0
      %v2538 = vadd.f32 0.0, %v2537
      %2539 = vmatmul.f32.gmra.mxu0 %v2424
      %v2540 = vpop.f32.mrf.mxu0
      %v2541 = vadd.f32 0.0, %v2540
      %2542 = vmatmul.f32.gmra.mxu0 %v2427
      %v2543 = vpop.f32.mrf.mxu0
      %v2544 = vadd.f32 0.0, %v2543
      %2545 = vmatmul.f32.gmra.mxu0 %v2430
      %v2546 = vpop.f32.mrf.mxu0
      %v2547 = vadd.f32 0.0, %v2546
      %2548 = vmatmul.f32.gmra.mxu0 %v2433
      %v2549 = vpop.f32.mrf.mxu0
      %v2550 = vadd.f32 0.0, %v2549
      %2551 = vmatmul.f32.gmra.mxu0 %v2436
      %v2552 = vpop.f32.mrf.mxu0
      %v2553 = vadd.f32 0.0, %v2552
      %2554 = vmatmul.f32.gmra.mxu0 %v2439
      %v2555 = vpop.f32.mrf.mxu0
      %v2556 = vadd.f32 0.0, %v2555
      %2557 = vmatmul.f32.gmra.mxu0 %v2442
      %v2558 = vpop.f32.mrf.mxu0
      %v2559 = vadd.f32 0.0, %v2558
      %2560 = vmatmul.f32.gmra.mxu0 %v2445
      %v2561 = vpop.f32.mrf.mxu0
      %v2562 = vadd.f32 0.0, %v2561
      %2563 = vdwg.mxu0
      %v2565 = vsel %vm2163, %v2284, 0
      %v2568 = vsel %vm2163, %v2285, 0
      %v2571 = vsel %vm2163, %v2286, 0
      %v2574 = vsel %vm2163, %v2287, 0
      %v2577 = vsel %vm2163, %v2288, 0
      %v2580 = vsel %vm2163, %v2289, 0
      %v2583 = vsel %vm2163, %v2290, 0
      %v2586 = vsel %vm2163, %v2291, 0
      %v2589 = vsel %vm2163, %v2292, 0
      %v2592 = vsel %vm2163, %v2293, 0
      %v2595 = vsel %vm2163, %v2294, 0
      %v2598 = vsel %vm2163, %v2295, 0
      %v2601 = vsel %vm2163, %v2296, 0
      %v2604 = vsel %vm2163, %v2297, 0
      %v2607 = vsel %vm2163, %v2298, 0
      %v2610 = vsel %vm2163, %v2299, 0
      %v2613 = vsel %vm2163, %v2300, 0
      %v2616 = vsel %vm2163, %v2301, 0
      %v2619 = vsel %vm2163, %v2302, 0
      %v2622 = vsel %vm2163, %v2303, 0
      %v2625 = vsel %vm2163, %v2304, 0
      %v2628 = vsel %vm2163, %v2305, 0
      %v2631 = vsel %vm2163, %v2306, 0
      %v2634 = vsel %vm2163, %v2307, 0
      %v2637 = vsel %vm2163, %v2308, 0
      %v2640 = vsel %vm2163, %v2309, 0
      %v2643 = vsel %vm2163, %v2310, 0
      %v2646 = vsel %vm2163, %v2311, 0
      %v2649 = vsel %vm2163, %v2312, 0
      %v2652 = vsel %vm2163, %v2313, 0
      %v2655 = vsel %vm2163, %v2314, 0
      %v2658 = vsel %vm2163, %v2315, 0
      %v2661 = vsel %vm2447, %v2316, 0
      %2663 = vmatpush.msra.mxu0 0.0
      %2664 = vmatpush.msra.mxu0 0.0
      %2665 = vmatpush.msra.mxu0 0.0
      %2666 = vmatpush.msra.mxu0 0.0
      %2667 = vmatpush.msra.mxu0 0.0
      %2668 = vmatpush.msra.mxu0 0.0
      %2669 = vmatpush.msra.mxu0 0.0
      %2670 = vmatpush.msra.mxu0 0.0
      %2671 = vmatpush.msra.mxu0 0.0
      %2672 = vmatpush.msra.mxu0 0.0
      %2673 = vmatpush.msra.mxu0 0.0
      %2674 = vmatpush.msra.mxu0 0.0
      %2675 = vmatpush.msra.mxu0 0.0
      %2676 = vmatpush.msra.mxu0 0.0
      %2677 = vmatpush.msra.mxu0 0.0
      %2678 = vmatpush.msra.mxu0 %v2661
      %2679 = vmatmul.f32.gmra.mxu0 %v2565
      %v2680 = vpop.f32.mrf.mxu0
      %v2681 = vadd.f32 %v2469, %v2680
      %2682 = vmatmul.f32.gmra.mxu0 %v2568
      %v2683 = vpop.f32.mrf.mxu0
      %v2684 = vadd.f32 %v2472, %v2683
      %2685 = vmatmul.f32.gmra.mxu0 %v2571
      %v2686 = vpop.f32.mrf.mxu0
      %v2687 = vadd.f32 %v2475, %v2686
      %2688 = vmatmul.f32.gmra.mxu0 %v2574
      %v2689 = vpop.f32.mrf.mxu0
      %v2690 = vadd.f32 %v2478, %v2689
      %2691 = vmatmul.f32.gmra.mxu0 %v2577
      %v2692 = vpop.f32.mrf.mxu0
      %v2693 = vadd.f32 %v2481, %v2692
      %2694 = vmatmul.f32.gmra.mxu0 %v2580
      %v2695 = vpop.f32.mrf.mxu0
      %v2696 = vadd.f32 %v2484, %v2695
      %2697 = vmatmul.f32.gmra.mxu0 %v2583
      %v2698 = vpop.f32.mrf.mxu0
      %v2699 = vadd.f32 %v2487, %v2698
      %2700 = vmatmul.f32.gmra.mxu0 %v2586
      %v2701 = vpop.f32.mrf.mxu0
      %v2702 = vadd.f32 %v2490, %v2701
      %2703 = vmatmul.f32.gmra.mxu0 %v2589
      %v2704 = vpop.f32.mrf.mxu0
      %v2705 = vadd.f32 %v2493, %v2704
      %2706 = vmatmul.f32.gmra.mxu0 %v2592
      %v2707 = vpop.f32.mrf.mxu0
      %v2708 = vadd.f32 %v2496, %v2707
      %2709 = vmatmul.f32.gmra.mxu0 %v2595
      %v2710 = vpop.f32.mrf.mxu0
      %v2711 = vadd.f32 %v2499, %v2710
      %2712 = vmatmul.f32.gmra.mxu0 %v2598
      %v2713 = vpop.f32.mrf.mxu0
      %v2714 = vadd.f32 %v2502, %v2713
      %2715 = vmatmul.f32.gmra.mxu0 %v2601
      %v2716 = vpop.f32.mrf.mxu0
      %v2717 = vadd.f32 %v2505, %v2716
      %2718 = vmatmul.f32.gmra.mxu0 %v2604
      %v2719 = vpop.f32.mrf.mxu0
      %v2720 = vadd.f32 %v2508, %v2719
      %2721 = vmatmul.f32.gmra.mxu0 %v2607
      %v2722 = vpop.f32.mrf.mxu0
      %v2723 = vadd.f32 %v2511, %v2722
      %2724 = vmatmul.f32.gmra.mxu0 %v2610
      %v2725 = vpop.f32.mrf.mxu0
      %v2726 = vadd.f32 %v2514, %v2725
      %2727 = vmatmul.f32.gmra.mxu0 %v2613
      %v2728 = vpop.f32.mrf.mxu0
      %v2729 = vadd.f32 %v2517, %v2728
      %2730 = vmatmul.f32.gmra.mxu0 %v2616
      %v2731 = vpop.f32.mrf.mxu0
      %v2732 = vadd.f32 %v2520, %v2731
      %2733 = vmatmul.f32.gmra.mxu0 %v2619
      %v2734 = vpop.f32.mrf.mxu0
      %v2735 = vadd.f32 %v2523, %v2734
      %2736 = vmatmul.f32.gmra.mxu0 %v2622
      %v2737 = vpop.f32.mrf.mxu0
      %v2738 = vadd.f32 %v2526, %v2737
      %2739 = vmatmul.f32.gmra.mxu0 %v2625
      %v2740 = vpop.f32.mrf.mxu0
      %v2741 = vadd.f32 %v2529, %v2740
      %2742 = vmatmul.f32.gmra.mxu0 %v2628
      %v2743 = vpop.f32.mrf.mxu0
      %v2744 = vadd.f32 %v2532, %v2743
      %2745 = vmatmul.f32.gmra.mxu0 %v2631
      %v2746 = vpop.f32.mrf.mxu0
      %v2747 = vadd.f32 %v2535, %v2746
      %2748 = vmatmul.f32.gmra.mxu0 %v2634
      %v2749 = vpop.f32.mrf.mxu0
      %v2750 = vadd.f32 %v2538, %v2749
      %2751 = vmatmul.f32.gmra.mxu0 %v2637
      %v2752 = vpop.f32.mrf.mxu0
      %v2753 = vadd.f32 %v2541, %v2752
      %2754 = vmatmul.f32.gmra.mxu0 %v2640
      %v2755 = vpop.f32.mrf.mxu0
      %v2756 = vadd.f32 %v2544, %v2755
      %2757 = vmatmul.f32.gmra.mxu0 %v2643
      %v2758 = vpop.f32.mrf.mxu0
      %v2759 = vadd.f32 %v2547, %v2758
      %2760 = vmatmul.f32.gmra.mxu0 %v2646
      %v2761 = vpop.f32.mrf.mxu0
      %v2762 = vadd.f32 %v2550, %v2761
      %2763 = vmatmul.f32.gmra.mxu0 %v2649
      %v2764 = vpop.f32.mrf.mxu0
      %v2765 = vadd.f32 %v2553, %v2764
      %2766 = vmatmul.f32.gmra.mxu0 %v2652
      %v2767 = vpop.f32.mrf.mxu0
      %v2768 = vadd.f32 %v2556, %v2767
      %2769 = vmatmul.f32.gmra.mxu0 %v2655
      %v2770 = vpop.f32.mrf.mxu0
      %v2771 = vadd.f32 %v2559, %v2770
      %2772 = vmatmul.f32.gmra.mxu0 %v2658
      %v2773 = vpop.f32.mrf.mxu0
      %v2774 = vadd.f32 %v2562, %v2773
      %2775 = vdwg.mxu0
      %v2776 = vld [vmem:[#allocation2 + $0x2] sm:$0xff]
      %v2777 = vld [vmem:[#allocation2 + $0xa] sm:$0xff]
      %v2778 = vld [vmem:[#allocation2 + $0x1a] sm:$0xff]
      %v2779 = vld [vmem:[#allocation2 + $0x22] sm:$0xff]
      %v2780 = vld [vmem:[#allocation2 + $0x32] sm:$0xff]
      %v2781 = vld [vmem:[#allocation2 + $0x3a] sm:$0xff]
      %v2782 = vld [vmem:[#allocation2 + $0x4a] sm:$0xff]
      %v2783 = vld [vmem:[#allocation2 + $0x52] sm:$0xff]
      %v2784 = vld [vmem:[#allocation2 + $0x62] sm:$0xff]
      %v2785 = vld [vmem:[#allocation2 + $0x6a] sm:$0xff]
      %v2786 = vld [vmem:[#allocation2 + $0x7a] sm:$0xff]
      %v2787 = vld [vmem:[#allocation2 + $0x82] sm:$0xff]
      %v2788 = vld [vmem:[#allocation2 + $0x92] sm:$0xff]
      %v2789 = vld [vmem:[#allocation2 + $0x9a] sm:$0xff]
      %v2790 = vld [vmem:[#allocation2 + $0xaa] sm:$0xff]
      %v2791 = vld [vmem:[#allocation2 + $0xb2] sm:$0xff]
      %v2792 = vld [vmem:[#allocation2 + $0xc2] sm:$0xff]
      %v2793 = vld [vmem:[#allocation2 + $0xca] sm:$0xff]
      %v2794 = vld [vmem:[#allocation2 + $0xda] sm:$0xff]
      %v2795 = vld [vmem:[#allocation2 + $0xe2] sm:$0xff]
      %v2796 = vld [vmem:[#allocation2 + $0xf2] sm:$0xff]
      %v2797 = vld [vmem:[#allocation2 + $0xfa] sm:$0xff]
      %v2798 = vld [vmem:[#allocation2 + $0x10a] sm:$0xff]
      %v2799 = vld [vmem:[#allocation2 + $0x112] sm:$0xff]
      %v2800 = vld [vmem:[#allocation2 + $0x122] sm:$0xff]
      %v2801 = vld [vmem:[#allocation2 + $0x12a] sm:$0xff]
      %v2802 = vld [vmem:[#allocation2 + $0x13a] sm:$0xff]
      %v2803 = vld [vmem:[#allocation2 + $0x142] sm:$0xff]
      %v2804 = vld [vmem:[#allocation2 + $0x152] sm:$0xff]
      %v2805 = vld [vmem:[#allocation2 + $0x15a] sm:$0xff]
      %v2806 = vld [vmem:[#allocation2 + $0x16a] sm:$0xff]
      %v2807 = vld [vmem:[#allocation2 + $0x172] sm:$0xff]
      %s2808 = scalar_lea.vmem %s4, 8
      %v2809 = vld [vmem:[%s2808] sm:$0xf]
      %v2811 = vsel %vm2163, %v2776, 0
      %v2814 = vsel %vm2163, %v2777, 0
      %v2817 = vsel %vm2163, %v2778, 0
      %v2820 = vsel %vm2163, %v2779, 0
      %v2823 = vsel %vm2163, %v2780, 0
      %v2826 = vsel %vm2163, %v2781, 0
      %v2829 = vsel %vm2163, %v2782, 0
      %v2832 = vsel %vm2163, %v2783, 0
      %v2835 = vsel %vm2163, %v2784, 0
      %v2838 = vsel %vm2163, %v2785, 0
      %v2841 = vsel %vm2163, %v2786, 0
      %v2844 = vsel %vm2163, %v2787, 0
      %v2847 = vsel %vm2163, %v2788, 0
      %v2850 = vsel %vm2163, %v2789, 0
      %v2853 = vsel %vm2163, %v2790, 0
      %v2856 = vsel %vm2163, %v2791, 0
      %v2859 = vsel %vm2163, %v2792, 0
      %v2862 = vsel %vm2163, %v2793, 0
      %v2865 = vsel %vm2163, %v2794, 0
      %v2868 = vsel %vm2163, %v2795, 0
      %v2871 = vsel %vm2163, %v2796, 0
      %v2874 = vsel %vm2163, %v2797, 0
      %v2877 = vsel %vm2163, %v2798, 0
      %v2880 = vsel %vm2163, %v2799, 0
      %v2883 = vsel %vm2163, %v2800, 0
      %v2886 = vsel %vm2163, %v2801, 0
      %v2889 = vsel %vm2163, %v2802, 0
      %v2892 = vsel %vm2163, %v2803, 0
      %v2895 = vsel %vm2163, %v2804, 0
      %v2898 = vsel %vm2163, %v2805, 0
      %v2901 = vsel %vm2163, %v2806, 0
      %v2904 = vsel %vm2163, %v2807, 0
      %v2907 = vsel %vm2447, %v2809, 0
      %2909 = vmatpush.msra.mxu0 0.0
      %2910 = vmatpush.msra.mxu0 0.0
      %2911 = vmatpush.msra.mxu0 0.0
      %2912 = vmatpush.msra.mxu0 0.0
      %2913 = vmatpush.msra.mxu0 0.0
      %2914 = vmatpush.msra.mxu0 0.0
      %2915 = vmatpush.msra.mxu0 0.0
      %2916 = vmatpush.msra.mxu0 0.0
      %2917 = vmatpush.msra.mxu0 0.0
      %2918 = vmatpush.msra.mxu0 0.0
      %2919 = vmatpush.msra.mxu0 0.0
      %2920 = vmatpush.msra.mxu0 0.0
      %2921 = vmatpush.msra.mxu0 0.0
      %2922 = vmatpush.msra.mxu0 0.0
      %2923 = vmatpush.msra.mxu0 0.0
      %2924 = vmatpush.msra.mxu0 %v2907
      %2925 = vmatmul.f32.gmra.mxu0 %v2811
      %v2926 = vpop.f32.mrf.mxu0
      %v2927 = vadd.f32 0.0, %v2926
      %2928 = vmatmul.f32.gmra.mxu0 %v2814
      %v2929 = vpop.f32.mrf.mxu0
      %v2930 = vadd.f32 0.0, %v2929
      %2931 = vmatmul.f32.gmra.mxu0 %v2817
      %v2932 = vpop.f32.mrf.mxu0
      %v2933 = vadd.f32 0.0, %v2932
      %2934 = vmatmul.f32.gmra.mxu0 %v2820
      %v2935 = vpop.f32.mrf.mxu0
      %v2936 = vadd.f32 0.0, %v2935
      %2937 = vmatmul.f32.gmra.mxu0 %v2823
      %v2938 = vpop.f32.mrf.mxu0
      %v2939 = vadd.f32 0.0, %v2938
      %2940 = vmatmul.f32.gmra.mxu0 %v2826
      %v2941 = vpop.f32.mrf.mxu0
      %v2942 = vadd.f32 0.0, %v2941
      %2943 = vmatmul.f32.gmra.mxu0 %v2829
      %v2944 = vpop.f32.mrf.mxu0
      %v2945 = vadd.f32 0.0, %v2944
      %2946 = vmatmul.f32.gmra.mxu0 %v2832
      %v2947 = vpop.f32.mrf.mxu0
      %v2948 = vadd.f32 0.0, %v2947
      %2949 = vmatmul.f32.gmra.mxu0 %v2835
      %v2950 = vpop.f32.mrf.mxu0
      %v2951 = vadd.f32 0.0, %v2950
      %2952 = vmatmul.f32.gmra.mxu0 %v2838
      %v2953 = vpop.f32.mrf.mxu0
      %v2954 = vadd.f32 0.0, %v2953
      %2955 = vmatmul.f32.gmra.mxu0 %v2841
      %v2956 = vpop.f32.mrf.mxu0
      %v2957 = vadd.f32 0.0, %v2956
      %2958 = vmatmul.f32.gmra.mxu0 %v2844
      %v2959 = vpop.f32.mrf.mxu0
      %v2960 = vadd.f32 0.0, %v2959
      %2961 = vmatmul.f32.gmra.mxu0 %v2847
      %v2962 = vpop.f32.mrf.mxu0
      %v2963 = vadd.f32 0.0, %v2962
      %2964 = vmatmul.f32.gmra.mxu0 %v2850
      %v2965 = vpop.f32.mrf.mxu0
      %v2966 = vadd.f32 0.0, %v2965
      %2967 = vmatmul.f32.gmra.mxu0 %v2853
      %v2968 = vpop.f32.mrf.mxu0
      %v2969 = vadd.f32 0.0, %v2968
      %2970 = vmatmul.f32.gmra.mxu0 %v2856
      %v2971 = vpop.f32.mrf.mxu0
      %v2972 = vadd.f32 0.0, %v2971
      %2973 = vmatmul.f32.gmra.mxu0 %v2859
      %v2974 = vpop.f32.mrf.mxu0
      %v2975 = vadd.f32 0.0, %v2974
      %2976 = vmatmul.f32.gmra.mxu0 %v2862
      %v2977 = vpop.f32.mrf.mxu0
      %v2978 = vadd.f32 0.0, %v2977
      %2979 = vmatmul.f32.gmra.mxu0 %v2865
      %v2980 = vpop.f32.mrf.mxu0
      %v2981 = vadd.f32 0.0, %v2980
      %2982 = vmatmul.f32.gmra.mxu0 %v2868
      %v2983 = vpop.f32.mrf.mxu0
      %v2984 = vadd.f32 0.0, %v2983
      %2985 = vmatmul.f32.gmra.mxu0 %v2871
      %v2986 = vpop.f32.mrf.mxu0
      %v2987 = vadd.f32 0.0, %v2986
      %2988 = vmatmul.f32.gmra.mxu0 %v2874
      %v2989 = vpop.f32.mrf.mxu0
      %v2990 = vadd.f32 0.0, %v2989
      %2991 = vmatmul.f32.gmra.mxu0 %v2877
      %v2992 = vpop.f32.mrf.mxu0
      %v2993 = vadd.f32 0.0, %v2992
      %2994 = vmatmul.f32.gmra.mxu0 %v2880
      %v2995 = vpop.f32.mrf.mxu0
      %v2996 = vadd.f32 0.0, %v2995
      %2997 = vmatmul.f32.gmra.mxu0 %v2883
      %v2998 = vpop.f32.mrf.mxu0
      %v2999 = vadd.f32 0.0, %v2998
      %3000 = vmatmul.f32.gmra.mxu0 %v2886
      %v3001 = vpop.f32.mrf.mxu0
      %v3002 = vadd.f32 0.0, %v3001
      %3003 = vmatmul.f32.gmra.mxu0 %v2889
      %v3004 = vpop.f32.mrf.mxu0
      %v3005 = vadd.f32 0.0, %v3004
      %3006 = vmatmul.f32.gmra.mxu0 %v2892
      %v3007 = vpop.f32.mrf.mxu0
      %v3008 = vadd.f32 0.0, %v3007
      %3009 = vmatmul.f32.gmra.mxu0 %v2895
      %v3010 = vpop.f32.mrf.mxu0
      %v3011 = vadd.f32 0.0, %v3010
      %3012 = vmatmul.f32.gmra.mxu0 %v2898
      %v3013 = vpop.f32.mrf.mxu0
      %v3014 = vadd.f32 0.0, %v3013
      %3015 = vmatmul.f32.gmra.mxu0 %v2901
      %v3016 = vpop.f32.mrf.mxu0
      %v3017 = vadd.f32 0.0, %v3016
      %3018 = vmatmul.f32.gmra.mxu0 %v2904
      %v3019 = vpop.f32.mrf.mxu0
      %v3020 = vadd.f32 0.0, %v3019
      %3021 = vdwg.mxu0
      %v3022 = vadd.f32 %v2681, %v2927
      %v3023 = vadd.f32 %v2684, %v2930
      %v3024 = vadd.f32 %v2687, %v2933
      %v3025 = vadd.f32 %v2690, %v2936
      %v3026 = vadd.f32 %v2693, %v2939
      %v3027 = vadd.f32 %v2696, %v2942
      %v3028 = vadd.f32 %v2699, %v2945
      %v3029 = vadd.f32 %v2702, %v2948
      %v3030 = vadd.f32 %v2705, %v2951
      %v3031 = vadd.f32 %v2708, %v2954
      %v3032 = vadd.f32 %v2711, %v2957
      %v3033 = vadd.f32 %v2714, %v2960
      %v3034 = vadd.f32 %v2717, %v2963
      %v3035 = vadd.f32 %v2720, %v2966
      %v3036 = vadd.f32 %v2723, %v2969
      %v3037 = vadd.f32 %v2726, %v2972
      %v3038 = vadd.f32 %v2729, %v2975
      %v3039 = vadd.f32 %v2732, %v2978
      %v3040 = vadd.f32 %v2735, %v2981
      %v3041 = vadd.f32 %v2738, %v2984
      %v3042 = vadd.f32 %v2741, %v2987
      %v3043 = vadd.f32 %v2744, %v2990
      %v3044 = vadd.f32 %v2747, %v2993
      %v3045 = vadd.f32 %v2750, %v2996
      %v3046 = vadd.f32 %v2753, %v2999
      %v3047 = vadd.f32 %v2756, %v3002
      %v3048 = vadd.f32 %v2759, %v3005
      %v3049 = vadd.f32 %v2762, %v3008
      %v3050 = vadd.f32 %v2765, %v3011
      %v3051 = vadd.f32 %v2768, %v3014
      %v3052 = vadd.f32 %v2771, %v3017
      %v3053 = vadd.f32 %v2774, %v3020
      %v3054 = vld [vmem:[%s2251] sm:$0xff]
      %v3055 = vld [vmem:[%s2251 + $0x8] sm:$0xff]
      %v3056 = vld [vmem:[%s2251 + $0x18] sm:$0xff]
      %v3057 = vld [vmem:[%s2251 + $0x20] sm:$0xff]
      %v3058 = vld [vmem:[%s2251 + $0x30] sm:$0xff]
      %v3059 = vld [vmem:[%s2251 + $0x38] sm:$0xff]
      %v3060 = vld [vmem:[%s2251 + $0x48] sm:$0xff]
      %v3061 = vld [vmem:[%s2251 + $0x50] sm:$0xff]
      %v3062 = vld [vmem:[%s2251 + $0x60] sm:$0xff]
      %v3063 = vld [vmem:[%s2251 + $0x68] sm:$0xff]
      %v3064 = vld [vmem:[%s2251 + $0x78] sm:$0xff]
      %v3065 = vld [vmem:[%s2251 + $0x80] sm:$0xff]
      %v3066 = vld [vmem:[%s2251 + $0x90] sm:$0xff]
      %v3067 = vld [vmem:[%s2251 + $0x98] sm:$0xff]
      %v3068 = vld [vmem:[%s2251 + $0xa8] sm:$0xff]
      %v3069 = vld [vmem:[%s2251 + $0xb0] sm:$0xff]
      %v3070 = vld [vmem:[%s2251 + $0xc0] sm:$0xff]
      %v3071 = vld [vmem:[%s2251 + $0xc8] sm:$0xff]
      %v3072 = vld [vmem:[%s2251 + $0xd8] sm:$0xff]
      %v3073 = vld [vmem:[%s2251 + $0xe0] sm:$0xff]
      %v3074 = vld [vmem:[%s2251 + $0xf0] sm:$0xff]
      %v3075 = vld [vmem:[%s2251 + $0xf8] sm:$0xff]
      %v3076 = vld [vmem:[%s2251 + $0x108] sm:$0xff]
      %v3077 = vld [vmem:[%s2251 + $0x110] sm:$0xff]
      %v3078 = vld [vmem:[%s2251 + $0x120] sm:$0xff]
      %v3079 = vld [vmem:[%s2251 + $0x128] sm:$0xff]
      %v3080 = vld [vmem:[%s2251 + $0x138] sm:$0xff]
      %v3081 = vld [vmem:[%s2251 + $0x140] sm:$0xff]
      %v3082 = vld [vmem:[%s2251 + $0x150] sm:$0xff]
      %v3083 = vld [vmem:[%s2251 + $0x158] sm:$0xff]
      %v3084 = vld [vmem:[%s2251 + $0x168] sm:$0xff]
      %v3085 = vld [vmem:[%s2251 + $0x170] sm:$0xff]
      %s3086 = scalar_lea.vmem %s4, 12
      %v3087 = vld [vmem:[%s3086] sm:$0xf]
      %v3089 = vsel %vm2163, %v3054, 0
      %v3092 = vsel %vm2163, %v3055, 0
      %v3095 = vsel %vm2163, %v3056, 0
      %v3098 = vsel %vm2163, %v3057, 0
      %v3101 = vsel %vm2163, %v3058, 0
      %v3104 = vsel %vm2163, %v3059, 0
      %v3107 = vsel %vm2163, %v3060, 0
      %v3110 = vsel %vm2163, %v3061, 0
      %v3113 = vsel %vm2163, %v3062, 0
      %v3116 = vsel %vm2163, %v3063, 0
      %v3119 = vsel %vm2163, %v3064, 0
      %v3122 = vsel %vm2163, %v3065, 0
      %v3125 = vsel %vm2163, %v3066, 0
      %v3128 = vsel %vm2163, %v3067, 0
      %v3131 = vsel %vm2163, %v3068, 0
      %v3134 = vsel %vm2163, %v3069, 0
      %v3137 = vsel %vm2163, %v3070, 0
      %v3140 = vsel %vm2163, %v3071, 0
      %v3143 = vsel %vm2163, %v3072, 0
      %v3146 = vsel %vm2163, %v3073, 0
      %v3149 = vsel %vm2163, %v3074, 0
      %v3152 = vsel %vm2163, %v3075, 0
      %v3155 = vsel %vm2163, %v3076, 0
      %v3158 = vsel %vm2163, %v3077, 0
      %v3161 = vsel %vm2163, %v3078, 0
      %v3164 = vsel %vm2163, %v3079, 0
      %v3167 = vsel %vm2163, %v3080, 0
      %v3170 = vsel %vm2163, %v3081, 0
      %v3173 = vsel %vm2163, %v3082, 0
      %v3176 = vsel %vm2163, %v3083, 0
      %v3179 = vsel %vm2163, %v3084, 0
      %v3182 = vsel %vm2163, %v3085, 0
      %v3185 = vsel %vm2447, %v3087, 0
      %3187 = vmatpush.msra.mxu0 0.0
      %3188 = vmatpush.msra.mxu0 0.0
      %3189 = vmatpush.msra.mxu0 0.0
      %3190 = vmatpush.msra.mxu0 0.0
      %3191 = vmatpush.msra.mxu0 0.0
      %3192 = vmatpush.msra.mxu0 0.0
      %3193 = vmatpush.msra.mxu0 0.0
      %3194 = vmatpush.msra.mxu0 0.0
      %3195 = vmatpush.msra.mxu0 0.0
      %3196 = vmatpush.msra.mxu0 0.0
      %3197 = vmatpush.msra.mxu0 0.0
      %3198 = vmatpush.msra.mxu0 0.0
      %3199 = vmatpush.msra.mxu0 0.0
      %3200 = vmatpush.msra.mxu0 0.0
      %3201 = vmatpush.msra.mxu0 0.0
      %3202 = vmatpush.msra.mxu0 %v3185
      %3203 = vmatmul.f32.gmra.mxu0 %v3089
      %v3204 = vpop.f32.mrf.mxu0
      %v3205 = vadd.f32 0.0, %v3204
      %3206 = vmatmul.f32.gmra.mxu0 %v3092
      %v3207 = vpop.f32.mrf.mxu0
      %v3208 = vadd.f32 0.0, %v3207
      %3209 = vmatmul.f32.gmra.mxu0 %v3095
      %v3210 = vpop.f32.mrf.mxu0
      %v3211 = vadd.f32 0.0, %v3210
      %3212 = vmatmul.f32.gmra.mxu0 %v3098
      %v3213 = vpop.f32.mrf.mxu0
      %v3214 = vadd.f32 0.0, %v3213
      %3215 = vmatmul.f32.gmra.mxu0 %v3101
      %v3216 = vpop.f32.mrf.mxu0
      %v3217 = vadd.f32 0.0, %v3216
      %3218 = vmatmul.f32.gmra.mxu0 %v3104
      %v3219 = vpop.f32.mrf.mxu0
      %v3220 = vadd.f32 0.0, %v3219
      %3221 = vmatmul.f32.gmra.mxu0 %v3107
      %v3222 = vpop.f32.mrf.mxu0
      %v3223 = vadd.f32 0.0, %v3222
      %3224 = vmatmul.f32.gmra.mxu0 %v3110
      %v3225 = vpop.f32.mrf.mxu0
      %v3226 = vadd.f32 0.0, %v3225
      %3227 = vmatmul.f32.gmra.mxu0 %v3113
      %v3228 = vpop.f32.mrf.mxu0
      %v3229 = vadd.f32 0.0, %v3228
      %3230 = vmatmul.f32.gmra.mxu0 %v3116
      %v3231 = vpop.f32.mrf.mxu0
      %v3232 = vadd.f32 0.0, %v3231
      %3233 = vmatmul.f32.gmra.mxu0 %v3119
      %v3234 = vpop.f32.mrf.mxu0
      %v3235 = vadd.f32 0.0, %v3234
      %3236 = vmatmul.f32.gmra.mxu0 %v3122
      %v3237 = vpop.f32.mrf.mxu0
      %v3238 = vadd.f32 0.0, %v3237
      %3239 = vmatmul.f32.gmra.mxu0 %v3125
      %v3240 = vpop.f32.mrf.mxu0
      %v3241 = vadd.f32 0.0, %v3240
      %3242 = vmatmul.f32.gmra.mxu0 %v3128
      %v3243 = vpop.f32.mrf.mxu0
      %v3244 = vadd.f32 0.0, %v3243
      %3245 = vmatmul.f32.gmra.mxu0 %v3131
      %v3246 = vpop.f32.mrf.mxu0
      %v3247 = vadd.f32 0.0, %v3246
      %3248 = vmatmul.f32.gmra.mxu0 %v3134
      %v3249 = vpop.f32.mrf.mxu0
      %v3250 = vadd.f32 0.0, %v3249
      %3251 = vmatmul.f32.gmra.mxu0 %v3137
      %v3252 = vpop.f32.mrf.mxu0
      %v3253 = vadd.f32 0.0, %v3252
      %3254 = vmatmul.f32.gmra.mxu0 %v3140
      %v3255 = vpop.f32.mrf.mxu0
      %v3256 = vadd.f32 0.0, %v3255
      %3257 = vmatmul.f32.gmra.mxu0 %v3143
      %v3258 = vpop.f32.mrf.mxu0
      %v3259 = vadd.f32 0.0, %v3258
      %3260 = vmatmul.f32.gmra.mxu0 %v3146
      %v3261 = vpop.f32.mrf.mxu0
      %v3262 = vadd.f32 0.0, %v3261
      %3263 = vmatmul.f32.gmra.mxu0 %v3149
      %v3264 = vpop.f32.mrf.mxu0
      %v3265 = vadd.f32 0.0, %v3264
      %3266 = vmatmul.f32.gmra.mxu0 %v3152
      %v3267 = vpop.f32.mrf.mxu0
      %v3268 = vadd.f32 0.0, %v3267
      %3269 = vmatmul.f32.gmra.mxu0 %v3155
      %v3270 = vpop.f32.mrf.mxu0
      %v3271 = vadd.f32 0.0, %v3270
      %3272 = vmatmul.f32.gmra.mxu0 %v3158
      %v3273 = vpop.f32.mrf.mxu0
      %v3274 = vadd.f32 0.0, %v3273
      %3275 = vmatmul.f32.gmra.mxu0 %v3161
      %v3276 = vpop.f32.mrf.mxu0
      %v3277 = vadd.f32 0.0, %v3276
      %3278 = vmatmul.f32.gmra.mxu0 %v3164
      %v3279 = vpop.f32.mrf.mxu0
      %v3280 = vadd.f32 0.0, %v3279
      %3281 = vmatmul.f32.gmra.mxu0 %v3167
      %v3282 = vpop.f32.mrf.mxu0
      %v3283 = vadd.f32 0.0, %v3282
      %3284 = vmatmul.f32.gmra.mxu0 %v3170
      %v3285 = vpop.f32.mrf.mxu0
      %v3286 = vadd.f32 0.0, %v3285
      %3287 = vmatmul.f32.gmra.mxu0 %v3173
      %v3288 = vpop.f32.mrf.mxu0
      %v3289 = vadd.f32 0.0, %v3288
      %3290 = vmatmul.f32.gmra.mxu0 %v3176
      %v3291 = vpop.f32.mrf.mxu0
      %v3292 = vadd.f32 0.0, %v3291
      %3293 = vmatmul.f32.gmra.mxu0 %v3179
      %v3294 = vpop.f32.mrf.mxu0
      %v3295 = vadd.f32 0.0, %v3294
      %3296 = vmatmul.f32.gmra.mxu0 %v3182
      %v3297 = vpop.f32.mrf.mxu0
      %v3298 = vadd.f32 0.0, %v3297
      %3299 = vdwg.mxu0
      %v3300 = vadd.f32 %v3022, %v3205
      %v3301 = vadd.f32 %v3023, %v3208
      %v3302 = vadd.f32 %v3024, %v3211
      %v3303 = vadd.f32 %v3025, %v3214
      %v3304 = vadd.f32 %v3026, %v3217
      %v3305 = vadd.f32 %v3027, %v3220
      %v3306 = vadd.f32 %v3028, %v3223
      %v3307 = vadd.f32 %v3029, %v3226
      %v3308 = vadd.f32 %v3030, %v3229
      %v3309 = vadd.f32 %v3031, %v3232
      %v3310 = vadd.f32 %v3032, %v3235
      %v3311 = vadd.f32 %v3033, %v3238
      %v3312 = vadd.f32 %v3034, %v3241
      %v3313 = vadd.f32 %v3035, %v3244
      %v3314 = vadd.f32 %v3036, %v3247
      %v3315 = vadd.f32 %v3037, %v3250
      %v3316 = vadd.f32 %v3038, %v3253
      %v3317 = vadd.f32 %v3039, %v3256
      %v3318 = vadd.f32 %v3040, %v3259
      %v3319 = vadd.f32 %v3041, %v3262
      %v3320 = vadd.f32 %v3042, %v3265
      %v3321 = vadd.f32 %v3043, %v3268
      %v3322 = vadd.f32 %v3044, %v3271
      %v3323 = vadd.f32 %v3045, %v3274
      %v3324 = vadd.f32 %v3046, %v3277
      %v3325 = vadd.f32 %v3047, %v3280
      %v3326 = vadd.f32 %v3048, %v3283
      %v3327 = vadd.f32 %v3049, %v3286
      %v3328 = vadd.f32 %v3050, %v3289
      %v3329 = vadd.f32 %v3051, %v3292
      %v3330 = vadd.f32 %v3052, %v3295
      %v3331 = vadd.f32 %v3053, %v3298
      %v3332 = vld [vmem:[%s2251 + $0x1] sm:$0xff]
      %v3333 = vld [vmem:[%s2251 + $0x9] sm:$0xff]
      %v3334 = vld [vmem:[%s2251 + $0x19] sm:$0xff]
      %v3335 = vld [vmem:[%s2251 + $0x21] sm:$0xff]
      %v3336 = vld [vmem:[%s2251 + $0x31] sm:$0xff]
      %v3337 = vld [vmem:[%s2251 + $0x39] sm:$0xff]
      %v3338 = vld [vmem:[%s2251 + $0x49] sm:$0xff]
      %v3339 = vld [vmem:[%s2251 + $0x51] sm:$0xff]
      %v3340 = vld [vmem:[%s2251 + $0x61] sm:$0xff]
      %v3341 = vld [vmem:[%s2251 + $0x69] sm:$0xff]
      %v3342 = vld [vmem:[%s2251 + $0x79] sm:$0xff]
      %v3343 = vld [vmem:[%s2251 + $0x81] sm:$0xff]
      %v3344 = vld [vmem:[%s2251 + $0x91] sm:$0xff]
      %v3345 = vld [vmem:[%s2251 + $0x99] sm:$0xff]
      %v3346 = vld [vmem:[%s2251 + $0xa9] sm:$0xff]
      %v3347 = vld [vmem:[%s2251 + $0xb1] sm:$0xff]
      %v3348 = vld [vmem:[%s2251 + $0xc1] sm:$0xff]
      %v3349 = vld [vmem:[%s2251 + $0xc9] sm:$0xff]
      %v3350 = vld [vmem:[%s2251 + $0xd9] sm:$0xff]
      %v3351 = vld [vmem:[%s2251 + $0xe1] sm:$0xff]
      %v3352 = vld [vmem:[%s2251 + $0xf1] sm:$0xff]
      %v3353 = vld [vmem:[%s2251 + $0xf9] sm:$0xff]
      %v3354 = vld [vmem:[%s2251 + $0x109] sm:$0xff]
      %v3355 = vld [vmem:[%s2251 + $0x111] sm:$0xff]
      %v3356 = vld [vmem:[%s2251 + $0x121] sm:$0xff]
      %v3357 = vld [vmem:[%s2251 + $0x129] sm:$0xff]
      %v3358 = vld [vmem:[%s2251 + $0x139] sm:$0xff]
      %v3359 = vld [vmem:[%s2251 + $0x141] sm:$0xff]
      %v3360 = vld [vmem:[%s2251 + $0x151] sm:$0xff]
      %v3361 = vld [vmem:[%s2251 + $0x159] sm:$0xff]
      %v3362 = vld [vmem:[%s2251 + $0x169] sm:$0xff]
      %v3363 = vld [vmem:[%s2251 + $0x171] sm:$0xff]
      %s3364 = scalar_lea.vmem %s4, 16
      %v3365 = vld [vmem:[%s3364] sm:$0xf]
      %v3367 = vsel %vm2163, %v3332, 0
      %v3370 = vsel %vm2163, %v3333, 0
      %v3373 = vsel %vm2163, %v3334, 0
      %v3376 = vsel %vm2163, %v3335, 0
      %v3379 = vsel %vm2163, %v3336, 0
      %v3382 = vsel %vm2163, %v3337, 0
      %v3385 = vsel %vm2163, %v3338, 0
      %v3388 = vsel %vm2163, %v3339, 0
      %v3391 = vsel %vm2163, %v3340, 0
      %v3394 = vsel %vm2163, %v3341, 0
      %v3397 = vsel %vm2163, %v3342, 0
      %v3400 = vsel %vm2163, %v3343, 0
      %v3403 = vsel %vm2163, %v3344, 0
      %v3406 = vsel %vm2163, %v3345, 0
      %v3409 = vsel %vm2163, %v3346, 0
      %v3412 = vsel %vm2163, %v3347, 0
      %v3415 = vsel %vm2163, %v3348, 0
      %v3418 = vsel %vm2163, %v3349, 0
      %v3421 = vsel %vm2163, %v3350, 0
      %v3424 = vsel %vm2163, %v3351, 0
      %v3427 = vsel %vm2163, %v3352, 0
      %v3430 = vsel %vm2163, %v3353, 0
      %v3433 = vsel %vm2163, %v3354, 0
      %v3436 = vsel %vm2163, %v3355, 0
      %v3439 = vsel %vm2163, %v3356, 0
      %v3442 = vsel %vm2163, %v3357, 0
      %v3445 = vsel %vm2163, %v3358, 0
      %v3448 = vsel %vm2163, %v3359, 0
      %v3451 = vsel %vm2163, %v3360, 0
      %v3454 = vsel %vm2163, %v3361, 0
      %v3457 = vsel %vm2163, %v3362, 0
      %v3460 = vsel %vm2163, %v3363, 0
      %v3463 = vsel %vm2447, %v3365, 0
      %3465 = vmatpush.msra.mxu0 0.0
      %3466 = vmatpush.msra.mxu0 0.0
      %3467 = vmatpush.msra.mxu0 0.0
      %3468 = vmatpush.msra.mxu0 0.0
      %3469 = vmatpush.msra.mxu0 0.0
      %3470 = vmatpush.msra.mxu0 0.0
      %3471 = vmatpush.msra.mxu0 0.0
      %3472 = vmatpush.msra.mxu0 0.0
      %3473 = vmatpush.msra.mxu0 0.0
      %3474 = vmatpush.msra.mxu0 0.0
      %3475 = vmatpush.msra.mxu0 0.0
      %3476 = vmatpush.msra.mxu0 0.0
      %3477 = vmatpush.msra.mxu0 0.0
      %3478 = vmatpush.msra.mxu0 0.0
      %3479 = vmatpush.msra.mxu0 0.0
      %3480 = vmatpush.msra.mxu0 %v3463
      %3481 = vmatmul.f32.gmra.mxu0 %v3367
      %v3482 = vpop.f32.mrf.mxu0
      %v3483 = vadd.f32 0.0, %v3482
      %3484 = vmatmul.f32.gmra.mxu0 %v3370
      %v3485 = vpop.f32.mrf.mxu0
      %v3486 = vadd.f32 0.0, %v3485
      %3487 = vmatmul.f32.gmra.mxu0 %v3373
      %v3488 = vpop.f32.mrf.mxu0
      %v3489 = vadd.f32 0.0, %v3488
      %3490 = vmatmul.f32.gmra.mxu0 %v3376
      %v3491 = vpop.f32.mrf.mxu0
      %v3492 = vadd.f32 0.0, %v3491
      %3493 = vmatmul.f32.gmra.mxu0 %v3379
      %v3494 = vpop.f32.mrf.mxu0
      %v3495 = vadd.f32 0.0, %v3494
      %3496 = vmatmul.f32.gmra.mxu0 %v3382
      %v3497 = vpop.f32.mrf.mxu0
      %v3498 = vadd.f32 0.0, %v3497
      %3499 = vmatmul.f32.gmra.mxu0 %v3385
      %v3500 = vpop.f32.mrf.mxu0
      %v3501 = vadd.f32 0.0, %v3500
      %3502 = vmatmul.f32.gmra.mxu0 %v3388
      %v3503 = vpop.f32.mrf.mxu0
      %v3504 = vadd.f32 0.0, %v3503
      %3505 = vmatmul.f32.gmra.mxu0 %v3391
      %v3506 = vpop.f32.mrf.mxu0
      %v3507 = vadd.f32 0.0, %v3506
      %3508 = vmatmul.f32.gmra.mxu0 %v3394
      %v3509 = vpop.f32.mrf.mxu0
      %v3510 = vadd.f32 0.0, %v3509
      %3511 = vmatmul.f32.gmra.mxu0 %v3397
      %v3512 = vpop.f32.mrf.mxu0
      %v3513 = vadd.f32 0.0, %v3512
      %3514 = vmatmul.f32.gmra.mxu0 %v3400
      %v3515 = vpop.f32.mrf.mxu0
      %v3516 = vadd.f32 0.0, %v3515
      %3517 = vmatmul.f32.gmra.mxu0 %v3403
      %v3518 = vpop.f32.mrf.mxu0
      %v3519 = vadd.f32 0.0, %v3518
      %3520 = vmatmul.f32.gmra.mxu0 %v3406
      %v3521 = vpop.f32.mrf.mxu0
      %v3522 = vadd.f32 0.0, %v3521
      %3523 = vmatmul.f32.gmra.mxu0 %v3409
      %v3524 = vpop.f32.mrf.mxu0
      %v3525 = vadd.f32 0.0, %v3524
      %3526 = vmatmul.f32.gmra.mxu0 %v3412
      %v3527 = vpop.f32.mrf.mxu0
      %v3528 = vadd.f32 0.0, %v3527
      %3529 = vmatmul.f32.gmra.mxu0 %v3415
      %v3530 = vpop.f32.mrf.mxu0
      %v3531 = vadd.f32 0.0, %v3530
      %3532 = vmatmul.f32.gmra.mxu0 %v3418
      %v3533 = vpop.f32.mrf.mxu0
      %v3534 = vadd.f32 0.0, %v3533
      %3535 = vmatmul.f32.gmra.mxu0 %v3421
      %v3536 = vpop.f32.mrf.mxu0
      %v3537 = vadd.f32 0.0, %v3536
      %3538 = vmatmul.f32.gmra.mxu0 %v3424
      %v3539 = vpop.f32.mrf.mxu0
      %v3540 = vadd.f32 0.0, %v3539
      %3541 = vmatmul.f32.gmra.mxu0 %v3427
      %v3542 = vpop.f32.mrf.mxu0
      %v3543 = vadd.f32 0.0, %v3542
      %3544 = vmatmul.f32.gmra.mxu0 %v3430
      %v3545 = vpop.f32.mrf.mxu0
      %v3546 = vadd.f32 0.0, %v3545
      %3547 = vmatmul.f32.gmra.mxu0 %v3433
      %v3548 = vpop.f32.mrf.mxu0
      %v3549 = vadd.f32 0.0, %v3548
      %3550 = vmatmul.f32.gmra.mxu0 %v3436
      %v3551 = vpop.f32.mrf.mxu0
      %v3552 = vadd.f32 0.0, %v3551
      %3553 = vmatmul.f32.gmra.mxu0 %v3439
      %v3554 = vpop.f32.mrf.mxu0
      %v3555 = vadd.f32 0.0, %v3554
      %3556 = vmatmul.f32.gmra.mxu0 %v3442
      %v3557 = vpop.f32.mrf.mxu0
      %v3558 = vadd.f32 0.0, %v3557
      %3559 = vmatmul.f32.gmra.mxu0 %v3445
      %v3560 = vpop.f32.mrf.mxu0
      %v3561 = vadd.f32 0.0, %v3560
      %3562 = vmatmul.f32.gmra.mxu0 %v3448
      %v3563 = vpop.f32.mrf.mxu0
      %v3564 = vadd.f32 0.0, %v3563
      %3565 = vmatmul.f32.gmra.mxu0 %v3451
      %v3566 = vpop.f32.mrf.mxu0
      %v3567 = vadd.f32 0.0, %v3566
      %3568 = vmatmul.f32.gmra.mxu0 %v3454
      %v3569 = vpop.f32.mrf.mxu0
      %v3570 = vadd.f32 0.0, %v3569
      %3571 = vmatmul.f32.gmra.mxu0 %v3457
      %v3572 = vpop.f32.mrf.mxu0
      %v3573 = vadd.f32 0.0, %v3572
      %3574 = vmatmul.f32.gmra.mxu0 %v3460
      %v3575 = vpop.f32.mrf.mxu0
      %v3576 = vadd.f32 0.0, %v3575
      %3577 = vdwg.mxu0
      %v3578 = vadd.f32 %v3300, %v3483
      %v3579 = vadd.f32 %v3301, %v3486
      %v3580 = vadd.f32 %v3302, %v3489
      %v3581 = vadd.f32 %v3303, %v3492
      %v3582 = vadd.f32 %v3304, %v3495
      %v3583 = vadd.f32 %v3305, %v3498
      %v3584 = vadd.f32 %v3306, %v3501
      %v3585 = vadd.f32 %v3307, %v3504
      %v3586 = vadd.f32 %v3308, %v3507
      %v3587 = vadd.f32 %v3309, %v3510
      %v3588 = vadd.f32 %v3310, %v3513
      %v3589 = vadd.f32 %v3311, %v3516
      %v3590 = vadd.f32 %v3312, %v3519
      %v3591 = vadd.f32 %v3313, %v3522
      %v3592 = vadd.f32 %v3314, %v3525
      %v3593 = vadd.f32 %v3315, %v3528
      %v3594 = vadd.f32 %v3316, %v3531
      %v3595 = vadd.f32 %v3317, %v3534
      %v3596 = vadd.f32 %v3318, %v3537
      %v3597 = vadd.f32 %v3319, %v3540
      %v3598 = vadd.f32 %v3320, %v3543
      %v3599 = vadd.f32 %v3321, %v3546
      %v3600 = vadd.f32 %v3322, %v3549
      %v3601 = vadd.f32 %v3323, %v3552
      %v3602 = vadd.f32 %v3324, %v3555
      %v3603 = vadd.f32 %v3325, %v3558
      %v3604 = vadd.f32 %v3326, %v3561
      %v3605 = vadd.f32 %v3327, %v3564
      %v3606 = vadd.f32 %v3328, %v3567
      %v3607 = vadd.f32 %v3329, %v3570
      %v3608 = vadd.f32 %v3330, %v3573
      %v3609 = vadd.f32 %v3331, %v3576
      %v3610 = vld [vmem:[%s2251 + $0x2] sm:$0xff]
      %v3611 = vld [vmem:[%s2251 + $0xa] sm:$0xff]
      %v3612 = vld [vmem:[%s2251 + $0x1a] sm:$0xff]
      %v3613 = vld [vmem:[%s2251 + $0x22] sm:$0xff]
      %v3614 = vld [vmem:[%s2251 + $0x32] sm:$0xff]
      %v3615 = vld [vmem:[%s2251 + $0x3a] sm:$0xff]
      %v3616 = vld [vmem:[%s2251 + $0x4a] sm:$0xff]
      %v3617 = vld [vmem:[%s2251 + $0x52] sm:$0xff]
      %v3618 = vld [vmem:[%s2251 + $0x62] sm:$0xff]
      %v3619 = vld [vmem:[%s2251 + $0x6a] sm:$0xff]
      %v3620 = vld [vmem:[%s2251 + $0x7a] sm:$0xff]
      %v3621 = vld [vmem:[%s2251 + $0x82] sm:$0xff]
      %v3622 = vld [vmem:[%s2251 + $0x92] sm:$0xff]
      %v3623 = vld [vmem:[%s2251 + $0x9a] sm:$0xff]
      %v3624 = vld [vmem:[%s2251 + $0xaa] sm:$0xff]
      %v3625 = vld [vmem:[%s2251 + $0xb2] sm:$0xff]
      %v3626 = vld [vmem:[%s2251 + $0xc2] sm:$0xff]
      %v3627 = vld [vmem:[%s2251 + $0xca] sm:$0xff]
      %v3628 = vld [vmem:[%s2251 + $0xda] sm:$0xff]
      %v3629 = vld [vmem:[%s2251 + $0xe2] sm:$0xff]
      %v3630 = vld [vmem:[%s2251 + $0xf2] sm:$0xff]
      %v3631 = vld [vmem:[%s2251 + $0xfa] sm:$0xff]
      %v3632 = vld [vmem:[%s2251 + $0x10a] sm:$0xff]
      %v3633 = vld [vmem:[%s2251 + $0x112] sm:$0xff]
      %v3634 = vld [vmem:[%s2251 + $0x122] sm:$0xff]
      %v3635 = vld [vmem:[%s2251 + $0x12a] sm:$0xff]
      %v3636 = vld [vmem:[%s2251 + $0x13a] sm:$0xff]
      %v3637 = vld [vmem:[%s2251 + $0x142] sm:$0xff]
      %v3638 = vld [vmem:[%s2251 + $0x152] sm:$0xff]
      %v3639 = vld [vmem:[%s2251 + $0x15a] sm:$0xff]
      %v3640 = vld [vmem:[%s2251 + $0x16a] sm:$0xff]
      %v3641 = vld [vmem:[%s2251 + $0x172] sm:$0xff]
      %s3642 = scalar_lea.vmem %s4, 20
      %v3643 = vld [vmem:[%s3642] sm:$0xf]
      %v3645 = vsel %vm2163, %v3610, 0
      %v3648 = vsel %vm2163, %v3611, 0
      %v3651 = vsel %vm2163, %v3612, 0
      %v3654 = vsel %vm2163, %v3613, 0
      %v3657 = vsel %vm2163, %v3614, 0
      %v3660 = vsel %vm2163, %v3615, 0
      %v3663 = vsel %vm2163, %v3616, 0
      %v3666 = vsel %vm2163, %v3617, 0
      %v3669 = vsel %vm2163, %v3618, 0
      %v3672 = vsel %vm2163, %v3619, 0
      %v3675 = vsel %vm2163, %v3620, 0
      %v3678 = vsel %vm2163, %v3621, 0
      %v3681 = vsel %vm2163, %v3622, 0
      %v3684 = vsel %vm2163, %v3623, 0
      %v3687 = vsel %vm2163, %v3624, 0
      %v3690 = vsel %vm2163, %v3625, 0
      %v3693 = vsel %vm2163, %v3626, 0
      %v3696 = vsel %vm2163, %v3627, 0
      %v3699 = vsel %vm2163, %v3628, 0
      %v3702 = vsel %vm2163, %v3629, 0
      %v3705 = vsel %vm2163, %v3630, 0
      %v3708 = vsel %vm2163, %v3631, 0
      %v3711 = vsel %vm2163, %v3632, 0
      %v3714 = vsel %vm2163, %v3633, 0
      %v3717 = vsel %vm2163, %v3634, 0
      %v3720 = vsel %vm2163, %v3635, 0
      %v3723 = vsel %vm2163, %v3636, 0
      %v3726 = vsel %vm2163, %v3637, 0
      %v3729 = vsel %vm2163, %v3638, 0
      %v3732 = vsel %vm2163, %v3639, 0
      %v3735 = vsel %vm2163, %v3640, 0
      %v3738 = vsel %vm2163, %v3641, 0
      %v3741 = vsel %vm2447, %v3643, 0
      %3743 = vmatpush.msra.mxu0 0.0
      %3744 = vmatpush.msra.mxu0 0.0
      %3745 = vmatpush.msra.mxu0 0.0
      %3746 = vmatpush.msra.mxu0 0.0
      %3747 = vmatpush.msra.mxu0 0.0
      %3748 = vmatpush.msra.mxu0 0.0
      %3749 = vmatpush.msra.mxu0 0.0
      %3750 = vmatpush.msra.mxu0 0.0
      %3751 = vmatpush.msra.mxu0 0.0
      %3752 = vmatpush.msra.mxu0 0.0
      %3753 = vmatpush.msra.mxu0 0.0
      %3754 = vmatpush.msra.mxu0 0.0
      %3755 = vmatpush.msra.mxu0 0.0
      %3756 = vmatpush.msra.mxu0 0.0
      %3757 = vmatpush.msra.mxu0 0.0
      %3758 = vmatpush.msra.mxu0 %v3741
      %3759 = vmatmul.f32.gmra.mxu0 %v3645
      %v3760 = vpop.f32.mrf.mxu0
      %v3761 = vadd.f32 0.0, %v3760
      %3762 = vmatmul.f32.gmra.mxu0 %v3648
      %v3763 = vpop.f32.mrf.mxu0
      %v3764 = vadd.f32 0.0, %v3763
      %3765 = vmatmul.f32.gmra.mxu0 %v3651
      %v3766 = vpop.f32.mrf.mxu0
      %v3767 = vadd.f32 0.0, %v3766
      %3768 = vmatmul.f32.gmra.mxu0 %v3654
      %v3769 = vpop.f32.mrf.mxu0
      %v3770 = vadd.f32 0.0, %v3769
      %3771 = vmatmul.f32.gmra.mxu0 %v3657
      %v3772 = vpop.f32.mrf.mxu0
      %v3773 = vadd.f32 0.0, %v3772
      %3774 = vmatmul.f32.gmra.mxu0 %v3660
      %v3775 = vpop.f32.mrf.mxu0
      %v3776 = vadd.f32 0.0, %v3775
      %3777 = vmatmul.f32.gmra.mxu0 %v3663
      %v3778 = vpop.f32.mrf.mxu0
      %v3779 = vadd.f32 0.0, %v3778
      %3780 = vmatmul.f32.gmra.mxu0 %v3666
      %v3781 = vpop.f32.mrf.mxu0
      %v3782 = vadd.f32 0.0, %v3781
      %3783 = vmatmul.f32.gmra.mxu0 %v3669
      %v3784 = vpop.f32.mrf.mxu0
      %v3785 = vadd.f32 0.0, %v3784
      %3786 = vmatmul.f32.gmra.mxu0 %v3672
      %v3787 = vpop.f32.mrf.mxu0
      %v3788 = vadd.f32 0.0, %v3787
      %3789 = vmatmul.f32.gmra.mxu0 %v3675
      %v3790 = vpop.f32.mrf.mxu0
      %v3791 = vadd.f32 0.0, %v3790
      %3792 = vmatmul.f32.gmra.mxu0 %v3678
      %v3793 = vpop.f32.mrf.mxu0
      %v3794 = vadd.f32 0.0, %v3793
      %3795 = vmatmul.f32.gmra.mxu0 %v3681
      %v3796 = vpop.f32.mrf.mxu0
      %v3797 = vadd.f32 0.0, %v3796
      %3798 = vmatmul.f32.gmra.mxu0 %v3684
      %v3799 = vpop.f32.mrf.mxu0
      %v3800 = vadd.f32 0.0, %v3799
      %3801 = vmatmul.f32.gmra.mxu0 %v3687
      %v3802 = vpop.f32.mrf.mxu0
      %v3803 = vadd.f32 0.0, %v3802
      %3804 = vmatmul.f32.gmra.mxu0 %v3690
      %v3805 = vpop.f32.mrf.mxu0
      %v3806 = vadd.f32 0.0, %v3805
      %3807 = vmatmul.f32.gmra.mxu0 %v3693
      %v3808 = vpop.f32.mrf.mxu0
      %v3809 = vadd.f32 0.0, %v3808
      %3810 = vmatmul.f32.gmra.mxu0 %v3696
      %v3811 = vpop.f32.mrf.mxu0
      %v3812 = vadd.f32 0.0, %v3811
      %3813 = vmatmul.f32.gmra.mxu0 %v3699
      %v3814 = vpop.f32.mrf.mxu0
      %v3815 = vadd.f32 0.0, %v3814
      %3816 = vmatmul.f32.gmra.mxu0 %v3702
      %v3817 = vpop.f32.mrf.mxu0
      %v3818 = vadd.f32 0.0, %v3817
      %3819 = vmatmul.f32.gmra.mxu0 %v3705
      %v3820 = vpop.f32.mrf.mxu0
      %v3821 = vadd.f32 0.0, %v3820
      %3822 = vmatmul.f32.gmra.mxu0 %v3708
      %v3823 = vpop.f32.mrf.mxu0
      %v3824 = vadd.f32 0.0, %v3823
      %3825 = vmatmul.f32.gmra.mxu0 %v3711
      %v3826 = vpop.f32.mrf.mxu0
      %v3827 = vadd.f32 0.0, %v3826
      %3828 = vmatmul.f32.gmra.mxu0 %v3714
      %v3829 = vpop.f32.mrf.mxu0
      %v3830 = vadd.f32 0.0, %v3829
      %3831 = vmatmul.f32.gmra.mxu0 %v3717
      %v3832 = vpop.f32.mrf.mxu0
      %v3833 = vadd.f32 0.0, %v3832
      %3834 = vmatmul.f32.gmra.mxu0 %v3720
      %v3835 = vpop.f32.mrf.mxu0
      %v3836 = vadd.f32 0.0, %v3835
      %3837 = vmatmul.f32.gmra.mxu0 %v3723
      %v3838 = vpop.f32.mrf.mxu0
      %v3839 = vadd.f32 0.0, %v3838
      %3840 = vmatmul.f32.gmra.mxu0 %v3726
      %v3841 = vpop.f32.mrf.mxu0
      %v3842 = vadd.f32 0.0, %v3841
      %3843 = vmatmul.f32.gmra.mxu0 %v3729
      %v3844 = vpop.f32.mrf.mxu0
      %v3845 = vadd.f32 0.0, %v3844
      %3846 = vmatmul.f32.gmra.mxu0 %v3732
      %v3847 = vpop.f32.mrf.mxu0
      %v3848 = vadd.f32 0.0, %v3847
      %3849 = vmatmul.f32.gmra.mxu0 %v3735
      %v3850 = vpop.f32.mrf.mxu0
      %v3851 = vadd.f32 0.0, %v3850
      %3852 = vmatmul.f32.gmra.mxu0 %v3738
      %v3853 = vpop.f32.mrf.mxu0
      %v3854 = vadd.f32 0.0, %v3853
      %3855 = vdwg.mxu0
      %v3856 = vadd.f32 %v3578, %v3761
      %v3857 = vadd.f32 %v3579, %v3764
      %v3858 = vadd.f32 %v3580, %v3767
      %v3859 = vadd.f32 %v3581, %v3770
      %v3860 = vadd.f32 %v3582, %v3773
      %v3861 = vadd.f32 %v3583, %v3776
      %v3862 = vadd.f32 %v3584, %v3779
      %v3863 = vadd.f32 %v3585, %v3782
      %v3864 = vadd.f32 %v3586, %v3785
      %v3865 = vadd.f32 %v3587, %v3788
      %v3866 = vadd.f32 %v3588, %v3791
      %v3867 = vadd.f32 %v3589, %v3794
      %v3868 = vadd.f32 %v3590, %v3797
      %v3869 = vadd.f32 %v3591, %v3800
      %v3870 = vadd.f32 %v3592, %v3803
      %v3871 = vadd.f32 %v3593, %v3806
      %v3872 = vadd.f32 %v3594, %v3809
      %v3873 = vadd.f32 %v3595, %v3812
      %v3874 = vadd.f32 %v3596, %v3815
      %v3875 = vadd.f32 %v3597, %v3818
      %v3876 = vadd.f32 %v3598, %v3821
      %v3877 = vadd.f32 %v3599, %v3824
      %v3878 = vadd.f32 %v3600, %v3827
      %v3879 = vadd.f32 %v3601, %v3830
      %v3880 = vadd.f32 %v3602, %v3833
      %v3881 = vadd.f32 %v3603, %v3836
      %v3882 = vadd.f32 %v3604, %v3839
      %v3883 = vadd.f32 %v3605, %v3842
      %v3884 = vadd.f32 %v3606, %v3845
      %v3885 = vadd.f32 %v3607, %v3848
      %v3886 = vadd.f32 %v3608, %v3851
      %v3887 = vadd.f32 %v3609, %v3854
      %s3888 = scalar_lea.vmem [#allocation2], 48
      %v3889 = vld [vmem:[%s3888] sm:$0xff]
      %v3890 = vld [vmem:[%s3888 + $0x8] sm:$0xff]
      %v3891 = vld [vmem:[%s3888 + $0x18] sm:$0xff]
      %v3892 = vld [vmem:[%s3888 + $0x20] sm:$0xff]
      %v3893 = vld [vmem:[%s3888 + $0x30] sm:$0xff]
      %v3894 = vld [vmem:[%s3888 + $0x38] sm:$0xff]
      %v3895 = vld [vmem:[%s3888 + $0x48] sm:$0xff]
      %v3896 = vld [vmem:[%s3888 + $0x50] sm:$0xff]
      %v3897 = vld [vmem:[%s3888 + $0x60] sm:$0xff]
      %v3898 = vld [vmem:[%s3888 + $0x68] sm:$0xff]
      %v3899 = vld [vmem:[%s3888 + $0x78] sm:$0xff]
      %v3900 = vld [vmem:[%s3888 + $0x80] sm:$0xff]
      %v3901 = vld [vmem:[%s3888 + $0x90] sm:$0xff]
      %v3902 = vld [vmem:[%s3888 + $0x98] sm:$0xff]
      %v3903 = vld [vmem:[%s3888 + $0xa8] sm:$0xff]
      %v3904 = vld [vmem:[%s3888 + $0xb0] sm:$0xff]
      %v3905 = vld [vmem:[%s3888 + $0xc0] sm:$0xff]
      %v3906 = vld [vmem:[%s3888 + $0xc8] sm:$0xff]
      %v3907 = vld [vmem:[%s3888 + $0xd8] sm:$0xff]
      %v3908 = vld [vmem:[%s3888 + $0xe0] sm:$0xff]
      %v3909 = vld [vmem:[%s3888 + $0xf0] sm:$0xff]
      %v3910 = vld [vmem:[%s3888 + $0xf8] sm:$0xff]
      %v3911 = vld [vmem:[%s3888 + $0x108] sm:$0xff]
      %v3912 = vld [vmem:[%s3888 + $0x110] sm:$0xff]
      %v3913 = vld [vmem:[%s3888 + $0x120] sm:$0xff]
      %v3914 = vld [vmem:[%s3888 + $0x128] sm:$0xff]
      %v3915 = vld [vmem:[%s3888 + $0x138] sm:$0xff]
      %v3916 = vld [vmem:[%s3888 + $0x140] sm:$0xff]
      %v3917 = vld [vmem:[%s3888 + $0x150] sm:$0xff]
      %v3918 = vld [vmem:[%s3888 + $0x158] sm:$0xff]
      %v3919 = vld [vmem:[%s3888 + $0x168] sm:$0xff]
      %v3920 = vld [vmem:[%s3888 + $0x170] sm:$0xff]
      %s3921 = scalar_lea.vmem %s4, 24
      %v3922 = vld [vmem:[%s3921] sm:$0xf]
      %v3924 = vsel %vm2163, %v3889, 0
      %v3927 = vsel %vm2163, %v3890, 0
      %v3930 = vsel %vm2163, %v3891, 0
      %v3933 = vsel %vm2163, %v3892, 0
      %v3936 = vsel %vm2163, %v3893, 0
      %v3939 = vsel %vm2163, %v3894, 0
      %v3942 = vsel %vm2163, %v3895, 0
      %v3945 = vsel %vm2163, %v3896, 0
      %v3948 = vsel %vm2163, %v3897, 0
      %v3951 = vsel %vm2163, %v3898, 0
      %v3954 = vsel %vm2163, %v3899, 0
      %v3957 = vsel %vm2163, %v3900, 0
      %v3960 = vsel %vm2163, %v3901, 0
      %v3963 = vsel %vm2163, %v3902, 0
      %v3966 = vsel %vm2163, %v3903, 0
      %v3969 = vsel %vm2163, %v3904, 0
      %v3972 = vsel %vm2163, %v3905, 0
      %v3975 = vsel %vm2163, %v3906, 0
      %v3978 = vsel %vm2163, %v3907, 0
      %v3981 = vsel %vm2163, %v3908, 0
      %v3984 = vsel %vm2163, %v3909, 0
      %v3987 = vsel %vm2163, %v3910, 0
      %v3990 = vsel %vm2163, %v3911, 0
      %v3993 = vsel %vm2163, %v3912, 0
      %v3996 = vsel %vm2163, %v3913, 0
      %v3999 = vsel %vm2163, %v3914, 0
      %v4002 = vsel %vm2163, %v3915, 0
      %v4005 = vsel %vm2163, %v3916, 0
      %v4008 = vsel %vm2163, %v3917, 0
      %v4011 = vsel %vm2163, %v3918, 0
      %v4014 = vsel %vm2163, %v3919, 0
      %v4017 = vsel %vm2163, %v3920, 0
      %v4020 = vsel %vm2447, %v3922, 0
      %4022 = vmatpush.msra.mxu0 0.0
      %4023 = vmatpush.msra.mxu0 0.0
      %4024 = vmatpush.msra.mxu0 0.0
      %4025 = vmatpush.msra.mxu0 0.0
      %4026 = vmatpush.msra.mxu0 0.0
      %4027 = vmatpush.msra.mxu0 0.0
      %4028 = vmatpush.msra.mxu0 0.0
      %4029 = vmatpush.msra.mxu0 0.0
      %4030 = vmatpush.msra.mxu0 0.0
      %4031 = vmatpush.msra.mxu0 0.0
      %4032 = vmatpush.msra.mxu0 0.0
      %4033 = vmatpush.msra.mxu0 0.0
      %4034 = vmatpush.msra.mxu0 0.0
      %4035 = vmatpush.msra.mxu0 0.0
      %4036 = vmatpush.msra.mxu0 0.0
      %4037 = vmatpush.msra.mxu0 %v4020
      %4038 = vmatmul.f32.gmra.mxu0 %v3924
      %v4039 = vpop.f32.mrf.mxu0
      %v4040 = vadd.f32 0.0, %v4039
      %4041 = vmatmul.f32.gmra.mxu0 %v3927
      %v4042 = vpop.f32.mrf.mxu0
      %v4043 = vadd.f32 0.0, %v4042
      %4044 = vmatmul.f32.gmra.mxu0 %v3930
      %v4045 = vpop.f32.mrf.mxu0
      %v4046 = vadd.f32 0.0, %v4045
      %4047 = vmatmul.f32.gmra.mxu0 %v3933
      %v4048 = vpop.f32.mrf.mxu0
      %v4049 = vadd.f32 0.0, %v4048
      %4050 = vmatmul.f32.gmra.mxu0 %v3936
      %v4051 = vpop.f32.mrf.mxu0
      %v4052 = vadd.f32 0.0, %v4051
      %4053 = vmatmul.f32.gmra.mxu0 %v3939
      %v4054 = vpop.f32.mrf.mxu0
      %v4055 = vadd.f32 0.0, %v4054
      %4056 = vmatmul.f32.gmra.mxu0 %v3942
      %v4057 = vpop.f32.mrf.mxu0
      %v4058 = vadd.f32 0.0, %v4057
      %4059 = vmatmul.f32.gmra.mxu0 %v3945
      %v4060 = vpop.f32.mrf.mxu0
      %v4061 = vadd.f32 0.0, %v4060
      %4062 = vmatmul.f32.gmra.mxu0 %v3948
      %v4063 = vpop.f32.mrf.mxu0
      %v4064 = vadd.f32 0.0, %v4063
      %4065 = vmatmul.f32.gmra.mxu0 %v3951
      %v4066 = vpop.f32.mrf.mxu0
      %v4067 = vadd.f32 0.0, %v4066
      %4068 = vmatmul.f32.gmra.mxu0 %v3954
      %v4069 = vpop.f32.mrf.mxu0
      %v4070 = vadd.f32 0.0, %v4069
      %4071 = vmatmul.f32.gmra.mxu0 %v3957
      %v4072 = vpop.f32.mrf.mxu0
      %v4073 = vadd.f32 0.0, %v4072
      %4074 = vmatmul.f32.gmra.mxu0 %v3960
      %v4075 = vpop.f32.mrf.mxu0
      %v4076 = vadd.f32 0.0, %v4075
      %4077 = vmatmul.f32.gmra.mxu0 %v3963
      %v4078 = vpop.f32.mrf.mxu0
      %v4079 = vadd.f32 0.0, %v4078
      %4080 = vmatmul.f32.gmra.mxu0 %v3966
      %v4081 = vpop.f32.mrf.mxu0
      %v4082 = vadd.f32 0.0, %v4081
      %4083 = vmatmul.f32.gmra.mxu0 %v3969
      %v4084 = vpop.f32.mrf.mxu0
      %v4085 = vadd.f32 0.0, %v4084
      %4086 = vmatmul.f32.gmra.mxu0 %v3972
      %v4087 = vpop.f32.mrf.mxu0
      %v4088 = vadd.f32 0.0, %v4087
      %4089 = vmatmul.f32.gmra.mxu0 %v3975
      %v4090 = vpop.f32.mrf.mxu0
      %v4091 = vadd.f32 0.0, %v4090
      %4092 = vmatmul.f32.gmra.mxu0 %v3978
      %v4093 = vpop.f32.mrf.mxu0
      %v4094 = vadd.f32 0.0, %v4093
      %4095 = vmatmul.f32.gmra.mxu0 %v3981
      %v4096 = vpop.f32.mrf.mxu0
      %v4097 = vadd.f32 0.0, %v4096
      %4098 = vmatmul.f32.gmra.mxu0 %v3984
      %v4099 = vpop.f32.mrf.mxu0
      %v4100 = vadd.f32 0.0, %v4099
      %4101 = vmatmul.f32.gmra.mxu0 %v3987
      %v4102 = vpop.f32.mrf.mxu0
      %v4103 = vadd.f32 0.0, %v4102
      %4104 = vmatmul.f32.gmra.mxu0 %v3990
      %v4105 = vpop.f32.mrf.mxu0
      %v4106 = vadd.f32 0.0, %v4105
      %4107 = vmatmul.f32.gmra.mxu0 %v3993
      %v4108 = vpop.f32.mrf.mxu0
      %v4109 = vadd.f32 0.0, %v4108
      %4110 = vmatmul.f32.gmra.mxu0 %v3996
      %v4111 = vpop.f32.mrf.mxu0
      %v4112 = vadd.f32 0.0, %v4111
      %4113 = vmatmul.f32.gmra.mxu0 %v3999
      %v4114 = vpop.f32.mrf.mxu0
      %v4115 = vadd.f32 0.0, %v4114
      %4116 = vmatmul.f32.gmra.mxu0 %v4002
      %v4117 = vpop.f32.mrf.mxu0
      %v4118 = vadd.f32 0.0, %v4117
      %4119 = vmatmul.f32.gmra.mxu0 %v4005
      %v4120 = vpop.f32.mrf.mxu0
      %v4121 = vadd.f32 0.0, %v4120
      %4122 = vmatmul.f32.gmra.mxu0 %v4008
      %v4123 = vpop.f32.mrf.mxu0
      %v4124 = vadd.f32 0.0, %v4123
      %4125 = vmatmul.f32.gmra.mxu0 %v4011
      %v4126 = vpop.f32.mrf.mxu0
      %v4127 = vadd.f32 0.0, %v4126
      %4128 = vmatmul.f32.gmra.mxu0 %v4014
      %v4129 = vpop.f32.mrf.mxu0
      %v4130 = vadd.f32 0.0, %v4129
      %4131 = vmatmul.f32.gmra.mxu0 %v4017
      %v4132 = vpop.f32.mrf.mxu0
      %v4133 = vadd.f32 0.0, %v4132
      %4134 = vdwg.mxu0
      %v4135 = vadd.f32 %v3856, %v4040
      %v4136 = vadd.f32 %v3857, %v4043
      %v4137 = vadd.f32 %v3858, %v4046
      %v4138 = vadd.f32 %v3859, %v4049
      %v4139 = vadd.f32 %v3860, %v4052
      %v4140 = vadd.f32 %v3861, %v4055
      %v4141 = vadd.f32 %v3862, %v4058
      %v4142 = vadd.f32 %v3863, %v4061
      %v4143 = vadd.f32 %v3864, %v4064
      %v4144 = vadd.f32 %v3865, %v4067
      %v4145 = vadd.f32 %v3866, %v4070
      %v4146 = vadd.f32 %v3867, %v4073
      %v4147 = vadd.f32 %v3868, %v4076
      %v4148 = vadd.f32 %v3869, %v4079
      %v4149 = vadd.f32 %v3870, %v4082
      %v4150 = vadd.f32 %v3871, %v4085
      %v4151 = vadd.f32 %v3872, %v4088
      %v4152 = vadd.f32 %v3873, %v4091
      %v4153 = vadd.f32 %v3874, %v4094
      %v4154 = vadd.f32 %v3875, %v4097
      %v4155 = vadd.f32 %v3876, %v4100
      %v4156 = vadd.f32 %v3877, %v4103
      %v4157 = vadd.f32 %v3878, %v4106
      %v4158 = vadd.f32 %v3879, %v4109
      %v4159 = vadd.f32 %v3880, %v4112
      %v4160 = vadd.f32 %v3881, %v4115
      %v4161 = vadd.f32 %v3882, %v4118
      %v4162 = vadd.f32 %v3883, %v4121
      %v4163 = vadd.f32 %v3884, %v4124
      %v4164 = vadd.f32 %v3885, %v4127
      %v4165 = vadd.f32 %v3886, %v4130
      %v4166 = vadd.f32 %v3887, %v4133
      %v4167 = vld [vmem:[%s3888 + $0x1] sm:$0xff]
      %v4168 = vld [vmem:[%s3888 + $0x9] sm:$0xff]
      %v4169 = vld [vmem:[%s3888 + $0x19] sm:$0xff]
      %v4170 = vld [vmem:[%s3888 + $0x21] sm:$0xff]
      %v4171 = vld [vmem:[%s3888 + $0x31] sm:$0xff]
      %v4172 = vld [vmem:[%s3888 + $0x39] sm:$0xff]
      %v4173 = vld [vmem:[%s3888 + $0x49] sm:$0xff]
      %v4174 = vld [vmem:[%s3888 + $0x51] sm:$0xff]
      %v4175 = vld [vmem:[%s3888 + $0x61] sm:$0xff]
      %v4176 = vld [vmem:[%s3888 + $0x69] sm:$0xff]
      %v4177 = vld [vmem:[%s3888 + $0x79] sm:$0xff]
      %v4178 = vld [vmem:[%s3888 + $0x81] sm:$0xff]
      %v4179 = vld [vmem:[%s3888 + $0x91] sm:$0xff]
      %v4180 = vld [vmem:[%s3888 + $0x99] sm:$0xff]
      %v4181 = vld [vmem:[%s3888 + $0xa9] sm:$0xff]
      %v4182 = vld [vmem:[%s3888 + $0xb1] sm:$0xff]
      %v4183 = vld [vmem:[%s3888 + $0xc1] sm:$0xff]
      %v4184 = vld [vmem:[%s3888 + $0xc9] sm:$0xff]
      %v4185 = vld [vmem:[%s3888 + $0xd9] sm:$0xff]
      %v4186 = vld [vmem:[%s3888 + $0xe1] sm:$0xff]
      %v4187 = vld [vmem:[%s3888 + $0xf1] sm:$0xff]
      %v4188 = vld [vmem:[%s3888 + $0xf9] sm:$0xff]
      %v4189 = vld [vmem:[%s3888 + $0x109] sm:$0xff]
      %v4190 = vld [vmem:[%s3888 + $0x111] sm:$0xff]
      %v4191 = vld [vmem:[%s3888 + $0x121] sm:$0xff]
      %v4192 = vld [vmem:[%s3888 + $0x129] sm:$0xff]
      %v4193 = vld [vmem:[%s3888 + $0x139] sm:$0xff]
      %v4194 = vld [vmem:[%s3888 + $0x141] sm:$0xff]
      %v4195 = vld [vmem:[%s3888 + $0x151] sm:$0xff]
      %v4196 = vld [vmem:[%s3888 + $0x159] sm:$0xff]
      %v4197 = vld [vmem:[%s3888 + $0x169] sm:$0xff]
      %v4198 = vld [vmem:[%s3888 + $0x171] sm:$0xff]
      %s4199 = scalar_lea.vmem %s4, 28
      %v4200 = vld [vmem:[%s4199] sm:$0xf]
      %v4202 = vsel %vm2163, %v4167, 0
      %v4205 = vsel %vm2163, %v4168, 0
      %v4208 = vsel %vm2163, %v4169, 0
      %v4211 = vsel %vm2163, %v4170, 0
      %v4214 = vsel %vm2163, %v4171, 0
      %v4217 = vsel %vm2163, %v4172, 0
      %v4220 = vsel %vm2163, %v4173, 0
      %v4223 = vsel %vm2163, %v4174, 0
      %v4226 = vsel %vm2163, %v4175, 0
      %v4229 = vsel %vm2163, %v4176, 0
      %v4232 = vsel %vm2163, %v4177, 0
      %v4235 = vsel %vm2163, %v4178, 0
      %v4238 = vsel %vm2163, %v4179, 0
      %v4241 = vsel %vm2163, %v4180, 0
      %v4244 = vsel %vm2163, %v4181, 0
      %v4247 = vsel %vm2163, %v4182, 0
      %v4250 = vsel %vm2163, %v4183, 0
      %v4253 = vsel %vm2163, %v4184, 0
      %v4256 = vsel %vm2163, %v4185, 0
      %v4259 = vsel %vm2163, %v4186, 0
      %v4262 = vsel %vm2163, %v4187, 0
      %v4265 = vsel %vm2163, %v4188, 0
      %v4268 = vsel %vm2163, %v4189, 0
      %v4271 = vsel %vm2163, %v4190, 0
      %v4274 = vsel %vm2163, %v4191, 0
      %v4277 = vsel %vm2163, %v4192, 0
      %v4280 = vsel %vm2163, %v4193, 0
      %v4283 = vsel %vm2163, %v4194, 0
      %v4286 = vsel %vm2163, %v4195, 0
      %v4289 = vsel %vm2163, %v4196, 0
      %v4292 = vsel %vm2163, %v4197, 0
      %v4295 = vsel %vm2163, %v4198, 0
      %v4298 = vsel %vm2447, %v4200, 0
      %4300 = vmatpush.msra.mxu0 0.0
      %4301 = vmatpush.msra.mxu0 0.0
      %4302 = vmatpush.msra.mxu0 0.0
      %4303 = vmatpush.msra.mxu0 0.0
      %4304 = vmatpush.msra.mxu0 0.0
      %4305 = vmatpush.msra.mxu0 0.0
      %4306 = vmatpush.msra.mxu0 0.0
      %4307 = vmatpush.msra.mxu0 0.0
      %4308 = vmatpush.msra.mxu0 0.0
      %4309 = vmatpush.msra.mxu0 0.0
      %4310 = vmatpush.msra.mxu0 0.0
      %4311 = vmatpush.msra.mxu0 0.0
      %4312 = vmatpush.msra.mxu0 0.0
      %4313 = vmatpush.msra.mxu0 0.0
      %4314 = vmatpush.msra.mxu0 0.0
      %4315 = vmatpush.msra.mxu0 %v4298
      %4316 = vmatmul.f32.gmra.mxu0 %v4202
      %v4317 = vpop.f32.mrf.mxu0
      %v4318 = vadd.f32 0.0, %v4317
      %4319 = vmatmul.f32.gmra.mxu0 %v4205
      %v4320 = vpop.f32.mrf.mxu0
      %v4321 = vadd.f32 0.0, %v4320
      %4322 = vmatmul.f32.gmra.mxu0 %v4208
      %v4323 = vpop.f32.mrf.mxu0
      %v4324 = vadd.f32 0.0, %v4323
      %4325 = vmatmul.f32.gmra.mxu0 %v4211
      %v4326 = vpop.f32.mrf.mxu0
      %v4327 = vadd.f32 0.0, %v4326
      %4328 = vmatmul.f32.gmra.mxu0 %v4214
      %v4329 = vpop.f32.mrf.mxu0
      %v4330 = vadd.f32 0.0, %v4329
      %4331 = vmatmul.f32.gmra.mxu0 %v4217
      %v4332 = vpop.f32.mrf.mxu0
      %v4333 = vadd.f32 0.0, %v4332
      %4334 = vmatmul.f32.gmra.mxu0 %v4220
      %v4335 = vpop.f32.mrf.mxu0
      %v4336 = vadd.f32 0.0, %v4335
      %4337 = vmatmul.f32.gmra.mxu0 %v4223
      %v4338 = vpop.f32.mrf.mxu0
      %v4339 = vadd.f32 0.0, %v4338
      %4340 = vmatmul.f32.gmra.mxu0 %v4226
      %v4341 = vpop.f32.mrf.mxu0
      %v4342 = vadd.f32 0.0, %v4341
      %4343 = vmatmul.f32.gmra.mxu0 %v4229
      %v4344 = vpop.f32.mrf.mxu0
      %v4345 = vadd.f32 0.0, %v4344
      %4346 = vmatmul.f32.gmra.mxu0 %v4232
      %v4347 = vpop.f32.mrf.mxu0
      %v4348 = vadd.f32 0.0, %v4347
      %4349 = vmatmul.f32.gmra.mxu0 %v4235
      %v4350 = vpop.f32.mrf.mxu0
      %v4351 = vadd.f32 0.0, %v4350
      %4352 = vmatmul.f32.gmra.mxu0 %v4238
      %v4353 = vpop.f32.mrf.mxu0
      %v4354 = vadd.f32 0.0, %v4353
      %4355 = vmatmul.f32.gmra.mxu0 %v4241
      %v4356 = vpop.f32.mrf.mxu0
      %v4357 = vadd.f32 0.0, %v4356
      %4358 = vmatmul.f32.gmra.mxu0 %v4244
      %v4359 = vpop.f32.mrf.mxu0
      %v4360 = vadd.f32 0.0, %v4359
      %4361 = vmatmul.f32.gmra.mxu0 %v4247
      %v4362 = vpop.f32.mrf.mxu0
      %v4363 = vadd.f32 0.0, %v4362
      %4364 = vmatmul.f32.gmra.mxu0 %v4250
      %v4365 = vpop.f32.mrf.mxu0
      %v4366 = vadd.f32 0.0, %v4365
      %4367 = vmatmul.f32.gmra.mxu0 %v4253
      %v4368 = vpop.f32.mrf.mxu0
      %v4369 = vadd.f32 0.0, %v4368
      %4370 = vmatmul.f32.gmra.mxu0 %v4256
      %v4371 = vpop.f32.mrf.mxu0
      %v4372 = vadd.f32 0.0, %v4371
      %4373 = vmatmul.f32.gmra.mxu0 %v4259
      %v4374 = vpop.f32.mrf.mxu0
      %v4375 = vadd.f32 0.0, %v4374
      %4376 = vmatmul.f32.gmra.mxu0 %v4262
      %v4377 = vpop.f32.mrf.mxu0
      %v4378 = vadd.f32 0.0, %v4377
      %4379 = vmatmul.f32.gmra.mxu0 %v4265
      %v4380 = vpop.f32.mrf.mxu0
      %v4381 = vadd.f32 0.0, %v4380
      %4382 = vmatmul.f32.gmra.mxu0 %v4268
      %v4383 = vpop.f32.mrf.mxu0
      %v4384 = vadd.f32 0.0, %v4383
      %4385 = vmatmul.f32.gmra.mxu0 %v4271
      %v4386 = vpop.f32.mrf.mxu0
      %v4387 = vadd.f32 0.0, %v4386
      %4388 = vmatmul.f32.gmra.mxu0 %v4274
      %v4389 = vpop.f32.mrf.mxu0
      %v4390 = vadd.f32 0.0, %v4389
      %4391 = vmatmul.f32.gmra.mxu0 %v4277
      %v4392 = vpop.f32.mrf.mxu0
      %v4393 = vadd.f32 0.0, %v4392
      %4394 = vmatmul.f32.gmra.mxu0 %v4280
      %v4395 = vpop.f32.mrf.mxu0
      %v4396 = vadd.f32 0.0, %v4395
      %4397 = vmatmul.f32.gmra.mxu0 %v4283
      %v4398 = vpop.f32.mrf.mxu0
      %v4399 = vadd.f32 0.0, %v4398
      %4400 = vmatmul.f32.gmra.mxu0 %v4286
      %v4401 = vpop.f32.mrf.mxu0
      %v4402 = vadd.f32 0.0, %v4401
      %4403 = vmatmul.f32.gmra.mxu0 %v4289
      %v4404 = vpop.f32.mrf.mxu0
      %v4405 = vadd.f32 0.0, %v4404
      %4406 = vmatmul.f32.gmra.mxu0 %v4292
      %v4407 = vpop.f32.mrf.mxu0
      %v4408 = vadd.f32 0.0, %v4407
      %4409 = vmatmul.f32.gmra.mxu0 %v4295
      %v4410 = vpop.f32.mrf.mxu0
      %v4411 = vadd.f32 0.0, %v4410
      %4412 = vdwg.mxu0
      %v4413 = vadd.f32 %v4135, %v4318
      %v4414 = vadd.f32 %v4136, %v4321
      %v4415 = vadd.f32 %v4137, %v4324
      %v4416 = vadd.f32 %v4138, %v4327
      %v4417 = vadd.f32 %v4139, %v4330
      %v4418 = vadd.f32 %v4140, %v4333
      %v4419 = vadd.f32 %v4141, %v4336
      %v4420 = vadd.f32 %v4142, %v4339
      %v4421 = vadd.f32 %v4143, %v4342
      %v4422 = vadd.f32 %v4144, %v4345
      %v4423 = vadd.f32 %v4145, %v4348
      %v4424 = vadd.f32 %v4146, %v4351
      %v4425 = vadd.f32 %v4147, %v4354
      %v4426 = vadd.f32 %v4148, %v4357
      %v4427 = vadd.f32 %v4149, %v4360
      %v4428 = vadd.f32 %v4150, %v4363
      %v4429 = vadd.f32 %v4151, %v4366
      %v4430 = vadd.f32 %v4152, %v4369
      %v4431 = vadd.f32 %v4153, %v4372
      %v4432 = vadd.f32 %v4154, %v4375
      %v4433 = vadd.f32 %v4155, %v4378
      %v4434 = vadd.f32 %v4156, %v4381
      %v4435 = vadd.f32 %v4157, %v4384
      %v4436 = vadd.f32 %v4158, %v4387
      %v4437 = vadd.f32 %v4159, %v4390
      %v4438 = vadd.f32 %v4160, %v4393
      %v4439 = vadd.f32 %v4161, %v4396
      %v4440 = vadd.f32 %v4162, %v4399
      %v4441 = vadd.f32 %v4163, %v4402
      %v4442 = vadd.f32 %v4164, %v4405
      %v4443 = vadd.f32 %v4165, %v4408
      %v4444 = vadd.f32 %v4166, %v4411
      %v4445 = vld [vmem:[%s3888 + $0x2] sm:$0xff]
      %v4446 = vld [vmem:[%s3888 + $0xa] sm:$0xff]
      %v4447 = vld [vmem:[%s3888 + $0x1a] sm:$0xff]
      %v4448 = vld [vmem:[%s3888 + $0x22] sm:$0xff]
      %v4449 = vld [vmem:[%s3888 + $0x32] sm:$0xff]
      %v4450 = vld [vmem:[%s3888 + $0x3a] sm:$0xff]
      %v4451 = vld [vmem:[%s3888 + $0x4a] sm:$0xff]
      %v4452 = vld [vmem:[%s3888 + $0x52] sm:$0xff]
      %v4453 = vld [vmem:[%s3888 + $0x62] sm:$0xff]
      %v4454 = vld [vmem:[%s3888 + $0x6a] sm:$0xff]
      %v4455 = vld [vmem:[%s3888 + $0x7a] sm:$0xff]
      %v4456 = vld [vmem:[%s3888 + $0x82] sm:$0xff]
      %v4457 = vld [vmem:[%s3888 + $0x92] sm:$0xff]
      %v4458 = vld [vmem:[%s3888 + $0x9a] sm:$0xff]
      %v4459 = vld [vmem:[%s3888 + $0xaa] sm:$0xff]
      %v4460 = vld [vmem:[%s3888 + $0xb2] sm:$0xff]
      %v4461 = vld [vmem:[%s3888 + $0xc2] sm:$0xff]
      %v4462 = vld [vmem:[%s3888 + $0xca] sm:$0xff]
      %v4463 = vld [vmem:[%s3888 + $0xda] sm:$0xff]
      %v4464 = vld [vmem:[%s3888 + $0xe2] sm:$0xff]
      %v4465 = vld [vmem:[%s3888 + $0xf2] sm:$0xff]
      %v4466 = vld [vmem:[%s3888 + $0xfa] sm:$0xff]
      %v4467 = vld [vmem:[%s3888 + $0x10a] sm:$0xff]
      %v4468 = vld [vmem:[%s3888 + $0x112] sm:$0xff]
      %v4469 = vld [vmem:[%s3888 + $0x122] sm:$0xff]
      %v4470 = vld [vmem:[%s3888 + $0x12a] sm:$0xff]
      %v4471 = vld [vmem:[%s3888 + $0x13a] sm:$0xff]
      %v4472 = vld [vmem:[%s3888 + $0x142] sm:$0xff]
      %v4473 = vld [vmem:[%s3888 + $0x152] sm:$0xff]
      %v4474 = vld [vmem:[%s3888 + $0x15a] sm:$0xff]
      %v4475 = vld [vmem:[%s3888 + $0x16a] sm:$0xff]
      %v4476 = vld [vmem:[%s3888 + $0x172] sm:$0xff]
      %s4477 = scalar_lea.vmem %s4, 32
      %v4478 = vld [vmem:[%s4477] sm:$0xf]
      %v4480 = vsel %vm2163, %v4445, 0
      %v4483 = vsel %vm2163, %v4446, 0
      %v4486 = vsel %vm2163, %v4447, 0
      %v4489 = vsel %vm2163, %v4448, 0
      %v4492 = vsel %vm2163, %v4449, 0
      %v4495 = vsel %vm2163, %v4450, 0
      %v4498 = vsel %vm2163, %v4451, 0
      %v4501 = vsel %vm2163, %v4452, 0
      %v4504 = vsel %vm2163, %v4453, 0
      %v4507 = vsel %vm2163, %v4454, 0
      %v4510 = vsel %vm2163, %v4455, 0
      %v4513 = vsel %vm2163, %v4456, 0
      %v4516 = vsel %vm2163, %v4457, 0
      %v4519 = vsel %vm2163, %v4458, 0
      %v4522 = vsel %vm2163, %v4459, 0
      %v4525 = vsel %vm2163, %v4460, 0
      %v4528 = vsel %vm2163, %v4461, 0
      %v4531 = vsel %vm2163, %v4462, 0
      %v4534 = vsel %vm2163, %v4463, 0
      %v4537 = vsel %vm2163, %v4464, 0
      %v4540 = vsel %vm2163, %v4465, 0
      %v4543 = vsel %vm2163, %v4466, 0
      %v4546 = vsel %vm2163, %v4467, 0
      %v4549 = vsel %vm2163, %v4468, 0
      %v4552 = vsel %vm2163, %v4469, 0
      %v4555 = vsel %vm2163, %v4470, 0
      %v4558 = vsel %vm2163, %v4471, 0
      %v4561 = vsel %vm2163, %v4472, 0
      %v4564 = vsel %vm2163, %v4473, 0
      %v4567 = vsel %vm2163, %v4474, 0
      %v4570 = vsel %vm2163, %v4475, 0
      %v4573 = vsel %vm2163, %v4476, 0
      %v4576 = vsel %vm2447, %v4478, 0
      %4578 = vmatpush.msra.mxu0 0.0
      %4579 = vmatpush.msra.mxu0 0.0
      %4580 = vmatpush.msra.mxu0 0.0
      %4581 = vmatpush.msra.mxu0 0.0
      %4582 = vmatpush.msra.mxu0 0.0
      %4583 = vmatpush.msra.mxu0 0.0
      %4584 = vmatpush.msra.mxu0 0.0
      %4585 = vmatpush.msra.mxu0 0.0
      %4586 = vmatpush.msra.mxu0 0.0
      %4587 = vmatpush.msra.mxu0 0.0
      %4588 = vmatpush.msra.mxu0 0.0
      %4589 = vmatpush.msra.mxu0 0.0
      %4590 = vmatpush.msra.mxu0 0.0
      %4591 = vmatpush.msra.mxu0 0.0
      %4592 = vmatpush.msra.mxu0 0.0
      %4593 = vmatpush.msra.mxu0 %v4576
      %4594 = vmatmul.f32.gmra.mxu0 %v4480
      %v4595 = vpop.f32.mrf.mxu0
      %v4596 = vadd.f32 0.0, %v4595
      %4597 = vmatmul.f32.gmra.mxu0 %v4483
      %v4598 = vpop.f32.mrf.mxu0
      %v4599 = vadd.f32 0.0, %v4598
      %4600 = vmatmul.f32.gmra.mxu0 %v4486
      %v4601 = vpop.f32.mrf.mxu0
      %v4602 = vadd.f32 0.0, %v4601
      %4603 = vmatmul.f32.gmra.mxu0 %v4489
      %v4604 = vpop.f32.mrf.mxu0
      %v4605 = vadd.f32 0.0, %v4604
      %4606 = vmatmul.f32.gmra.mxu0 %v4492
      %v4607 = vpop.f32.mrf.mxu0
      %v4608 = vadd.f32 0.0, %v4607
      %4609 = vmatmul.f32.gmra.mxu0 %v4495
      %v4610 = vpop.f32.mrf.mxu0
      %v4611 = vadd.f32 0.0, %v4610
      %4612 = vmatmul.f32.gmra.mxu0 %v4498
      %v4613 = vpop.f32.mrf.mxu0
      %v4614 = vadd.f32 0.0, %v4613
      %4615 = vmatmul.f32.gmra.mxu0 %v4501
      %v4616 = vpop.f32.mrf.mxu0
      %v4617 = vadd.f32 0.0, %v4616
      %4618 = vmatmul.f32.gmra.mxu0 %v4504
      %v4619 = vpop.f32.mrf.mxu0
      %v4620 = vadd.f32 0.0, %v4619
      %4621 = vmatmul.f32.gmra.mxu0 %v4507
      %v4622 = vpop.f32.mrf.mxu0
      %v4623 = vadd.f32 0.0, %v4622
      %4624 = vmatmul.f32.gmra.mxu0 %v4510
      %v4625 = vpop.f32.mrf.mxu0
      %v4626 = vadd.f32 0.0, %v4625
      %4627 = vmatmul.f32.gmra.mxu0 %v4513
      %v4628 = vpop.f32.mrf.mxu0
      %v4629 = vadd.f32 0.0, %v4628
      %4630 = vmatmul.f32.gmra.mxu0 %v4516
      %v4631 = vpop.f32.mrf.mxu0
      %v4632 = vadd.f32 0.0, %v4631
      %4633 = vmatmul.f32.gmra.mxu0 %v4519
      %v4634 = vpop.f32.mrf.mxu0
      %v4635 = vadd.f32 0.0, %v4634
      %4636 = vmatmul.f32.gmra.mxu0 %v4522
      %v4637 = vpop.f32.mrf.mxu0
      %v4638 = vadd.f32 0.0, %v4637
      %4639 = vmatmul.f32.gmra.mxu0 %v4525
      %v4640 = vpop.f32.mrf.mxu0
      %v4641 = vadd.f32 0.0, %v4640
      %4642 = vmatmul.f32.gmra.mxu0 %v4528
      %v4643 = vpop.f32.mrf.mxu0
      %v4644 = vadd.f32 0.0, %v4643
      %4645 = vmatmul.f32.gmra.mxu0 %v4531
      %v4646 = vpop.f32.mrf.mxu0
      %v4647 = vadd.f32 0.0, %v4646
      %4648 = vmatmul.f32.gmra.mxu0 %v4534
      %v4649 = vpop.f32.mrf.mxu0
      %v4650 = vadd.f32 0.0, %v4649
      %4651 = vmatmul.f32.gmra.mxu0 %v4537
      %v4652 = vpop.f32.mrf.mxu0
      %v4653 = vadd.f32 0.0, %v4652
      %4654 = vmatmul.f32.gmra.mxu0 %v4540
      %v4655 = vpop.f32.mrf.mxu0
      %v4656 = vadd.f32 0.0, %v4655
      %4657 = vmatmul.f32.gmra.mxu0 %v4543
      %v4658 = vpop.f32.mrf.mxu0
      %v4659 = vadd.f32 0.0, %v4658
      %4660 = vmatmul.f32.gmra.mxu0 %v4546
      %v4661 = vpop.f32.mrf.mxu0
      %v4662 = vadd.f32 0.0, %v4661
      %4663 = vmatmul.f32.gmra.mxu0 %v4549
      %v4664 = vpop.f32.mrf.mxu0
      %v4665 = vadd.f32 0.0, %v4664
      %4666 = vmatmul.f32.gmra.mxu0 %v4552
      %v4667 = vpop.f32.mrf.mxu0
      %v4668 = vadd.f32 0.0, %v4667
      %4669 = vmatmul.f32.gmra.mxu0 %v4555
      %v4670 = vpop.f32.mrf.mxu0
      %v4671 = vadd.f32 0.0, %v4670
      %4672 = vmatmul.f32.gmra.mxu0 %v4558
      %v4673 = vpop.f32.mrf.mxu0
      %v4674 = vadd.f32 0.0, %v4673
      %4675 = vmatmul.f32.gmra.mxu0 %v4561
      %v4676 = vpop.f32.mrf.mxu0
      %v4677 = vadd.f32 0.0, %v4676
      %4678 = vmatmul.f32.gmra.mxu0 %v4564
      %v4679 = vpop.f32.mrf.mxu0
      %v4680 = vadd.f32 0.0, %v4679
      %4681 = vmatmul.f32.gmra.mxu0 %v4567
      %v4682 = vpop.f32.mrf.mxu0
      %v4683 = vadd.f32 0.0, %v4682
      %4684 = vmatmul.f32.gmra.mxu0 %v4570
      %v4685 = vpop.f32.mrf.mxu0
      %v4686 = vadd.f32 0.0, %v4685
      %4687 = vmatmul.f32.gmra.mxu0 %v4573
      %v4688 = vpop.f32.mrf.mxu0
      %v4689 = vadd.f32 0.0, %v4688
      %4690 = vdwg.mxu0
      %v4691 = vadd.f32 %v4413, %v4596
      %v4692 = vadd.f32 %v4414, %v4599
      %v4693 = vadd.f32 %v4415, %v4602
      %v4694 = vadd.f32 %v4416, %v4605
      %v4695 = vadd.f32 %v4417, %v4608
      %v4696 = vadd.f32 %v4418, %v4611
      %v4697 = vadd.f32 %v4419, %v4614
      %v4698 = vadd.f32 %v4420, %v4617
      %v4699 = vadd.f32 %v4421, %v4620
      %v4700 = vadd.f32 %v4422, %v4623
      %v4701 = vadd.f32 %v4423, %v4626
      %v4702 = vadd.f32 %v4424, %v4629
      %v4703 = vadd.f32 %v4425, %v4632
      %v4704 = vadd.f32 %v4426, %v4635
      %v4705 = vadd.f32 %v4427, %v4638
      %v4706 = vadd.f32 %v4428, %v4641
      %v4707 = vadd.f32 %v4429, %v4644
      %v4708 = vadd.f32 %v4430, %v4647
      %v4709 = vadd.f32 %v4431, %v4650
      %v4710 = vadd.f32 %v4432, %v4653
      %v4711 = vadd.f32 %v4433, %v4656
      %v4712 = vadd.f32 %v4434, %v4659
      %v4713 = vadd.f32 %v4435, %v4662
      %v4714 = vadd.f32 %v4436, %v4665
      %v4715 = vadd.f32 %v4437, %v4668
      %v4716 = vadd.f32 %v4438, %v4671
      %v4717 = vadd.f32 %v4439, %v4674
      %v4718 = vadd.f32 %v4440, %v4677
      %v4719 = vadd.f32 %v4441, %v4680
      %v4720 = vadd.f32 %v4442, %v4683
      %v4721 = vadd.f32 %v4443, %v4686
      %v4722 = vadd.f32 %v4444, %v4689
      %v4723 = vadd.f32 %v2068, %v4691
      %v4724 = vadd.f32 %v2071, %v4692
      %v4725 = vadd.f32 %v2074, %v4693
      %v4726 = vadd.f32 %v2077, %v4694
      %v4727 = vadd.f32 %v2080, %v4695
      %v4728 = vadd.f32 %v2083, %v4696
      %v4729 = vadd.f32 %v2086, %v4697
      %v4730 = vadd.f32 %v2089, %v4698
      %v4731 = vadd.f32 %v2092, %v4699
      %v4732 = vadd.f32 %v2095, %v4700
      %v4733 = vadd.f32 %v2098, %v4701
      %v4734 = vadd.f32 %v2101, %v4702
      %v4735 = vadd.f32 %v2104, %v4703
      %v4736 = vadd.f32 %v2107, %v4704
      %v4737 = vadd.f32 %v2110, %v4705
      %v4738 = vadd.f32 %v2113, %v4706
      %v4739 = vadd.f32 %v2116, %v4707
      %v4740 = vadd.f32 %v2119, %v4708
      %v4741 = vadd.f32 %v2122, %v4709
      %v4742 = vadd.f32 %v2125, %v4710
      %v4743 = vadd.f32 %v2128, %v4711
      %v4744 = vadd.f32 %v2131, %v4712
      %v4745 = vadd.f32 %v2134, %v4713
      %v4746 = vadd.f32 %v2137, %v4714
      %v4747 = vadd.f32 %v2140, %v4715
      %v4748 = vadd.f32 %v2143, %v4716
      %v4749 = vadd.f32 %v2146, %v4717
      %v4750 = vadd.f32 %v2149, %v4718
      %v4751 = vadd.f32 %v2152, %v4719
      %v4752 = vadd.f32 %v2155, %v4720
      %v4753 = vadd.f32 %v2158, %v4721
      %v4754 = vadd.f32 %v2161, %v4722
      %v4755 = vmax.f32 %v4723, 0.0
      %v4756 = vmax.f32 %v4724, 0.0
      %v4757 = vmax.f32 %v4725, 0.0
      %v4758 = vmax.f32 %v4726, 0.0
      %v4759 = vmax.f32 %v4727, 0.0
      %v4760 = vmax.f32 %v4728, 0.0
      %v4761 = vmax.f32 %v4729, 0.0
      %v4762 = vmax.f32 %v4730, 0.0
      %v4763 = vmax.f32 %v4731, 0.0
      %v4764 = vmax.f32 %v4732, 0.0
      %v4765 = vmax.f32 %v4733, 0.0
      %v4766 = vmax.f32 %v4734, 0.0
      %v4767 = vmax.f32 %v4735, 0.0
      %v4768 = vmax.f32 %v4736, 0.0
      %v4769 = vmax.f32 %v4737, 0.0
      %v4770 = vmax.f32 %v4738, 0.0
      %v4771 = vmax.f32 %v4739, 0.0
      %v4772 = vmax.f32 %v4740, 0.0
      %v4773 = vmax.f32 %v4741, 0.0
      %v4774 = vmax.f32 %v4742, 0.0
      %v4775 = vmax.f32 %v4743, 0.0
      %v4776 = vmax.f32 %v4744, 0.0
      %v4777 = vmax.f32 %v4745, 0.0
      %v4778 = vmax.f32 %v4746, 0.0
      %v4779 = vmax.f32 %v4747, 0.0
      %v4780 = vmax.f32 %v4748, 0.0
      %v4781 = vmax.f32 %v4749, 0.0
      %v4782 = vmax.f32 %v4750, 0.0
      %v4783 = vmax.f32 %v4751, 0.0
      %v4784 = vmax.f32 %v4752, 0.0
      %v4785 = vmax.f32 %v4753, 0.0
      %v4786 = vmax.f32 %v4754, 0.0
      %v4787 = vsub.f32 1.0, %v1571
      %v4788 = vsub.f32 1.0, %v1586
      %v4789 = vsub.f32 1.0, %v1601
      %v4790 = vsub.f32 1.0, %v1616
      %v4791 = vsub.f32 1.0, %v1631
      %v4792 = vsub.f32 1.0, %v1646
      %v4793 = vsub.f32 1.0, %v1661
      %v4794 = vsub.f32 1.0, %v1676
      %v4795 = vsub.f32 1.0, %v1691
      %v4796 = vsub.f32 1.0, %v1706
      %v4797 = vsub.f32 1.0, %v1721
      %v4798 = vsub.f32 1.0, %v1736
      %v4799 = vsub.f32 1.0, %v1751
      %v4800 = vsub.f32 1.0, %v1766
      %v4801 = vsub.f32 1.0, %v1781
      %v4802 = vsub.f32 1.0, %v1796
      %v4803 = vsub.f32 1.0, %v1811
      %v4804 = vsub.f32 1.0, %v1826
      %v4805 = vsub.f32 1.0, %v1841
      %v4806 = vsub.f32 1.0, %v1856
      %v4807 = vsub.f32 1.0, %v1871
      %v4808 = vsub.f32 1.0, %v1886
      %v4809 = vsub.f32 1.0, %v1901
      %v4810 = vsub.f32 1.0, %v1916
      %v4811 = vsub.f32 1.0, %v1931
      %v4812 = vsub.f32 1.0, %v1946
      %v4813 = vsub.f32 1.0, %v1961
      %v4814 = vsub.f32 1.0, %v1976
      %v4815 = vsub.f32 1.0, %v1991
      %v4816 = vsub.f32 1.0, %v2006
      %v4817 = vsub.f32 1.0, %v2021
      %v4818 = vsub.f32 1.0, %v2036
      %v4819 = vmul.f32 %v4787, %v4755
      %v4820 = vmul.f32 %v4788, %v4756
      %v4821 = vmul.f32 %v4789, %v4757
      %v4822 = vmul.f32 %v4790, %v4758
      %v4823 = vmul.f32 %v4791, %v4759
      %v4824 = vmul.f32 %v4792, %v4760
      %v4825 = vmul.f32 %v4793, %v4761
      %v4826 = vmul.f32 %v4794, %v4762
      %v4827 = vmul.f32 %v4795, %v4763
      %v4828 = vmul.f32 %v4796, %v4764
      %v4829 = vmul.f32 %v4797, %v4765
      %v4830 = vmul.f32 %v4798, %v4766
      %v4831 = vmul.f32 %v4799, %v4767
      %v4832 = vmul.f32 %v4800, %v4768
      %v4833 = vmul.f32 %v4801, %v4769
      %v4834 = vmul.f32 %v4802, %v4770
      %v4835 = vmul.f32 %v4803, %v4771
      %v4836 = vmul.f32 %v4804, %v4772
      %v4837 = vmul.f32 %v4805, %v4773
      %v4838 = vmul.f32 %v4806, %v4774
      %v4839 = vmul.f32 %v4807, %v4775
      %v4840 = vmul.f32 %v4808, %v4776
      %v4841 = vmul.f32 %v4809, %v4777
      %v4842 = vmul.f32 %v4810, %v4778
      %v4843 = vmul.f32 %v4811, %v4779
      %v4844 = vmul.f32 %v4812, %v4780
      %v4845 = vmul.f32 %v4813, %v4781
      %v4846 = vmul.f32 %v4814, %v4782
      %v4847 = vmul.f32 %v4815, %v4783
      %v4848 = vmul.f32 %v4816, %v4784
      %v4849 = vmul.f32 %v4817, %v4785
      %v4850 = vmul.f32 %v4818, %v4786
      %v4851 = vmul.f32 %v1571, %v439
      %v4852 = vmul.f32 %v1586, %v440
      %v4853 = vmul.f32 %v1601, %v441
      %v4854 = vmul.f32 %v1616, %v442
      %v4855 = vmul.f32 %v1631, %v443
      %v4856 = vmul.f32 %v1646, %v444
      %v4857 = vmul.f32 %v1661, %v445
      %v4858 = vmul.f32 %v1676, %v446
      %v4859 = vmul.f32 %v1691, %v447
      %v4860 = vmul.f32 %v1706, %v448
      %v4861 = vmul.f32 %v1721, %v449
      %v4862 = vmul.f32 %v1736, %v450
      %v4863 = vmul.f32 %v1751, %v451
      %v4864 = vmul.f32 %v1766, %v452
      %v4865 = vmul.f32 %v1781, %v453
      %v4866 = vmul.f32 %v1796, %v454
      %v4867 = vmul.f32 %v1811, %v455
      %v4868 = vmul.f32 %v1826, %v456
      %v4869 = vmul.f32 %v1841, %v457
      %v4870 = vmul.f32 %v1856, %v458
      %v4871 = vmul.f32 %v1871, %v459
      %v4872 = vmul.f32 %v1886, %v460
      %v4873 = vmul.f32 %v1901, %v461
      %v4874 = vmul.f32 %v1916, %v462
      %v4875 = vmul.f32 %v1931, %v463
      %v4876 = vmul.f32 %v1946, %v464
      %v4877 = vmul.f32 %v1961, %v465
      %v4878 = vmul.f32 %v1976, %v466
      %v4879 = vmul.f32 %v1991, %v467
      %v4880 = vmul.f32 %v2006, %v468
      %v4881 = vmul.f32 %v2021, %v469
      %v4882 = vmul.f32 %v2036, %v470
      %v4883 = vadd.f32 %v4819, %v4851
      %v4884 = vadd.f32 %v4820, %v4852
      %v4885 = vadd.f32 %v4821, %v4853
      %v4886 = vadd.f32 %v4822, %v4854
      %v4887 = vadd.f32 %v4823, %v4855
      %v4888 = vadd.f32 %v4824, %v4856
      %v4889 = vadd.f32 %v4825, %v4857
      %v4890 = vadd.f32 %v4826, %v4858
      %v4891 = vadd.f32 %v4827, %v4859
      %v4892 = vadd.f32 %v4828, %v4860
      %v4893 = vadd.f32 %v4829, %v4861
      %v4894 = vadd.f32 %v4830, %v4862
      %v4895 = vadd.f32 %v4831, %v4863
      %v4896 = vadd.f32 %v4832, %v4864
      %v4897 = vadd.f32 %v4833, %v4865
      %v4898 = vadd.f32 %v4834, %v4866
      %v4899 = vadd.f32 %v4835, %v4867
      %v4900 = vadd.f32 %v4836, %v4868
      %v4901 = vadd.f32 %v4837, %v4869
      %v4902 = vadd.f32 %v4838, %v4870
      %v4903 = vadd.f32 %v4839, %v4871
      %v4904 = vadd.f32 %v4840, %v4872
      %v4905 = vadd.f32 %v4841, %v4873
      %v4906 = vadd.f32 %v4842, %v4874
      %v4907 = vadd.f32 %v4843, %v4875
      %v4908 = vadd.f32 %v4844, %v4876
      %v4909 = vadd.f32 %v4845, %v4877
      %v4910 = vadd.f32 %v4846, %v4878
      %v4911 = vadd.f32 %v4847, %v4879
      %v4912 = vadd.f32 %v4848, %v4880
      %v4913 = vadd.f32 %v4849, %v4881
      %v4914 = vadd.f32 %v4850, %v4882
      %4915 = vst.msk [vmem:[%s2251 + $0x1] sm:$0xff] %vm2163, %v4883
      %4916 = vst.msk [vmem:[%s2251 + $0x9] sm:$0xff] %vm2163, %v4884
      %4917 = vst.msk [vmem:[%s2251 + $0x19] sm:$0xff] %vm2163, %v4885
      %4918 = vst.msk [vmem:[%s2251 + $0x21] sm:$0xff] %vm2163, %v4886
      %4919 = vst.msk [vmem:[%s2251 + $0x31] sm:$0xff] %vm2163, %v4887
      %4920 = vst.msk [vmem:[%s2251 + $0x39] sm:$0xff] %vm2163, %v4888
      %4921 = vst.msk [vmem:[%s2251 + $0x49] sm:$0xff] %vm2163, %v4889
      %4922 = vst.msk [vmem:[%s2251 + $0x51] sm:$0xff] %vm2163, %v4890
      %4923 = vst.msk [vmem:[%s2251 + $0x61] sm:$0xff] %vm2163, %v4891
      %4924 = vst.msk [vmem:[%s2251 + $0x69] sm:$0xff] %vm2163, %v4892
      %4925 = vst.msk [vmem:[%s2251 + $0x79] sm:$0xff] %vm2163, %v4893
      %4926 = vst.msk [vmem:[%s2251 + $0x81] sm:$0xff] %vm2163, %v4894
      %4927 = vst.msk [vmem:[%s2251 + $0x91] sm:$0xff] %vm2163, %v4895
      %4928 = vst.msk [vmem:[%s2251 + $0x99] sm:$0xff] %vm2163, %v4896
      %4929 = vst.msk [vmem:[%s2251 + $0xa9] sm:$0xff] %vm2163, %v4897
      %4930 = vst.msk [vmem:[%s2251 + $0xb1] sm:$0xff] %vm2163, %v4898
      %4931 = vst.msk [vmem:[%s2251 + $0xc1] sm:$0xff] %vm2163, %v4899
      %4932 = vst.msk [vmem:[%s2251 + $0xc9] sm:$0xff] %vm2163, %v4900
      %4933 = vst.msk [vmem:[%s2251 + $0xd9] sm:$0xff] %vm2163, %v4901
      %4934 = vst.msk [vmem:[%s2251 + $0xe1] sm:$0xff] %vm2163, %v4902
      %4935 = vst.msk [vmem:[%s2251 + $0xf1] sm:$0xff] %vm2163, %v4903
      %4936 = vst.msk [vmem:[%s2251 + $0xf9] sm:$0xff] %vm2163, %v4904
      %4937 = vst.msk [vmem:[%s2251 + $0x109] sm:$0xff] %vm2163, %v4905
      %4938 = vst.msk [vmem:[%s2251 + $0x111] sm:$0xff] %vm2163, %v4906
      %4939 = vst.msk [vmem:[%s2251 + $0x121] sm:$0xff] %vm2163, %v4907
      %4940 = vst.msk [vmem:[%s2251 + $0x129] sm:$0xff] %vm2163, %v4908
      %4941 = vst.msk [vmem:[%s2251 + $0x139] sm:$0xff] %vm2163, %v4909
      %4942 = vst.msk [vmem:[%s2251 + $0x141] sm:$0xff] %vm2163, %v4910
      %4943 = vst.msk [vmem:[%s2251 + $0x151] sm:$0xff] %vm2163, %v4911
      %4944 = vst.msk [vmem:[%s2251 + $0x159] sm:$0xff] %vm2163, %v4912
      %4945 = vst.msk [vmem:[%s2251 + $0x169] sm:$0xff] %vm2163, %v4913
      %4946 = vst.msk [vmem:[%s2251 + $0x171] sm:$0xff] %vm2163, %v4914
      %v4947 = vld [vmem:[#allocation2] sm:$0xff]
      %v4948 = vld [vmem:[#allocation2 + $0x8] sm:$0xff]
      %v4949 = vld [vmem:[#allocation2 + $0x18] sm:$0xff]
      %v4950 = vld [vmem:[#allocation2 + $0x20] sm:$0xff]
      %v4951 = vld [vmem:[#allocation2 + $0x30] sm:$0xff]
      %v4952 = vld [vmem:[#allocation2 + $0x38] sm:$0xff]
      %v4953 = vld [vmem:[#allocation2 + $0x48] sm:$0xff]
      %v4954 = vld [vmem:[#allocation2 + $0x50] sm:$0xff]
      %v4955 = vld [vmem:[#allocation2 + $0x60] sm:$0xff]
      %v4956 = vld [vmem:[#allocation2 + $0x68] sm:$0xff]
      %v4957 = vld [vmem:[#allocation2 + $0x78] sm:$0xff]
      %v4958 = vld [vmem:[#allocation2 + $0x80] sm:$0xff]
      %v4959 = vld [vmem:[#allocation2 + $0x90] sm:$0xff]
      %v4960 = vld [vmem:[#allocation2 + $0x98] sm:$0xff]
      %v4961 = vld [vmem:[#allocation2 + $0xa8] sm:$0xff]
      %v4962 = vld [vmem:[#allocation2 + $0xb0] sm:$0xff]
      %v4963 = vld [vmem:[#allocation2 + $0xc0] sm:$0xff]
      %v4964 = vld [vmem:[#allocation2 + $0xc8] sm:$0xff]
      %v4965 = vld [vmem:[#allocation2 + $0xd8] sm:$0xff]
      %v4966 = vld [vmem:[#allocation2 + $0xe0] sm:$0xff]
      %v4967 = vld [vmem:[#allocation2 + $0xf0] sm:$0xff]
      %v4968 = vld [vmem:[#allocation2 + $0xf8] sm:$0xff]
      %v4969 = vld [vmem:[#allocation2 + $0x108] sm:$0xff]
      %v4970 = vld [vmem:[#allocation2 + $0x110] sm:$0xff]
      %v4971 = vld [vmem:[#allocation2 + $0x120] sm:$0xff]
      %v4972 = vld [vmem:[#allocation2 + $0x128] sm:$0xff]
      %v4973 = vld [vmem:[#allocation2 + $0x138] sm:$0xff]
      %v4974 = vld [vmem:[#allocation2 + $0x140] sm:$0xff]
      %v4975 = vld [vmem:[#allocation2 + $0x150] sm:$0xff]
      %v4976 = vld [vmem:[#allocation2 + $0x158] sm:$0xff]
      %v4977 = vld [vmem:[#allocation2 + $0x168] sm:$0xff]
      %v4978 = vld [vmem:[#allocation2 + $0x170] sm:$0xff]
      %v4979 = vld [vmem:[%s9] sm:$0xf]
      %v4980 = vld [vmem:[#allocation2 + $0x1] sm:$0xff]
      %v4981 = vld [vmem:[#allocation2 + $0x9] sm:$0xff]
      %v4982 = vld [vmem:[#allocation2 + $0x19] sm:$0xff]
      %v4983 = vld [vmem:[#allocation2 + $0x21] sm:$0xff]
      %v4984 = vld [vmem:[#allocation2 + $0x31] sm:$0xff]
      %v4985 = vld [vmem:[#allocation2 + $0x39] sm:$0xff]
      %v4986 = vld [vmem:[#allocation2 + $0x49] sm:$0xff]
      %v4987 = vld [vmem:[#allocation2 + $0x51] sm:$0xff]
      %v4988 = vld [vmem:[#allocation2 + $0x61] sm:$0xff]
      %v4989 = vld [vmem:[#allocation2 + $0x69] sm:$0xff]
      %v4990 = vld [vmem:[#allocation2 + $0x79] sm:$0xff]
      %v4991 = vld [vmem:[#allocation2 + $0x81] sm:$0xff]
      %v4992 = vld [vmem:[#allocation2 + $0x91] sm:$0xff]
      %v4993 = vld [vmem:[#allocation2 + $0x99] sm:$0xff]
      %v4994 = vld [vmem:[#allocation2 + $0xa9] sm:$0xff]
      %v4995 = vld [vmem:[#allocation2 + $0xb1] sm:$0xff]
      %v4996 = vld [vmem:[#allocation2 + $0xc1] sm:$0xff]
      %v4997 = vld [vmem:[#allocation2 + $0xc9] sm:$0xff]
      %v4998 = vld [vmem:[#allocation2 + $0xd9] sm:$0xff]
      %v4999 = vld [vmem:[#allocation2 + $0xe1] sm:$0xff]
      %v5000 = vld [vmem:[#allocation2 + $0xf1] sm:$0xff]
      %v5001 = vld [vmem:[#allocation2 + $0xf9] sm:$0xff]
      %v5002 = vld [vmem:[#allocation2 + $0x109] sm:$0xff]
      %v5003 = vld [vmem:[#allocation2 + $0x111] sm:$0xff]
      %v5004 = vld [vmem:[#allocation2 + $0x121] sm:$0xff]
      %v5005 = vld [vmem:[#allocation2 + $0x129] sm:$0xff]
      %v5006 = vld [vmem:[#allocation2 + $0x139] sm:$0xff]
      %v5007 = vld [vmem:[#allocation2 + $0x141] sm:$0xff]
      %v5008 = vld [vmem:[#allocation2 + $0x151] sm:$0xff]
      %v5009 = vld [vmem:[#allocation2 + $0x159] sm:$0xff]
      %v5010 = vld [vmem:[#allocation2 + $0x169] sm:$0xff]
      %v5011 = vld [vmem:[#allocation2 + $0x171] sm:$0xff]
      %s5012 = scalar_lea.vmem %s9, 4
      %v5013 = vld [vmem:[%s5012] sm:$0xf]
      %v5015 = vsel %vm2163, %v4980, 0
      %v5018 = vsel %vm2163, %v4981, 0
      %v5021 = vsel %vm2163, %v4982, 0
      %v5024 = vsel %vm2163, %v4983, 0
      %v5027 = vsel %vm2163, %v4984, 0
      %v5030 = vsel %vm2163, %v4985, 0
      %v5033 = vsel %vm2163, %v4986, 0
      %v5036 = vsel %vm2163, %v4987, 0
      %v5039 = vsel %vm2163, %v4988, 0
      %v5042 = vsel %vm2163, %v4989, 0
      %v5045 = vsel %vm2163, %v4990, 0
      %v5048 = vsel %vm2163, %v4991, 0
      %v5051 = vsel %vm2163, %v4992, 0
      %v5054 = vsel %vm2163, %v4993, 0
      %v5057 = vsel %vm2163, %v4994, 0
      %v5060 = vsel %vm2163, %v4995, 0
      %v5063 = vsel %vm2163, %v4996, 0
      %v5066 = vsel %vm2163, %v4997, 0
      %v5069 = vsel %vm2163, %v4998, 0
      %v5072 = vsel %vm2163, %v4999, 0
      %v5075 = vsel %vm2163, %v5000, 0
      %v5078 = vsel %vm2163, %v5001, 0
      %v5081 = vsel %vm2163, %v5002, 0
      %v5084 = vsel %vm2163, %v5003, 0
      %v5087 = vsel %vm2163, %v5004, 0
      %v5090 = vsel %vm2163, %v5005, 0
      %v5093 = vsel %vm2163, %v5006, 0
      %v5096 = vsel %vm2163, %v5007, 0
      %v5099 = vsel %vm2163, %v5008, 0
      %v5102 = vsel %vm2163, %v5009, 0
      %v5105 = vsel %vm2163, %v5010, 0
      %v5108 = vsel %vm2163, %v5011, 0
      %v5111 = vsel %vm2447, %v5013, 0
      %5113 = vmatpush.msra.mxu0 0.0
      %5114 = vmatpush.msra.mxu0 0.0
      %5115 = vmatpush.msra.mxu0 0.0
      %5116 = vmatpush.msra.mxu0 0.0
      %5117 = vmatpush.msra.mxu0 0.0
      %5118 = vmatpush.msra.mxu0 0.0
      %5119 = vmatpush.msra.mxu0 0.0
      %5120 = vmatpush.msra.mxu0 0.0
      %5121 = vmatpush.msra.mxu0 0.0
      %5122 = vmatpush.msra.mxu0 0.0
      %5123 = vmatpush.msra.mxu0 0.0
      %5124 = vmatpush.msra.mxu0 0.0
      %5125 = vmatpush.msra.mxu0 0.0
      %5126 = vmatpush.msra.mxu0 0.0
      %5127 = vmatpush.msra.mxu0 0.0
      %5128 = vmatpush.msra.mxu0 %v5111
      %5129 = vmatmul.f32.gmra.mxu0 %v5015
      %v5130 = vpop.f32.mrf.mxu0
      %v5131 = vadd.f32 0.0, %v5130
      %5132 = vmatmul.f32.gmra.mxu0 %v5018
      %v5133 = vpop.f32.mrf.mxu0
      %v5134 = vadd.f32 0.0, %v5133
      %5135 = vmatmul.f32.gmra.mxu0 %v5021
      %v5136 = vpop.f32.mrf.mxu0
      %v5137 = vadd.f32 0.0, %v5136
      %5138 = vmatmul.f32.gmra.mxu0 %v5024
      %v5139 = vpop.f32.mrf.mxu0
      %v5140 = vadd.f32 0.0, %v5139
      %5141 = vmatmul.f32.gmra.mxu0 %v5027
      %v5142 = vpop.f32.mrf.mxu0
      %v5143 = vadd.f32 0.0, %v5142
      %5144 = vmatmul.f32.gmra.mxu0 %v5030
      %v5145 = vpop.f32.mrf.mxu0
      %v5146 = vadd.f32 0.0, %v5145
      %5147 = vmatmul.f32.gmra.mxu0 %v5033
      %v5148 = vpop.f32.mrf.mxu0
      %v5149 = vadd.f32 0.0, %v5148
      %5150 = vmatmul.f32.gmra.mxu0 %v5036
      %v5151 = vpop.f32.mrf.mxu0
      %v5152 = vadd.f32 0.0, %v5151
      %5153 = vmatmul.f32.gmra.mxu0 %v5039
      %v5154 = vpop.f32.mrf.mxu0
      %v5155 = vadd.f32 0.0, %v5154
      %5156 = vmatmul.f32.gmra.mxu0 %v5042
      %v5157 = vpop.f32.mrf.mxu0
      %v5158 = vadd.f32 0.0, %v5157
      %5159 = vmatmul.f32.gmra.mxu0 %v5045
      %v5160 = vpop.f32.mrf.mxu0
      %v5161 = vadd.f32 0.0, %v5160
      %5162 = vmatmul.f32.gmra.mxu0 %v5048
      %v5163 = vpop.f32.mrf.mxu0
      %v5164 = vadd.f32 0.0, %v5163
      %5165 = vmatmul.f32.gmra.mxu0 %v5051
      %v5166 = vpop.f32.mrf.mxu0
      %v5167 = vadd.f32 0.0, %v5166
      %5168 = vmatmul.f32.gmra.mxu0 %v5054
      %v5169 = vpop.f32.mrf.mxu0
      %v5170 = vadd.f32 0.0, %v5169
      %5171 = vmatmul.f32.gmra.mxu0 %v5057
      %v5172 = vpop.f32.mrf.mxu0
      %v5173 = vadd.f32 0.0, %v5172
      %5174 = vmatmul.f32.gmra.mxu0 %v5060
      %v5175 = vpop.f32.mrf.mxu0
      %v5176 = vadd.f32 0.0, %v5175
      %5177 = vmatmul.f32.gmra.mxu0 %v5063
      %v5178 = vpop.f32.mrf.mxu0
      %v5179 = vadd.f32 0.0, %v5178
      %5180 = vmatmul.f32.gmra.mxu0 %v5066
      %v5181 = vpop.f32.mrf.mxu0
      %v5182 = vadd.f32 0.0, %v5181
      %5183 = vmatmul.f32.gmra.mxu0 %v5069
      %v5184 = vpop.f32.mrf.mxu0
      %v5185 = vadd.f32 0.0, %v5184
      %5186 = vmatmul.f32.gmra.mxu0 %v5072
      %v5187 = vpop.f32.mrf.mxu0
      %v5188 = vadd.f32 0.0, %v5187
      %5189 = vmatmul.f32.gmra.mxu0 %v5075
      %v5190 = vpop.f32.mrf.mxu0
      %v5191 = vadd.f32 0.0, %v5190
      %5192 = vmatmul.f32.gmra.mxu0 %v5078
      %v5193 = vpop.f32.mrf.mxu0
      %v5194 = vadd.f32 0.0, %v5193
      %5195 = vmatmul.f32.gmra.mxu0 %v5081
      %v5196 = vpop.f32.mrf.mxu0
      %v5197 = vadd.f32 0.0, %v5196
      %5198 = vmatmul.f32.gmra.mxu0 %v5084
      %v5199 = vpop.f32.mrf.mxu0
      %v5200 = vadd.f32 0.0, %v5199
      %5201 = vmatmul.f32.gmra.mxu0 %v5087
      %v5202 = vpop.f32.mrf.mxu0
      %v5203 = vadd.f32 0.0, %v5202
      %5204 = vmatmul.f32.gmra.mxu0 %v5090
      %v5205 = vpop.f32.mrf.mxu0
      %v5206 = vadd.f32 0.0, %v5205
      %5207 = vmatmul.f32.gmra.mxu0 %v5093
      %v5208 = vpop.f32.mrf.mxu0
      %v5209 = vadd.f32 0.0, %v5208
      %5210 = vmatmul.f32.gmra.mxu0 %v5096
      %v5211 = vpop.f32.mrf.mxu0
      %v5212 = vadd.f32 0.0, %v5211
      %5213 = vmatmul.f32.gmra.mxu0 %v5099
      %v5214 = vpop.f32.mrf.mxu0
      %v5215 = vadd.f32 0.0, %v5214
      %5216 = vmatmul.f32.gmra.mxu0 %v5102
      %v5217 = vpop.f32.mrf.mxu0
      %v5218 = vadd.f32 0.0, %v5217
      %5219 = vmatmul.f32.gmra.mxu0 %v5105
      %v5220 = vpop.f32.mrf.mxu0
      %v5221 = vadd.f32 0.0, %v5220
      %5222 = vmatmul.f32.gmra.mxu0 %v5108
      %v5223 = vpop.f32.mrf.mxu0
      %v5224 = vadd.f32 0.0, %v5223
      %5225 = vdwg.mxu0
      %v5227 = vsel %vm2163, %v4947, 0
      %v5230 = vsel %vm2163, %v4948, 0
      %v5233 = vsel %vm2163, %v4949, 0
      %v5236 = vsel %vm2163, %v4950, 0
      %v5239 = vsel %vm2163, %v4951, 0
      %v5242 = vsel %vm2163, %v4952, 0
      %v5245 = vsel %vm2163, %v4953, 0
      %v5248 = vsel %vm2163, %v4954, 0
      %v5251 = vsel %vm2163, %v4955, 0
      %v5254 = vsel %vm2163, %v4956, 0
      %v5257 = vsel %vm2163, %v4957, 0
      %v5260 = vsel %vm2163, %v4958, 0
      %v5263 = vsel %vm2163, %v4959, 0
      %v5266 = vsel %vm2163, %v4960, 0
      %v5269 = vsel %vm2163, %v4961, 0
      %v5272 = vsel %vm2163, %v4962, 0
      %v5275 = vsel %vm2163, %v4963, 0
      %v5278 = vsel %vm2163, %v4964, 0
      %v5281 = vsel %vm2163, %v4965, 0
      %v5284 = vsel %vm2163, %v4966, 0
      %v5287 = vsel %vm2163, %v4967, 0
      %v5290 = vsel %vm2163, %v4968, 0
      %v5293 = vsel %vm2163, %v4969, 0
      %v5296 = vsel %vm2163, %v4970, 0
      %v5299 = vsel %vm2163, %v4971, 0
      %v5302 = vsel %vm2163, %v4972, 0
      %v5305 = vsel %vm2163, %v4973, 0
      %v5308 = vsel %vm2163, %v4974, 0
      %v5311 = vsel %vm2163, %v4975, 0
      %v5314 = vsel %vm2163, %v4976, 0
      %v5317 = vsel %vm2163, %v4977, 0
      %v5320 = vsel %vm2163, %v4978, 0
      %v5323 = vsel %vm2447, %v4979, 0
      %5325 = vmatpush.msra.mxu0 0.0
      %5326 = vmatpush.msra.mxu0 0.0
      %5327 = vmatpush.msra.mxu0 0.0
      %5328 = vmatpush.msra.mxu0 0.0
      %5329 = vmatpush.msra.mxu0 0.0
      %5330 = vmatpush.msra.mxu0 0.0
      %5331 = vmatpush.msra.mxu0 0.0
      %5332 = vmatpush.msra.mxu0 0.0
      %5333 = vmatpush.msra.mxu0 0.0
      %5334 = vmatpush.msra.mxu0 0.0
      %5335 = vmatpush.msra.mxu0 0.0
      %5336 = vmatpush.msra.mxu0 0.0
      %5337 = vmatpush.msra.mxu0 0.0
      %5338 = vmatpush.msra.mxu0 0.0
      %5339 = vmatpush.msra.mxu0 0.0
      %5340 = vmatpush.msra.mxu0 %v5323
      %5341 = vmatmul.f32.gmra.mxu0 %v5227
      %v5342 = vpop.f32.mrf.mxu0
      %v5343 = vadd.f32 %v5131, %v5342
      %5344 = vmatmul.f32.gmra.mxu0 %v5230
      %v5345 = vpop.f32.mrf.mxu0
      %v5346 = vadd.f32 %v5134, %v5345
      %5347 = vmatmul.f32.gmra.mxu0 %v5233
      %v5348 = vpop.f32.mrf.mxu0
      %v5349 = vadd.f32 %v5137, %v5348
      %5350 = vmatmul.f32.gmra.mxu0 %v5236
      %v5351 = vpop.f32.mrf.mxu0
      %v5352 = vadd.f32 %v5140, %v5351
      %5353 = vmatmul.f32.gmra.mxu0 %v5239
      %v5354 = vpop.f32.mrf.mxu0
      %v5355 = vadd.f32 %v5143, %v5354
      %5356 = vmatmul.f32.gmra.mxu0 %v5242
      %v5357 = vpop.f32.mrf.mxu0
      %v5358 = vadd.f32 %v5146, %v5357
      %5359 = vmatmul.f32.gmra.mxu0 %v5245
      %v5360 = vpop.f32.mrf.mxu0
      %v5361 = vadd.f32 %v5149, %v5360
      %5362 = vmatmul.f32.gmra.mxu0 %v5248
      %v5363 = vpop.f32.mrf.mxu0
      %v5364 = vadd.f32 %v5152, %v5363
      %5365 = vmatmul.f32.gmra.mxu0 %v5251
      %v5366 = vpop.f32.mrf.mxu0
      %v5367 = vadd.f32 %v5155, %v5366
      %5368 = vmatmul.f32.gmra.mxu0 %v5254
      %v5369 = vpop.f32.mrf.mxu0
      %v5370 = vadd.f32 %v5158, %v5369
      %5371 = vmatmul.f32.gmra.mxu0 %v5257
      %v5372 = vpop.f32.mrf.mxu0
      %v5373 = vadd.f32 %v5161, %v5372
      %5374 = vmatmul.f32.gmra.mxu0 %v5260
      %v5375 = vpop.f32.mrf.mxu0
      %v5376 = vadd.f32 %v5164, %v5375
      %5377 = vmatmul.f32.gmra.mxu0 %v5263
      %v5378 = vpop.f32.mrf.mxu0
      %v5379 = vadd.f32 %v5167, %v5378
      %5380 = vmatmul.f32.gmra.mxu0 %v5266
      %v5381 = vpop.f32.mrf.mxu0
      %v5382 = vadd.f32 %v5170, %v5381
      %5383 = vmatmul.f32.gmra.mxu0 %v5269
      %v5384 = vpop.f32.mrf.mxu0
      %v5385 = vadd.f32 %v5173, %v5384
      %5386 = vmatmul.f32.gmra.mxu0 %v5272
      %v5387 = vpop.f32.mrf.mxu0
      %v5388 = vadd.f32 %v5176, %v5387
      %5389 = vmatmul.f32.gmra.mxu0 %v5275
      %v5390 = vpop.f32.mrf.mxu0
      %v5391 = vadd.f32 %v5179, %v5390
      %5392 = vmatmul.f32.gmra.mxu0 %v5278
      %v5393 = vpop.f32.mrf.mxu0
      %v5394 = vadd.f32 %v5182, %v5393
      %5395 = vmatmul.f32.gmra.mxu0 %v5281
      %v5396 = vpop.f32.mrf.mxu0
      %v5397 = vadd.f32 %v5185, %v5396
      %5398 = vmatmul.f32.gmra.mxu0 %v5284
      %v5399 = vpop.f32.mrf.mxu0
      %v5400 = vadd.f32 %v5188, %v5399
      %5401 = vmatmul.f32.gmra.mxu0 %v5287
      %v5402 = vpop.f32.mrf.mxu0
      %v5403 = vadd.f32 %v5191, %v5402
      %5404 = vmatmul.f32.gmra.mxu0 %v5290
      %v5405 = vpop.f32.mrf.mxu0
      %v5406 = vadd.f32 %v5194, %v5405
      %5407 = vmatmul.f32.gmra.mxu0 %v5293
      %v5408 = vpop.f32.mrf.mxu0
      %v5409 = vadd.f32 %v5197, %v5408
      %5410 = vmatmul.f32.gmra.mxu0 %v5296
      %v5411 = vpop.f32.mrf.mxu0
      %v5412 = vadd.f32 %v5200, %v5411
      %5413 = vmatmul.f32.gmra.mxu0 %v5299
      %v5414 = vpop.f32.mrf.mxu0
      %v5415 = vadd.f32 %v5203, %v5414
      %5416 = vmatmul.f32.gmra.mxu0 %v5302
      %v5417 = vpop.f32.mrf.mxu0
      %v5418 = vadd.f32 %v5206, %v5417
      %5419 = vmatmul.f32.gmra.mxu0 %v5305
      %v5420 = vpop.f32.mrf.mxu0
      %v5421 = vadd.f32 %v5209, %v5420
      %5422 = vmatmul.f32.gmra.mxu0 %v5308
      %v5423 = vpop.f32.mrf.mxu0
      %v5424 = vadd.f32 %v5212, %v5423
      %5425 = vmatmul.f32.gmra.mxu0 %v5311
      %v5426 = vpop.f32.mrf.mxu0
      %v5427 = vadd.f32 %v5215, %v5426
      %5428 = vmatmul.f32.gmra.mxu0 %v5314
      %v5429 = vpop.f32.mrf.mxu0
      %v5430 = vadd.f32 %v5218, %v5429
      %5431 = vmatmul.f32.gmra.mxu0 %v5317
      %v5432 = vpop.f32.mrf.mxu0
      %v5433 = vadd.f32 %v5221, %v5432
      %5434 = vmatmul.f32.gmra.mxu0 %v5320
      %v5435 = vpop.f32.mrf.mxu0
      %v5436 = vadd.f32 %v5224, %v5435
      %5437 = vdwg.mxu0
      %v5438 = vld [vmem:[#allocation2 + $0x2] sm:$0xff]
      %v5439 = vld [vmem:[#allocation2 + $0xa] sm:$0xff]
      %v5440 = vld [vmem:[#allocation2 + $0x1a] sm:$0xff]
      %v5441 = vld [vmem:[#allocation2 + $0x22] sm:$0xff]
      %v5442 = vld [vmem:[#allocation2 + $0x32] sm:$0xff]
      %v5443 = vld [vmem:[#allocation2 + $0x3a] sm:$0xff]
      %v5444 = vld [vmem:[#allocation2 + $0x4a] sm:$0xff]
      %v5445 = vld [vmem:[#allocation2 + $0x52] sm:$0xff]
      %v5446 = vld [vmem:[#allocation2 + $0x62] sm:$0xff]
      %v5447 = vld [vmem:[#allocation2 + $0x6a] sm:$0xff]
      %v5448 = vld [vmem:[#allocation2 + $0x7a] sm:$0xff]
      %v5449 = vld [vmem:[#allocation2 + $0x82] sm:$0xff]
      %v5450 = vld [vmem:[#allocation2 + $0x92] sm:$0xff]
      %v5451 = vld [vmem:[#allocation2 + $0x9a] sm:$0xff]
      %v5452 = vld [vmem:[#allocation2 + $0xaa] sm:$0xff]
      %v5453 = vld [vmem:[#allocation2 + $0xb2] sm:$0xff]
      %v5454 = vld [vmem:[#allocation2 + $0xc2] sm:$0xff]
      %v5455 = vld [vmem:[#allocation2 + $0xca] sm:$0xff]
      %v5456 = vld [vmem:[#allocation2 + $0xda] sm:$0xff]
      %v5457 = vld [vmem:[#allocation2 + $0xe2] sm:$0xff]
      %v5458 = vld [vmem:[#allocation2 + $0xf2] sm:$0xff]
      %v5459 = vld [vmem:[#allocation2 + $0xfa] sm:$0xff]
      %v5460 = vld [vmem:[#allocation2 + $0x10a] sm:$0xff]
      %v5461 = vld [vmem:[#allocation2 + $0x112] sm:$0xff]
      %v5462 = vld [vmem:[#allocation2 + $0x122] sm:$0xff]
      %v5463 = vld [vmem:[#allocation2 + $0x12a] sm:$0xff]
      %v5464 = vld [vmem:[#allocation2 + $0x13a] sm:$0xff]
      %v5465 = vld [vmem:[#allocation2 + $0x142] sm:$0xff]
      %v5466 = vld [vmem:[#allocation2 + $0x152] sm:$0xff]
      %v5467 = vld [vmem:[#allocation2 + $0x15a] sm:$0xff]
      %v5468 = vld [vmem:[#allocation2 + $0x16a] sm:$0xff]
      %v5469 = vld [vmem:[#allocation2 + $0x172] sm:$0xff]
      %s5470 = scalar_lea.vmem %s9, 8
      %v5471 = vld [vmem:[%s5470] sm:$0xf]
      %v5473 = vsel %vm2163, %v5438, 0
      %v5476 = vsel %vm2163, %v5439, 0
      %v5479 = vsel %vm2163, %v5440, 0
      %v5482 = vsel %vm2163, %v5441, 0
      %v5485 = vsel %vm2163, %v5442, 0
      %v5488 = vsel %vm2163, %v5443, 0
      %v5491 = vsel %vm2163, %v5444, 0
      %v5494 = vsel %vm2163, %v5445, 0
      %v5497 = vsel %vm2163, %v5446, 0
      %v5500 = vsel %vm2163, %v5447, 0
      %v5503 = vsel %vm2163, %v5448, 0
      %v5506 = vsel %vm2163, %v5449, 0
      %v5509 = vsel %vm2163, %v5450, 0
      %v5512 = vsel %vm2163, %v5451, 0
      %v5515 = vsel %vm2163, %v5452, 0
      %v5518 = vsel %vm2163, %v5453, 0
      %v5521 = vsel %vm2163, %v5454, 0
      %v5524 = vsel %vm2163, %v5455, 0
      %v5527 = vsel %vm2163, %v5456, 0
      %v5530 = vsel %vm2163, %v5457, 0
      %v5533 = vsel %vm2163, %v5458, 0
      %v5536 = vsel %vm2163, %v5459, 0
      %v5539 = vsel %vm2163, %v5460, 0
      %v5542 = vsel %vm2163, %v5461, 0
      %v5545 = vsel %vm2163, %v5462, 0
      %v5548 = vsel %vm2163, %v5463, 0
      %v5551 = vsel %vm2163, %v5464, 0
      %v5554 = vsel %vm2163, %v5465, 0
      %v5557 = vsel %vm2163, %v5466, 0
      %v5560 = vsel %vm2163, %v5467, 0
      %v5563 = vsel %vm2163, %v5468, 0
      %v5566 = vsel %vm2163, %v5469, 0
      %v5569 = vsel %vm2447, %v5471, 0
      %5571 = vmatpush.msra.mxu0 0.0
      %5572 = vmatpush.msra.mxu0 0.0
      %5573 = vmatpush.msra.mxu0 0.0
      %5574 = vmatpush.msra.mxu0 0.0
      %5575 = vmatpush.msra.mxu0 0.0
      %5576 = vmatpush.msra.mxu0 0.0
      %5577 = vmatpush.msra.mxu0 0.0
      %5578 = vmatpush.msra.mxu0 0.0
      %5579 = vmatpush.msra.mxu0 0.0
      %5580 = vmatpush.msra.mxu0 0.0
      %5581 = vmatpush.msra.mxu0 0.0
      %5582 = vmatpush.msra.mxu0 0.0
      %5583 = vmatpush.msra.mxu0 0.0
      %5584 = vmatpush.msra.mxu0 0.0
      %5585 = vmatpush.msra.mxu0 0.0
      %5586 = vmatpush.msra.mxu0 %v5569
      %5587 = vmatmul.f32.gmra.mxu0 %v5473
      %v5588 = vpop.f32.mrf.mxu0
      %v5589 = vadd.f32 0.0, %v5588
      %5590 = vmatmul.f32.gmra.mxu0 %v5476
      %v5591 = vpop.f32.mrf.mxu0
      %v5592 = vadd.f32 0.0, %v5591
      %5593 = vmatmul.f32.gmra.mxu0 %v5479
      %v5594 = vpop.f32.mrf.mxu0
      %v5595 = vadd.f32 0.0, %v5594
      %5596 = vmatmul.f32.gmra.mxu0 %v5482
      %v5597 = vpop.f32.mrf.mxu0
      %v5598 = vadd.f32 0.0, %v5597
      %5599 = vmatmul.f32.gmra.mxu0 %v5485
      %v5600 = vpop.f32.mrf.mxu0
      %v5601 = vadd.f32 0.0, %v5600
      %5602 = vmatmul.f32.gmra.mxu0 %v5488
      %v5603 = vpop.f32.mrf.mxu0
      %v5604 = vadd.f32 0.0, %v5603
      %5605 = vmatmul.f32.gmra.mxu0 %v5491
      %v5606 = vpop.f32.mrf.mxu0
      %v5607 = vadd.f32 0.0, %v5606
      %5608 = vmatmul.f32.gmra.mxu0 %v5494
      %v5609 = vpop.f32.mrf.mxu0
      %v5610 = vadd.f32 0.0, %v5609
      %5611 = vmatmul.f32.gmra.mxu0 %v5497
      %v5612 = vpop.f32.mrf.mxu0
      %v5613 = vadd.f32 0.0, %v5612
      %5614 = vmatmul.f32.gmra.mxu0 %v5500
      %v5615 = vpop.f32.mrf.mxu0
      %v5616 = vadd.f32 0.0, %v5615
      %5617 = vmatmul.f32.gmra.mxu0 %v5503
      %v5618 = vpop.f32.mrf.mxu0
      %v5619 = vadd.f32 0.0, %v5618
      %5620 = vmatmul.f32.gmra.mxu0 %v5506
      %v5621 = vpop.f32.mrf.mxu0
      %v5622 = vadd.f32 0.0, %v5621
      %5623 = vmatmul.f32.gmra.mxu0 %v5509
      %v5624 = vpop.f32.mrf.mxu0
      %v5625 = vadd.f32 0.0, %v5624
      %5626 = vmatmul.f32.gmra.mxu0 %v5512
      %v5627 = vpop.f32.mrf.mxu0
      %v5628 = vadd.f32 0.0, %v5627
      %5629 = vmatmul.f32.gmra.mxu0 %v5515
      %v5630 = vpop.f32.mrf.mxu0
      %v5631 = vadd.f32 0.0, %v5630
      %5632 = vmatmul.f32.gmra.mxu0 %v5518
      %v5633 = vpop.f32.mrf.mxu0
      %v5634 = vadd.f32 0.0, %v5633
      %5635 = vmatmul.f32.gmra.mxu0 %v5521
      %v5636 = vpop.f32.mrf.mxu0
      %v5637 = vadd.f32 0.0, %v5636
      %5638 = vmatmul.f32.gmra.mxu0 %v5524
      %v5639 = vpop.f32.mrf.mxu0
      %v5640 = vadd.f32 0.0, %v5639
      %5641 = vmatmul.f32.gmra.mxu0 %v5527
      %v5642 = vpop.f32.mrf.mxu0
      %v5643 = vadd.f32 0.0, %v5642
      %5644 = vmatmul.f32.gmra.mxu0 %v5530
      %v5645 = vpop.f32.mrf.mxu0
      %v5646 = vadd.f32 0.0, %v5645
      %5647 = vmatmul.f32.gmra.mxu0 %v5533
      %v5648 = vpop.f32.mrf.mxu0
      %v5649 = vadd.f32 0.0, %v5648
      %5650 = vmatmul.f32.gmra.mxu0 %v5536
      %v5651 = vpop.f32.mrf.mxu0
      %v5652 = vadd.f32 0.0, %v5651
      %5653 = vmatmul.f32.gmra.mxu0 %v5539
      %v5654 = vpop.f32.mrf.mxu0
      %v5655 = vadd.f32 0.0, %v5654
      %5656 = vmatmul.f32.gmra.mxu0 %v5542
      %v5657 = vpop.f32.mrf.mxu0
      %v5658 = vadd.f32 0.0, %v5657
      %5659 = vmatmul.f32.gmra.mxu0 %v5545
      %v5660 = vpop.f32.mrf.mxu0
      %v5661 = vadd.f32 0.0, %v5660
      %5662 = vmatmul.f32.gmra.mxu0 %v5548
      %v5663 = vpop.f32.mrf.mxu0
      %v5664 = vadd.f32 0.0, %v5663
      %5665 = vmatmul.f32.gmra.mxu0 %v5551
      %v5666 = vpop.f32.mrf.mxu0
      %v5667 = vadd.f32 0.0, %v5666
      %5668 = vmatmul.f32.gmra.mxu0 %v5554
      %v5669 = vpop.f32.mrf.mxu0
      %v5670 = vadd.f32 0.0, %v5669
      %5671 = vmatmul.f32.gmra.mxu0 %v5557
      %v5672 = vpop.f32.mrf.mxu0
      %v5673 = vadd.f32 0.0, %v5672
      %5674 = vmatmul.f32.gmra.mxu0 %v5560
      %v5675 = vpop.f32.mrf.mxu0
      %v5676 = vadd.f32 0.0, %v5675
      %5677 = vmatmul.f32.gmra.mxu0 %v5563
      %v5678 = vpop.f32.mrf.mxu0
      %v5679 = vadd.f32 0.0, %v5678
      %5680 = vmatmul.f32.gmra.mxu0 %v5566
      %v5681 = vpop.f32.mrf.mxu0
      %v5682 = vadd.f32 0.0, %v5681
      %5683 = vdwg.mxu0
      %v5684 = vadd.f32 %v5343, %v5589
      %v5685 = vadd.f32 %v5346, %v5592
      %v5686 = vadd.f32 %v5349, %v5595
      %v5687 = vadd.f32 %v5352, %v5598
      %v5688 = vadd.f32 %v5355, %v5601
      %v5689 = vadd.f32 %v5358, %v5604
      %v5690 = vadd.f32 %v5361, %v5607
      %v5691 = vadd.f32 %v5364, %v5610
      %v5692 = vadd.f32 %v5367, %v5613
      %v5693 = vadd.f32 %v5370, %v5616
      %v5694 = vadd.f32 %v5373, %v5619
      %v5695 = vadd.f32 %v5376, %v5622
      %v5696 = vadd.f32 %v5379, %v5625
      %v5697 = vadd.f32 %v5382, %v5628
      %v5698 = vadd.f32 %v5385, %v5631
      %v5699 = vadd.f32 %v5388, %v5634
      %v5700 = vadd.f32 %v5391, %v5637
      %v5701 = vadd.f32 %v5394, %v5640
      %v5702 = vadd.f32 %v5397, %v5643
      %v5703 = vadd.f32 %v5400, %v5646
      %v5704 = vadd.f32 %v5403, %v5649
      %v5705 = vadd.f32 %v5406, %v5652
      %v5706 = vadd.f32 %v5409, %v5655
      %v5707 = vadd.f32 %v5412, %v5658
      %v5708 = vadd.f32 %v5415, %v5661
      %v5709 = vadd.f32 %v5418, %v5664
      %v5710 = vadd.f32 %v5421, %v5667
      %v5711 = vadd.f32 %v5424, %v5670
      %v5712 = vadd.f32 %v5427, %v5673
      %v5713 = vadd.f32 %v5430, %v5676
      %v5714 = vadd.f32 %v5433, %v5679
      %v5715 = vadd.f32 %v5436, %v5682
      %v5716 = vld [vmem:[%s2251] sm:$0xff]
      %v5717 = vld [vmem:[%s2251 + $0x8] sm:$0xff]
      %v5718 = vld [vmem:[%s2251 + $0x18] sm:$0xff]
      %v5719 = vld [vmem:[%s2251 + $0x20] sm:$0xff]
      %v5720 = vld [vmem:[%s2251 + $0x30] sm:$0xff]
      %v5721 = vld [vmem:[%s2251 + $0x38] sm:$0xff]
      %v5722 = vld [vmem:[%s2251 + $0x48] sm:$0xff]
      %v5723 = vld [vmem:[%s2251 + $0x50] sm:$0xff]
      %v5724 = vld [vmem:[%s2251 + $0x60] sm:$0xff]
      %v5725 = vld [vmem:[%s2251 + $0x68] sm:$0xff]
      %v5726 = vld [vmem:[%s2251 + $0x78] sm:$0xff]
      %v5727 = vld [vmem:[%s2251 + $0x80] sm:$0xff]
      %v5728 = vld [vmem:[%s2251 + $0x90] sm:$0xff]
      %v5729 = vld [vmem:[%s2251 + $0x98] sm:$0xff]
      %v5730 = vld [vmem:[%s2251 + $0xa8] sm:$0xff]
      %v5731 = vld [vmem:[%s2251 + $0xb0] sm:$0xff]
      %v5732 = vld [vmem:[%s2251 + $0xc0] sm:$0xff]
      %v5733 = vld [vmem:[%s2251 + $0xc8] sm:$0xff]
      %v5734 = vld [vmem:[%s2251 + $0xd8] sm:$0xff]
      %v5735 = vld [vmem:[%s2251 + $0xe0] sm:$0xff]
      %v5736 = vld [vmem:[%s2251 + $0xf0] sm:$0xff]
      %v5737 = vld [vmem:[%s2251 + $0xf8] sm:$0xff]
      %v5738 = vld [vmem:[%s2251 + $0x108] sm:$0xff]
      %v5739 = vld [vmem:[%s2251 + $0x110] sm:$0xff]
      %v5740 = vld [vmem:[%s2251 + $0x120] sm:$0xff]
      %v5741 = vld [vmem:[%s2251 + $0x128] sm:$0xff]
      %v5742 = vld [vmem:[%s2251 + $0x138] sm:$0xff]
      %v5743 = vld [vmem:[%s2251 + $0x140] sm:$0xff]
      %v5744 = vld [vmem:[%s2251 + $0x150] sm:$0xff]
      %v5745 = vld [vmem:[%s2251 + $0x158] sm:$0xff]
      %v5746 = vld [vmem:[%s2251 + $0x168] sm:$0xff]
      %v5747 = vld [vmem:[%s2251 + $0x170] sm:$0xff]
      %s5748 = scalar_lea.vmem %s9, 12
      %v5749 = vld [vmem:[%s5748] sm:$0xf]
      %v5751 = vsel %vm2163, %v5716, 0
      %v5754 = vsel %vm2163, %v5717, 0
      %v5757 = vsel %vm2163, %v5718, 0
      %v5760 = vsel %vm2163, %v5719, 0
      %v5763 = vsel %vm2163, %v5720, 0
      %v5766 = vsel %vm2163, %v5721, 0
      %v5769 = vsel %vm2163, %v5722, 0
      %v5772 = vsel %vm2163, %v5723, 0
      %v5775 = vsel %vm2163, %v5724, 0
      %v5778 = vsel %vm2163, %v5725, 0
      %v5781 = vsel %vm2163, %v5726, 0
      %v5784 = vsel %vm2163, %v5727, 0
      %v5787 = vsel %vm2163, %v5728, 0
      %v5790 = vsel %vm2163, %v5729, 0
      %v5793 = vsel %vm2163, %v5730, 0
      %v5796 = vsel %vm2163, %v5731, 0
      %v5799 = vsel %vm2163, %v5732, 0
      %v5802 = vsel %vm2163, %v5733, 0
      %v5805 = vsel %vm2163, %v5734, 0
      %v5808 = vsel %vm2163, %v5735, 0
      %v5811 = vsel %vm2163, %v5736, 0
      %v5814 = vsel %vm2163, %v5737, 0
      %v5817 = vsel %vm2163, %v5738, 0
      %v5820 = vsel %vm2163, %v5739, 0
      %v5823 = vsel %vm2163, %v5740, 0
      %v5826 = vsel %vm2163, %v5741, 0
      %v5829 = vsel %vm2163, %v5742, 0
      %v5832 = vsel %vm2163, %v5743, 0
      %v5835 = vsel %vm2163, %v5744, 0
      %v5838 = vsel %vm2163, %v5745, 0
      %v5841 = vsel %vm2163, %v5746, 0
      %v5844 = vsel %vm2163, %v5747, 0
      %v5847 = vsel %vm2447, %v5749, 0
      %5849 = vmatpush.msra.mxu0 0.0
      %5850 = vmatpush.msra.mxu0 0.0
      %5851 = vmatpush.msra.mxu0 0.0
      %5852 = vmatpush.msra.mxu0 0.0
      %5853 = vmatpush.msra.mxu0 0.0
      %5854 = vmatpush.msra.mxu0 0.0
      %5855 = vmatpush.msra.mxu0 0.0
      %5856 = vmatpush.msra.mxu0 0.0
      %5857 = vmatpush.msra.mxu0 0.0
      %5858 = vmatpush.msra.mxu0 0.0
      %5859 = vmatpush.msra.mxu0 0.0
      %5860 = vmatpush.msra.mxu0 0.0
      %5861 = vmatpush.msra.mxu0 0.0
      %5862 = vmatpush.msra.mxu0 0.0
      %5863 = vmatpush.msra.mxu0 0.0
      %5864 = vmatpush.msra.mxu0 %v5847
      %5865 = vmatmul.f32.gmra.mxu0 %v5751
      %v5866 = vpop.f32.mrf.mxu0
      %v5867 = vadd.f32 0.0, %v5866
      %5868 = vmatmul.f32.gmra.mxu0 %v5754
      %v5869 = vpop.f32.mrf.mxu0
      %v5870 = vadd.f32 0.0, %v5869
      %5871 = vmatmul.f32.gmra.mxu0 %v5757
      %v5872 = vpop.f32.mrf.mxu0
      %v5873 = vadd.f32 0.0, %v5872
      %5874 = vmatmul.f32.gmra.mxu0 %v5760
      %v5875 = vpop.f32.mrf.mxu0
      %v5876 = vadd.f32 0.0, %v5875
      %5877 = vmatmul.f32.gmra.mxu0 %v5763
      %v5878 = vpop.f32.mrf.mxu0
      %v5879 = vadd.f32 0.0, %v5878
      %5880 = vmatmul.f32.gmra.mxu0 %v5766
      %v5881 = vpop.f32.mrf.mxu0
      %v5882 = vadd.f32 0.0, %v5881
      %5883 = vmatmul.f32.gmra.mxu0 %v5769
      %v5884 = vpop.f32.mrf.mxu0
      %v5885 = vadd.f32 0.0, %v5884
      %5886 = vmatmul.f32.gmra.mxu0 %v5772
      %v5887 = vpop.f32.mrf.mxu0
      %v5888 = vadd.f32 0.0, %v5887
      %5889 = vmatmul.f32.gmra.mxu0 %v5775
      %v5890 = vpop.f32.mrf.mxu0
      %v5891 = vadd.f32 0.0, %v5890
      %5892 = vmatmul.f32.gmra.mxu0 %v5778
      %v5893 = vpop.f32.mrf.mxu0
      %v5894 = vadd.f32 0.0, %v5893
      %5895 = vmatmul.f32.gmra.mxu0 %v5781
      %v5896 = vpop.f32.mrf.mxu0
      %v5897 = vadd.f32 0.0, %v5896
      %5898 = vmatmul.f32.gmra.mxu0 %v5784
      %v5899 = vpop.f32.mrf.mxu0
      %v5900 = vadd.f32 0.0, %v5899
      %5901 = vmatmul.f32.gmra.mxu0 %v5787
      %v5902 = vpop.f32.mrf.mxu0
      %v5903 = vadd.f32 0.0, %v5902
      %5904 = vmatmul.f32.gmra.mxu0 %v5790
      %v5905 = vpop.f32.mrf.mxu0
      %v5906 = vadd.f32 0.0, %v5905
      %5907 = vmatmul.f32.gmra.mxu0 %v5793
      %v5908 = vpop.f32.mrf.mxu0
      %v5909 = vadd.f32 0.0, %v5908
      %5910 = vmatmul.f32.gmra.mxu0 %v5796
      %v5911 = vpop.f32.mrf.mxu0
      %v5912 = vadd.f32 0.0, %v5911
      %5913 = vmatmul.f32.gmra.mxu0 %v5799
      %v5914 = vpop.f32.mrf.mxu0
      %v5915 = vadd.f32 0.0, %v5914
      %5916 = vmatmul.f32.gmra.mxu0 %v5802
      %v5917 = vpop.f32.mrf.mxu0
      %v5918 = vadd.f32 0.0, %v5917
      %5919 = vmatmul.f32.gmra.mxu0 %v5805
      %v5920 = vpop.f32.mrf.mxu0
      %v5921 = vadd.f32 0.0, %v5920
      %5922 = vmatmul.f32.gmra.mxu0 %v5808
      %v5923 = vpop.f32.mrf.mxu0
      %v5924 = vadd.f32 0.0, %v5923
      %5925 = vmatmul.f32.gmra.mxu0 %v5811
      %v5926 = vpop.f32.mrf.mxu0
      %v5927 = vadd.f32 0.0, %v5926
      %5928 = vmatmul.f32.gmra.mxu0 %v5814
      %v5929 = vpop.f32.mrf.mxu0
      %v5930 = vadd.f32 0.0, %v5929
      %5931 = vmatmul.f32.gmra.mxu0 %v5817
      %v5932 = vpop.f32.mrf.mxu0
      %v5933 = vadd.f32 0.0, %v5932
      %5934 = vmatmul.f32.gmra.mxu0 %v5820
      %v5935 = vpop.f32.mrf.mxu0
      %v5936 = vadd.f32 0.0, %v5935
      %5937 = vmatmul.f32.gmra.mxu0 %v5823
      %v5938 = vpop.f32.mrf.mxu0
      %v5939 = vadd.f32 0.0, %v5938
      %5940 = vmatmul.f32.gmra.mxu0 %v5826
      %v5941 = vpop.f32.mrf.mxu0
      %v5942 = vadd.f32 0.0, %v5941
      %5943 = vmatmul.f32.gmra.mxu0 %v5829
      %v5944 = vpop.f32.mrf.mxu0
      %v5945 = vadd.f32 0.0, %v5944
      %5946 = vmatmul.f32.gmra.mxu0 %v5832
      %v5947 = vpop.f32.mrf.mxu0
      %v5948 = vadd.f32 0.0, %v5947
      %5949 = vmatmul.f32.gmra.mxu0 %v5835
      %v5950 = vpop.f32.mrf.mxu0
      %v5951 = vadd.f32 0.0, %v5950
      %5952 = vmatmul.f32.gmra.mxu0 %v5838
      %v5953 = vpop.f32.mrf.mxu0
      %v5954 = vadd.f32 0.0, %v5953
      %5955 = vmatmul.f32.gmra.mxu0 %v5841
      %v5956 = vpop.f32.mrf.mxu0
      %v5957 = vadd.f32 0.0, %v5956
      %5958 = vmatmul.f32.gmra.mxu0 %v5844
      %v5959 = vpop.f32.mrf.mxu0
      %v5960 = vadd.f32 0.0, %v5959
      %5961 = vdwg.mxu0
      %v5962 = vadd.f32 %v5684, %v5867
      %v5963 = vadd.f32 %v5685, %v5870
      %v5964 = vadd.f32 %v5686, %v5873
      %v5965 = vadd.f32 %v5687, %v5876
      %v5966 = vadd.f32 %v5688, %v5879
      %v5967 = vadd.f32 %v5689, %v5882
      %v5968 = vadd.f32 %v5690, %v5885
      %v5969 = vadd.f32 %v5691, %v5888
      %v5970 = vadd.f32 %v5692, %v5891
      %v5971 = vadd.f32 %v5693, %v5894
      %v5972 = vadd.f32 %v5694, %v5897
      %v5973 = vadd.f32 %v5695, %v5900
      %v5974 = vadd.f32 %v5696, %v5903
      %v5975 = vadd.f32 %v5697, %v5906
      %v5976 = vadd.f32 %v5698, %v5909
      %v5977 = vadd.f32 %v5699, %v5912
      %v5978 = vadd.f32 %v5700, %v5915
      %v5979 = vadd.f32 %v5701, %v5918
      %v5980 = vadd.f32 %v5702, %v5921
      %v5981 = vadd.f32 %v5703, %v5924
      %v5982 = vadd.f32 %v5704, %v5927
      %v5983 = vadd.f32 %v5705, %v5930
      %v5984 = vadd.f32 %v5706, %v5933
      %v5985 = vadd.f32 %v5707, %v5936
      %v5986 = vadd.f32 %v5708, %v5939
      %v5987 = vadd.f32 %v5709, %v5942
      %v5988 = vadd.f32 %v5710, %v5945
      %v5989 = vadd.f32 %v5711, %v5948
      %v5990 = vadd.f32 %v5712, %v5951
      %v5991 = vadd.f32 %v5713, %v5954
      %v5992 = vadd.f32 %v5714, %v5957
      %v5993 = vadd.f32 %v5715, %v5960
      %v5994 = vld [vmem:[%s2251 + $0x1] sm:$0xff]
      %v5995 = vld [vmem:[%s2251 + $0x9] sm:$0xff]
      %v5996 = vld [vmem:[%s2251 + $0x19] sm:$0xff]
      %v5997 = vld [vmem:[%s2251 + $0x21] sm:$0xff]
      %v5998 = vld [vmem:[%s2251 + $0x31] sm:$0xff]
      %v5999 = vld [vmem:[%s2251 + $0x39] sm:$0xff]
      %v6000 = vld [vmem:[%s2251 + $0x49] sm:$0xff]
      %v6001 = vld [vmem:[%s2251 + $0x51] sm:$0xff]
      %v6002 = vld [vmem:[%s2251 + $0x61] sm:$0xff]
      %v6003 = vld [vmem:[%s2251 + $0x69] sm:$0xff]
      %v6004 = vld [vmem:[%s2251 + $0x79] sm:$0xff]
      %v6005 = vld [vmem:[%s2251 + $0x81] sm:$0xff]
      %v6006 = vld [vmem:[%s2251 + $0x91] sm:$0xff]
      %v6007 = vld [vmem:[%s2251 + $0x99] sm:$0xff]
      %v6008 = vld [vmem:[%s2251 + $0xa9] sm:$0xff]
      %v6009 = vld [vmem:[%s2251 + $0xb1] sm:$0xff]
      %v6010 = vld [vmem:[%s2251 + $0xc1] sm:$0xff]
      %v6011 = vld [vmem:[%s2251 + $0xc9] sm:$0xff]
      %v6012 = vld [vmem:[%s2251 + $0xd9] sm:$0xff]
      %v6013 = vld [vmem:[%s2251 + $0xe1] sm:$0xff]
      %v6014 = vld [vmem:[%s2251 + $0xf1] sm:$0xff]
      %v6015 = vld [vmem:[%s2251 + $0xf9] sm:$0xff]
      %v6016 = vld [vmem:[%s2251 + $0x109] sm:$0xff]
      %v6017 = vld [vmem:[%s2251 + $0x111] sm:$0xff]
      %v6018 = vld [vmem:[%s2251 + $0x121] sm:$0xff]
      %v6019 = vld [vmem:[%s2251 + $0x129] sm:$0xff]
      %v6020 = vld [vmem:[%s2251 + $0x139] sm:$0xff]
      %v6021 = vld [vmem:[%s2251 + $0x141] sm:$0xff]
      %v6022 = vld [vmem:[%s2251 + $0x151] sm:$0xff]
      %v6023 = vld [vmem:[%s2251 + $0x159] sm:$0xff]
      %v6024 = vld [vmem:[%s2251 + $0x169] sm:$0xff]
      %v6025 = vld [vmem:[%s2251 + $0x171] sm:$0xff]
      %s6026 = scalar_lea.vmem %s9, 16
      %v6027 = vld [vmem:[%s6026] sm:$0xf]
      %v6029 = vsel %vm2163, %v5994, 0
      %v6032 = vsel %vm2163, %v5995, 0
      %v6035 = vsel %vm2163, %v5996, 0
      %v6038 = vsel %vm2163, %v5997, 0
      %v6041 = vsel %vm2163, %v5998, 0
      %v6044 = vsel %vm2163, %v5999, 0
      %v6047 = vsel %vm2163, %v6000, 0
      %v6050 = vsel %vm2163, %v6001, 0
      %v6053 = vsel %vm2163, %v6002, 0
      %v6056 = vsel %vm2163, %v6003, 0
      %v6059 = vsel %vm2163, %v6004, 0
      %v6062 = vsel %vm2163, %v6005, 0
      %v6065 = vsel %vm2163, %v6006, 0
      %v6068 = vsel %vm2163, %v6007, 0
      %v6071 = vsel %vm2163, %v6008, 0
      %v6074 = vsel %vm2163, %v6009, 0
      %v6077 = vsel %vm2163, %v6010, 0
      %v6080 = vsel %vm2163, %v6011, 0
      %v6083 = vsel %vm2163, %v6012, 0
      %v6086 = vsel %vm2163, %v6013, 0
      %v6089 = vsel %vm2163, %v6014, 0
      %v6092 = vsel %vm2163, %v6015, 0
      %v6095 = vsel %vm2163, %v6016, 0
      %v6098 = vsel %vm2163, %v6017, 0
      %v6101 = vsel %vm2163, %v6018, 0
      %v6104 = vsel %vm2163, %v6019, 0
      %v6107 = vsel %vm2163, %v6020, 0
      %v6110 = vsel %vm2163, %v6021, 0
      %v6113 = vsel %vm2163, %v6022, 0
      %v6116 = vsel %vm2163, %v6023, 0
      %v6119 = vsel %vm2163, %v6024, 0
      %v6122 = vsel %vm2163, %v6025, 0
      %v6125 = vsel %vm2447, %v6027, 0
      %6127 = vmatpush.msra.mxu0 0.0
      %6128 = vmatpush.msra.mxu0 0.0
      %6129 = vmatpush.msra.mxu0 0.0
      %6130 = vmatpush.msra.mxu0 0.0
      %6131 = vmatpush.msra.mxu0 0.0
      %6132 = vmatpush.msra.mxu0 0.0
      %6133 = vmatpush.msra.mxu0 0.0
      %6134 = vmatpush.msra.mxu0 0.0
      %6135 = vmatpush.msra.mxu0 0.0
      %6136 = vmatpush.msra.mxu0 0.0
      %6137 = vmatpush.msra.mxu0 0.0
      %6138 = vmatpush.msra.mxu0 0.0
      %6139 = vmatpush.msra.mxu0 0.0
      %6140 = vmatpush.msra.mxu0 0.0
      %6141 = vmatpush.msra.mxu0 0.0
      %6142 = vmatpush.msra.mxu0 %v6125
      %6143 = vmatmul.f32.gmra.mxu0 %v6029
      %v6144 = vpop.f32.mrf.mxu0
      %v6145 = vadd.f32 0.0, %v6144
      %6146 = vmatmul.f32.gmra.mxu0 %v6032
      %v6147 = vpop.f32.mrf.mxu0
      %v6148 = vadd.f32 0.0, %v6147
      %6149 = vmatmul.f32.gmra.mxu0 %v6035
      %v6150 = vpop.f32.mrf.mxu0
      %v6151 = vadd.f32 0.0, %v6150
      %6152 = vmatmul.f32.gmra.mxu0 %v6038
      %v6153 = vpop.f32.mrf.mxu0
      %v6154 = vadd.f32 0.0, %v6153
      %6155 = vmatmul.f32.gmra.mxu0 %v6041
      %v6156 = vpop.f32.mrf.mxu0
      %v6157 = vadd.f32 0.0, %v6156
      %6158 = vmatmul.f32.gmra.mxu0 %v6044
      %v6159 = vpop.f32.mrf.mxu0
      %v6160 = vadd.f32 0.0, %v6159
      %6161 = vmatmul.f32.gmra.mxu0 %v6047
      %v6162 = vpop.f32.mrf.mxu0
      %v6163 = vadd.f32 0.0, %v6162
      %6164 = vmatmul.f32.gmra.mxu0 %v6050
      %v6165 = vpop.f32.mrf.mxu0
      %v6166 = vadd.f32 0.0, %v6165
      %6167 = vmatmul.f32.gmra.mxu0 %v6053
      %v6168 = vpop.f32.mrf.mxu0
      %v6169 = vadd.f32 0.0, %v6168
      %6170 = vmatmul.f32.gmra.mxu0 %v6056
      %v6171 = vpop.f32.mrf.mxu0
      %v6172 = vadd.f32 0.0, %v6171
      %6173 = vmatmul.f32.gmra.mxu0 %v6059
      %v6174 = vpop.f32.mrf.mxu0
      %v6175 = vadd.f32 0.0, %v6174
      %6176 = vmatmul.f32.gmra.mxu0 %v6062
      %v6177 = vpop.f32.mrf.mxu0
      %v6178 = vadd.f32 0.0, %v6177
      %6179 = vmatmul.f32.gmra.mxu0 %v6065
      %v6180 = vpop.f32.mrf.mxu0
      %v6181 = vadd.f32 0.0, %v6180
      %6182 = vmatmul.f32.gmra.mxu0 %v6068
      %v6183 = vpop.f32.mrf.mxu0
      %v6184 = vadd.f32 0.0, %v6183
      %6185 = vmatmul.f32.gmra.mxu0 %v6071
      %v6186 = vpop.f32.mrf.mxu0
      %v6187 = vadd.f32 0.0, %v6186
      %6188 = vmatmul.f32.gmra.mxu0 %v6074
      %v6189 = vpop.f32.mrf.mxu0
      %v6190 = vadd.f32 0.0, %v6189
      %6191 = vmatmul.f32.gmra.mxu0 %v6077
      %v6192 = vpop.f32.mrf.mxu0
      %v6193 = vadd.f32 0.0, %v6192
      %6194 = vmatmul.f32.gmra.mxu0 %v6080
      %v6195 = vpop.f32.mrf.mxu0
      %v6196 = vadd.f32 0.0, %v6195
      %6197 = vmatmul.f32.gmra.mxu0 %v6083
      %v6198 = vpop.f32.mrf.mxu0
      %v6199 = vadd.f32 0.0, %v6198
      %6200 = vmatmul.f32.gmra.mxu0 %v6086
      %v6201 = vpop.f32.mrf.mxu0
      %v6202 = vadd.f32 0.0, %v6201
      %6203 = vmatmul.f32.gmra.mxu0 %v6089
      %v6204 = vpop.f32.mrf.mxu0
      %v6205 = vadd.f32 0.0, %v6204
      %6206 = vmatmul.f32.gmra.mxu0 %v6092
      %v6207 = vpop.f32.mrf.mxu0
      %v6208 = vadd.f32 0.0, %v6207
      %6209 = vmatmul.f32.gmra.mxu0 %v6095
      %v6210 = vpop.f32.mrf.mxu0
      %v6211 = vadd.f32 0.0, %v6210
      %6212 = vmatmul.f32.gmra.mxu0 %v6098
      %v6213 = vpop.f32.mrf.mxu0
      %v6214 = vadd.f32 0.0, %v6213
      %6215 = vmatmul.f32.gmra.mxu0 %v6101
      %v6216 = vpop.f32.mrf.mxu0
      %v6217 = vadd.f32 0.0, %v6216
      %6218 = vmatmul.f32.gmra.mxu0 %v6104
      %v6219 = vpop.f32.mrf.mxu0
      %v6220 = vadd.f32 0.0, %v6219
      %6221 = vmatmul.f32.gmra.mxu0 %v6107
      %v6222 = vpop.f32.mrf.mxu0
      %v6223 = vadd.f32 0.0, %v6222
      %6224 = vmatmul.f32.gmra.mxu0 %v6110
      %v6225 = vpop.f32.mrf.mxu0
      %v6226 = vadd.f32 0.0, %v6225
      %6227 = vmatmul.f32.gmra.mxu0 %v6113
      %v6228 = vpop.f32.mrf.mxu0
      %v6229 = vadd.f32 0.0, %v6228
      %6230 = vmatmul.f32.gmra.mxu0 %v6116
      %v6231 = vpop.f32.mrf.mxu0
      %v6232 = vadd.f32 0.0, %v6231
      %6233 = vmatmul.f32.gmra.mxu0 %v6119
      %v6234 = vpop.f32.mrf.mxu0
      %v6235 = vadd.f32 0.0, %v6234
      %6236 = vmatmul.f32.gmra.mxu0 %v6122
      %v6237 = vpop.f32.mrf.mxu0
      %v6238 = vadd.f32 0.0, %v6237
      %6239 = vdwg.mxu0
      %v6240 = vadd.f32 %v5962, %v6145
      %v6241 = vadd.f32 %v5963, %v6148
      %v6242 = vadd.f32 %v5964, %v6151
      %v6243 = vadd.f32 %v5965, %v6154
      %v6244 = vadd.f32 %v5966, %v6157
      %v6245 = vadd.f32 %v5967, %v6160
      %v6246 = vadd.f32 %v5968, %v6163
      %v6247 = vadd.f32 %v5969, %v6166
      %v6248 = vadd.f32 %v5970, %v6169
      %v6249 = vadd.f32 %v5971, %v6172
      %v6250 = vadd.f32 %v5972, %v6175
      %v6251 = vadd.f32 %v5973, %v6178
      %v6252 = vadd.f32 %v5974, %v6181
      %v6253 = vadd.f32 %v5975, %v6184
      %v6254 = vadd.f32 %v5976, %v6187
      %v6255 = vadd.f32 %v5977, %v6190
      %v6256 = vadd.f32 %v5978, %v6193
      %v6257 = vadd.f32 %v5979, %v6196
      %v6258 = vadd.f32 %v5980, %v6199
      %v6259 = vadd.f32 %v5981, %v6202
      %v6260 = vadd.f32 %v5982, %v6205
      %v6261 = vadd.f32 %v5983, %v6208
      %v6262 = vadd.f32 %v5984, %v6211
      %v6263 = vadd.f32 %v5985, %v6214
      %v6264 = vadd.f32 %v5986, %v6217
      %v6265 = vadd.f32 %v5987, %v6220
      %v6266 = vadd.f32 %v5988, %v6223
      %v6267 = vadd.f32 %v5989, %v6226
      %v6268 = vadd.f32 %v5990, %v6229
      %v6269 = vadd.f32 %v5991, %v6232
      %v6270 = vadd.f32 %v5992, %v6235
      %v6271 = vadd.f32 %v5993, %v6238
      %v6272 = vld [vmem:[%s2251 + $0x2] sm:$0xff]
      %v6273 = vld [vmem:[%s2251 + $0xa] sm:$0xff]
      %v6274 = vld [vmem:[%s2251 + $0x1a] sm:$0xff]
      %v6275 = vld [vmem:[%s2251 + $0x22] sm:$0xff]
      %v6276 = vld [vmem:[%s2251 + $0x32] sm:$0xff]
      %v6277 = vld [vmem:[%s2251 + $0x3a] sm:$0xff]
      %v6278 = vld [vmem:[%s2251 + $0x4a] sm:$0xff]
      %v6279 = vld [vmem:[%s2251 + $0x52] sm:$0xff]
      %v6280 = vld [vmem:[%s2251 + $0x62] sm:$0xff]
      %v6281 = vld [vmem:[%s2251 + $0x6a] sm:$0xff]
      %v6282 = vld [vmem:[%s2251 + $0x7a] sm:$0xff]
      %v6283 = vld [vmem:[%s2251 + $0x82] sm:$0xff]
      %v6284 = vld [vmem:[%s2251 + $0x92] sm:$0xff]
      %v6285 = vld [vmem:[%s2251 + $0x9a] sm:$0xff]
      %v6286 = vld [vmem:[%s2251 + $0xaa] sm:$0xff]
      %v6287 = vld [vmem:[%s2251 + $0xb2] sm:$0xff]
      %v6288 = vld [vmem:[%s2251 + $0xc2] sm:$0xff]
      %v6289 = vld [vmem:[%s2251 + $0xca] sm:$0xff]
      %v6290 = vld [vmem:[%s2251 + $0xda] sm:$0xff]
      %v6291 = vld [vmem:[%s2251 + $0xe2] sm:$0xff]
      %v6292 = vld [vmem:[%s2251 + $0xf2] sm:$0xff]
      %v6293 = vld [vmem:[%s2251 + $0xfa] sm:$0xff]
      %v6294 = vld [vmem:[%s2251 + $0x10a] sm:$0xff]
      %v6295 = vld [vmem:[%s2251 + $0x112] sm:$0xff]
      %v6296 = vld [vmem:[%s2251 + $0x122] sm:$0xff]
      %v6297 = vld [vmem:[%s2251 + $0x12a] sm:$0xff]
      %v6298 = vld [vmem:[%s2251 + $0x13a] sm:$0xff]
      %v6299 = vld [vmem:[%s2251 + $0x142] sm:$0xff]
      %v6300 = vld [vmem:[%s2251 + $0x152] sm:$0xff]
      %v6301 = vld [vmem:[%s2251 + $0x15a] sm:$0xff]
      %v6302 = vld [vmem:[%s2251 + $0x16a] sm:$0xff]
      %v6303 = vld [vmem:[%s2251 + $0x172] sm:$0xff]
      %s6304 = scalar_lea.vmem %s9, 20
      %v6305 = vld [vmem:[%s6304] sm:$0xf]
      %v6307 = vsel %vm2163, %v6272, 0
      %v6310 = vsel %vm2163, %v6273, 0
      %v6313 = vsel %vm2163, %v6274, 0
      %v6316 = vsel %vm2163, %v6275, 0
      %v6319 = vsel %vm2163, %v6276, 0
      %v6322 = vsel %vm2163, %v6277, 0
      %v6325 = vsel %vm2163, %v6278, 0
      %v6328 = vsel %vm2163, %v6279, 0
      %v6331 = vsel %vm2163, %v6280, 0
      %v6334 = vsel %vm2163, %v6281, 0
      %v6337 = vsel %vm2163, %v6282, 0
      %v6340 = vsel %vm2163, %v6283, 0
      %v6343 = vsel %vm2163, %v6284, 0
      %v6346 = vsel %vm2163, %v6285, 0
      %v6349 = vsel %vm2163, %v6286, 0
      %v6352 = vsel %vm2163, %v6287, 0
      %v6355 = vsel %vm2163, %v6288, 0
      %v6358 = vsel %vm2163, %v6289, 0
      %v6361 = vsel %vm2163, %v6290, 0
      %v6364 = vsel %vm2163, %v6291, 0
      %v6367 = vsel %vm2163, %v6292, 0
      %v6370 = vsel %vm2163, %v6293, 0
      %v6373 = vsel %vm2163, %v6294, 0
      %v6376 = vsel %vm2163, %v6295, 0
      %v6379 = vsel %vm2163, %v6296, 0
      %v6382 = vsel %vm2163, %v6297, 0
      %v6385 = vsel %vm2163, %v6298, 0
      %v6388 = vsel %vm2163, %v6299, 0
      %v6391 = vsel %vm2163, %v6300, 0
      %v6394 = vsel %vm2163, %v6301, 0
      %v6397 = vsel %vm2163, %v6302, 0
      %v6400 = vsel %vm2163, %v6303, 0
      %v6403 = vsel %vm2447, %v6305, 0
      %6405 = vmatpush.msra.mxu0 0.0
      %6406 = vmatpush.msra.mxu0 0.0
      %6407 = vmatpush.msra.mxu0 0.0
      %6408 = vmatpush.msra.mxu0 0.0
      %6409 = vmatpush.msra.mxu0 0.0
      %6410 = vmatpush.msra.mxu0 0.0
      %6411 = vmatpush.msra.mxu0 0.0
      %6412 = vmatpush.msra.mxu0 0.0
      %6413 = vmatpush.msra.mxu0 0.0
      %6414 = vmatpush.msra.mxu0 0.0
      %6415 = vmatpush.msra.mxu0 0.0
      %6416 = vmatpush.msra.mxu0 0.0
      %6417 = vmatpush.msra.mxu0 0.0
      %6418 = vmatpush.msra.mxu0 0.0
      %6419 = vmatpush.msra.mxu0 0.0
      %6420 = vmatpush.msra.mxu0 %v6403
      %6421 = vmatmul.f32.gmra.mxu0 %v6307
      %v6422 = vpop.f32.mrf.mxu0
      %v6423 = vadd.f32 0.0, %v6422
      %6424 = vmatmul.f32.gmra.mxu0 %v6310
      %v6425 = vpop.f32.mrf.mxu0
      %v6426 = vadd.f32 0.0, %v6425
      %6427 = vmatmul.f32.gmra.mxu0 %v6313
      %v6428 = vpop.f32.mrf.mxu0
      %v6429 = vadd.f32 0.0, %v6428
      %6430 = vmatmul.f32.gmra.mxu0 %v6316
      %v6431 = vpop.f32.mrf.mxu0
      %v6432 = vadd.f32 0.0, %v6431
      %6433 = vmatmul.f32.gmra.mxu0 %v6319
      %v6434 = vpop.f32.mrf.mxu0
      %v6435 = vadd.f32 0.0, %v6434
      %6436 = vmatmul.f32.gmra.mxu0 %v6322
      %v6437 = vpop.f32.mrf.mxu0
      %v6438 = vadd.f32 0.0, %v6437
      %6439 = vmatmul.f32.gmra.mxu0 %v6325
      %v6440 = vpop.f32.mrf.mxu0
      %v6441 = vadd.f32 0.0, %v6440
      %6442 = vmatmul.f32.gmra.mxu0 %v6328
      %v6443 = vpop.f32.mrf.mxu0
      %v6444 = vadd.f32 0.0, %v6443
      %6445 = vmatmul.f32.gmra.mxu0 %v6331
      %v6446 = vpop.f32.mrf.mxu0
      %v6447 = vadd.f32 0.0, %v6446
      %6448 = vmatmul.f32.gmra.mxu0 %v6334
      %v6449 = vpop.f32.mrf.mxu0
      %v6450 = vadd.f32 0.0, %v6449
      %6451 = vmatmul.f32.gmra.mxu0 %v6337
      %v6452 = vpop.f32.mrf.mxu0
      %v6453 = vadd.f32 0.0, %v6452
      %6454 = vmatmul.f32.gmra.mxu0 %v6340
      %v6455 = vpop.f32.mrf.mxu0
      %v6456 = vadd.f32 0.0, %v6455
      %6457 = vmatmul.f32.gmra.mxu0 %v6343
      %v6458 = vpop.f32.mrf.mxu0
      %v6459 = vadd.f32 0.0, %v6458
      %6460 = vmatmul.f32.gmra.mxu0 %v6346
      %v6461 = vpop.f32.mrf.mxu0
      %v6462 = vadd.f32 0.0, %v6461
      %6463 = vmatmul.f32.gmra.mxu0 %v6349
      %v6464 = vpop.f32.mrf.mxu0
      %v6465 = vadd.f32 0.0, %v6464
      %6466 = vmatmul.f32.gmra.mxu0 %v6352
      %v6467 = vpop.f32.mrf.mxu0
      %v6468 = vadd.f32 0.0, %v6467
      %6469 = vmatmul.f32.gmra.mxu0 %v6355
      %v6470 = vpop.f32.mrf.mxu0
      %v6471 = vadd.f32 0.0, %v6470
      %6472 = vmatmul.f32.gmra.mxu0 %v6358
      %v6473 = vpop.f32.mrf.mxu0
      %v6474 = vadd.f32 0.0, %v6473
      %6475 = vmatmul.f32.gmra.mxu0 %v6361
      %v6476 = vpop.f32.mrf.mxu0
      %v6477 = vadd.f32 0.0, %v6476
      %6478 = vmatmul.f32.gmra.mxu0 %v6364
      %v6479 = vpop.f32.mrf.mxu0
      %v6480 = vadd.f32 0.0, %v6479
      %6481 = vmatmul.f32.gmra.mxu0 %v6367
      %v6482 = vpop.f32.mrf.mxu0
      %v6483 = vadd.f32 0.0, %v6482
      %6484 = vmatmul.f32.gmra.mxu0 %v6370
      %v6485 = vpop.f32.mrf.mxu0
      %v6486 = vadd.f32 0.0, %v6485
      %6487 = vmatmul.f32.gmra.mxu0 %v6373
      %v6488 = vpop.f32.mrf.mxu0
      %v6489 = vadd.f32 0.0, %v6488
      %6490 = vmatmul.f32.gmra.mxu0 %v6376
      %v6491 = vpop.f32.mrf.mxu0
      %v6492 = vadd.f32 0.0, %v6491
      %6493 = vmatmul.f32.gmra.mxu0 %v6379
      %v6494 = vpop.f32.mrf.mxu0
      %v6495 = vadd.f32 0.0, %v6494
      %6496 = vmatmul.f32.gmra.mxu0 %v6382
      %v6497 = vpop.f32.mrf.mxu0
      %v6498 = vadd.f32 0.0, %v6497
      %6499 = vmatmul.f32.gmra.mxu0 %v6385
      %v6500 = vpop.f32.mrf.mxu0
      %v6501 = vadd.f32 0.0, %v6500
      %6502 = vmatmul.f32.gmra.mxu0 %v6388
      %v6503 = vpop.f32.mrf.mxu0
      %v6504 = vadd.f32 0.0, %v6503
      %6505 = vmatmul.f32.gmra.mxu0 %v6391
      %v6506 = vpop.f32.mrf.mxu0
      %v6507 = vadd.f32 0.0, %v6506
      %6508 = vmatmul.f32.gmra.mxu0 %v6394
      %v6509 = vpop.f32.mrf.mxu0
      %v6510 = vadd.f32 0.0, %v6509
      %6511 = vmatmul.f32.gmra.mxu0 %v6397
      %v6512 = vpop.f32.mrf.mxu0
      %v6513 = vadd.f32 0.0, %v6512
      %6514 = vmatmul.f32.gmra.mxu0 %v6400
      %v6515 = vpop.f32.mrf.mxu0
      %v6516 = vadd.f32 0.0, %v6515
      %6517 = vdwg.mxu0
      %v6518 = vadd.f32 %v6240, %v6423
      %v6519 = vadd.f32 %v6241, %v6426
      %v6520 = vadd.f32 %v6242, %v6429
      %v6521 = vadd.f32 %v6243, %v6432
      %v6522 = vadd.f32 %v6244, %v6435
      %v6523 = vadd.f32 %v6245, %v6438
      %v6524 = vadd.f32 %v6246, %v6441
      %v6525 = vadd.f32 %v6247, %v6444
      %v6526 = vadd.f32 %v6248, %v6447
      %v6527 = vadd.f32 %v6249, %v6450
      %v6528 = vadd.f32 %v6250, %v6453
      %v6529 = vadd.f32 %v6251, %v6456
      %v6530 = vadd.f32 %v6252, %v6459
      %v6531 = vadd.f32 %v6253, %v6462
      %v6532 = vadd.f32 %v6254, %v6465
      %v6533 = vadd.f32 %v6255, %v6468
      %v6534 = vadd.f32 %v6256, %v6471
      %v6535 = vadd.f32 %v6257, %v6474
      %v6536 = vadd.f32 %v6258, %v6477
      %v6537 = vadd.f32 %v6259, %v6480
      %v6538 = vadd.f32 %v6260, %v6483
      %v6539 = vadd.f32 %v6261, %v6486
      %v6540 = vadd.f32 %v6262, %v6489
      %v6541 = vadd.f32 %v6263, %v6492
      %v6542 = vadd.f32 %v6264, %v6495
      %v6543 = vadd.f32 %v6265, %v6498
      %v6544 = vadd.f32 %v6266, %v6501
      %v6545 = vadd.f32 %v6267, %v6504
      %v6546 = vadd.f32 %v6268, %v6507
      %v6547 = vadd.f32 %v6269, %v6510
      %v6548 = vadd.f32 %v6270, %v6513
      %v6549 = vadd.f32 %v6271, %v6516
      %v6550 = vld [vmem:[%s3888] sm:$0xff]
      %v6551 = vld [vmem:[%s3888 + $0x8] sm:$0xff]
      %v6552 = vld [vmem:[%s3888 + $0x18] sm:$0xff]
      %v6553 = vld [vmem:[%s3888 + $0x20] sm:$0xff]
      %v6554 = vld [vmem:[%s3888 + $0x30] sm:$0xff]
      %v6555 = vld [vmem:[%s3888 + $0x38] sm:$0xff]
      %v6556 = vld [vmem:[%s3888 + $0x48] sm:$0xff]
      %v6557 = vld [vmem:[%s3888 + $0x50] sm:$0xff]
      %v6558 = vld [vmem:[%s3888 + $0x60] sm:$0xff]
      %v6559 = vld [vmem:[%s3888 + $0x68] sm:$0xff]
      %v6560 = vld [vmem:[%s3888 + $0x78] sm:$0xff]
      %v6561 = vld [vmem:[%s3888 + $0x80] sm:$0xff]
      %v6562 = vld [vmem:[%s3888 + $0x90] sm:$0xff]
      %v6563 = vld [vmem:[%s3888 + $0x98] sm:$0xff]
      %v6564 = vld [vmem:[%s3888 + $0xa8] sm:$0xff]
      %v6565 = vld [vmem:[%s3888 + $0xb0] sm:$0xff]
      %v6566 = vld [vmem:[%s3888 + $0xc0] sm:$0xff]
      %v6567 = vld [vmem:[%s3888 + $0xc8] sm:$0xff]
      %v6568 = vld [vmem:[%s3888 + $0xd8] sm:$0xff]
      %v6569 = vld [vmem:[%s3888 + $0xe0] sm:$0xff]
      %v6570 = vld [vmem:[%s3888 + $0xf0] sm:$0xff]
      %v6571 = vld [vmem:[%s3888 + $0xf8] sm:$0xff]
      %v6572 = vld [vmem:[%s3888 + $0x108] sm:$0xff]
      %v6573 = vld [vmem:[%s3888 + $0x110] sm:$0xff]
      %v6574 = vld [vmem:[%s3888 + $0x120] sm:$0xff]
      %v6575 = vld [vmem:[%s3888 + $0x128] sm:$0xff]
      %v6576 = vld [vmem:[%s3888 + $0x138] sm:$0xff]
      %v6577 = vld [vmem:[%s3888 + $0x140] sm:$0xff]
      %v6578 = vld [vmem:[%s3888 + $0x150] sm:$0xff]
      %v6579 = vld [vmem:[%s3888 + $0x158] sm:$0xff]
      %v6580 = vld [vmem:[%s3888 + $0x168] sm:$0xff]
      %v6581 = vld [vmem:[%s3888 + $0x170] sm:$0xff]
      %s6582 = scalar_lea.vmem %s9, 24
      %v6583 = vld [vmem:[%s6582] sm:$0xf]
      %v6585 = vsel %vm2163, %v6550, 0
      %v6588 = vsel %vm2163, %v6551, 0
      %v6591 = vsel %vm2163, %v6552, 0
      %v6594 = vsel %vm2163, %v6553, 0
      %v6597 = vsel %vm2163, %v6554, 0
      %v6600 = vsel %vm2163, %v6555, 0
      %v6603 = vsel %vm2163, %v6556, 0
      %v6606 = vsel %vm2163, %v6557, 0
      %v6609 = vsel %vm2163, %v6558, 0
      %v6612 = vsel %vm2163, %v6559, 0
      %v6615 = vsel %vm2163, %v6560, 0
      %v6618 = vsel %vm2163, %v6561, 0
      %v6621 = vsel %vm2163, %v6562, 0
      %v6624 = vsel %vm2163, %v6563, 0
      %v6627 = vsel %vm2163, %v6564, 0
      %v6630 = vsel %vm2163, %v6565, 0
      %v6633 = vsel %vm2163, %v6566, 0
      %v6636 = vsel %vm2163, %v6567, 0
      %v6639 = vsel %vm2163, %v6568, 0
      %v6642 = vsel %vm2163, %v6569, 0
      %v6645 = vsel %vm2163, %v6570, 0
      %v6648 = vsel %vm2163, %v6571, 0
      %v6651 = vsel %vm2163, %v6572, 0
      %v6654 = vsel %vm2163, %v6573, 0
      %v6657 = vsel %vm2163, %v6574, 0
      %v6660 = vsel %vm2163, %v6575, 0
      %v6663 = vsel %vm2163, %v6576, 0
      %v6666 = vsel %vm2163, %v6577, 0
      %v6669 = vsel %vm2163, %v6578, 0
      %v6672 = vsel %vm2163, %v6579, 0
      %v6675 = vsel %vm2163, %v6580, 0
      %v6678 = vsel %vm2163, %v6581, 0
      %v6681 = vsel %vm2447, %v6583, 0
      %6683 = vmatpush.msra.mxu0 0.0
      %6684 = vmatpush.msra.mxu0 0.0
      %6685 = vmatpush.msra.mxu0 0.0
      %6686 = vmatpush.msra.mxu0 0.0
      %6687 = vmatpush.msra.mxu0 0.0
      %6688 = vmatpush.msra.mxu0 0.0
      %6689 = vmatpush.msra.mxu0 0.0
      %6690 = vmatpush.msra.mxu0 0.0
      %6691 = vmatpush.msra.mxu0 0.0
      %6692 = vmatpush.msra.mxu0 0.0
      %6693 = vmatpush.msra.mxu0 0.0
      %6694 = vmatpush.msra.mxu0 0.0
      %6695 = vmatpush.msra.mxu0 0.0
      %6696 = vmatpush.msra.mxu0 0.0
      %6697 = vmatpush.msra.mxu0 0.0
      %6698 = vmatpush.msra.mxu0 %v6681
      %6699 = vmatmul.f32.gmra.mxu0 %v6585
      %v6700 = vpop.f32.mrf.mxu0
      %v6701 = vadd.f32 0.0, %v6700
      %6702 = vmatmul.f32.gmra.mxu0 %v6588
      %v6703 = vpop.f32.mrf.mxu0
      %v6704 = vadd.f32 0.0, %v6703
      %6705 = vmatmul.f32.gmra.mxu0 %v6591
      %v6706 = vpop.f32.mrf.mxu0
      %v6707 = vadd.f32 0.0, %v6706
      %6708 = vmatmul.f32.gmra.mxu0 %v6594
      %v6709 = vpop.f32.mrf.mxu0
      %v6710 = vadd.f32 0.0, %v6709
      %6711 = vmatmul.f32.gmra.mxu0 %v6597
      %v6712 = vpop.f32.mrf.mxu0
      %v6713 = vadd.f32 0.0, %v6712
      %6714 = vmatmul.f32.gmra.mxu0 %v6600
      %v6715 = vpop.f32.mrf.mxu0
      %v6716 = vadd.f32 0.0, %v6715
      %6717 = vmatmul.f32.gmra.mxu0 %v6603
      %v6718 = vpop.f32.mrf.mxu0
      %v6719 = vadd.f32 0.0, %v6718
      %6720 = vmatmul.f32.gmra.mxu0 %v6606
      %v6721 = vpop.f32.mrf.mxu0
      %v6722 = vadd.f32 0.0, %v6721
      %6723 = vmatmul.f32.gmra.mxu0 %v6609
      %v6724 = vpop.f32.mrf.mxu0
      %v6725 = vadd.f32 0.0, %v6724
      %6726 = vmatmul.f32.gmra.mxu0 %v6612
      %v6727 = vpop.f32.mrf.mxu0
      %v6728 = vadd.f32 0.0, %v6727
      %6729 = vmatmul.f32.gmra.mxu0 %v6615
      %v6730 = vpop.f32.mrf.mxu0
      %v6731 = vadd.f32 0.0, %v6730
      %6732 = vmatmul.f32.gmra.mxu0 %v6618
      %v6733 = vpop.f32.mrf.mxu0
      %v6734 = vadd.f32 0.0, %v6733
      %6735 = vmatmul.f32.gmra.mxu0 %v6621
      %v6736 = vpop.f32.mrf.mxu0
      %v6737 = vadd.f32 0.0, %v6736
      %6738 = vmatmul.f32.gmra.mxu0 %v6624
      %v6739 = vpop.f32.mrf.mxu0
      %v6740 = vadd.f32 0.0, %v6739
      %6741 = vmatmul.f32.gmra.mxu0 %v6627
      %v6742 = vpop.f32.mrf.mxu0
      %v6743 = vadd.f32 0.0, %v6742
      %6744 = vmatmul.f32.gmra.mxu0 %v6630
      %v6745 = vpop.f32.mrf.mxu0
      %v6746 = vadd.f32 0.0, %v6745
      %6747 = vmatmul.f32.gmra.mxu0 %v6633
      %v6748 = vpop.f32.mrf.mxu0
      %v6749 = vadd.f32 0.0, %v6748
      %6750 = vmatmul.f32.gmra.mxu0 %v6636
      %v6751 = vpop.f32.mrf.mxu0
      %v6752 = vadd.f32 0.0, %v6751
      %6753 = vmatmul.f32.gmra.mxu0 %v6639
      %v6754 = vpop.f32.mrf.mxu0
      %v6755 = vadd.f32 0.0, %v6754
      %6756 = vmatmul.f32.gmra.mxu0 %v6642
      %v6757 = vpop.f32.mrf.mxu0
      %v6758 = vadd.f32 0.0, %v6757
      %6759 = vmatmul.f32.gmra.mxu0 %v6645
      %v6760 = vpop.f32.mrf.mxu0
      %v6761 = vadd.f32 0.0, %v6760
      %6762 = vmatmul.f32.gmra.mxu0 %v6648
      %v6763 = vpop.f32.mrf.mxu0
      %v6764 = vadd.f32 0.0, %v6763
      %6765 = vmatmul.f32.gmra.mxu0 %v6651
      %v6766 = vpop.f32.mrf.mxu0
      %v6767 = vadd.f32 0.0, %v6766
      %6768 = vmatmul.f32.gmra.mxu0 %v6654
      %v6769 = vpop.f32.mrf.mxu0
      %v6770 = vadd.f32 0.0, %v6769
      %6771 = vmatmul.f32.gmra.mxu0 %v6657
      %v6772 = vpop.f32.mrf.mxu0
      %v6773 = vadd.f32 0.0, %v6772
      %6774 = vmatmul.f32.gmra.mxu0 %v6660
      %v6775 = vpop.f32.mrf.mxu0
      %v6776 = vadd.f32 0.0, %v6775
      %6777 = vmatmul.f32.gmra.mxu0 %v6663
      %v6778 = vpop.f32.mrf.mxu0
      %v6779 = vadd.f32 0.0, %v6778
      %6780 = vmatmul.f32.gmra.mxu0 %v6666
      %v6781 = vpop.f32.mrf.mxu0
      %v6782 = vadd.f32 0.0, %v6781
      %6783 = vmatmul.f32.gmra.mxu0 %v6669
      %v6784 = vpop.f32.mrf.mxu0
      %v6785 = vadd.f32 0.0, %v6784
      %6786 = vmatmul.f32.gmra.mxu0 %v6672
      %v6787 = vpop.f32.mrf.mxu0
      %v6788 = vadd.f32 0.0, %v6787
      %6789 = vmatmul.f32.gmra.mxu0 %v6675
      %v6790 = vpop.f32.mrf.mxu0
      %v6791 = vadd.f32 0.0, %v6790
      %6792 = vmatmul.f32.gmra.mxu0 %v6678
      %v6793 = vpop.f32.mrf.mxu0
      %v6794 = vadd.f32 0.0, %v6793
      %6795 = vdwg.mxu0
      %v6796 = vadd.f32 %v6518, %v6701
      %v6797 = vadd.f32 %v6519, %v6704
      %v6798 = vadd.f32 %v6520, %v6707
      %v6799 = vadd.f32 %v6521, %v6710
      %v6800 = vadd.f32 %v6522, %v6713
      %v6801 = vadd.f32 %v6523, %v6716
      %v6802 = vadd.f32 %v6524, %v6719
      %v6803 = vadd.f32 %v6525, %v6722
      %v6804 = vadd.f32 %v6526, %v6725
      %v6805 = vadd.f32 %v6527, %v6728
      %v6806 = vadd.f32 %v6528, %v6731
      %v6807 = vadd.f32 %v6529, %v6734
      %v6808 = vadd.f32 %v6530, %v6737
      %v6809 = vadd.f32 %v6531, %v6740
      %v6810 = vadd.f32 %v6532, %v6743
      %v6811 = vadd.f32 %v6533, %v6746
      %v6812 = vadd.f32 %v6534, %v6749
      %v6813 = vadd.f32 %v6535, %v6752
      %v6814 = vadd.f32 %v6536, %v6755
      %v6815 = vadd.f32 %v6537, %v6758
      %v6816 = vadd.f32 %v6538, %v6761
      %v6817 = vadd.f32 %v6539, %v6764
      %v6818 = vadd.f32 %v6540, %v6767
      %v6819 = vadd.f32 %v6541, %v6770
      %v6820 = vadd.f32 %v6542, %v6773
      %v6821 = vadd.f32 %v6543, %v6776
      %v6822 = vadd.f32 %v6544, %v6779
      %v6823 = vadd.f32 %v6545, %v6782
      %v6824 = vadd.f32 %v6546, %v6785
      %v6825 = vadd.f32 %v6547, %v6788
      %v6826 = vadd.f32 %v6548, %v6791
      %v6827 = vadd.f32 %v6549, %v6794
      %v6828 = vld [vmem:[%s3888 + $0x1] sm:$0xff]
      %v6829 = vld [vmem:[%s3888 + $0x9] sm:$0xff]
      %v6830 = vld [vmem:[%s3888 + $0x19] sm:$0xff]
      %v6831 = vld [vmem:[%s3888 + $0x21] sm:$0xff]
      %v6832 = vld [vmem:[%s3888 + $0x31] sm:$0xff]
      %v6833 = vld [vmem:[%s3888 + $0x39] sm:$0xff]
      %v6834 = vld [vmem:[%s3888 + $0x49] sm:$0xff]
      %v6835 = vld [vmem:[%s3888 + $0x51] sm:$0xff]
      %v6836 = vld [vmem:[%s3888 + $0x61] sm:$0xff]
      %v6837 = vld [vmem:[%s3888 + $0x69] sm:$0xff]
      %v6838 = vld [vmem:[%s3888 + $0x79] sm:$0xff]
      %v6839 = vld [vmem:[%s3888 + $0x81] sm:$0xff]
      %v6840 = vld [vmem:[%s3888 + $0x91] sm:$0xff]
      %v6841 = vld [vmem:[%s3888 + $0x99] sm:$0xff]
      %v6842 = vld [vmem:[%s3888 + $0xa9] sm:$0xff]
      %v6843 = vld [vmem:[%s3888 + $0xb1] sm:$0xff]
      %v6844 = vld [vmem:[%s3888 + $0xc1] sm:$0xff]
      %v6845 = vld [vmem:[%s3888 + $0xc9] sm:$0xff]
      %v6846 = vld [vmem:[%s3888 + $0xd9] sm:$0xff]
      %v6847 = vld [vmem:[%s3888 + $0xe1] sm:$0xff]
      %v6848 = vld [vmem:[%s3888 + $0xf1] sm:$0xff]
      %v6849 = vld [vmem:[%s3888 + $0xf9] sm:$0xff]
      %v6850 = vld [vmem:[%s3888 + $0x109] sm:$0xff]
      %v6851 = vld [vmem:[%s3888 + $0x111] sm:$0xff]
      %v6852 = vld [vmem:[%s3888 + $0x121] sm:$0xff]
      %v6853 = vld [vmem:[%s3888 + $0x129] sm:$0xff]
      %v6854 = vld [vmem:[%s3888 + $0x139] sm:$0xff]
      %v6855 = vld [vmem:[%s3888 + $0x141] sm:$0xff]
      %v6856 = vld [vmem:[%s3888 + $0x151] sm:$0xff]
      %v6857 = vld [vmem:[%s3888 + $0x159] sm:$0xff]
      %v6858 = vld [vmem:[%s3888 + $0x169] sm:$0xff]
      %v6859 = vld [vmem:[%s3888 + $0x171] sm:$0xff]
      %s6860 = scalar_lea.vmem %s9, 28
      %v6861 = vld [vmem:[%s6860] sm:$0xf]
      %v6863 = vsel %vm2163, %v6828, 0
      %v6866 = vsel %vm2163, %v6829, 0
      %v6869 = vsel %vm2163, %v6830, 0
      %v6872 = vsel %vm2163, %v6831, 0
      %v6875 = vsel %vm2163, %v6832, 0
      %v6878 = vsel %vm2163, %v6833, 0
      %v6881 = vsel %vm2163, %v6834, 0
      %v6884 = vsel %vm2163, %v6835, 0
      %v6887 = vsel %vm2163, %v6836, 0
      %v6890 = vsel %vm2163, %v6837, 0
      %v6893 = vsel %vm2163, %v6838, 0
      %v6896 = vsel %vm2163, %v6839, 0
      %v6899 = vsel %vm2163, %v6840, 0
      %v6902 = vsel %vm2163, %v6841, 0
      %v6905 = vsel %vm2163, %v6842, 0
      %v6908 = vsel %vm2163, %v6843, 0
      %v6911 = vsel %vm2163, %v6844, 0
      %v6914 = vsel %vm2163, %v6845, 0
      %v6917 = vsel %vm2163, %v6846, 0
      %v6920 = vsel %vm2163, %v6847, 0
      %v6923 = vsel %vm2163, %v6848, 0
      %v6926 = vsel %vm2163, %v6849, 0
      %v6929 = vsel %vm2163, %v6850, 0
      %v6932 = vsel %vm2163, %v6851, 0
      %v6935 = vsel %vm2163, %v6852, 0
      %v6938 = vsel %vm2163, %v6853, 0
      %v6941 = vsel %vm2163, %v6854, 0
      %v6944 = vsel %vm2163, %v6855, 0
      %v6947 = vsel %vm2163, %v6856, 0
      %v6950 = vsel %vm2163, %v6857, 0
      %v6953 = vsel %vm2163, %v6858, 0
      %v6956 = vsel %vm2163, %v6859, 0
      %v6959 = vsel %vm2447, %v6861, 0
      %6961 = vmatpush.msra.mxu0 0.0
      %6962 = vmatpush.msra.mxu0 0.0
      %6963 = vmatpush.msra.mxu0 0.0
      %6964 = vmatpush.msra.mxu0 0.0
      %6965 = vmatpush.msra.mxu0 0.0
      %6966 = vmatpush.msra.mxu0 0.0
      %6967 = vmatpush.msra.mxu0 0.0
      %6968 = vmatpush.msra.mxu0 0.0
      %6969 = vmatpush.msra.mxu0 0.0
      %6970 = vmatpush.msra.mxu0 0.0
      %6971 = vmatpush.msra.mxu0 0.0
      %6972 = vmatpush.msra.mxu0 0.0
      %6973 = vmatpush.msra.mxu0 0.0
      %6974 = vmatpush.msra.mxu0 0.0
      %6975 = vmatpush.msra.mxu0 0.0
      %6976 = vmatpush.msra.mxu0 %v6959
      %6977 = vmatmul.f32.gmra.mxu0 %v6863
      %v6978 = vpop.f32.mrf.mxu0
      %v6979 = vadd.f32 0.0, %v6978
      %6980 = vmatmul.f32.gmra.mxu0 %v6866
      %v6981 = vpop.f32.mrf.mxu0
      %v6982 = vadd.f32 0.0, %v6981
      %6983 = vmatmul.f32.gmra.mxu0 %v6869
      %v6984 = vpop.f32.mrf.mxu0
      %v6985 = vadd.f32 0.0, %v6984
      %6986 = vmatmul.f32.gmra.mxu0 %v6872
      %v6987 = vpop.f32.mrf.mxu0
      %v6988 = vadd.f32 0.0, %v6987
      %6989 = vmatmul.f32.gmra.mxu0 %v6875
      %v6990 = vpop.f32.mrf.mxu0
      %v6991 = vadd.f32 0.0, %v6990
      %6992 = vmatmul.f32.gmra.mxu0 %v6878
      %v6993 = vpop.f32.mrf.mxu0
      %v6994 = vadd.f32 0.0, %v6993
      %6995 = vmatmul.f32.gmra.mxu0 %v6881
      %v6996 = vpop.f32.mrf.mxu0
      %v6997 = vadd.f32 0.0, %v6996
      %6998 = vmatmul.f32.gmra.mxu0 %v6884
      %v6999 = vpop.f32.mrf.mxu0
      %v7000 = vadd.f32 0.0, %v6999
      %7001 = vmatmul.f32.gmra.mxu0 %v6887
      %v7002 = vpop.f32.mrf.mxu0
      %v7003 = vadd.f32 0.0, %v7002
      %7004 = vmatmul.f32.gmra.mxu0 %v6890
      %v7005 = vpop.f32.mrf.mxu0
      %v7006 = vadd.f32 0.0, %v7005
      %7007 = vmatmul.f32.gmra.mxu0 %v6893
      %v7008 = vpop.f32.mrf.mxu0
      %v7009 = vadd.f32 0.0, %v7008
      %7010 = vmatmul.f32.gmra.mxu0 %v6896
      %v7011 = vpop.f32.mrf.mxu0
      %v7012 = vadd.f32 0.0, %v7011
      %7013 = vmatmul.f32.gmra.mxu0 %v6899
      %v7014 = vpop.f32.mrf.mxu0
      %v7015 = vadd.f32 0.0, %v7014
      %7016 = vmatmul.f32.gmra.mxu0 %v6902
      %v7017 = vpop.f32.mrf.mxu0
      %v7018 = vadd.f32 0.0, %v7017
      %7019 = vmatmul.f32.gmra.mxu0 %v6905
      %v7020 = vpop.f32.mrf.mxu0
      %v7021 = vadd.f32 0.0, %v7020
      %7022 = vmatmul.f32.gmra.mxu0 %v6908
      %v7023 = vpop.f32.mrf.mxu0
      %v7024 = vadd.f32 0.0, %v7023
      %7025 = vmatmul.f32.gmra.mxu0 %v6911
      %v7026 = vpop.f32.mrf.mxu0
      %v7027 = vadd.f32 0.0, %v7026
      %7028 = vmatmul.f32.gmra.mxu0 %v6914
      %v7029 = vpop.f32.mrf.mxu0
      %v7030 = vadd.f32 0.0, %v7029
      %7031 = vmatmul.f32.gmra.mxu0 %v6917
      %v7032 = vpop.f32.mrf.mxu0
      %v7033 = vadd.f32 0.0, %v7032
      %7034 = vmatmul.f32.gmra.mxu0 %v6920
      %v7035 = vpop.f32.mrf.mxu0
      %v7036 = vadd.f32 0.0, %v7035
      %7037 = vmatmul.f32.gmra.mxu0 %v6923
      %v7038 = vpop.f32.mrf.mxu0
      %v7039 = vadd.f32 0.0, %v7038
      %7040 = vmatmul.f32.gmra.mxu0 %v6926
      %v7041 = vpop.f32.mrf.mxu0
      %v7042 = vadd.f32 0.0, %v7041
      %7043 = vmatmul.f32.gmra.mxu0 %v6929
      %v7044 = vpop.f32.mrf.mxu0
      %v7045 = vadd.f32 0.0, %v7044
      %7046 = vmatmul.f32.gmra.mxu0 %v6932
      %v7047 = vpop.f32.mrf.mxu0
      %v7048 = vadd.f32 0.0, %v7047
      %7049 = vmatmul.f32.gmra.mxu0 %v6935
      %v7050 = vpop.f32.mrf.mxu0
      %v7051 = vadd.f32 0.0, %v7050
      %7052 = vmatmul.f32.gmra.mxu0 %v6938
      %v7053 = vpop.f32.mrf.mxu0
      %v7054 = vadd.f32 0.0, %v7053
      %7055 = vmatmul.f32.gmra.mxu0 %v6941
      %v7056 = vpop.f32.mrf.mxu0
      %v7057 = vadd.f32 0.0, %v7056
      %7058 = vmatmul.f32.gmra.mxu0 %v6944
      %v7059 = vpop.f32.mrf.mxu0
      %v7060 = vadd.f32 0.0, %v7059
      %7061 = vmatmul.f32.gmra.mxu0 %v6947
      %v7062 = vpop.f32.mrf.mxu0
      %v7063 = vadd.f32 0.0, %v7062
      %7064 = vmatmul.f32.gmra.mxu0 %v6950
      %v7065 = vpop.f32.mrf.mxu0
      %v7066 = vadd.f32 0.0, %v7065
      %7067 = vmatmul.f32.gmra.mxu0 %v6953
      %v7068 = vpop.f32.mrf.mxu0
      %v7069 = vadd.f32 0.0, %v7068
      %7070 = vmatmul.f32.gmra.mxu0 %v6956
      %v7071 = vpop.f32.mrf.mxu0
      %v7072 = vadd.f32 0.0, %v7071
      %7073 = vdwg.mxu0
      %v7074 = vadd.f32 %v6796, %v6979
      %v7075 = vadd.f32 %v6797, %v6982
      %v7076 = vadd.f32 %v6798, %v6985
      %v7077 = vadd.f32 %v6799, %v6988
      %v7078 = vadd.f32 %v6800, %v6991
      %v7079 = vadd.f32 %v6801, %v6994
      %v7080 = vadd.f32 %v6802, %v6997
      %v7081 = vadd.f32 %v6803, %v7000
      %v7082 = vadd.f32 %v6804, %v7003
      %v7083 = vadd.f32 %v6805, %v7006
      %v7084 = vadd.f32 %v6806, %v7009
      %v7085 = vadd.f32 %v6807, %v7012
      %v7086 = vadd.f32 %v6808, %v7015
      %v7087 = vadd.f32 %v6809, %v7018
      %v7088 = vadd.f32 %v6810, %v7021
      %v7089 = vadd.f32 %v6811, %v7024
      %v7090 = vadd.f32 %v6812, %v7027
      %v7091 = vadd.f32 %v6813, %v7030
      %v7092 = vadd.f32 %v6814, %v7033
      %v7093 = vadd.f32 %v6815, %v7036
      %v7094 = vadd.f32 %v6816, %v7039
      %v7095 = vadd.f32 %v6817, %v7042
      %v7096 = vadd.f32 %v6818, %v7045
      %v7097 = vadd.f32 %v6819, %v7048
      %v7098 = vadd.f32 %v6820, %v7051
      %v7099 = vadd.f32 %v6821, %v7054
      %v7100 = vadd.f32 %v6822, %v7057
      %v7101 = vadd.f32 %v6823, %v7060
      %v7102 = vadd.f32 %v6824, %v7063
      %v7103 = vadd.f32 %v6825, %v7066
      %v7104 = vadd.f32 %v6826, %v7069
      %v7105 = vadd.f32 %v6827, %v7072
      %v7106 = vld [vmem:[%s3888 + $0x2] sm:$0xff]
      %v7107 = vld [vmem:[%s3888 + $0xa] sm:$0xff]
      %v7108 = vld [vmem:[%s3888 + $0x1a] sm:$0xff]
      %v7109 = vld [vmem:[%s3888 + $0x22] sm:$0xff]
      %v7110 = vld [vmem:[%s3888 + $0x32] sm:$0xff]
      %v7111 = vld [vmem:[%s3888 + $0x3a] sm:$0xff]
      %v7112 = vld [vmem:[%s3888 + $0x4a] sm:$0xff]
      %v7113 = vld [vmem:[%s3888 + $0x52] sm:$0xff]
      %v7114 = vld [vmem:[%s3888 + $0x62] sm:$0xff]
      %v7115 = vld [vmem:[%s3888 + $0x6a] sm:$0xff]
      %v7116 = vld [vmem:[%s3888 + $0x7a] sm:$0xff]
      %v7117 = vld [vmem:[%s3888 + $0x82] sm:$0xff]
      %v7118 = vld [vmem:[%s3888 + $0x92] sm:$0xff]
      %v7119 = vld [vmem:[%s3888 + $0x9a] sm:$0xff]
      %v7120 = vld [vmem:[%s3888 + $0xaa] sm:$0xff]
      %v7121 = vld [vmem:[%s3888 + $0xb2] sm:$0xff]
      %v7122 = vld [vmem:[%s3888 + $0xc2] sm:$0xff]
      %v7123 = vld [vmem:[%s3888 + $0xca] sm:$0xff]
      %v7124 = vld [vmem:[%s3888 + $0xda] sm:$0xff]
      %v7125 = vld [vmem:[%s3888 + $0xe2] sm:$0xff]
      %v7126 = vld [vmem:[%s3888 + $0xf2] sm:$0xff]
      %v7127 = vld [vmem:[%s3888 + $0xfa] sm:$0xff]
      %v7128 = vld [vmem:[%s3888 + $0x10a] sm:$0xff]
      %v7129 = vld [vmem:[%s3888 + $0x112] sm:$0xff]
      %v7130 = vld [vmem:[%s3888 + $0x122] sm:$0xff]
      %v7131 = vld [vmem:[%s3888 + $0x12a] sm:$0xff]
      %v7132 = vld [vmem:[%s3888 + $0x13a] sm:$0xff]
      %v7133 = vld [vmem:[%s3888 + $0x142] sm:$0xff]
      %v7134 = vld [vmem:[%s3888 + $0x152] sm:$0xff]
      %v7135 = vld [vmem:[%s3888 + $0x15a] sm:$0xff]
      %v7136 = vld [vmem:[%s3888 + $0x16a] sm:$0xff]
      %v7137 = vld [vmem:[%s3888 + $0x172] sm:$0xff]
      %s7138 = scalar_lea.vmem %s9, 32
      %v7139 = vld [vmem:[%s7138] sm:$0xf]
      %v7141 = vsel %vm2163, %v7106, 0
      %v7144 = vsel %vm2163, %v7107, 0
      %v7147 = vsel %vm2163, %v7108, 0
      %v7150 = vsel %vm2163, %v7109, 0
      %v7153 = vsel %vm2163, %v7110, 0
      %v7156 = vsel %vm2163, %v7111, 0
      %v7159 = vsel %vm2163, %v7112, 0
      %v7162 = vsel %vm2163, %v7113, 0
      %v7165 = vsel %vm2163, %v7114, 0
      %v7168 = vsel %vm2163, %v7115, 0
      %v7171 = vsel %vm2163, %v7116, 0
      %v7174 = vsel %vm2163, %v7117, 0
      %v7177 = vsel %vm2163, %v7118, 0
      %v7180 = vsel %vm2163, %v7119, 0
      %v7183 = vsel %vm2163, %v7120, 0
      %v7186 = vsel %vm2163, %v7121, 0
      %v7189 = vsel %vm2163, %v7122, 0
      %v7192 = vsel %vm2163, %v7123, 0
      %v7195 = vsel %vm2163, %v7124, 0
      %v7198 = vsel %vm2163, %v7125, 0
      %v7201 = vsel %vm2163, %v7126, 0
      %v7204 = vsel %vm2163, %v7127, 0
      %v7207 = vsel %vm2163, %v7128, 0
      %v7210 = vsel %vm2163, %v7129, 0
      %v7213 = vsel %vm2163, %v7130, 0
      %v7216 = vsel %vm2163, %v7131, 0
      %v7219 = vsel %vm2163, %v7132, 0
      %v7222 = vsel %vm2163, %v7133, 0
      %v7225 = vsel %vm2163, %v7134, 0
      %v7228 = vsel %vm2163, %v7135, 0
      %v7231 = vsel %vm2163, %v7136, 0
      %v7234 = vsel %vm2163, %v7137, 0
      %v7237 = vsel %vm2447, %v7139, 0
      %7239 = vmatpush.msra.mxu0 0.0
      %7240 = vmatpush.msra.mxu0 0.0
      %7241 = vmatpush.msra.mxu0 0.0
      %7242 = vmatpush.msra.mxu0 0.0
      %7243 = vmatpush.msra.mxu0 0.0
      %7244 = vmatpush.msra.mxu0 0.0
      %7245 = vmatpush.msra.mxu0 0.0
      %7246 = vmatpush.msra.mxu0 0.0
      %7247 = vmatpush.msra.mxu0 0.0
      %7248 = vmatpush.msra.mxu0 0.0
      %7249 = vmatpush.msra.mxu0 0.0
      %7250 = vmatpush.msra.mxu0 0.0
      %7251 = vmatpush.msra.mxu0 0.0
      %7252 = vmatpush.msra.mxu0 0.0
      %7253 = vmatpush.msra.mxu0 0.0
      %7254 = vmatpush.msra.mxu0 %v7237
      %7255 = vmatmul.f32.gmra.mxu0 %v7141
      %v7256 = vpop.f32.mrf.mxu0
      %v7257 = vadd.f32 0.0, %v7256
      %7258 = vmatmul.f32.gmra.mxu0 %v7144
      %v7259 = vpop.f32.mrf.mxu0
      %v7260 = vadd.f32 0.0, %v7259
      %7261 = vmatmul.f32.gmra.mxu0 %v7147
      %v7262 = vpop.f32.mrf.mxu0
      %v7263 = vadd.f32 0.0, %v7262
      %7264 = vmatmul.f32.gmra.mxu0 %v7150
      %v7265 = vpop.f32.mrf.mxu0
      %v7266 = vadd.f32 0.0, %v7265
      %7267 = vmatmul.f32.gmra.mxu0 %v7153
      %v7268 = vpop.f32.mrf.mxu0
      %v7269 = vadd.f32 0.0, %v7268
      %7270 = vmatmul.f32.gmra.mxu0 %v7156
      %v7271 = vpop.f32.mrf.mxu0
      %v7272 = vadd.f32 0.0, %v7271
      %7273 = vmatmul.f32.gmra.mxu0 %v7159
      %v7274 = vpop.f32.mrf.mxu0
      %v7275 = vadd.f32 0.0, %v7274
      %7276 = vmatmul.f32.gmra.mxu0 %v7162
      %v7277 = vpop.f32.mrf.mxu0
      %v7278 = vadd.f32 0.0, %v7277
      %7279 = vmatmul.f32.gmra.mxu0 %v7165
      %v7280 = vpop.f32.mrf.mxu0
      %v7281 = vadd.f32 0.0, %v7280
      %7282 = vmatmul.f32.gmra.mxu0 %v7168
      %v7283 = vpop.f32.mrf.mxu0
      %v7284 = vadd.f32 0.0, %v7283
      %7285 = vmatmul.f32.gmra.mxu0 %v7171
      %v7286 = vpop.f32.mrf.mxu0
      %v7287 = vadd.f32 0.0, %v7286
      %7288 = vmatmul.f32.gmra.mxu0 %v7174
      %v7289 = vpop.f32.mrf.mxu0
      %v7290 = vadd.f32 0.0, %v7289
      %7291 = vmatmul.f32.gmra.mxu0 %v7177
      %v7292 = vpop.f32.mrf.mxu0
      %v7293 = vadd.f32 0.0, %v7292
      %7294 = vmatmul.f32.gmra.mxu0 %v7180
      %v7295 = vpop.f32.mrf.mxu0
      %v7296 = vadd.f32 0.0, %v7295
      %7297 = vmatmul.f32.gmra.mxu0 %v7183
      %v7298 = vpop.f32.mrf.mxu0
      %v7299 = vadd.f32 0.0, %v7298
      %7300 = vmatmul.f32.gmra.mxu0 %v7186
      %v7301 = vpop.f32.mrf.mxu0
      %v7302 = vadd.f32 0.0, %v7301
      %7303 = vmatmul.f32.gmra.mxu0 %v7189
      %v7304 = vpop.f32.mrf.mxu0
      %v7305 = vadd.f32 0.0, %v7304
      %7306 = vmatmul.f32.gmra.mxu0 %v7192
      %v7307 = vpop.f32.mrf.mxu0
      %v7308 = vadd.f32 0.0, %v7307
      %7309 = vmatmul.f32.gmra.mxu0 %v7195
      %v7310 = vpop.f32.mrf.mxu0
      %v7311 = vadd.f32 0.0, %v7310
      %7312 = vmatmul.f32.gmra.mxu0 %v7198
      %v7313 = vpop.f32.mrf.mxu0
      %v7314 = vadd.f32 0.0, %v7313
      %7315 = vmatmul.f32.gmra.mxu0 %v7201
      %v7316 = vpop.f32.mrf.mxu0
      %v7317 = vadd.f32 0.0, %v7316
      %7318 = vmatmul.f32.gmra.mxu0 %v7204
      %v7319 = vpop.f32.mrf.mxu0
      %v7320 = vadd.f32 0.0, %v7319
      %7321 = vmatmul.f32.gmra.mxu0 %v7207
      %v7322 = vpop.f32.mrf.mxu0
      %v7323 = vadd.f32 0.0, %v7322
      %7324 = vmatmul.f32.gmra.mxu0 %v7210
      %v7325 = vpop.f32.mrf.mxu0
      %v7326 = vadd.f32 0.0, %v7325
      %7327 = vmatmul.f32.gmra.mxu0 %v7213
      %v7328 = vpop.f32.mrf.mxu0
      %v7329 = vadd.f32 0.0, %v7328
      %7330 = vmatmul.f32.gmra.mxu0 %v7216
      %v7331 = vpop.f32.mrf.mxu0
      %v7332 = vadd.f32 0.0, %v7331
      %7333 = vmatmul.f32.gmra.mxu0 %v7219
      %v7334 = vpop.f32.mrf.mxu0
      %v7335 = vadd.f32 0.0, %v7334
      %7336 = vmatmul.f32.gmra.mxu0 %v7222
      %v7337 = vpop.f32.mrf.mxu0
      %v7338 = vadd.f32 0.0, %v7337
      %7339 = vmatmul.f32.gmra.mxu0 %v7225
      %v7340 = vpop.f32.mrf.mxu0
      %v7341 = vadd.f32 0.0, %v7340
      %7342 = vmatmul.f32.gmra.mxu0 %v7228
      %v7343 = vpop.f32.mrf.mxu0
      %v7344 = vadd.f32 0.0, %v7343
      %7345 = vmatmul.f32.gmra.mxu0 %v7231
      %v7346 = vpop.f32.mrf.mxu0
      %v7347 = vadd.f32 0.0, %v7346
      %7348 = vmatmul.f32.gmra.mxu0 %v7234
      %v7349 = vpop.f32.mrf.mxu0
      %v7350 = vadd.f32 0.0, %v7349
      %7351 = vdwg.mxu0
      %v7352 = vadd.f32 %v7074, %v7257
      %v7353 = vadd.f32 %v7075, %v7260
      %v7354 = vadd.f32 %v7076, %v7263
      %v7355 = vadd.f32 %v7077, %v7266
      %v7356 = vadd.f32 %v7078, %v7269
      %v7357 = vadd.f32 %v7079, %v7272
      %v7358 = vadd.f32 %v7080, %v7275
      %v7359 = vadd.f32 %v7081, %v7278
      %v7360 = vadd.f32 %v7082, %v7281
      %v7361 = vadd.f32 %v7083, %v7284
      %v7362 = vadd.f32 %v7084, %v7287
      %v7363 = vadd.f32 %v7085, %v7290
      %v7364 = vadd.f32 %v7086, %v7293
      %v7365 = vadd.f32 %v7087, %v7296
      %v7366 = vadd.f32 %v7088, %v7299
      %v7367 = vadd.f32 %v7089, %v7302
      %v7368 = vadd.f32 %v7090, %v7305
      %v7369 = vadd.f32 %v7091, %v7308
      %v7370 = vadd.f32 %v7092, %v7311
      %v7371 = vadd.f32 %v7093, %v7314
      %v7372 = vadd.f32 %v7094, %v7317
      %v7373 = vadd.f32 %v7095, %v7320
      %v7374 = vadd.f32 %v7096, %v7323
      %v7375 = vadd.f32 %v7097, %v7326
      %v7376 = vadd.f32 %v7098, %v7329
      %v7377 = vadd.f32 %v7099, %v7332
      %v7378 = vadd.f32 %v7100, %v7335
      %v7379 = vadd.f32 %v7101, %v7338
      %v7380 = vadd.f32 %v7102, %v7341
      %v7381 = vadd.f32 %v7103, %v7344
      %v7382 = vadd.f32 %v7104, %v7347
      %v7383 = vadd.f32 %v7105, %v7350
      %v7384 = vld [vmem:[%s10] sm:$0x1]
      %v7386 = vperm.slane %v7384, 0
      %v7388 = vadd.f32 %v7352, %v7386
      %v7389 = vadd.f32 %v7353, %v7386
      %v7390 = vadd.f32 %v7354, %v7386
      %v7391 = vadd.f32 %v7355, %v7386
      %v7392 = vadd.f32 %v7356, %v7386
      %v7393 = vadd.f32 %v7357, %v7386
      %v7394 = vadd.f32 %v7358, %v7386
      %v7395 = vadd.f32 %v7359, %v7386
      %v7396 = vadd.f32 %v7360, %v7386
      %v7397 = vadd.f32 %v7361, %v7386
      %v7398 = vadd.f32 %v7362, %v7386
      %v7399 = vadd.f32 %v7363, %v7386
      %v7400 = vadd.f32 %v7364, %v7386
      %v7401 = vadd.f32 %v7365, %v7386
      %v7402 = vadd.f32 %v7366, %v7386
      %v7403 = vadd.f32 %v7367, %v7386
      %v7404 = vadd.f32 %v7368, %v7386
      %v7405 = vadd.f32 %v7369, %v7386
      %v7406 = vadd.f32 %v7370, %v7386
      %v7407 = vadd.f32 %v7371, %v7386
      %v7408 = vadd.f32 %v7372, %v7386
      %v7409 = vadd.f32 %v7373, %v7386
      %v7410 = vadd.f32 %v7374, %v7386
      %v7411 = vadd.f32 %v7375, %v7386
      %v7412 = vadd.f32 %v7376, %v7386
      %v7413 = vadd.f32 %v7377, %v7386
      %v7414 = vadd.f32 %v7378, %v7386
      %v7415 = vadd.f32 %v7379, %v7386
      %v7416 = vadd.f32 %v7380, %v7386
      %v7417 = vadd.f32 %v7381, %v7386
      %v7418 = vadd.f32 %v7382, %v7386
      %v7419 = vadd.f32 %v7383, %v7386
      %v7420 = vxor.u32 %v7388, 2147483648
      %v7421 = vxor.u32 %v7389, 2147483648
      %v7422 = vxor.u32 %v7390, 2147483648
      %v7423 = vxor.u32 %v7391, 2147483648
      %v7424 = vxor.u32 %v7392, 2147483648
      %v7425 = vxor.u32 %v7393, 2147483648
      %v7426 = vxor.u32 %v7394, 2147483648
      %v7427 = vxor.u32 %v7395, 2147483648
      %v7428 = vxor.u32 %v7396, 2147483648
      %v7429 = vxor.u32 %v7397, 2147483648
      %v7430 = vxor.u32 %v7398, 2147483648
      %v7431 = vxor.u32 %v7399, 2147483648
      %v7432 = vxor.u32 %v7400, 2147483648
      %v7433 = vxor.u32 %v7401, 2147483648
      %v7434 = vxor.u32 %v7402, 2147483648
      %v7435 = vxor.u32 %v7403, 2147483648
      %v7436 = vxor.u32 %v7404, 2147483648
      %v7437 = vxor.u32 %v7405, 2147483648
      %v7438 = vxor.u32 %v7406, 2147483648
      %v7439 = vxor.u32 %v7407, 2147483648
      %v7440 = vxor.u32 %v7408, 2147483648
      %v7441 = vxor.u32 %v7409, 2147483648
      %v7442 = vxor.u32 %v7410, 2147483648
      %v7443 = vxor.u32 %v7411, 2147483648
      %v7444 = vxor.u32 %v7412, 2147483648
      %v7445 = vxor.u32 %v7413, 2147483648
      %v7446 = vxor.u32 %v7414, 2147483648
      %v7447 = vxor.u32 %v7415, 2147483648
      %v7448 = vxor.u32 %v7416, 2147483648
      %v7449 = vxor.u32 %v7417, 2147483648
      %v7450 = vxor.u32 %v7418, 2147483648
      %v7451 = vxor.u32 %v7419, 2147483648
      %v7452 = vmul.f32 %v7420, 1.442695
      %v7453 = vpow.pop %v7452
      %v7454 = vmul.f32 %v7421, 1.442695
      %v7455 = vpow.pop %v7454
      %v7456 = vmul.f32 %v7422, 1.442695
      %v7457 = vpow.pop %v7456
      %v7458 = vmul.f32 %v7423, 1.442695
      %v7459 = vpow.pop %v7458
      %v7460 = vmul.f32 %v7424, 1.442695
      %v7461 = vpow.pop %v7460
      %v7462 = vmul.f32 %v7425, 1.442695
      %v7463 = vpow.pop %v7462
      %v7464 = vmul.f32 %v7426, 1.442695
      %v7465 = vpow.pop %v7464
      %v7466 = vmul.f32 %v7427, 1.442695
      %v7467 = vpow.pop %v7466
      %v7468 = vmul.f32 %v7428, 1.442695
      %v7469 = vpow.pop %v7468
      %v7470 = vmul.f32 %v7429, 1.442695
      %v7471 = vpow.pop %v7470
      %v7472 = vmul.f32 %v7430, 1.442695
      %v7473 = vpow.pop %v7472
      %v7474 = vmul.f32 %v7431, 1.442695
      %v7475 = vpow.pop %v7474
      %v7476 = vmul.f32 %v7432, 1.442695
      %v7477 = vpow.pop %v7476
      %v7478 = vmul.f32 %v7433, 1.442695
      %v7479 = vpow.pop %v7478
      %v7480 = vmul.f32 %v7434, 1.442695
      %v7481 = vpow.pop %v7480
      %v7482 = vmul.f32 %v7435, 1.442695
      %v7483 = vpow.pop %v7482
      %v7484 = vmul.f32 %v7436, 1.442695
      %v7485 = vpow.pop %v7484
      %v7486 = vmul.f32 %v7437, 1.442695
      %v7487 = vpow.pop %v7486
      %v7488 = vmul.f32 %v7438, 1.442695
      %v7489 = vpow.pop %v7488
      %v7490 = vmul.f32 %v7439, 1.442695
      %v7491 = vpow.pop %v7490
      %v7492 = vmul.f32 %v7440, 1.442695
      %v7493 = vpow.pop %v7492
      %v7494 = vmul.f32 %v7441, 1.442695
      %v7495 = vpow.pop %v7494
      %v7496 = vmul.f32 %v7442, 1.442695
      %v7497 = vpow.pop %v7496
      %v7498 = vmul.f32 %v7443, 1.442695
      %v7499 = vpow.pop %v7498
      %v7500 = vmul.f32 %v7444, 1.442695
      %v7501 = vpow.pop %v7500
      %v7502 = vmul.f32 %v7445, 1.442695
      %v7503 = vpow.pop %v7502
      %v7504 = vmul.f32 %v7446, 1.442695
      %v7505 = vpow.pop %v7504
      %v7506 = vmul.f32 %v7447, 1.442695
      %v7507 = vpow.pop %v7506
      %v7508 = vmul.f32 %v7448, 1.442695
      %v7509 = vpow.pop %v7508
      %v7510 = vmul.f32 %v7449, 1.442695
      %v7511 = vpow.pop %v7510
      %v7512 = vmul.f32 %v7450, 1.442695
      %v7513 = vpow.pop %v7512
      %v7514 = vmul.f32 %v7451, 1.442695
      %v7515 = vpow.pop %v7514
      %v7516 = vadd.f32 %v7453, 1.0
      %v7517 = vadd.f32 %v7455, 1.0
      %v7518 = vadd.f32 %v7457, 1.0
      %v7519 = vadd.f32 %v7459, 1.0
      %v7520 = vadd.f32 %v7461, 1.0
      %v7521 = vadd.f32 %v7463, 1.0
      %v7522 = vadd.f32 %v7465, 1.0
      %v7523 = vadd.f32 %v7467, 1.0
      %v7524 = vadd.f32 %v7469, 1.0
      %v7525 = vadd.f32 %v7471, 1.0
      %v7526 = vadd.f32 %v7473, 1.0
      %v7527 = vadd.f32 %v7475, 1.0
      %v7528 = vadd.f32 %v7477, 1.0
      %v7529 = vadd.f32 %v7479, 1.0
      %v7530 = vadd.f32 %v7481, 1.0
      %v7531 = vadd.f32 %v7483, 1.0
      %v7532 = vadd.f32 %v7485, 1.0
      %v7533 = vadd.f32 %v7487, 1.0
      %v7534 = vadd.f32 %v7489, 1.0
      %v7535 = vadd.f32 %v7491, 1.0
      %v7536 = vadd.f32 %v7493, 1.0
      %v7537 = vadd.f32 %v7495, 1.0
      %v7538 = vadd.f32 %v7497, 1.0
      %v7539 = vadd.f32 %v7499, 1.0
      %v7540 = vadd.f32 %v7501, 1.0
      %v7541 = vadd.f32 %v7503, 1.0
      %v7542 = vadd.f32 %v7505, 1.0
      %v7543 = vadd.f32 %v7507, 1.0
      %v7544 = vadd.f32 %v7509, 1.0
      %v7545 = vadd.f32 %v7511, 1.0
      %v7546 = vadd.f32 %v7513, 1.0
      %v7547 = vadd.f32 %v7515, 1.0
      %v7548 = vrcp.pop %v7516
      %v7549 = vmul.f32 %v7516, %v7548
      %v7550 = vsub.f32 1.0, %v7549
      %v7551 = vmul.f32 %v7548, %v7550
      %v7552 = vadd.f32 %v7548, %v7551
      %vm7553 = vweird.f32 %v7516
      %vm7554 = vweird.f32 %v7548
      %vm7555 = vmor %vm7553, %vm7554
      %v7556 = vsel %vm7555, %v7548, %v7552
      %v7557 = vand.u32 2147483647, %v7516
      %vm7558 = vcmp.eq.f32.partialorder %v7557, 8.507059e+37
      %v7559 = vand.u32 %v7516, 2147483648
      %v7560 = vor.u32 1.1754944e-38, %v7559
      %v7561 = vsel %vm7558, %v7560, %v7556
      %v7562 = vmul.f32 1.0, %v7561
      %v7563 = vrcp.pop %v7517
      %v7564 = vmul.f32 %v7517, %v7563
      %v7565 = vsub.f32 1.0, %v7564
      %v7566 = vmul.f32 %v7563, %v7565
      %v7567 = vadd.f32 %v7563, %v7566
      %vm7568 = vweird.f32 %v7517
      %vm7569 = vweird.f32 %v7563
      %vm7570 = vmor %vm7568, %vm7569
      %v7571 = vsel %vm7570, %v7563, %v7567
      %v7572 = vand.u32 2147483647, %v7517
      %vm7573 = vcmp.eq.f32.partialorder %v7572, 8.507059e+37
      %v7574 = vand.u32 %v7517, 2147483648
      %v7575 = vor.u32 1.1754944e-38, %v7574
      %v7576 = vsel %vm7573, %v7575, %v7571
      %v7577 = vmul.f32 1.0, %v7576
      %v7578 = vrcp.pop %v7518
      %v7579 = vmul.f32 %v7518, %v7578
      %v7580 = vsub.f32 1.0, %v7579
      %v7581 = vmul.f32 %v7578, %v7580
      %v7582 = vadd.f32 %v7578, %v7581
      %vm7583 = vweird.f32 %v7518
      %vm7584 = vweird.f32 %v7578
      %vm7585 = vmor %vm7583, %vm7584
      %v7586 = vsel %vm7585, %v7578, %v7582
      %v7587 = vand.u32 2147483647, %v7518
      %vm7588 = vcmp.eq.f32.partialorder %v7587, 8.507059e+37
      %v7589 = vand.u32 %v7518, 2147483648
      %v7590 = vor.u32 1.1754944e-38, %v7589
      %v7591 = vsel %vm7588, %v7590, %v7586
      %v7592 = vmul.f32 1.0, %v7591
      %v7593 = vrcp.pop %v7519
      %v7594 = vmul.f32 %v7519, %v7593
      %v7595 = vsub.f32 1.0, %v7594
      %v7596 = vmul.f32 %v7593, %v7595
      %v7597 = vadd.f32 %v7593, %v7596
      %vm7598 = vweird.f32 %v7519
      %vm7599 = vweird.f32 %v7593
      %vm7600 = vmor %vm7598, %vm7599
      %v7601 = vsel %vm7600, %v7593, %v7597
      %v7602 = vand.u32 2147483647, %v7519
      %vm7603 = vcmp.eq.f32.partialorder %v7602, 8.507059e+37
      %v7604 = vand.u32 %v7519, 2147483648
      %v7605 = vor.u32 1.1754944e-38, %v7604
      %v7606 = vsel %vm7603, %v7605, %v7601
      %v7607 = vmul.f32 1.0, %v7606
      %v7608 = vrcp.pop %v7520
      %v7609 = vmul.f32 %v7520, %v7608
      %v7610 = vsub.f32 1.0, %v7609
      %v7611 = vmul.f32 %v7608, %v7610
      %v7612 = vadd.f32 %v7608, %v7611
      %vm7613 = vweird.f32 %v7520
      %vm7614 = vweird.f32 %v7608
      %vm7615 = vmor %vm7613, %vm7614
      %v7616 = vsel %vm7615, %v7608, %v7612
      %v7617 = vand.u32 2147483647, %v7520
      %vm7618 = vcmp.eq.f32.partialorder %v7617, 8.507059e+37
      %v7619 = vand.u32 %v7520, 2147483648
      %v7620 = vor.u32 1.1754944e-38, %v7619
      %v7621 = vsel %vm7618, %v7620, %v7616
      %v7622 = vmul.f32 1.0, %v7621
      %v7623 = vrcp.pop %v7521
      %v7624 = vmul.f32 %v7521, %v7623
      %v7625 = vsub.f32 1.0, %v7624
      %v7626 = vmul.f32 %v7623, %v7625
      %v7627 = vadd.f32 %v7623, %v7626
      %vm7628 = vweird.f32 %v7521
      %vm7629 = vweird.f32 %v7623
      %vm7630 = vmor %vm7628, %vm7629
      %v7631 = vsel %vm7630, %v7623, %v7627
      %v7632 = vand.u32 2147483647, %v7521
      %vm7633 = vcmp.eq.f32.partialorder %v7632, 8.507059e+37
      %v7634 = vand.u32 %v7521, 2147483648
      %v7635 = vor.u32 1.1754944e-38, %v7634
      %v7636 = vsel %vm7633, %v7635, %v7631
      %v7637 = vmul.f32 1.0, %v7636
      %v7638 = vrcp.pop %v7522
      %v7639 = vmul.f32 %v7522, %v7638
      %v7640 = vsub.f32 1.0, %v7639
      %v7641 = vmul.f32 %v7638, %v7640
      %v7642 = vadd.f32 %v7638, %v7641
      %vm7643 = vweird.f32 %v7522
      %vm7644 = vweird.f32 %v7638
      %vm7645 = vmor %vm7643, %vm7644
      %v7646 = vsel %vm7645, %v7638, %v7642
      %v7647 = vand.u32 2147483647, %v7522
      %vm7648 = vcmp.eq.f32.partialorder %v7647, 8.507059e+37
      %v7649 = vand.u32 %v7522, 2147483648
      %v7650 = vor.u32 1.1754944e-38, %v7649
      %v7651 = vsel %vm7648, %v7650, %v7646
      %v7652 = vmul.f32 1.0, %v7651
      %v7653 = vrcp.pop %v7523
      %v7654 = vmul.f32 %v7523, %v7653
      %v7655 = vsub.f32 1.0, %v7654
      %v7656 = vmul.f32 %v7653, %v7655
      %v7657 = vadd.f32 %v7653, %v7656
      %vm7658 = vweird.f32 %v7523
      %vm7659 = vweird.f32 %v7653
      %vm7660 = vmor %vm7658, %vm7659
      %v7661 = vsel %vm7660, %v7653, %v7657
      %v7662 = vand.u32 2147483647, %v7523
      %vm7663 = vcmp.eq.f32.partialorder %v7662, 8.507059e+37
      %v7664 = vand.u32 %v7523, 2147483648
      %v7665 = vor.u32 1.1754944e-38, %v7664
      %v7666 = vsel %vm7663, %v7665, %v7661
      %v7667 = vmul.f32 1.0, %v7666
      %v7668 = vrcp.pop %v7524
      %v7669 = vmul.f32 %v7524, %v7668
      %v7670 = vsub.f32 1.0, %v7669
      %v7671 = vmul.f32 %v7668, %v7670
      %v7672 = vadd.f32 %v7668, %v7671
      %vm7673 = vweird.f32 %v7524
      %vm7674 = vweird.f32 %v7668
      %vm7675 = vmor %vm7673, %vm7674
      %v7676 = vsel %vm7675, %v7668, %v7672
      %v7677 = vand.u32 2147483647, %v7524
      %vm7678 = vcmp.eq.f32.partialorder %v7677, 8.507059e+37
      %v7679 = vand.u32 %v7524, 2147483648
      %v7680 = vor.u32 1.1754944e-38, %v7679
      %v7681 = vsel %vm7678, %v7680, %v7676
      %v7682 = vmul.f32 1.0, %v7681
      %v7683 = vrcp.pop %v7525
      %v7684 = vmul.f32 %v7525, %v7683
      %v7685 = vsub.f32 1.0, %v7684
      %v7686 = vmul.f32 %v7683, %v7685
      %v7687 = vadd.f32 %v7683, %v7686
      %vm7688 = vweird.f32 %v7525
      %vm7689 = vweird.f32 %v7683
      %vm7690 = vmor %vm7688, %vm7689
      %v7691 = vsel %vm7690, %v7683, %v7687
      %v7692 = vand.u32 2147483647, %v7525
      %vm7693 = vcmp.eq.f32.partialorder %v7692, 8.507059e+37
      %v7694 = vand.u32 %v7525, 2147483648
      %v7695 = vor.u32 1.1754944e-38, %v7694
      %v7696 = vsel %vm7693, %v7695, %v7691
      %v7697 = vmul.f32 1.0, %v7696
      %v7698 = vrcp.pop %v7526
      %v7699 = vmul.f32 %v7526, %v7698
      %v7700 = vsub.f32 1.0, %v7699
      %v7701 = vmul.f32 %v7698, %v7700
      %v7702 = vadd.f32 %v7698, %v7701
      %vm7703 = vweird.f32 %v7526
      %vm7704 = vweird.f32 %v7698
      %vm7705 = vmor %vm7703, %vm7704
      %v7706 = vsel %vm7705, %v7698, %v7702
      %v7707 = vand.u32 2147483647, %v7526
      %vm7708 = vcmp.eq.f32.partialorder %v7707, 8.507059e+37
      %v7709 = vand.u32 %v7526, 2147483648
      %v7710 = vor.u32 1.1754944e-38, %v7709
      %v7711 = vsel %vm7708, %v7710, %v7706
      %v7712 = vmul.f32 1.0, %v7711
      %v7713 = vrcp.pop %v7527
      %v7714 = vmul.f32 %v7527, %v7713
      %v7715 = vsub.f32 1.0, %v7714
      %v7716 = vmul.f32 %v7713, %v7715
      %v7717 = vadd.f32 %v7713, %v7716
      %vm7718 = vweird.f32 %v7527
      %vm7719 = vweird.f32 %v7713
      %vm7720 = vmor %vm7718, %vm7719
      %v7721 = vsel %vm7720, %v7713, %v7717
      %v7722 = vand.u32 2147483647, %v7527
      %vm7723 = vcmp.eq.f32.partialorder %v7722, 8.507059e+37
      %v7724 = vand.u32 %v7527, 2147483648
      %v7725 = vor.u32 1.1754944e-38, %v7724
      %v7726 = vsel %vm7723, %v7725, %v7721
      %v7727 = vmul.f32 1.0, %v7726
      %v7728 = vrcp.pop %v7528
      %v7729 = vmul.f32 %v7528, %v7728
      %v7730 = vsub.f32 1.0, %v7729
      %v7731 = vmul.f32 %v7728, %v7730
      %v7732 = vadd.f32 %v7728, %v7731
      %vm7733 = vweird.f32 %v7528
      %vm7734 = vweird.f32 %v7728
      %vm7735 = vmor %vm7733, %vm7734
      %v7736 = vsel %vm7735, %v7728, %v7732
      %v7737 = vand.u32 2147483647, %v7528
      %vm7738 = vcmp.eq.f32.partialorder %v7737, 8.507059e+37
      %v7739 = vand.u32 %v7528, 2147483648
      %v7740 = vor.u32 1.1754944e-38, %v7739
      %v7741 = vsel %vm7738, %v7740, %v7736
      %v7742 = vmul.f32 1.0, %v7741
      %v7743 = vrcp.pop %v7529
      %v7744 = vmul.f32 %v7529, %v7743
      %v7745 = vsub.f32 1.0, %v7744
      %v7746 = vmul.f32 %v7743, %v7745
      %v7747 = vadd.f32 %v7743, %v7746
      %vm7748 = vweird.f32 %v7529
      %vm7749 = vweird.f32 %v7743
      %vm7750 = vmor %vm7748, %vm7749
      %v7751 = vsel %vm7750, %v7743, %v7747
      %v7752 = vand.u32 2147483647, %v7529
      %vm7753 = vcmp.eq.f32.partialorder %v7752, 8.507059e+37
      %v7754 = vand.u32 %v7529, 2147483648
      %v7755 = vor.u32 1.1754944e-38, %v7754
      %v7756 = vsel %vm7753, %v7755, %v7751
      %v7757 = vmul.f32 1.0, %v7756
      %v7758 = vrcp.pop %v7530
      %v7759 = vmul.f32 %v7530, %v7758
      %v7760 = vsub.f32 1.0, %v7759
      %v7761 = vmul.f32 %v7758, %v7760
      %v7762 = vadd.f32 %v7758, %v7761
      %vm7763 = vweird.f32 %v7530
      %vm7764 = vweird.f32 %v7758
      %vm7765 = vmor %vm7763, %vm7764
      %v7766 = vsel %vm7765, %v7758, %v7762
      %v7767 = vand.u32 2147483647, %v7530
      %vm7768 = vcmp.eq.f32.partialorder %v7767, 8.507059e+37
      %v7769 = vand.u32 %v7530, 2147483648
      %v7770 = vor.u32 1.1754944e-38, %v7769
      %v7771 = vsel %vm7768, %v7770, %v7766
      %v7772 = vmul.f32 1.0, %v7771
      %v7773 = vrcp.pop %v7531
      %v7774 = vmul.f32 %v7531, %v7773
      %v7775 = vsub.f32 1.0, %v7774
      %v7776 = vmul.f32 %v7773, %v7775
      %v7777 = vadd.f32 %v7773, %v7776
      %vm7778 = vweird.f32 %v7531
      %vm7779 = vweird.f32 %v7773
      %vm7780 = vmor %vm7778, %vm7779
      %v7781 = vsel %vm7780, %v7773, %v7777
      %v7782 = vand.u32 2147483647, %v7531
      %vm7783 = vcmp.eq.f32.partialorder %v7782, 8.507059e+37
      %v7784 = vand.u32 %v7531, 2147483648
      %v7785 = vor.u32 1.1754944e-38, %v7784
      %v7786 = vsel %vm7783, %v7785, %v7781
      %v7787 = vmul.f32 1.0, %v7786
      %v7788 = vrcp.pop %v7532
      %v7789 = vmul.f32 %v7532, %v7788
      %v7790 = vsub.f32 1.0, %v7789
      %v7791 = vmul.f32 %v7788, %v7790
      %v7792 = vadd.f32 %v7788, %v7791
      %vm7793 = vweird.f32 %v7532
      %vm7794 = vweird.f32 %v7788
      %vm7795 = vmor %vm7793, %vm7794
      %v7796 = vsel %vm7795, %v7788, %v7792
      %v7797 = vand.u32 2147483647, %v7532
      %vm7798 = vcmp.eq.f32.partialorder %v7797, 8.507059e+37
      %v7799 = vand.u32 %v7532, 2147483648
      %v7800 = vor.u32 1.1754944e-38, %v7799
      %v7801 = vsel %vm7798, %v7800, %v7796
      %v7802 = vmul.f32 1.0, %v7801
      %v7803 = vrcp.pop %v7533
      %v7804 = vmul.f32 %v7533, %v7803
      %v7805 = vsub.f32 1.0, %v7804
      %v7806 = vmul.f32 %v7803, %v7805
      %v7807 = vadd.f32 %v7803, %v7806
      %vm7808 = vweird.f32 %v7533
      %vm7809 = vweird.f32 %v7803
      %vm7810 = vmor %vm7808, %vm7809
      %v7811 = vsel %vm7810, %v7803, %v7807
      %v7812 = vand.u32 2147483647, %v7533
      %vm7813 = vcmp.eq.f32.partialorder %v7812, 8.507059e+37
      %v7814 = vand.u32 %v7533, 2147483648
      %v7815 = vor.u32 1.1754944e-38, %v7814
      %v7816 = vsel %vm7813, %v7815, %v7811
      %v7817 = vmul.f32 1.0, %v7816
      %v7818 = vrcp.pop %v7534
      %v7819 = vmul.f32 %v7534, %v7818
      %v7820 = vsub.f32 1.0, %v7819
      %v7821 = vmul.f32 %v7818, %v7820
      %v7822 = vadd.f32 %v7818, %v7821
      %vm7823 = vweird.f32 %v7534
      %vm7824 = vweird.f32 %v7818
      %vm7825 = vmor %vm7823, %vm7824
      %v7826 = vsel %vm7825, %v7818, %v7822
      %v7827 = vand.u32 2147483647, %v7534
      %vm7828 = vcmp.eq.f32.partialorder %v7827, 8.507059e+37
      %v7829 = vand.u32 %v7534, 2147483648
      %v7830 = vor.u32 1.1754944e-38, %v7829
      %v7831 = vsel %vm7828, %v7830, %v7826
      %v7832 = vmul.f32 1.0, %v7831
      %v7833 = vrcp.pop %v7535
      %v7834 = vmul.f32 %v7535, %v7833
      %v7835 = vsub.f32 1.0, %v7834
      %v7836 = vmul.f32 %v7833, %v7835
      %v7837 = vadd.f32 %v7833, %v7836
      %vm7838 = vweird.f32 %v7535
      %vm7839 = vweird.f32 %v7833
      %vm7840 = vmor %vm7838, %vm7839
      %v7841 = vsel %vm7840, %v7833, %v7837
      %v7842 = vand.u32 2147483647, %v7535
      %vm7843 = vcmp.eq.f32.partialorder %v7842, 8.507059e+37
      %v7844 = vand.u32 %v7535, 2147483648
      %v7845 = vor.u32 1.1754944e-38, %v7844
      %v7846 = vsel %vm7843, %v7845, %v7841
      %v7847 = vmul.f32 1.0, %v7846
      %v7848 = vrcp.pop %v7536
      %v7849 = vmul.f32 %v7536, %v7848
      %v7850 = vsub.f32 1.0, %v7849
      %v7851 = vmul.f32 %v7848, %v7850
      %v7852 = vadd.f32 %v7848, %v7851
      %vm7853 = vweird.f32 %v7536
      %vm7854 = vweird.f32 %v7848
      %vm7855 = vmor %vm7853, %vm7854
      %v7856 = vsel %vm7855, %v7848, %v7852
      %v7857 = vand.u32 2147483647, %v7536
      %vm7858 = vcmp.eq.f32.partialorder %v7857, 8.507059e+37
      %v7859 = vand.u32 %v7536, 2147483648
      %v7860 = vor.u32 1.1754944e-38, %v7859
      %v7861 = vsel %vm7858, %v7860, %v7856
      %v7862 = vmul.f32 1.0, %v7861
      %v7863 = vrcp.pop %v7537
      %v7864 = vmul.f32 %v7537, %v7863
      %v7865 = vsub.f32 1.0, %v7864
      %v7866 = vmul.f32 %v7863, %v7865
      %v7867 = vadd.f32 %v7863, %v7866
      %vm7868 = vweird.f32 %v7537
      %vm7869 = vweird.f32 %v7863
      %vm7870 = vmor %vm7868, %vm7869
      %v7871 = vsel %vm7870, %v7863, %v7867
      %v7872 = vand.u32 2147483647, %v7537
      %vm7873 = vcmp.eq.f32.partialorder %v7872, 8.507059e+37
      %v7874 = vand.u32 %v7537, 2147483648
      %v7875 = vor.u32 1.1754944e-38, %v7874
      %v7876 = vsel %vm7873, %v7875, %v7871
      %v7877 = vmul.f32 1.0, %v7876
      %v7878 = vrcp.pop %v7538
      %v7879 = vmul.f32 %v7538, %v7878
      %v7880 = vsub.f32 1.0, %v7879
      %v7881 = vmul.f32 %v7878, %v7880
      %v7882 = vadd.f32 %v7878, %v7881
      %vm7883 = vweird.f32 %v7538
      %vm7884 = vweird.f32 %v7878
      %vm7885 = vmor %vm7883, %vm7884
      %v7886 = vsel %vm7885, %v7878, %v7882
      %v7887 = vand.u32 2147483647, %v7538
      %vm7888 = vcmp.eq.f32.partialorder %v7887, 8.507059e+37
      %v7889 = vand.u32 %v7538, 2147483648
      %v7890 = vor.u32 1.1754944e-38, %v7889
      %v7891 = vsel %vm7888, %v7890, %v7886
      %v7892 = vmul.f32 1.0, %v7891
      %v7893 = vrcp.pop %v7539
      %v7894 = vmul.f32 %v7539, %v7893
      %v7895 = vsub.f32 1.0, %v7894
      %v7896 = vmul.f32 %v7893, %v7895
      %v7897 = vadd.f32 %v7893, %v7896
      %vm7898 = vweird.f32 %v7539
      %vm7899 = vweird.f32 %v7893
      %vm7900 = vmor %vm7898, %vm7899
      %v7901 = vsel %vm7900, %v7893, %v7897
      %v7902 = vand.u32 2147483647, %v7539
      %vm7903 = vcmp.eq.f32.partialorder %v7902, 8.507059e+37
      %v7904 = vand.u32 %v7539, 2147483648
      %v7905 = vor.u32 1.1754944e-38, %v7904
      %v7906 = vsel %vm7903, %v7905, %v7901
      %v7907 = vmul.f32 1.0, %v7906
      %v7908 = vrcp.pop %v7540
      %v7909 = vmul.f32 %v7540, %v7908
      %v7910 = vsub.f32 1.0, %v7909
      %v7911 = vmul.f32 %v7908, %v7910
      %v7912 = vadd.f32 %v7908, %v7911
      %vm7913 = vweird.f32 %v7540
      %vm7914 = vweird.f32 %v7908
      %vm7915 = vmor %vm7913, %vm7914
      %v7916 = vsel %vm7915, %v7908, %v7912
      %v7917 = vand.u32 2147483647, %v7540
      %vm7918 = vcmp.eq.f32.partialorder %v7917, 8.507059e+37
      %v7919 = vand.u32 %v7540, 2147483648
      %v7920 = vor.u32 1.1754944e-38, %v7919
      %v7921 = vsel %vm7918, %v7920, %v7916
      %v7922 = vmul.f32 1.0, %v7921
      %v7923 = vrcp.pop %v7541
      %v7924 = vmul.f32 %v7541, %v7923
      %v7925 = vsub.f32 1.0, %v7924
      %v7926 = vmul.f32 %v7923, %v7925
      %v7927 = vadd.f32 %v7923, %v7926
      %vm7928 = vweird.f32 %v7541
      %vm7929 = vweird.f32 %v7923
      %vm7930 = vmor %vm7928, %vm7929
      %v7931 = vsel %vm7930, %v7923, %v7927
      %v7932 = vand.u32 2147483647, %v7541
      %vm7933 = vcmp.eq.f32.partialorder %v7932, 8.507059e+37
      %v7934 = vand.u32 %v7541, 2147483648
      %v7935 = vor.u32 1.1754944e-38, %v7934
      %v7936 = vsel %vm7933, %v7935, %v7931
      %v7937 = vmul.f32 1.0, %v7936
      %v7938 = vrcp.pop %v7542
      %v7939 = vmul.f32 %v7542, %v7938
      %v7940 = vsub.f32 1.0, %v7939
      %v7941 = vmul.f32 %v7938, %v7940
      %v7942 = vadd.f32 %v7938, %v7941
      %vm7943 = vweird.f32 %v7542
      %vm7944 = vweird.f32 %v7938
      %vm7945 = vmor %vm7943, %vm7944
      %v7946 = vsel %vm7945, %v7938, %v7942
      %v7947 = vand.u32 2147483647, %v7542
      %vm7948 = vcmp.eq.f32.partialorder %v7947, 8.507059e+37
      %v7949 = vand.u32 %v7542, 2147483648
      %v7950 = vor.u32 1.1754944e-38, %v7949
      %v7951 = vsel %vm7948, %v7950, %v7946
      %v7952 = vmul.f32 1.0, %v7951
      %v7953 = vrcp.pop %v7543
      %v7954 = vmul.f32 %v7543, %v7953
      %v7955 = vsub.f32 1.0, %v7954
      %v7956 = vmul.f32 %v7953, %v7955
      %v7957 = vadd.f32 %v7953, %v7956
      %vm7958 = vweird.f32 %v7543
      %vm7959 = vweird.f32 %v7953
      %vm7960 = vmor %vm7958, %vm7959
      %v7961 = vsel %vm7960, %v7953, %v7957
      %v7962 = vand.u32 2147483647, %v7543
      %vm7963 = vcmp.eq.f32.partialorder %v7962, 8.507059e+37
      %v7964 = vand.u32 %v7543, 2147483648
      %v7965 = vor.u32 1.1754944e-38, %v7964
      %v7966 = vsel %vm7963, %v7965, %v7961
      %v7967 = vmul.f32 1.0, %v7966
      %v7968 = vrcp.pop %v7544
      %v7969 = vmul.f32 %v7544, %v7968
      %v7970 = vsub.f32 1.0, %v7969
      %v7971 = vmul.f32 %v7968, %v7970
      %v7972 = vadd.f32 %v7968, %v7971
      %vm7973 = vweird.f32 %v7544
      %vm7974 = vweird.f32 %v7968
      %vm7975 = vmor %vm7973, %vm7974
      %v7976 = vsel %vm7975, %v7968, %v7972
      %v7977 = vand.u32 2147483647, %v7544
      %vm7978 = vcmp.eq.f32.partialorder %v7977, 8.507059e+37
      %v7979 = vand.u32 %v7544, 2147483648
      %v7980 = vor.u32 1.1754944e-38, %v7979
      %v7981 = vsel %vm7978, %v7980, %v7976
      %v7982 = vmul.f32 1.0, %v7981
      %v7983 = vrcp.pop %v7545
      %v7984 = vmul.f32 %v7545, %v7983
      %v7985 = vsub.f32 1.0, %v7984
      %v7986 = vmul.f32 %v7983, %v7985
      %v7987 = vadd.f32 %v7983, %v7986
      %vm7988 = vweird.f32 %v7545
      %vm7989 = vweird.f32 %v7983
      %vm7990 = vmor %vm7988, %vm7989
      %v7991 = vsel %vm7990, %v7983, %v7987
      %v7992 = vand.u32 2147483647, %v7545
      %vm7993 = vcmp.eq.f32.partialorder %v7992, 8.507059e+37
      %v7994 = vand.u32 %v7545, 2147483648
      %v7995 = vor.u32 1.1754944e-38, %v7994
      %v7996 = vsel %vm7993, %v7995, %v7991
      %v7997 = vmul.f32 1.0, %v7996
      %v7998 = vrcp.pop %v7546
      %v7999 = vmul.f32 %v7546, %v7998
      %v8000 = vsub.f32 1.0, %v7999
      %v8001 = vmul.f32 %v7998, %v8000
      %v8002 = vadd.f32 %v7998, %v8001
      %vm8003 = vweird.f32 %v7546
      %vm8004 = vweird.f32 %v7998
      %vm8005 = vmor %vm8003, %vm8004
      %v8006 = vsel %vm8005, %v7998, %v8002
      %v8007 = vand.u32 2147483647, %v7546
      %vm8008 = vcmp.eq.f32.partialorder %v8007, 8.507059e+37
      %v8009 = vand.u32 %v7546, 2147483648
      %v8010 = vor.u32 1.1754944e-38, %v8009
      %v8011 = vsel %vm8008, %v8010, %v8006
      %v8012 = vmul.f32 1.0, %v8011
      %v8013 = vrcp.pop %v7547
      %v8014 = vmul.f32 %v7547, %v8013
      %v8015 = vsub.f32 1.0, %v8014
      %v8016 = vmul.f32 %v8013, %v8015
      %v8017 = vadd.f32 %v8013, %v8016
      %vm8018 = vweird.f32 %v7547
      %vm8019 = vweird.f32 %v8013
      %vm8020 = vmor %vm8018, %vm8019
      %v8021 = vsel %vm8020, %v8013, %v8017
      %v8022 = vand.u32 2147483647, %v7547
      %vm8023 = vcmp.eq.f32.partialorder %v8022, 8.507059e+37
      %v8024 = vand.u32 %v7547, 2147483648
      %v8025 = vor.u32 1.1754944e-38, %v8024
      %v8026 = vsel %vm8023, %v8025, %v8021
      %v8027 = vmul.f32 1.0, %v8026
      %vm8028 = vcmask 64512
      %8029 = vst.msk [vmem:[%s406] sm:$0xff] %vm8028, %v7562
      %8030 = vst.msk [vmem:[%s406 + $0x8] sm:$0xff] %vm8028, %v7577
      %8031 = vst.msk [vmem:[%s406 + $0x10] sm:$0xff] %vm8028, %v7592
      %8032 = vst.msk [vmem:[%s406 + $0x18] sm:$0xff] %vm8028, %v7607
      %8033 = vst.msk [vmem:[%s406 + $0x20] sm:$0xff] %vm8028, %v7622
      %8034 = vst.msk [vmem:[%s406 + $0x28] sm:$0xff] %vm8028, %v7637
      %8035 = vst.msk [vmem:[%s406 + $0x30] sm:$0xff] %vm8028, %v7652
      %8036 = vst.msk [vmem:[%s406 + $0x38] sm:$0xff] %vm8028, %v7667
      %8037 = vst.msk [vmem:[%s406 + $0x40] sm:$0xff] %vm8028, %v7682
      %8038 = vst.msk [vmem:[%s406 + $0x48] sm:$0xff] %vm8028, %v7697
      %8039 = vst.msk [vmem:[%s406 + $0x50] sm:$0xff] %vm8028, %v7712
      %8040 = vst.msk [vmem:[%s406 + $0x58] sm:$0xff] %vm8028, %v7727
      %8041 = vst.msk [vmem:[%s406 + $0x60] sm:$0xff] %vm8028, %v7742
      %8042 = vst.msk [vmem:[%s406 + $0x68] sm:$0xff] %vm8028, %v7757
      %8043 = vst.msk [vmem:[%s406 + $0x70] sm:$0xff] %vm8028, %v7772
      %8044 = vst.msk [vmem:[%s406 + $0x78] sm:$0xff] %vm8028, %v7787
      %8045 = vst.msk [vmem:[%s406 + $0x80] sm:$0xff] %vm8028, %v7802
      %8046 = vst.msk [vmem:[%s406 + $0x88] sm:$0xff] %vm8028, %v7817
      %8047 = vst.msk [vmem:[%s406 + $0x90] sm:$0xff] %vm8028, %v7832
      %8048 = vst.msk [vmem:[%s406 + $0x98] sm:$0xff] %vm8028, %v7847
      %8049 = vst.msk [vmem:[%s406 + $0xa0] sm:$0xff] %vm8028, %v7862
      %8050 = vst.msk [vmem:[%s406 + $0xa8] sm:$0xff] %vm8028, %v7877
      %8051 = vst.msk [vmem:[%s406 + $0xb0] sm:$0xff] %vm8028, %v7892
      %8052 = vst.msk [vmem:[%s406 + $0xb8] sm:$0xff] %vm8028, %v7907
      %8053 = vst.msk [vmem:[%s406 + $0xc0] sm:$0xff] %vm8028, %v7922
      %8054 = vst.msk [vmem:[%s406 + $0xc8] sm:$0xff] %vm8028, %v7937
      %8055 = vst.msk [vmem:[%s406 + $0xd0] sm:$0xff] %vm8028, %v7952
      %8056 = vst.msk [vmem:[%s406 + $0xd8] sm:$0xff] %vm8028, %v7967
      %8057 = vst.msk [vmem:[%s406 + $0xe0] sm:$0xff] %vm8028, %v7982
      %8058 = vst.msk [vmem:[%s406 + $0xe8] sm:$0xff] %vm8028, %v7997
      %8059 = vst.msk [vmem:[%s406 + $0xf0] sm:$0xff] %vm8028, %v8012
      %8060 = vst.msk [vmem:[%s406 + $0xf8] sm:$0xff] %vm8028, %v8027
      %p8061 = scmp.lt.s32.totalorder %s22, 1
      %s8062 = scalar_select %p8061, %s22, 1
      %s8063 = smul.addr %s8062, 32
      %s8064 = smul.addr %s8063, 8
      %s8065 = scalar_lea.vmem %s11, %s8064
      // Predicated region
      $region65: #{down_mru2_forward.1} parent=63 // pred_check
        %p8066 = pneg %p281
      $region66: #{down_mru2_forward.1} parent=63 // pred_check_branch
        %8068 = sbr.rel (%p8066) target = $region68
      $region67: #{down_mru2_forward.1} parent=63 // pred_region
        _
      $region68: #{down_mru2_forward.1} parent=63 // pred_fallthru
        _
    $region64: #{down_mru2_forward.1} parent=5 // pred_fallthru
      _
    %p8069 = scmp.le.s32.totalorder 2, %s17
    // Predicated region
    $region69: #{down_mru2_forward.1} parent=5 // pred_check
      %p8070 = pneg %p8069
    $region70: #{down_mru2_forward.1} parent=5 // pred_check_branch
      %8072 = sbr.rel (%p8070) target = $region72
    $region71: #{down_mru2_forward.1} parent=5 // pred_region
      %s8073 = ssub.s32 %s17, 2
      // Predicated region
      $region73: #{down_mru2_forward.1} parent=71 // pred_check
        %p8074 = pneg %p287
      $region74: #{down_mru2_forward.1} parent=71 // pred_check_branch
        %8076 = sbr.rel (%p8074) target = $region76
      $region75: #{down_mru2_forward.1} parent=71 // pred_region
        %p8077 = scmp.lt.s32.totalorder %s23, 1
        %s8078 = scalar_select %p8077, %s23, 1
        %s8079 = smul.addr %s8078, 32
        %s8080 = smul.addr %s8079, 8
        %s8081 = scalar_lea.vmem %s11, %s8080
      $region76: #{down_mru2_forward.1} parent=71 // pred_fallthru
        _
    $region72: #{down_mru2_forward.1} parent=5 // pred_fallthru
      _
  $region6: #{down_mru2_forward.1} parent=0 // loop_footer
    %s21 = sadd.s32 1, %s17
  $region7: #{down_mru2_forward.1} parent=0 // loop_footer_branch
    %16 = sbr.rel target = $region3
  $region8: #{down_mru2_forward.1} parent=0 // loop_exit
    _

</llo_original>
